<compile_context>
chip_gen: v5e
topology: v5e:2x2
jax: 0.10.0
libtpu: 0.0.40
codegen_flags: <defaults>
</compile_context>

<pallas_src>
import functools

import jax
import jax.numpy as jnp
import numpy as np
from jax import lax
from jax.experimental import pallas as pl
from jax.experimental.pallas import tpu as pltpu


# ---------------------------------------------------------------------------
# Static problem geometry (fc1 = 16*5*5 forces 3x32x32 inputs).
# ---------------------------------------------------------------------------
IMG, CIN = 32, 3               # input spatial size / channels
C1, C2 = 6, 16                 # conv output channels
KH = KW = 5                    # conv kernel size
OH1 = IMG - KH + 1             # 28 : conv1 output height/width
OH2 = OH1 // 2 - KH + 1        # 10 : conv2 output height/width
PB2 = OH2 // 2                 # 5  : pool2 output height/width
XPAD = 128                     # input lanes   (32*3  = 96  -> pad 128)
Y1PAD = 256                    # conv1 lanes   (28*6  = 168 -> pad 256)
Y2PAD = 256                    # conv2 lanes   (10*16 = 160 -> pad 256)
FCP = 128                      # fc lane width (120/84/10 -> pad 128)
TB = 16                        # images per grid step (multiple of 8)


# ---------------------------------------------------------------------------
# The fused kernel (one grid step = TB images, fully resident in VMEM)
# ---------------------------------------------------------------------------
def _example_cnn_kernel(x_ref, w1_ref, b1_ref, w2_ref, b2_ref,
                        wf1_ref, bf1_ref, wf2_ref, bf2_ref, wf3_ref, bf3_ref,
                        out_ref, *, tb):
    f32, bf16 = jnp.float32, jnp.bfloat16
    r1 = OH1 * tb              # 28*tb : conv1 map rows  (row = oy*tb + b)
    rm = (OH1 - 1) * tb        # 27*tb : pool1 overlap-map rows
    r2 = (2 * OH2 - 1) * tb    # 19*tb : conv2 map rows  (row = 2*oy2*tb + b)

    x = x_ref[...]                                           # (32*tb, 128) bf16

    # conv1 + bias + ReLU: 5 kernel-row taps stacked on lanes -> one matmul.
    x5 = jnp.concatenate([x[i * tb:i * tb + r1, :] for i in range(KH)], axis=1)
    y1 = jnp.dot(x5, w1_ref[...], preferred_element_type=f32)    # (r1, 256)
    y1 = jnp.maximum(y1 + b1_ref[...], 0.0)

    # pool1 (2x2/2): row-pair max via tb-aligned slices, column-pair max via a
    # 6-lane roll (XLU); the stride-2 decimation is folded into conv2's band.
    a = jnp.maximum(y1[0:rm, :], y1[tb:tb + rm, :])
    m1 = jnp.maximum(a, pltpu.roll(a, shift=Y1PAD - C1, axis=1)).astype(bf16)

    # conv2 + bias + ReLU: 5 dilation-2 row taps stacked on lanes -> one matmul.
    m5 = jnp.concatenate(
        [m1[2 * i * tb:2 * i * tb + r2, :] for i in range(KH)], axis=1)
    y2 = jnp.dot(m5, w2_ref[...], preferred_element_type=f32)    # (r2, 256)
    y2 = jnp.maximum(y2 + b2_ref[...], 0.0)

    # pool2 + flatten: the two conv2 row-groups of each pool row are contiguous
    # (tb, 256) aligned slices (rows are already per-image there); column-pair
    # max via a 16-lane roll; the even-column selection + torch CHW flatten
    # order live in wf1's (zero) rows.  Result: (tb, 5*256) feature slab.
    feats = []
    for py in range(PB2):
        qa = y2[(4 * py) * tb:(4 * py + 1) * tb, :]
        qb = y2[(4 * py + 2) * tb:(4 * py + 3) * tb, :]
        q = jnp.maximum(qa, qb)
        q = jnp.maximum(q, pltpu.roll(q, shift=Y2PAD - C2, axis=1))
        feats.append(q)
    f = jnp.concatenate(feats, axis=1).astype(bf16)              # (tb, 1280)

    # fc head: three batched matmuls, one lane-dense (tb, 128) store.
    h1 = jnp.maximum(
        jnp.dot(f, wf1_ref[...], preferred_element_type=f32) + bf1_ref[...], 0.0)
    h2 = jnp.maximum(
        jnp.dot(h1.astype(bf16), wf2_ref[...], preferred_element_type=f32)
        + bf2_ref[...], 0.0)
    out_ref[...] = (jnp.dot(h2.astype(bf16), wf3_ref[...],
                            preferred_element_type=f32) + bf3_ref[...])


# ---------------------------------------------------------------------------
# One-time weight packing (hoisted out of the jitted forward)
# ---------------------------------------------------------------------------
def pack_params(params):
    f32 = np.float32
    w1 = np.asarray(params["conv1_w"], f32)   # (6, 3, 5, 5)
    b1 = np.asarray(params["conv1_b"], f32)
    w2 = np.asarray(params["conv2_w"], f32)   # (16, 6, 5, 5)
    b2 = np.asarray(params["conv2_b"], f32)
    fw1 = np.asarray(params["fc1_w"], f32)    # (120, 400)
    fb1 = np.asarray(params["fc1_b"], f32)
    fw2 = np.asarray(params["fc2_w"], f32)    # (84, 120)
    fb2 = np.asarray(params["fc2_b"], f32)
    fw3 = np.asarray(params["fc3_w"], f32)    # (10, 84)
    fb3 = np.asarray(params["fc3_b"], f32)

    # conv1 band: x5 lane (tap*128 + xw*3 + c) -> y1 lane (ox*6 + oc).
    W1 = np.zeros((KH * XPAD, Y1PAD), f32)
    for i in range(KH):
        for j in range(KW):
            for ox in range(OH1):
                xw = ox + j
                W1[i * XPAD + xw * CIN:i * XPAD + xw * CIN + CIN,
                   ox * C1:(ox + 1) * C1] = w1[:, :, i, j].T
    B1 = np.zeros((1, Y1PAD), f32)
    B1[0, :OH1 * C1] = np.tile(b1, OH1)

    # conv2 band (stride-2 pool1 decimation folded in):
    # m5 lane (tap*256 + x*6 + c1) with x = 2*(ox2+j) -> y2 lane (ox2*16 + oc2).
    W2 = np.zeros((KH * Y1PAD, Y2PAD), f32)
    for i in range(KH):
        for j in range(KW):
            for ox2 in range(OH2):
                xx = 2 * (ox2 + j)
                W2[i * Y1PAD + xx * C1:i * Y1PAD + xx * C1 + C1,
                   ox2 * C2:(ox2 + 1) * C2] = w2[:, :, i, j].T
    B2 = np.zeros((1, Y2PAD), f32)
    B2[0, :OH2 * C2] = np.tile(b2, OH2)

    # fc1: feature lane (py*256 + 2*px*16 + c2) -> unit n, value fc1_w[n, CHW],
    # CHW flat index = c2*25 + py*5 + px (torch flatten order); odd-ox2 rows
    # stay zero (pool2 even-column selection folded into the weight).
    WF1 = np.zeros((PB2 * Y2PAD, FCP), f32)
    for py in range(PB2):
        for px in range(PB2):
            cols = np.arange(C2) * (PB2 * PB2) + py * PB2 + px
            r0 = py * Y2PAD + 2 * px * C2
            WF1[r0:r0 + C2, :120] = fw1[:, cols].T
    BF1 = np.zeros((1, FCP), f32); BF1[0, :120] = fb1
    WF2 = np.zeros((FCP, FCP), f32); WF2[:120, :84] = fw2.T
    BF2 = np.zeros((1, FCP), f32); BF2[0, :84] = fb2
    WF3 = np.zeros((FCP, FCP), f32); WF3[:84, :10] = fw3.T
    BF3 = np.zeros((1, FCP), f32); BF3[0, :10] = fb3

    bf16 = jnp.bfloat16
    return {
        "w1": jnp.asarray(W1, bf16), "b1": jnp.asarray(B1),
        "w2": jnp.asarray(W2, bf16), "b2": jnp.asarray(B2),
        "wf1": jnp.asarray(WF1, bf16), "bf1": jnp.asarray(BF1),
        "wf2": jnp.asarray(WF2, bf16), "bf2": jnp.asarray(BF2),
        "wf3": jnp.asarray(WF3, bf16), "bf3": jnp.asarray(BF3),
    }


# ---------------------------------------------------------------------------
# Forward wrapper: input slab layout + single batch-tiled pallas_call
# ---------------------------------------------------------------------------
@functools.partial(jax.jit, static_argnames=("tb",))
def example_cnn_forward(x_nchw, packed, tb=TB):
    nb = x_nchw.shape[0]
    assert x_nchw.shape[1:] == (CIN, IMG, IMG)
    nb_pad = ((nb + tb - 1) // tb) * tb
    g = nb_pad // tb

    x = x_nchw.astype(jnp.float32)
    if nb_pad != nb:
        x = jnp.pad(x, ((0, nb_pad - nb), (0, 0), (0, 0), (0, 0)))
    # Slab rows = (tile, image-row, image-in-tile); lanes = xw*3 + c, pad 128.
    xs = x.reshape(g, tb, CIN, IMG, IMG)
    xs = jnp.transpose(xs, (0, 3, 1, 4, 2)).reshape(g * IMG * tb, IMG * CIN)
    xs = jnp.pad(xs, ((0, 0), (0, XPAD - IMG * CIN))).astype(jnp.bfloat16)

    args = (xs, packed["w1"], packed["b1"], packed["w2"], packed["b2"],
            packed["wf1"], packed["bf1"], packed["wf2"], packed["bf2"],
            packed["wf3"], packed["bf3"])
    in_specs = [pl.BlockSpec((IMG * tb, XPAD), lambda i: (i, 0))]
    in_specs += [pl.BlockSpec(a.shape, lambda i: (0, 0)) for a in args[1:]]

    out = pl.pallas_call(
        functools.partial(_example_cnn_kernel, tb=tb),
        out_shape=jax.ShapeDtypeStruct((nb_pad, FCP), jnp.float32),
        grid=(g,),
        in_specs=in_specs,
        out_specs=pl.BlockSpec((tb, FCP), lambda i: (i, 0)),
        compiler_params=pltpu.CompilerParams(
            dimension_semantics=("parallel",),
            vmem_limit_bytes=32 * 1024 * 1024),
    )(*args)
    return out[:nb, :10]


# ---------------------------------------------------------------------------
# Pure-JAX reference (independent code path, high precision)
# ---------------------------------------------------------------------------
def reference_forward(x_nchw, params):
    hp = jax.lax.Precision.HIGHEST

    def conv_relu(x, w, b):
        y = lax.conv_general_dilated(
            x, w, window_strides=(1, 1), padding="VALID",
            dimension_numbers=("NCHW", "OIHW", "NCHW"), precision=hp)
        return jnp.maximum(y + b[None, :, None, None], 0.0)

    def pool(x):
        n, c, h, w = x.shape
        return jnp.max(x.reshape(n, c, h // 2, 2, w // 2, 2), axis=(3, 5))

    x = pool(conv_relu(x_nchw, params["conv1_w"], params["conv1_b"]))
    x = pool(conv_relu(x, params["conv2_w"], params["conv2_b"]))
    x = x.reshape(x.shape[0], -1)                    # NCHW flatten == torch
    x = jnp.maximum(jnp.dot(x, params["fc1_w"].T, precision=hp) + params["fc1_b"], 0.0)
    x = jnp.maximum(jnp.dot(x, params["fc2_w"].T, precision=hp) + params["fc2_b"], 0.0)
    return jnp.dot(x, params["fc3_w"].T, precision=hp) + params["fc3_b"]


def init_params(key):
    """Deterministic parameters, PyTorch-convention shapes."""
    shapes = {
        "conv1_w": (6, 3, 5, 5),   "conv1_b": (6,),
        "conv2_w": (16, 6, 5, 5),  "conv2_b": (16,),
        "fc1_w": (120, 400),       "fc1_b": (120,),
        "fc2_w": (84, 120),        "fc2_b": (84,),
        "fc3_w": (10, 84),         "fc3_b": (10,),
    }
    params = {}
    for name, shape in shapes.items():
        key, sub = jax.random.split(key)
        fan_in = int(np.prod(shape[1:])) if len(shape) > 1 else shape[0]
        scale = 1.0 / np.sqrt(fan_in)
        params[name] = scale * jax.random.normal(sub, shape, dtype=jnp.float32)
    return params


if __name__ == "__main__":
    key = jax.random.PRNGKey(0)
    k_x, k_p = jax.random.split(key)
    # fc1 = 16*5*5 forces 3x32x32 inputs; batch=32 -> 2 grid steps of TB=16.
    x = jax.random.normal(k_x, (32, CIN, IMG, IMG), dtype=jnp.float32)
    params = init_params(k_p)
    packed = pack_params(params)        # one-time packing, outside the forward

    out = jax.block_until_ready(example_cnn_forward(x, packed))
    assert out.shape == (32, 10) and out.dtype == jnp.float32

    ref = jax.block_until_ready(reference_forward(x, params))
    # Tolerance accounts for bf16 MXU operands (f32 accumulation).
    np.testing.assert_allclose(np.asarray(out), np.asarray(ref),
                               rtol=3e-2, atol=3e-2)
    print("KERNEL_OK")
</pallas_src>

<mosaic_0001>
module attributes {stable_mosaic.version = 11 : i64} {
  func.func @_example_cnn_kernel(%arg0: i32, %arg1: memref<512x128xbf16, #tpu.memory_space<vmem>>, %arg2: memref<640x256xbf16, #tpu.memory_space<vmem>>, %arg3: memref<1x256xf32, #tpu.memory_space<vmem>>, %arg4: memref<1280x256xbf16, #tpu.memory_space<vmem>>, %arg5: memref<1x256xf32, #tpu.memory_space<vmem>>, %arg6: memref<1280x128xbf16, #tpu.memory_space<vmem>>, %arg7: memref<1x128xf32, #tpu.memory_space<vmem>>, %arg8: memref<128x128xbf16, #tpu.memory_space<vmem>>, %arg9: memref<1x128xf32, #tpu.memory_space<vmem>>, %arg10: memref<128x128xbf16, #tpu.memory_space<vmem>>, %arg11: memref<1x128xf32, #tpu.memory_space<vmem>>, %arg12: memref<16x128xf32, #tpu.memory_space<vmem>>) attributes {dimension_semantics = [#tpu.dimension_semantics<parallel>], iteration_bounds = array<i64: 2>, scalar_prefetch = 0 : i64, scratch_operands = 0 : i64, tpu.core_type = #tpu.core_type<tc>, window_params = [{transform_indices = @transform_0, window_bounds = array<i64: 512, 128>}, {pipeline_mode = #tpu.pipeline_mode<synchronous>, transform_indices = @transform_1, window_bounds = array<i64: 640, 256>}, {pipeline_mode = #tpu.pipeline_mode<synchronous>, transform_indices = @transform_2, window_bounds = array<i64: 1, 256>}, {pipeline_mode = #tpu.pipeline_mode<synchronous>, transform_indices = @transform_3, window_bounds = array<i64: 1280, 256>}, {pipeline_mode = #tpu.pipeline_mode<synchronous>, transform_indices = @transform_4, window_bounds = array<i64: 1, 256>}, {pipeline_mode = #tpu.pipeline_mode<synchronous>, transform_indices = @transform_5, window_bounds = array<i64: 1280, 128>}, {pipeline_mode = #tpu.pipeline_mode<synchronous>, transform_indices = @transform_6, window_bounds = array<i64: 1, 128>}, {pipeline_mode = #tpu.pipeline_mode<synchronous>, transform_indices = @transform_7, window_bounds = array<i64: 128, 128>}, {pipeline_mode = #tpu.pipeline_mode<synchronous>, transform_indices = @transform_8, window_bounds = array<i64: 1, 128>}, {pipeline_mode = #tpu.pipeline_mode<synchronous>, transform_indices = @transform_9, window_bounds = array<i64: 128, 128>}, {pipeline_mode = #tpu.pipeline_mode<synchronous>, transform_indices = @transform_10, window_bounds = array<i64: 1, 128>}, {transform_indices = @transform_11, window_bounds = array<i64: 16, 128>}]} {
    %c0 = arith.constant 0 : index
    %c0_0 = arith.constant 0 : index
    %0 = vector.load %arg1[%c0, %c0_0] : memref<512x128xbf16, #tpu.memory_space<vmem>>, vector<512x128xbf16>
    %1 = vector.extract_strided_slice %0 {offsets = [0, 0], sizes = [448, 128], strides = [1, 1]} : vector<512x128xbf16> to vector<448x128xbf16>
    %2 = vector.extract_strided_slice %0 {offsets = [16, 0], sizes = [448, 128], strides = [1, 1]} : vector<512x128xbf16> to vector<448x128xbf16>
    %3 = vector.extract_strided_slice %0 {offsets = [32, 0], sizes = [448, 128], strides = [1, 1]} : vector<512x128xbf16> to vector<448x128xbf16>
    %4 = vector.extract_strided_slice %0 {offsets = [48, 0], sizes = [448, 128], strides = [1, 1]} : vector<512x128xbf16> to vector<448x128xbf16>
    %5 = vector.extract_strided_slice %0 {offsets = [64, 0], sizes = [448, 128], strides = [1, 1]} : vector<512x128xbf16> to vector<448x128xbf16>
    %6 = tpu.concatenate %1, %2, %3, %4, %5 in 1 : vector<448x128xbf16>, vector<448x128xbf16>, vector<448x128xbf16>, vector<448x128xbf16>, vector<448x128xbf16> -> vector<448x640xbf16>
    %c0_1 = arith.constant 0 : index
    %c0_2 = arith.constant 0 : index
    %7 = vector.load %arg2[%c0_1, %c0_2] : memref<640x256xbf16, #tpu.memory_space<vmem>>, vector<640x256xbf16>
    %cst = arith.constant dense<0.000000e+00> : vector<448x256xf32>
    %8 = tpu.matmul %6, %7, %cst {dimension_numbers = #tpu.dot_dimension_numbers<[1], [0], [0], [1], [0, 0, 1, 1], [], []>} : vector<448x640xbf16>, vector<640x256xbf16>, vector<448x256xf32> -> vector<448x256xf32>
    %c0_3 = arith.constant 0 : index
    %c0_4 = arith.constant 0 : index
    %9 = vector.load %arg3[%c0_3, %c0_4] : memref<1x256xf32, #tpu.memory_space<vmem>>, vector<1x256xf32>
    %10 = vector.broadcast %9 : vector<1x256xf32> to vector<448x256xf32>
    %11 = arith.addf %8, %10 : vector<448x256xf32>
    %cst_5 = arith.constant 0.000000e+00 : f32
    %12 = vector.broadcast %cst_5 : f32 to vector<448x256xf32>
    %13 = arith.maximumf %11, %12 : vector<448x256xf32>
    %14 = vector.extract_strided_slice %13 {offsets = [0, 0], sizes = [432, 256], strides = [1, 1]} : vector<448x256xf32> to vector<432x256xf32>
    %15 = vector.extract_strided_slice %13 {offsets = [16, 0], sizes = [432, 256], strides = [1, 1]} : vector<448x256xf32> to vector<432x256xf32>
    %16 = arith.maximumf %14, %15 : vector<432x256xf32>
    %c250_i32 = arith.constant 250 : i32
    %17 = tpu.dynamic_rotate %16 by %c250_i32 dim 1 : vector<432x256xf32>, i32 -> vector<432x256xf32>
    %18 = arith.maximumf %16, %17 : vector<432x256xf32>
    %19 = arith.truncf %18 : vector<432x256xf32> to vector<432x256xbf16>
    %20 = vector.extract_strided_slice %19 {offsets = [0, 0], sizes = [304, 256], strides = [1, 1]} : vector<432x256xbf16> to vector<304x256xbf16>
    %21 = vector.extract_strided_slice %19 {offsets = [32, 0], sizes = [304, 256], strides = [1, 1]} : vector<432x256xbf16> to vector<304x256xbf16>
    %22 = vector.extract_strided_slice %19 {offsets = [64, 0], sizes = [304, 256], strides = [1, 1]} : vector<432x256xbf16> to vector<304x256xbf16>
    %23 = vector.extract_strided_slice %19 {offsets = [96, 0], sizes = [304, 256], strides = [1, 1]} : vector<432x256xbf16> to vector<304x256xbf16>
    %24 = vector.extract_strided_slice %19 {offsets = [128, 0], sizes = [304, 256], strides = [1, 1]} : vector<432x256xbf16> to vector<304x256xbf16>
    %25 = tpu.concatenate %20, %21, %22, %23, %24 in 1 : vector<304x256xbf16>, vector<304x256xbf16>, vector<304x256xbf16>, vector<304x256xbf16>, vector<304x256xbf16> -> vector<304x1280xbf16>
    %c0_6 = arith.constant 0 : index
    %c0_7 = arith.constant 0 : index
    %26 = vector.load %arg4[%c0_6, %c0_7] : memref<1280x256xbf16, #tpu.memory_space<vmem>>, vector<1280x256xbf16>
    %cst_8 = arith.constant dense<0.000000e+00> : vector<304x256xf32>
    %27 = tpu.matmul %25, %26, %cst_8 {dimension_numbers = #tpu.dot_dimension_numbers<[1], [0], [0], [1], [0, 0, 1, 1], [], []>} : vector<304x1280xbf16>, vector<1280x256xbf16>, vector<304x256xf32> -> vector<304x256xf32>
    %c0_9 = arith.constant 0 : index
    %c0_10 = arith.constant 0 : index
    %28 = vector.load %arg5[%c0_9, %c0_10] : memref<1x256xf32, #tpu.memory_space<vmem>>, vector<1x256xf32>
    %29 = vector.broadcast %28 : vector<1x256xf32> to vector<304x256xf32>
    %30 = arith.addf %27, %29 : vector<304x256xf32>
    %cst_11 = arith.constant 0.000000e+00 : f32
    %31 = vector.broadcast %cst_11 : f32 to vector<304x256xf32>
    %32 = arith.maximumf %30, %31 : vector<304x256xf32>
    %33 = vector.extract_strided_slice %32 {offsets = [0, 0], sizes = [16, 256], strides = [1, 1]} : vector<304x256xf32> to vector<16x256xf32>
    %34 = vector.extract_strided_slice %32 {offsets = [32, 0], sizes = [16, 256], strides = [1, 1]} : vector<304x256xf32> to vector<16x256xf32>
    %35 = arith.maximumf %33, %34 : vector<16x256xf32>
    %c240_i32 = arith.constant 240 : i32
    %36 = tpu.dynamic_rotate %35 by %c240_i32 dim 1 : vector<16x256xf32>, i32 -> vector<16x256xf32>
    %37 = arith.maximumf %35, %36 : vector<16x256xf32>
    %38 = vector.extract_strided_slice %32 {offsets = [64, 0], sizes = [16, 256], strides = [1, 1]} : vector<304x256xf32> to vector<16x256xf32>
    %39 = vector.extract_strided_slice %32 {offsets = [96, 0], sizes = [16, 256], strides = [1, 1]} : vector<304x256xf32> to vector<16x256xf32>
    %40 = arith.maximumf %38, %39 : vector<16x256xf32>
    %c240_i32_12 = arith.constant 240 : i32
    %41 = tpu.dynamic_rotate %40 by %c240_i32_12 dim 1 : vector<16x256xf32>, i32 -> vector<16x256xf32>
    %42 = arith.maximumf %40, %41 : vector<16x256xf32>
    %43 = vector.extract_strided_slice %32 {offsets = [128, 0], sizes = [16, 256], strides = [1, 1]} : vector<304x256xf32> to vector<16x256xf32>
    %44 = vector.extract_strided_slice %32 {offsets = [160, 0], sizes = [16, 256], strides = [1, 1]} : vector<304x256xf32> to vector<16x256xf32>
    %45 = arith.maximumf %43, %44 : vector<16x256xf32>
    %c240_i32_13 = arith.constant 240 : i32
    %46 = tpu.dynamic_rotate %45 by %c240_i32_13 dim 1 : vector<16x256xf32>, i32 -> vector<16x256xf32>
    %47 = arith.maximumf %45, %46 : vector<16x256xf32>
    %48 = vector.extract_strided_slice %32 {offsets = [192, 0], sizes = [16, 256], strides = [1, 1]} : vector<304x256xf32> to vector<16x256xf32>
    %49 = vector.extract_strided_slice %32 {offsets = [224, 0], sizes = [16, 256], strides = [1, 1]} : vector<304x256xf32> to vector<16x256xf32>
    %50 = arith.maximumf %48, %49 : vector<16x256xf32>
    %c240_i32_14 = arith.constant 240 : i32
    %51 = tpu.dynamic_rotate %50 by %c240_i32_14 dim 1 : vector<16x256xf32>, i32 -> vector<16x256xf32>
    %52 = arith.maximumf %50, %51 : vector<16x256xf32>
    %53 = vector.extract_strided_slice %32 {offsets = [256, 0], sizes = [16, 256], strides = [1, 1]} : vector<304x256xf32> to vector<16x256xf32>
    %54 = vector.extract_strided_slice %32 {offsets = [288, 0], sizes = [16, 256], strides = [1, 1]} : vector<304x256xf32> to vector<16x256xf32>
    %55 = arith.maximumf %53, %54 : vector<16x256xf32>
    %c240_i32_15 = arith.constant 240 : i32
    %56 = tpu.dynamic_rotate %55 by %c240_i32_15 dim 1 : vector<16x256xf32>, i32 -> vector<16x256xf32>
    %57 = arith.maximumf %55, %56 : vector<16x256xf32>
    %58 = tpu.concatenate %37, %42, %47, %52, %57 in 1 : vector<16x256xf32>, vector<16x256xf32>, vector<16x256xf32>, vector<16x256xf32>, vector<16x256xf32> -> vector<16x1280xf32>
    %59 = arith.truncf %58 : vector<16x1280xf32> to vector<16x1280xbf16>
    %c0_16 = arith.constant 0 : index
    %c0_17 = arith.constant 0 : index
    %60 = vector.load %arg6[%c0_16, %c0_17] : memref<1280x128xbf16, #tpu.memory_space<vmem>>, vector<1280x128xbf16>
    %cst_18 = arith.constant dense<0.000000e+00> : vector<16x128xf32>
    %61 = tpu.matmul %59, %60, %cst_18 {dimension_numbers = #tpu.dot_dimension_numbers<[1], [0], [0], [1], [0, 0, 1, 1], [], []>} : vector<16x1280xbf16>, vector<1280x128xbf16>, vector<16x128xf32> -> vector<16x128xf32>
    %c0_19 = arith.constant 0 : index
    %c0_20 = arith.constant 0 : index
    %62 = vector.load %arg7[%c0_19, %c0_20] : memref<1x128xf32, #tpu.memory_space<vmem>>, vector<1x128xf32>
    %63 = vector.broadcast %62 : vector<1x128xf32> to vector<16x128xf32>
    %64 = arith.addf %61, %63 : vector<16x128xf32>
    %cst_21 = arith.constant 0.000000e+00 : f32
    %65 = vector.broadcast %cst_21 : f32 to vector<16x128xf32>
    %66 = arith.maximumf %64, %65 : vector<16x128xf32>
    %67 = arith.truncf %66 : vector<16x128xf32> to vector<16x128xbf16>
    %c0_22 = arith.constant 0 : index
    %c0_23 = arith.constant 0 : index
    %68 = vector.load %arg8[%c0_22, %c0_23] : memref<128x128xbf16, #tpu.memory_space<vmem>>, vector<128x128xbf16>
    %cst_24 = arith.constant dense<0.000000e+00> : vector<16x128xf32>
    %69 = tpu.matmul %67, %68, %cst_24 {dimension_numbers = #tpu.dot_dimension_numbers<[1], [0], [0], [1], [0, 0, 1, 1], [], []>} : vector<16x128xbf16>, vector<128x128xbf16>, vector<16x128xf32> -> vector<16x128xf32>
    %c0_25 = arith.constant 0 : index
    %c0_26 = arith.constant 0 : index
    %70 = vector.load %arg9[%c0_25, %c0_26] : memref<1x128xf32, #tpu.memory_space<vmem>>, vector<1x128xf32>
    %71 = vector.broadcast %70 : vector<1x128xf32> to vector<16x128xf32>
    %72 = arith.addf %69, %71 : vector<16x128xf32>
    %cst_27 = arith.constant 0.000000e+00 : f32
    %73 = vector.broadcast %cst_27 : f32 to vector<16x128xf32>
    %74 = arith.maximumf %72, %73 : vector<16x128xf32>
    %75 = arith.truncf %74 : vector<16x128xf32> to vector<16x128xbf16>
    %c0_28 = arith.constant 0 : index
    %c0_29 = arith.constant 0 : index
    %76 = vector.load %arg10[%c0_28, %c0_29] : memref<128x128xbf16, #tpu.memory_space<vmem>>, vector<128x128xbf16>
    %cst_30 = arith.constant dense<0.000000e+00> : vector<16x128xf32>
    %77 = tpu.matmul %75, %76, %cst_30 {dimension_numbers = #tpu.dot_dimension_numbers<[1], [0], [0], [1], [0, 0, 1, 1], [], []>} : vector<16x128xbf16>, vector<128x128xbf16>, vector<16x128xf32> -> vector<16x128xf32>
    %c0_31 = arith.constant 0 : index
    %c0_32 = arith.constant 0 : index
    %78 = vector.load %arg11[%c0_31, %c0_32] : memref<1x128xf32, #tpu.memory_space<vmem>>, vector<1x128xf32>
    %79 = vector.broadcast %78 : vector<1x128xf32> to vector<16x128xf32>
    %80 = arith.addf %77, %79 : vector<16x128xf32>
    %c0_33 = arith.constant 0 : index
    %c0_34 = arith.constant 0 : index
    %81 = vector.load %arg12[%c0_33, %c0_34] : memref<16x128xf32, #tpu.memory_space<vmem>>, vector<16x128xf32>
    tpu.vector_store %arg12[%c0_33, %c0_34], %80 {strides = array<i32>} : memref<16x128xf32, #tpu.memory_space<vmem>>, vector<16x128xf32>,
    return
  }
  func.func @transform_0(%arg0: i32) -> (i32, i32) {
    %c0_i32 = arith.constant 0 : i32
    %c0_i32_0 = arith.constant 0 : i32
    return %arg0, %c0_i32 : i32, i32
  }
  func.func @transform_1(%arg0: i32) -> (i32, i32) {
    %c0_i32 = arith.constant 0 : i32
    %c0_i32_0 = arith.constant 0 : i32
    %c0_i32_1 = arith.constant 0 : i32
    return %c0_i32, %c0_i32_0 : i32, i32
  }
  func.func @transform_2(%arg0: i32) -> (i32, i32) {
    %c0_i32 = arith.constant 0 : i32
    %c0_i32_0 = arith.constant 0 : i32
    %c0_i32_1 = arith.constant 0 : i32
    return %c0_i32, %c0_i32_0 : i32, i32
  }
  func.func @transform_3(%arg0: i32) -> (i32, i32) {
    %c0_i32 = arith.constant 0 : i32
    %c0_i32_0 = arith.constant 0 : i32
    %c0_i32_1 = arith.constant 0 : i32
    return %c0_i32, %c0_i32_0 : i32, i32
  }
  func.func @transform_4(%arg0: i32) -> (i32, i32) {
    %c0_i32 = arith.constant 0 : i32
    %c0_i32_0 = arith.constant 0 : i32
    %c0_i32_1 = arith.constant 0 : i32
    return %c0_i32, %c0_i32_0 : i32, i32
  }
  func.func @transform_5(%arg0: i32) -> (i32, i32) {
    %c0_i32 = arith.constant 0 : i32
    %c0_i32_0 = arith.constant 0 : i32
    %c0_i32_1 = arith.constant 0 : i32
    return %c0_i32, %c0_i32_0 : i32, i32
  }
  func.func @transform_6(%arg0: i32) -> (i32, i32) {
    %c0_i32 = arith.constant 0 : i32
    %c0_i32_0 = arith.constant 0 : i32
    %c0_i32_1 = arith.constant 0 : i32
    return %c0_i32, %c0_i32_0 : i32, i32
  }
  func.func @transform_7(%arg0: i32) -> (i32, i32) {
    %c0_i32 = arith.constant 0 : i32
    %c0_i32_0 = arith.constant 0 : i32
    %c0_i32_1 = arith.constant 0 : i32
    return %c0_i32, %c0_i32_0 : i32, i32
  }
  func.func @transform_8(%arg0: i32) -> (i32, i32) {
    %c0_i32 = arith.constant 0 : i32
    %c0_i32_0 = arith.constant 0 : i32
    %c0_i32_1 = arith.constant 0 : i32
    return %c0_i32, %c0_i32_0 : i32, i32
  }
  func.func @transform_9(%arg0: i32) -> (i32, i32) {
    %c0_i32 = arith.constant 0 : i32
    %c0_i32_0 = arith.constant 0 : i32
    %c0_i32_1 = arith.constant 0 : i32
    return %c0_i32, %c0_i32_0 : i32, i32
  }
  func.func @transform_10(%arg0: i32) -> (i32, i32) {
    %c0_i32 = arith.constant 0 : i32
    %c0_i32_0 = arith.constant 0 : i32
    %c0_i32_1 = arith.constant 0 : i32
    return %c0_i32, %c0_i32_0 : i32, i32
  }
  func.func @transform_11(%arg0: i32) -> (i32, i32) {
    %c0_i32 = arith.constant 0 : i32
    %c0_i32_0 = arith.constant 0 : i32
    return %arg0, %c0_i32 : i32, i32
  }
}

</mosaic_0001>

<llo_original>
// kernel: example_cnn_forward.1
$region0: #{example_cnn_forward.1}
  #allocation0 [shape = 'u32[]', space=smem, size = 0x4, offset = 0x4, fixed_abs, tag = 'smem constant byte address 0x4 - core index']
  #allocation1 [shape = 'u32[72,128]{1,0:T(1,128)}', space=vmem, size = 0x9000, scoped, tag = 'internal scratch']
  %s0 = inlined_call_operand.vmem [shape: bf16[1024,128], index: 0, kind: input, shape index: {}]
  %s1 = inlined_call_operand.vmem [shape: bf16[640,256], index: 1, kind: input, shape index: {}]
  %s2 = inlined_call_operand.vmem [shape: f32[1,256], index: 2, kind: input, shape index: {}]
  %s3 = inlined_call_operand.vmem [shape: bf16[1280,256], index: 3, kind: input, shape index: {}]
  %s4 = inlined_call_operand.vmem [shape: f32[1,256], index: 4, kind: input, shape index: {}]
  %s5 = inlined_call_operand.vmem [shape: bf16[1280,128], index: 5, kind: input, shape index: {}]
  %s6 = inlined_call_operand.vmem [shape: f32[1,128], index: 6, kind: input, shape index: {}]
  %s7 = inlined_call_operand.vmem [shape: bf16[128,128], index: 7, kind: input, shape index: {}]
  %s8 = inlined_call_operand.vmem [shape: f32[1,128], index: 8, kind: input, shape index: {}]
  %s9 = inlined_call_operand.vmem [shape: bf16[128,128], index: 9, kind: input, shape index: {}]
  %s10 = inlined_call_operand.vmem [shape: f32[1,128], index: 10, kind: input, shape index: {}]
  %s11 = inlined_call_operand.vmem [shape: f32[32,128], index: 11, kind: output, shape index: {}]
  %s12 = sld [smem:[#allocation0]]
  $region77: #{example_cnn_forward.1} parent=0
    _
  %s14 = ssub.s32 1, %s12
  %s15 = scalar_select 0, %s14, %s12
  loop: start=0, step=1, limit=4
  $region2: #{example_cnn_forward.1} parent=0 // loop_pre_header
    _
  $region3: #{example_cnn_forward.1} parent=0 // loop_header
    %s17 = sphi 0, %s21
    %p18 = scmp.ge.s32.totalorder %s17, 4
    %s27 = sphi 0, %s29
    %s30 = sphi 0, %s27
    %s31 = sphi 0, %s30
    %s47 = sphi 0, %s31
    %s51 = sphi 0, %s51
    %s53 = sphi 0, %s51
    %s54 = sphi 0, %s53
    %s68 = sphi 0, %s54
    %s72 = sphi 0, %s72
    %s74 = sphi 0, %s72
    %s75 = sphi 0, %s74
    %s89 = sphi 0, %s75
    %s93 = sphi 0, %s93
    %s95 = sphi 0, %s93
    %s96 = sphi 0, %s95
    %s110 = sphi 0, %s96
    %s114 = sphi 0, %s114
    %s116 = sphi 0, %s114
    %s117 = sphi 0, %s116
    %s131 = sphi 0, %s117
    %s135 = sphi 0, %s135
    %s137 = sphi 0, %s135
    %s138 = sphi 0, %s137
    %s152 = sphi 0, %s138
    %s156 = sphi 0, %s156
    %s158 = sphi 0, %s156
    %s159 = sphi 0, %s158
    %s173 = sphi 0, %s159
    %s177 = sphi 0, %s177
    %s179 = sphi 0, %s177
    %s180 = sphi 0, %s179
    %s194 = sphi 0, %s180
    %s198 = sphi 0, %s198
    %s200 = sphi 0, %s198
    %s201 = sphi 0, %s200
    %s215 = sphi 0, %s201
    %s219 = sphi 0, %s219
    %s221 = sphi 0, %s219
    %s222 = sphi 0, %s221
    %s236 = sphi 0, %s222
    %s240 = sphi 0, %s240
    %s242 = sphi 0, %s240
    %s243 = sphi 0, %s242
    %s257 = sphi 0, %s243
    %s263 = sphi 0, %s265
    %s266 = sphi 0, %s263
    %s267 = sphi 0, %s266
    %s283 = sphi 0, %s267
  $region4: #{example_cnn_forward.1} parent=0 // loop_header_branch
    %20 = sbr.rel (%p18) target = $region8
  $region5: #{example_cnn_forward.1} parent=0 // loop_body
    %s22 = ssub.s32 %s17, 1
    %s23 = ssub.s32 %s17, 2
    %s24 = sadd.s32 %s17, 1
    %s25 = ssub.s32 %s17, %s24
    %p26 = scmp.eq.s32.totalorder %s25, 0
    %s28 = sadd.s32 %s27, 1
    %s29 = scalar_select %p26, %s27, %s28
    %p32 = pneg %p26
    %p33 = scmp.eq.s32.totalorder %s17, 1
    %p34 = por %p32, %p33
    %p35 = scmp.ne.s32.totalorder %s27, %s30
    %p36 = scmp.eq.s32.totalorder %s17, 0
    %p37 = por %p35, %p36
    %p38 = scmp.ne.s32.totalorder %s27, %s30
    %p39 = scmp.eq.s32.totalorder %s22, 1
    %p40 = por %p38, %p39
    %p41 = scmp.ne.s32.totalorder %s30, %s31
    %p42 = scmp.eq.s32.totalorder %s22, 0
    %p43 = por %p41, %p42
    %p44 = scmp.ne.s32.totalorder %s30, %s31
    %p45 = scmp.eq.s32.totalorder %s23, 1
    %p46 = por %p44, %p45
    %p48 = scmp.ne.s32.totalorder %s31, %s47
    %p49 = scmp.eq.s32.totalorder %s23, 0
    %p50 = por %p48, %p49
    %s52 = sadd.s32 %s51, 1
    %p55 = scmp.eq.s32.totalorder %s17, 1
    %p56 = scmp.ne.s32.totalorder %s51, %s53
    %p57 = scmp.eq.s32.totalorder %s17, 0
    %p58 = por %p56, %p57
    %p59 = scmp.ne.s32.totalorder %s51, %s53
    %p60 = scmp.eq.s32.totalorder %s22, 1
    %p61 = por %p59, %p60
    %p62 = scmp.ne.s32.totalorder %s53, %s54
    %p63 = scmp.eq.s32.totalorder %s22, 0
    %p64 = por %p62, %p63
    %p65 = scmp.ne.s32.totalorder %s53, %s54
    %p66 = scmp.eq.s32.totalorder %s23, 1
    %p67 = por %p65, %p66
    %p69 = scmp.ne.s32.totalorder %s54, %s68
    %p70 = scmp.eq.s32.totalorder %s23, 0
    %p71 = por %p69, %p70
    %s73 = sadd.s32 %s72, 1
    %p76 = scmp.eq.s32.totalorder %s17, 1
    %p77 = scmp.ne.s32.totalorder %s72, %s74
    %p78 = scmp.eq.s32.totalorder %s17, 0
    %p79 = por %p77, %p78
    %p80 = scmp.ne.s32.totalorder %s72, %s74
    %p81 = scmp.eq.s32.totalorder %s22, 1
    %p82 = por %p80, %p81
    %p83 = scmp.ne.s32.totalorder %s74, %s75
    %p84 = scmp.eq.s32.totalorder %s22, 0
    %p85 = por %p83, %p84
    %p86 = scmp.ne.s32.totalorder %s74, %s75
    %p87 = scmp.eq.s32.totalorder %s23, 1
    %p88 = por %p86, %p87
    %p90 = scmp.ne.s32.totalorder %s75, %s89
    %p91 = scmp.eq.s32.totalorder %s23, 0
    %p92 = por %p90, %p91
    %s94 = sadd.s32 %s93, 1
    %p97 = scmp.eq.s32.totalorder %s17, 1
    %p98 = scmp.ne.s32.totalorder %s93, %s95
    %p99 = scmp.eq.s32.totalorder %s17, 0
    %p100 = por %p98, %p99
    %p101 = scmp.ne.s32.totalorder %s93, %s95
    %p102 = scmp.eq.s32.totalorder %s22, 1
    %p103 = por %p101, %p102
    %p104 = scmp.ne.s32.totalorder %s95, %s96
    %p105 = scmp.eq.s32.totalorder %s22, 0
    %p106 = por %p104, %p105
    %p107 = scmp.ne.s32.totalorder %s95, %s96
    %p108 = scmp.eq.s32.totalorder %s23, 1
    %p109 = por %p107, %p108
    %p111 = scmp.ne.s32.totalorder %s96, %s110
    %p112 = scmp.eq.s32.totalorder %s23, 0
    %p113 = por %p111, %p112
    %s115 = sadd.s32 %s114, 1
    %p118 = scmp.eq.s32.totalorder %s17, 1
    %p119 = scmp.ne.s32.totalorder %s114, %s116
    %p120 = scmp.eq.s32.totalorder %s17, 0
    %p121 = por %p119, %p120
    %p122 = scmp.ne.s32.totalorder %s114, %s116
    %p123 = scmp.eq.s32.totalorder %s22, 1
    %p124 = por %p122, %p123
    %p125 = scmp.ne.s32.totalorder %s116, %s117
    %p126 = scmp.eq.s32.totalorder %s22, 0
    %p127 = por %p125, %p126
    %p128 = scmp.ne.s32.totalorder %s116, %s117
    %p129 = scmp.eq.s32.totalorder %s23, 1
    %p130 = por %p128, %p129
    %p132 = scmp.ne.s32.totalorder %s117, %s131
    %p133 = scmp.eq.s32.totalorder %s23, 0
    %p134 = por %p132, %p133
    %s136 = sadd.s32 %s135, 1
    %p139 = scmp.eq.s32.totalorder %s17, 1
    %p140 = scmp.ne.s32.totalorder %s135, %s137
    %p141 = scmp.eq.s32.totalorder %s17, 0
    %p142 = por %p140, %p141
    %p143 = scmp.ne.s32.totalorder %s135, %s137
    %p144 = scmp.eq.s32.totalorder %s22, 1
    %p145 = por %p143, %p144
    %p146 = scmp.ne.s32.totalorder %s137, %s138
    %p147 = scmp.eq.s32.totalorder %s22, 0
    %p148 = por %p146, %p147
    %p149 = scmp.ne.s32.totalorder %s137, %s138
    %p150 = scmp.eq.s32.totalorder %s23, 1
    %p151 = por %p149, %p150
    %p153 = scmp.ne.s32.totalorder %s138, %s152
    %p154 = scmp.eq.s32.totalorder %s23, 0
    %p155 = por %p153, %p154
    %s157 = sadd.s32 %s156, 1
    %p160 = scmp.eq.s32.totalorder %s17, 1
    %p161 = scmp.ne.s32.totalorder %s156, %s158
    %p162 = scmp.eq.s32.totalorder %s17, 0
    %p163 = por %p161, %p162
    %p164 = scmp.ne.s32.totalorder %s156, %s158
    %p165 = scmp.eq.s32.totalorder %s22, 1
    %p166 = por %p164, %p165
    %p167 = scmp.ne.s32.totalorder %s158, %s159
    %p168 = scmp.eq.s32.totalorder %s22, 0
    %p169 = por %p167, %p168
    %p170 = scmp.ne.s32.totalorder %s158, %s159
    %p171 = scmp.eq.s32.totalorder %s23, 1
    %p172 = por %p170, %p171
    %p174 = scmp.ne.s32.totalorder %s159, %s173
    %p175 = scmp.eq.s32.totalorder %s23, 0
    %p176 = por %p174, %p175
    %s178 = sadd.s32 %s177, 1
    %p181 = scmp.eq.s32.totalorder %s17, 1
    %p182 = scmp.ne.s32.totalorder %s177, %s179
    %p183 = scmp.eq.s32.totalorder %s17, 0
    %p184 = por %p182, %p183
    %p185 = scmp.ne.s32.totalorder %s177, %s179
    %p186 = scmp.eq.s32.totalorder %s22, 1
    %p187 = por %p185, %p186
    %p188 = scmp.ne.s32.totalorder %s179, %s180
    %p189 = scmp.eq.s32.totalorder %s22, 0
    %p190 = por %p188, %p189
    %p191 = scmp.ne.s32.totalorder %s179, %s180
    %p192 = scmp.eq.s32.totalorder %s23, 1
    %p193 = por %p191, %p192
    %p195 = scmp.ne.s32.totalorder %s180, %s194
    %p196 = scmp.eq.s32.totalorder %s23, 0
    %p197 = por %p195, %p196
    %s199 = sadd.s32 %s198, 1
    %p202 = scmp.eq.s32.totalorder %s17, 1
    %p203 = scmp.ne.s32.totalorder %s198, %s200
    %p204 = scmp.eq.s32.totalorder %s17, 0
    %p205 = por %p203, %p204
    %p206 = scmp.ne.s32.totalorder %s198, %s200
    %p207 = scmp.eq.s32.totalorder %s22, 1
    %p208 = por %p206, %p207
    %p209 = scmp.ne.s32.totalorder %s200, %s201
    %p210 = scmp.eq.s32.totalorder %s22, 0
    %p211 = por %p209, %p210
    %p212 = scmp.ne.s32.totalorder %s200, %s201
    %p213 = scmp.eq.s32.totalorder %s23, 1
    %p214 = por %p212, %p213
    %p216 = scmp.ne.s32.totalorder %s201, %s215
    %p217 = scmp.eq.s32.totalorder %s23, 0
    %p218 = por %p216, %p217
    %s220 = sadd.s32 %s219, 1
    %p223 = scmp.eq.s32.totalorder %s17, 1
    %p224 = scmp.ne.s32.totalorder %s219, %s221
    %p225 = scmp.eq.s32.totalorder %s17, 0
    %p226 = por %p224, %p225
    %p227 = scmp.ne.s32.totalorder %s219, %s221
    %p228 = scmp.eq.s32.totalorder %s22, 1
    %p229 = por %p227, %p228
    %p230 = scmp.ne.s32.totalorder %s221, %s222
    %p231 = scmp.eq.s32.totalorder %s22, 0
    %p232 = por %p230, %p231
    %p233 = scmp.ne.s32.totalorder %s221, %s222
    %p234 = scmp.eq.s32.totalorder %s23, 1
    %p235 = por %p233, %p234
    %p237 = scmp.ne.s32.totalorder %s222, %s236
    %p238 = scmp.eq.s32.totalorder %s23, 0
    %p239 = por %p237, %p238
    %s241 = sadd.s32 %s240, 1
    %p244 = scmp.eq.s32.totalorder %s17, 1
    %p245 = scmp.ne.s32.totalorder %s240, %s242
    %p246 = scmp.eq.s32.totalorder %s17, 0
    %p247 = por %p245, %p246
    %p248 = scmp.ne.s32.totalorder %s240, %s242
    %p249 = scmp.eq.s32.totalorder %s22, 1
    %p250 = por %p248, %p249
    %p251 = scmp.ne.s32.totalorder %s242, %s243
    %p252 = scmp.eq.s32.totalorder %s22, 0
    %p253 = por %p251, %p252
    %p254 = scmp.ne.s32.totalorder %s242, %s243
    %p255 = scmp.eq.s32.totalorder %s23, 1
    %p256 = por %p254, %p255
    %p258 = scmp.ne.s32.totalorder %s243, %s257
    %p259 = scmp.eq.s32.totalorder %s23, 0
    %p260 = por %p258, %p259
    %s261 = ssub.s32 %s17, %s24
    %p262 = scmp.eq.s32.totalorder %s261, 0
    %s264 = sadd.s32 %s263, 1
    %s265 = scalar_select %p262, %s263, %s264
    %p268 = pneg %p262
    %p269 = scmp.eq.s32.totalorder %s17, 1
    %p270 = por %p268, %p269
    %p271 = scmp.ne.s32.totalorder %s263, %s266
    %p272 = scmp.eq.s32.totalorder %s17, 0
    %p273 = por %p271, %p272
    %p274 = scmp.ne.s32.totalorder %s263, %s266
    %p275 = scmp.eq.s32.totalorder %s22, 1
    %p276 = por %p274, %p275
    %p277 = scmp.ne.s32.totalorder %s266, %s267
    %p278 = scmp.eq.s32.totalorder %s22, 0
    %p279 = por %p277, %p278
    %p280 = scmp.ne.s32.totalorder %s266, %s267
    %p281 = scmp.eq.s32.totalorder %s23, 1
    %p282 = por %p280, %p281
    %p284 = scmp.ne.s32.totalorder %s267, %s283
    %p285 = scmp.eq.s32.totalorder %s23, 0
    %p286 = por %p284, %p285
    %p287 = scmp.le.s32.totalorder 1, %s17
    %p288 = scmp.lt.s32.totalorder %s17, 3
    %p289 = pnand %p287, %p288
    %p290 = pneg %p289
    // Predicated region
    $region9: #{example_cnn_forward.1} parent=5 // pred_check
      _
    $region10: #{example_cnn_forward.1} parent=5 // pred_check_branch
      %292 = sbr.rel (%p289) target = $region12
    $region11: #{example_cnn_forward.1} parent=5 // pred_region
      %s293 = ssub.s32 %s17, 1
      // Predicated region
      $region13: #{example_cnn_forward.1} parent=11 // pred_check
        %p294 = pneg %p64
      $region14: #{example_cnn_forward.1} parent=11 // pred_check_branch
        %296 = sbr.rel (%p294) target = $region16
      $region15: #{example_cnn_forward.1} parent=11 // pred_region
        _
      $region16: #{example_cnn_forward.1} parent=11 // pred_fallthru
        _
      // Predicated region
      $region17: #{example_cnn_forward.1} parent=11 // pred_check
        %p297 = pneg %p85
      $region18: #{example_cnn_forward.1} parent=11 // pred_check_branch
        %299 = sbr.rel (%p297) target = $region20
      $region19: #{example_cnn_forward.1} parent=11 // pred_region
        _
      $region20: #{example_cnn_forward.1} parent=11 // pred_fallthru
        _
      // Predicated region
      $region21: #{example_cnn_forward.1} parent=11 // pred_check
        %p300 = pneg %p106
      $region22: #{example_cnn_forward.1} parent=11 // pred_check_branch
        %302 = sbr.rel (%p300) target = $region24
      $region23: #{example_cnn_forward.1} parent=11 // pred_region
        _
      $region24: #{example_cnn_forward.1} parent=11 // pred_fallthru
        _
      // Predicated region
      $region25: #{example_cnn_forward.1} parent=11 // pred_check
        %p303 = pneg %p127
      $region26: #{example_cnn_forward.1} parent=11 // pred_check_branch
        %305 = sbr.rel (%p303) target = $region28
      $region27: #{example_cnn_forward.1} parent=11 // pred_region
        _
      $region28: #{example_cnn_forward.1} parent=11 // pred_fallthru
        _
      // Predicated region
      $region29: #{example_cnn_forward.1} parent=11 // pred_check
        %p306 = pneg %p148
      $region30: #{example_cnn_forward.1} parent=11 // pred_check_branch
        %308 = sbr.rel (%p306) target = $region32
      $region31: #{example_cnn_forward.1} parent=11 // pred_region
        _
      $region32: #{example_cnn_forward.1} parent=11 // pred_fallthru
        _
      // Predicated region
      $region33: #{example_cnn_forward.1} parent=11 // pred_check
        %p309 = pneg %p169
      $region34: #{example_cnn_forward.1} parent=11 // pred_check_branch
        %311 = sbr.rel (%p309) target = $region36
      $region35: #{example_cnn_forward.1} parent=11 // pred_region
        _
      $region36: #{example_cnn_forward.1} parent=11 // pred_fallthru
        _
      // Predicated region
      $region37: #{example_cnn_forward.1} parent=11 // pred_check
        %p312 = pneg %p190
      $region38: #{example_cnn_forward.1} parent=11 // pred_check_branch
        %314 = sbr.rel (%p312) target = $region40
      $region39: #{example_cnn_forward.1} parent=11 // pred_region
        _
      $region40: #{example_cnn_forward.1} parent=11 // pred_fallthru
        _
      // Predicated region
      $region41: #{example_cnn_forward.1} parent=11 // pred_check
        %p315 = pneg %p211
      $region42: #{example_cnn_forward.1} parent=11 // pred_check_branch
        %317 = sbr.rel (%p315) target = $region44
      $region43: #{example_cnn_forward.1} parent=11 // pred_region
        _
      $region44: #{example_cnn_forward.1} parent=11 // pred_fallthru
        _
      // Predicated region
      $region45: #{example_cnn_forward.1} parent=11 // pred_check
        %p318 = pneg %p232
      $region46: #{example_cnn_forward.1} parent=11 // pred_check_branch
        %320 = sbr.rel (%p318) target = $region48
      $region47: #{example_cnn_forward.1} parent=11 // pred_region
        _
      $region48: #{example_cnn_forward.1} parent=11 // pred_fallthru
        _
      // Predicated region
      $region49: #{example_cnn_forward.1} parent=11 // pred_check
        %p321 = pneg %p253
      $region50: #{example_cnn_forward.1} parent=11 // pred_check_branch
        %323 = sbr.rel (%p321) target = $region52
      $region51: #{example_cnn_forward.1} parent=11 // pred_region
        _
      $region52: #{example_cnn_forward.1} parent=11 // pred_fallthru
        _
    $region12: #{example_cnn_forward.1} parent=5 // pred_fallthru
      _
    %p324 = scmp.lt.s32.totalorder %s17, 2
    // Predicated region
    $region53: #{example_cnn_forward.1} parent=5 // pred_check
      %p325 = pneg %p324
    $region54: #{example_cnn_forward.1} parent=5 // pred_check_branch
      %327 = sbr.rel (%p325) target = $region56
    $region55: #{example_cnn_forward.1} parent=5 // pred_region
      // Predicated region
      $region57: #{example_cnn_forward.1} parent=55 // pred_check
        %p328 = pneg %p37
      $region58: #{example_cnn_forward.1} parent=55 // pred_check_branch
        %330 = sbr.rel (%p328) target = $region60
      $region59: #{example_cnn_forward.1} parent=55 // pred_region
        %s331 = smul.u32 64, %s17
        %p332 = scmp.lt.s32.totalorder %s331, 127
        %s333 = scalar_select %p332, %s331, 127
        %s334 = smul.addr %s333, 4
        %s335 = scalar_lea.vmem %s0, %s334
        %s336 = smul.u32 64, %s17
      $region60: #{example_cnn_forward.1} parent=55 // pred_fallthru
        _
    $region56: #{example_cnn_forward.1} parent=5 // pred_fallthru
      _
    %p337 = scmp.le.s32.totalorder 1, %s17
    %p338 = scmp.lt.s32.totalorder %s17, 3
    %p339 = pnand %p337, %p338
    %p340 = pneg %p339
    // Predicated region
    $region61: #{example_cnn_forward.1} parent=5 // pred_check
      _
    $region62: #{example_cnn_forward.1} parent=5 // pred_check_branch
      %342 = sbr.rel (%p339) target = $region64
    $region63: #{example_cnn_forward.1} parent=5 // pred_region
      %s343 = ssub.s32 %s17, 1
      %s344 = smul.u32 64, %s22
      %p345 = scmp.lt.s32.totalorder %s344, 127
      %s346 = scalar_select %p345, %s344, 127
      %s347 = smul.addr %s346, 4
      %s348 = scalar_lea.vmem %s0, %s347
      %p349 = pneg %p43
      %p350 = pneg %p40
      %p351 = pneg %p64
      %p352 = pneg %p61
      %p353 = pneg %p85
      %p354 = pneg %p82
      %p355 = pneg %p106
      %p356 = pneg %p103
      %p357 = pneg %p127
      %p358 = pneg %p124
      %p359 = pneg %p148
      %p360 = pneg %p145
      %p361 = pneg %p169
      %p362 = pneg %p166
      %p363 = pneg %p190
      %p364 = pneg %p187
      %p365 = pneg %p211
      %p366 = pneg %p208
      %p367 = pneg %p232
      %p368 = pneg %p229
      %p369 = pneg %p253
      %p370 = pneg %p250
      %p371 = pneg %p279
      %p372 = pneg %p276
      %s373 = smul.u32 2, %s22
      %p374 = scmp.lt.s32.totalorder %s373, 3
      %s375 = scalar_select %p374, %s373, 3
      %s376 = smul.addr %s375, 8
      %s377 = scalar_lea.vmem %s11, %s376
      %s378 = smul.u32 64, %s22
      %p379 = scmp.lt.s32.totalorder %s378, 127
      %s380 = scalar_select %p379, %s378, 127
      %s381 = smul.addr %s380, 4
      %s382 = scalar_lea.vmem %s0, %s381
      %s383 = smul.u32 64, %s22
      %s384 = smul.u32 2, %s22
      %p385 = scmp.lt.s32.totalorder %s384, 3
      %s386 = scalar_select %p385, %s384, 3
      %s387 = smul.addr %s386, 8
      %s388 = scalar_lea.vmem %s11, %s387
      %s389 = smul.u32 2, %s22
      %v390 = vld [vmem:[%s382] sm:$0xf]
      %v391 = vld [vmem:[%s382 + $0x4] sm:$0xf]
      %v392 = vld [vmem:[%s382 + $0x8] sm:$0xf]
      %v393 = vld [vmem:[%s382 + $0xc] sm:$0xf]
      %v394 = vld [vmem:[%s382 + $0x10] sm:$0xf]
      %v395 = vld [vmem:[%s382 + $0x14] sm:$0xf]
      %v396 = vld [vmem:[%s382 + $0x18] sm:$0xf]
      %v397 = vld [vmem:[%s382 + $0x1c] sm:$0xf]
      %v398 = vld [vmem:[%s382 + $0x20] sm:$0xf]
      %v399 = vld [vmem:[%s382 + $0x24] sm:$0xf]
      %v400 = vld [vmem:[%s382 + $0x28] sm:$0xf]
      %v401 = vld [vmem:[%s382 + $0x2c] sm:$0xf]
      %v402 = vld [vmem:[%s382 + $0x30] sm:$0xf]
      %v403 = vld [vmem:[%s382 + $0x34] sm:$0xf]
      %v404 = vld [vmem:[%s382 + $0x38] sm:$0xf]
      %v405 = vld [vmem:[%s382 + $0x3c] sm:$0xf]
      %v406 = vld [vmem:[%s382 + $0x40] sm:$0xf]
      %v407 = vld [vmem:[%s382 + $0x44] sm:$0xf]
      %v408 = vld [vmem:[%s382 + $0x48] sm:$0xf]
      %v409 = vld [vmem:[%s382 + $0x4c] sm:$0xf]
      %v410 = vld [vmem:[%s382 + $0x50] sm:$0xf]
      %v411 = vld [vmem:[%s382 + $0x54] sm:$0xf]
      %v412 = vld [vmem:[%s382 + $0x58] sm:$0xf]
      %v413 = vld [vmem:[%s382 + $0x5c] sm:$0xf]
      %v414 = vld [vmem:[%s382 + $0x60] sm:$0xf]
      %v415 = vld [vmem:[%s382 + $0x64] sm:$0xf]
      %v416 = vld [vmem:[%s382 + $0x68] sm:$0xf]
      %v417 = vld [vmem:[%s382 + $0x6c] sm:$0xf]
      %v418 = vld [vmem:[%s382 + $0x70] sm:$0xf]
      %v419 = vld [vmem:[%s382 + $0x74] sm:$0xf]
      %v420 = vld [vmem:[%s382 + $0x78] sm:$0xf]
      %v421 = vld [vmem:[%s382 + $0x7c] sm:$0xf]
      %v422 = vld [vmem:[%s382 + $0x80] sm:$0xf]
      %v423 = vld [vmem:[%s382 + $0x84] sm:$0xf]
      %v424 = vld [vmem:[%s382 + $0x88] sm:$0xf]
      %v425 = vld [vmem:[%s382 + $0x8c] sm:$0xf]
      %v426 = vld [vmem:[%s382 + $0x90] sm:$0xf]
      %v427 = vld [vmem:[%s382 + $0x94] sm:$0xf]
      %v428 = vld [vmem:[%s382 + $0x98] sm:$0xf]
      %v429 = vld [vmem:[%s382 + $0x9c] sm:$0xf]
      %v430 = vld [vmem:[%s382 + $0xa0] sm:$0xf]
      %v431 = vld [vmem:[%s382 + $0xa4] sm:$0xf]
      %v432 = vld [vmem:[%s382 + $0xa8] sm:$0xf]
      %v433 = vld [vmem:[%s382 + $0xac] sm:$0xf]
      %v434 = vld [vmem:[%s382 + $0xb0] sm:$0xf]
      %v435 = vld [vmem:[%s382 + $0xb4] sm:$0xf]
      %v436 = vld [vmem:[%s382 + $0xb8] sm:$0xf]
      %v437 = vld [vmem:[%s382 + $0xbc] sm:$0xf]
      %v438 = vld [vmem:[%s382 + $0xc0] sm:$0xf]
      %v439 = vld [vmem:[%s382 + $0xc4] sm:$0xf]
      %v440 = vld [vmem:[%s382 + $0xc8] sm:$0xf]
      %v441 = vld [vmem:[%s382 + $0xcc] sm:$0xf]
      %v442 = vld [vmem:[%s382 + $0xd0] sm:$0xf]
      %v443 = vld [vmem:[%s382 + $0xd4] sm:$0xf]
      %v444 = vld [vmem:[%s382 + $0xd8] sm:$0xf]
      %v445 = vld [vmem:[%s382 + $0xdc] sm:$0xf]
      %v446 = vld [vmem:[%s382 + $0xe0] sm:$0xf]
      %v447 = vld [vmem:[%s382 + $0xe4] sm:$0xf]
      %v448 = vld [vmem:[%s382 + $0xe8] sm:$0xf]
      %v449 = vld [vmem:[%s382 + $0xec] sm:$0xf]
      %v450 = vld [vmem:[%s382 + $0xf0] sm:$0xf]
      %v451 = vld [vmem:[%s382 + $0xf4] sm:$0xf]
      %v452 = vld [vmem:[%s382 + $0xf8] sm:$0xf]
      %v453 = vld [vmem:[%s382 + $0xfc] sm:$0xf]
      %v510 = vunpack.c.l.b16 %v390
      %v511 = vunpack.c.l.b16 %v391
      %v512 = vunpack.c.l.b16 %v392
      %v513 = vunpack.c.l.b16 %v393
      %v514 = vunpack.c.l.b16 %v394
      %v515 = vunpack.c.l.b16 %v395
      %v516 = vunpack.c.l.b16 %v396
      %v517 = vunpack.c.l.b16 %v397
      %v518 = vunpack.c.l.b16 %v398
      %v519 = vunpack.c.l.b16 %v399
      %v520 = vunpack.c.l.b16 %v400
      %v521 = vunpack.c.l.b16 %v401
      %v522 = vunpack.c.l.b16 %v402
      %v523 = vunpack.c.l.b16 %v403
      %v524 = vunpack.c.l.b16 %v404
      %v525 = vunpack.c.l.b16 %v405
      %v526 = vunpack.c.l.b16 %v406
      %v527 = vunpack.c.l.b16 %v407
      %v528 = vunpack.c.l.b16 %v408
      %v529 = vunpack.c.l.b16 %v409
      %v530 = vunpack.c.l.b16 %v410
      %v531 = vunpack.c.l.b16 %v411
      %v532 = vunpack.c.l.b16 %v412
      %v533 = vunpack.c.l.b16 %v413
      %v534 = vunpack.c.l.b16 %v414
      %v535 = vunpack.c.l.b16 %v415
      %v536 = vunpack.c.l.b16 %v416
      %v537 = vunpack.c.l.b16 %v417
      %v538 = vunpack.c.l.b16 %v418
      %v539 = vunpack.c.l.b16 %v419
      %v540 = vunpack.c.l.b16 %v420
      %v541 = vunpack.c.l.b16 %v421
      %v542 = vunpack.c.l.b16 %v422
      %v543 = vunpack.c.l.b16 %v423
      %v544 = vunpack.c.l.b16 %v424
      %v545 = vunpack.c.l.b16 %v425
      %v546 = vunpack.c.l.b16 %v426
      %v547 = vunpack.c.l.b16 %v427
      %v548 = vunpack.c.l.b16 %v428
      %v549 = vunpack.c.l.b16 %v429
      %v550 = vunpack.c.l.b16 %v430
      %v551 = vunpack.c.l.b16 %v431
      %v552 = vunpack.c.l.b16 %v432
      %v553 = vunpack.c.l.b16 %v433
      %v554 = vunpack.c.l.b16 %v434
      %v555 = vunpack.c.l.b16 %v435
      %v556 = vunpack.c.l.b16 %v436
      %v557 = vunpack.c.l.b16 %v437
      %v558 = vunpack.c.l.b16 %v438
      %v559 = vunpack.c.l.b16 %v439
      %v560 = vunpack.c.l.b16 %v440
      %v561 = vunpack.c.l.b16 %v441
      %v562 = vunpack.c.l.b16 %v442
      %v563 = vunpack.c.l.b16 %v443
      %v564 = vunpack.c.l.b16 %v444
      %v565 = vunpack.c.l.b16 %v445
      %v566 = vpack.c.b16 %v511, %v510
      %v567 = vpack.c.b16 %v513, %v512
      %v568 = vpack.c.b16 %v515, %v514
      %v569 = vpack.c.b16 %v517, %v516
      %v570 = vpack.c.b16 %v519, %v518
      %v571 = vpack.c.b16 %v521, %v520
      %v572 = vpack.c.b16 %v523, %v522
      %v573 = vpack.c.b16 %v525, %v524
      %v574 = vpack.c.b16 %v527, %v526
      %v575 = vpack.c.b16 %v529, %v528
      %v576 = vpack.c.b16 %v531, %v530
      %v577 = vpack.c.b16 %v533, %v532
      %v578 = vpack.c.b16 %v535, %v534
      %v579 = vpack.c.b16 %v537, %v536
      %v580 = vpack.c.b16 %v539, %v538
      %v581 = vpack.c.b16 %v541, %v540
      %v582 = vpack.c.b16 %v543, %v542
      %v583 = vpack.c.b16 %v545, %v544
      %v584 = vpack.c.b16 %v547, %v546
      %v585 = vpack.c.b16 %v549, %v548
      %v586 = vpack.c.b16 %v551, %v550
      %v587 = vpack.c.b16 %v553, %v552
      %v588 = vpack.c.b16 %v555, %v554
      %v589 = vpack.c.b16 %v557, %v556
      %v590 = vpack.c.b16 %v559, %v558
      %v591 = vpack.c.b16 %v561, %v560
      %v592 = vpack.c.b16 %v563, %v562
      %v593 = vpack.c.b16 %v565, %v564
      %v624 = vunpack.c.l.b16 %v446
      %v625 = vunpack.c.l.b16 %v447
      %v626 = vpack.c.b16 %v625, %v624
      %v630 = vunpack.c.l.b16 %v448
      %v631 = vunpack.c.l.b16 %v449
      %v632 = vpack.c.b16 %v631, %v630
      %v636 = vunpack.c.l.b16 %v450
      %v637 = vunpack.c.l.b16 %v451
      %v638 = vpack.c.b16 %v637, %v636
      %v642 = vunpack.c.l.b16 %v452
      %v643 = vunpack.c.l.b16 %v453
      %v644 = vpack.c.b16 %v643, %v642
      %v646 = vld [vmem:[%s1] sm:$0xff]
      %v647 = vld [vmem:[%s1 + $0x8] sm:$0xff]
      %v648 = vld [vmem:[%s1 + $0x10] sm:$0xff]
      %v649 = vld [vmem:[%s1 + $0x18] sm:$0xff]
      %v650 = vld [vmem:[%s1 + $0x20] sm:$0xff]
      %v651 = vld [vmem:[%s1 + $0x28] sm:$0xff]
      %v652 = vld [vmem:[%s1 + $0x30] sm:$0xff]
      %v653 = vld [vmem:[%s1 + $0x38] sm:$0xff]
      %v654 = vld [vmem:[%s1 + $0x40] sm:$0xff]
      %v655 = vld [vmem:[%s1 + $0x48] sm:$0xff]
      %v656 = vld [vmem:[%s1 + $0x50] sm:$0xff]
      %v657 = vld [vmem:[%s1 + $0x58] sm:$0xff]
      %v658 = vld [vmem:[%s1 + $0x60] sm:$0xff]
      %v659 = vld [vmem:[%s1 + $0x68] sm:$0xff]
      %v660 = vld [vmem:[%s1 + $0x70] sm:$0xff]
      %v661 = vld [vmem:[%s1 + $0x78] sm:$0xff]
      %v662 = vld [vmem:[%s1 + $0x80] sm:$0xff]
      %v663 = vld [vmem:[%s1 + $0x88] sm:$0xff]
      %v664 = vld [vmem:[%s1 + $0x90] sm:$0xff]
      %v665 = vld [vmem:[%s1 + $0x98] sm:$0xff]
      %v666 = vld [vmem:[%s1 + $0xa0] sm:$0xff]
      %v667 = vld [vmem:[%s1 + $0xa8] sm:$0xff]
      %v668 = vld [vmem:[%s1 + $0xb0] sm:$0xff]
      %v669 = vld [vmem:[%s1 + $0xb8] sm:$0xff]
      %v670 = vld [vmem:[%s1 + $0xc0] sm:$0xff]
      %v671 = vld [vmem:[%s1 + $0xc8] sm:$0xff]
      %v672 = vld [vmem:[%s1 + $0xd0] sm:$0xff]
      %v673 = vld [vmem:[%s1 + $0xd8] sm:$0xff]
      %v674 = vld [vmem:[%s1 + $0xe0] sm:$0xff]
      %v675 = vld [vmem:[%s1 + $0xe8] sm:$0xff]
      %v676 = vld [vmem:[%s1 + $0xf0] sm:$0xff]
      %v677 = vld [vmem:[%s1 + $0xf8] sm:$0xff]
      %v678 = vld [vmem:[%s1 + $0x100] sm:$0xff]
      %v679 = vld [vmem:[%s1 + $0x108] sm:$0xff]
      %v680 = vld [vmem:[%s1 + $0x110] sm:$0xff]
      %v681 = vld [vmem:[%s1 + $0x118] sm:$0xff]
      %v682 = vld [vmem:[%s1 + $0x120] sm:$0xff]
      %v683 = vld [vmem:[%s1 + $0x128] sm:$0xff]
      %v684 = vld [vmem:[%s1 + $0x130] sm:$0xff]
      %v685 = vld [vmem:[%s1 + $0x138] sm:$0xff]
      %v686 = vld [vmem:[%s1 + $0x140] sm:$0xff]
      %v687 = vld [vmem:[%s1 + $0x148] sm:$0xff]
      %v688 = vld [vmem:[%s1 + $0x150] sm:$0xff]
      %v689 = vld [vmem:[%s1 + $0x158] sm:$0xff]
      %v690 = vld [vmem:[%s1 + $0x160] sm:$0xff]
      %v691 = vld [vmem:[%s1 + $0x168] sm:$0xff]
      %v692 = vld [vmem:[%s1 + $0x170] sm:$0xff]
      %v693 = vld [vmem:[%s1 + $0x178] sm:$0xff]
      %v694 = vld [vmem:[%s1 + $0x180] sm:$0xff]
      %v695 = vld [vmem:[%s1 + $0x188] sm:$0xff]
      %v696 = vld [vmem:[%s1 + $0x190] sm:$0xff]
      %v697 = vld [vmem:[%s1 + $0x198] sm:$0xff]
      %v698 = vld [vmem:[%s1 + $0x1a0] sm:$0xff]
      %v699 = vld [vmem:[%s1 + $0x1a8] sm:$0xff]
      %v700 = vld [vmem:[%s1 + $0x1b0] sm:$0xff]
      %v701 = vld [vmem:[%s1 + $0x1b8] sm:$0xff]
      %v702 = vld [vmem:[%s1 + $0x1c0] sm:$0xff]
      %v703 = vld [vmem:[%s1 + $0x1c8] sm:$0xff]
      %v704 = vld [vmem:[%s1 + $0x1d0] sm:$0xff]
      %v705 = vld [vmem:[%s1 + $0x1d8] sm:$0xff]
      %v706 = vld [vmem:[%s1 + $0x1e0] sm:$0xff]
      %v707 = vld [vmem:[%s1 + $0x1e8] sm:$0xff]
      %v708 = vld [vmem:[%s1 + $0x1f0] sm:$0xff]
      %v709 = vld [vmem:[%s1 + $0x1f8] sm:$0xff]
      %v710 = vld [vmem:[%s1 + $0x200] sm:$0xff]
      %v711 = vld [vmem:[%s1 + $0x208] sm:$0xff]
      %v712 = vld [vmem:[%s1 + $0x210] sm:$0xff]
      %v713 = vld [vmem:[%s1 + $0x218] sm:$0xff]
      %v714 = vld [vmem:[%s1 + $0x220] sm:$0xff]
      %v715 = vld [vmem:[%s1 + $0x228] sm:$0xff]
      %v716 = vld [vmem:[%s1 + $0x230] sm:$0xff]
      %v717 = vld [vmem:[%s1 + $0x238] sm:$0xff]
      %v718 = vld [vmem:[%s1 + $0x240] sm:$0xff]
      %v719 = vld [vmem:[%s1 + $0x248] sm:$0xff]
      %v720 = vld [vmem:[%s1 + $0x250] sm:$0xff]
      %v721 = vld [vmem:[%s1 + $0x258] sm:$0xff]
      %v722 = vld [vmem:[%s1 + $0x260] sm:$0xff]
      %v723 = vld [vmem:[%s1 + $0x268] sm:$0xff]
      %v724 = vld [vmem:[%s1 + $0x270] sm:$0xff]
      %v725 = vld [vmem:[%s1 + $0x278] sm:$0xff]
      %v726 = vld [vmem:[%s2] sm:$0x3]
      %v728 = vperm.slane %v726, 0
      %v729 = vperm.slane %v726, 1
      %v812 = vunpack.c.l.b16 %v646
      %v813 = vunpack.c.h.b16 %v646
      %v814 = vunpack.c.l.b16 %v647
      %v815 = vunpack.c.h.b16 %v647
      %v816 = vunpack.c.l.b16 %v648
      %v817 = vunpack.c.h.b16 %v648
      %v818 = vunpack.c.l.b16 %v649
      %v819 = vunpack.c.h.b16 %v649
      %v820 = vunpack.c.l.b16 %v650
      %v821 = vunpack.c.h.b16 %v650
      %v822 = vunpack.c.l.b16 %v651
      %v823 = vunpack.c.h.b16 %v651
      %v824 = vunpack.c.l.b16 %v652
      %v825 = vunpack.c.h.b16 %v652
      %v826 = vunpack.c.l.b16 %v653
      %v827 = vunpack.c.h.b16 %v653
      %v828 = vunpack.c.l.b16 %v654
      %v829 = vunpack.c.h.b16 %v654
      %v830 = vunpack.c.l.b16 %v655
      %v831 = vunpack.c.h.b16 %v655
      %v832 = vunpack.c.l.b16 %v656
      %v833 = vunpack.c.h.b16 %v656
      %v834 = vunpack.c.l.b16 %v657
      %v835 = vunpack.c.h.b16 %v657
      %v836 = vunpack.c.l.b16 %v658
      %v837 = vunpack.c.h.b16 %v658
      %v838 = vunpack.c.l.b16 %v659
      %v839 = vunpack.c.h.b16 %v659
      %v840 = vunpack.c.l.b16 %v660
      %v841 = vunpack.c.h.b16 %v660
      %v842 = vunpack.c.l.b16 %v661
      %v843 = vunpack.c.h.b16 %v661
      %v844 = vunpack.c.l.b16 %v662
      %v845 = vunpack.c.h.b16 %v662
      %v846 = vunpack.c.l.b16 %v663
      %v847 = vunpack.c.h.b16 %v663
      %v848 = vunpack.c.l.b16 %v664
      %v849 = vunpack.c.h.b16 %v664
      %v850 = vunpack.c.l.b16 %v665
      %v851 = vunpack.c.h.b16 %v665
      %v852 = vunpack.c.l.b16 %v666
      %v853 = vunpack.c.h.b16 %v666
      %v854 = vunpack.c.l.b16 %v667
      %v855 = vunpack.c.h.b16 %v667
      %v856 = vunpack.c.l.b16 %v668
      %v857 = vunpack.c.h.b16 %v668
      %v858 = vunpack.c.l.b16 %v669
      %v859 = vunpack.c.h.b16 %v669
      %v860 = vunpack.c.l.b16 %v670
      %v861 = vunpack.c.h.b16 %v670
      %v862 = vunpack.c.l.b16 %v671
      %v863 = vunpack.c.h.b16 %v671
      %v864 = vunpack.c.l.b16 %v672
      %v865 = vunpack.c.h.b16 %v672
      %v866 = vunpack.c.l.b16 %v673
      %v867 = vunpack.c.h.b16 %v673
      %v868 = vunpack.c.l.b16 %v674
      %v869 = vunpack.c.h.b16 %v674
      %v870 = vunpack.c.l.b16 %v675
      %v871 = vunpack.c.h.b16 %v675
      %v872 = vunpack.c.l.b16 %v676
      %v873 = vunpack.c.h.b16 %v676
      %v874 = vunpack.c.l.b16 %v677
      %v875 = vunpack.c.h.b16 %v677
      %v876 = vunpack.c.l.b16 %v678
      %v877 = vunpack.c.h.b16 %v678
      %v878 = vunpack.c.l.b16 %v679
      %v879 = vunpack.c.h.b16 %v679
      %v880 = vunpack.c.l.b16 %v680
      %v881 = vunpack.c.h.b16 %v680
      %v882 = vunpack.c.l.b16 %v681
      %v883 = vunpack.c.h.b16 %v681
      %v884 = vunpack.c.l.b16 %v682
      %v885 = vunpack.c.h.b16 %v682
      %v886 = vunpack.c.l.b16 %v683
      %v887 = vunpack.c.h.b16 %v683
      %v888 = vunpack.c.l.b16 %v684
      %v889 = vunpack.c.h.b16 %v684
      %v890 = vunpack.c.l.b16 %v685
      %v891 = vunpack.c.h.b16 %v685
      %v892 = vunpack.c.l.b16 %v686
      %v893 = vunpack.c.h.b16 %v686
      %v894 = vunpack.c.l.b16 %v687
      %v895 = vunpack.c.h.b16 %v687
      %v896 = vunpack.c.l.b16 %v688
      %v897 = vunpack.c.h.b16 %v688
      %v898 = vunpack.c.l.b16 %v689
      %v899 = vunpack.c.h.b16 %v689
      %v900 = vunpack.c.l.b16 %v690
      %v901 = vunpack.c.h.b16 %v690
      %v902 = vunpack.c.l.b16 %v691
      %v903 = vunpack.c.h.b16 %v691
      %v904 = vunpack.c.l.b16 %v692
      %v905 = vunpack.c.h.b16 %v692
      %v906 = vunpack.c.l.b16 %v693
      %v907 = vunpack.c.h.b16 %v693
      %v908 = vunpack.c.l.b16 %v694
      %v909 = vunpack.c.h.b16 %v694
      %v910 = vunpack.c.l.b16 %v695
      %v911 = vunpack.c.h.b16 %v695
      %v912 = vunpack.c.l.b16 %v696
      %v913 = vunpack.c.h.b16 %v696
      %v914 = vunpack.c.l.b16 %v697
      %v915 = vunpack.c.h.b16 %v697
      %v916 = vunpack.c.l.b16 %v698
      %v917 = vunpack.c.h.b16 %v698
      %v918 = vunpack.c.l.b16 %v699
      %v919 = vunpack.c.h.b16 %v699
      %v920 = vunpack.c.l.b16 %v700
      %v921 = vunpack.c.h.b16 %v700
      %v922 = vunpack.c.l.b16 %v701
      %v923 = vunpack.c.h.b16 %v701
      %v924 = vunpack.c.l.b16 %v702
      %v925 = vunpack.c.h.b16 %v702
      %v926 = vunpack.c.l.b16 %v703
      %v927 = vunpack.c.h.b16 %v703
      %v928 = vunpack.c.l.b16 %v704
      %v929 = vunpack.c.h.b16 %v704
      %v930 = vunpack.c.l.b16 %v705
      %v931 = vunpack.c.h.b16 %v705
      %v932 = vunpack.c.l.b16 %v706
      %v933 = vunpack.c.h.b16 %v706
      %v934 = vunpack.c.l.b16 %v707
      %v935 = vunpack.c.h.b16 %v707
      %v936 = vunpack.c.l.b16 %v708
      %v937 = vunpack.c.h.b16 %v708
      %v938 = vunpack.c.l.b16 %v709
      %v939 = vunpack.c.h.b16 %v709
      %v940 = vunpack.c.l.b16 %v710
      %v941 = vunpack.c.h.b16 %v710
      %v942 = vunpack.c.l.b16 %v711
      %v943 = vunpack.c.h.b16 %v711
      %v944 = vunpack.c.l.b16 %v712
      %v945 = vunpack.c.h.b16 %v712
      %v946 = vunpack.c.l.b16 %v713
      %v947 = vunpack.c.h.b16 %v713
      %v948 = vunpack.c.l.b16 %v714
      %v949 = vunpack.c.h.b16 %v714
      %v950 = vunpack.c.l.b16 %v715
      %v951 = vunpack.c.h.b16 %v715
      %v952 = vunpack.c.l.b16 %v716
      %v953 = vunpack.c.h.b16 %v716
      %v954 = vunpack.c.l.b16 %v717
      %v955 = vunpack.c.h.b16 %v717
      %v956 = vunpack.c.l.b16 %v718
      %v957 = vunpack.c.h.b16 %v718
      %v958 = vunpack.c.l.b16 %v719
      %v959 = vunpack.c.h.b16 %v719
      %v960 = vunpack.c.l.b16 %v720
      %v961 = vunpack.c.h.b16 %v720
      %v962 = vunpack.c.l.b16 %v721
      %v963 = vunpack.c.h.b16 %v721
      %v964 = vunpack.c.l.b16 %v722
      %v965 = vunpack.c.h.b16 %v722
      %v966 = vunpack.c.l.b16 %v723
      %v967 = vunpack.c.h.b16 %v723
      %v968 = vunpack.c.l.b16 %v724
      %v969 = vunpack.c.h.b16 %v724
      %v970 = vunpack.c.l.b16 %v725
      %v971 = vunpack.c.h.b16 %v725
      %v972 = vpack.c.b16 %v814, %v812
      %v973 = vpack.c.b16 %v815, %v813
      %v974 = vpack.c.b16 %v818, %v816
      %v975 = vpack.c.b16 %v819, %v817
      %v976 = vpack.c.b16 %v822, %v820
      %v977 = vpack.c.b16 %v823, %v821
      %v978 = vpack.c.b16 %v826, %v824
      %v979 = vpack.c.b16 %v827, %v825
      %v980 = vpack.c.b16 %v830, %v828
      %v981 = vpack.c.b16 %v831, %v829
      %v982 = vpack.c.b16 %v834, %v832
      %v983 = vpack.c.b16 %v835, %v833
      %v984 = vpack.c.b16 %v838, %v836
      %v985 = vpack.c.b16 %v839, %v837
      %v986 = vpack.c.b16 %v842, %v840
      %v987 = vpack.c.b16 %v843, %v841
      %v988 = vpack.c.b16 %v846, %v844
      %v989 = vpack.c.b16 %v847, %v845
      %v990 = vpack.c.b16 %v850, %v848
      %v991 = vpack.c.b16 %v851, %v849
      %v992 = vpack.c.b16 %v854, %v852
      %v993 = vpack.c.b16 %v855, %v853
      %v994 = vpack.c.b16 %v858, %v856
      %v995 = vpack.c.b16 %v859, %v857
      %v996 = vpack.c.b16 %v862, %v860
      %v997 = vpack.c.b16 %v863, %v861
      %v998 = vpack.c.b16 %v866, %v864
      %v999 = vpack.c.b16 %v867, %v865
      %v1000 = vpack.c.b16 %v870, %v868
      %v1001 = vpack.c.b16 %v871, %v869
      %v1002 = vpack.c.b16 %v874, %v872
      %v1003 = vpack.c.b16 %v875, %v873
      %v1004 = vpack.c.b16 %v878, %v876
      %v1005 = vpack.c.b16 %v879, %v877
      %v1006 = vpack.c.b16 %v882, %v880
      %v1007 = vpack.c.b16 %v883, %v881
      %v1008 = vpack.c.b16 %v886, %v884
      %v1009 = vpack.c.b16 %v887, %v885
      %v1010 = vpack.c.b16 %v890, %v888
      %v1011 = vpack.c.b16 %v891, %v889
      %v1012 = vpack.c.b16 %v894, %v892
      %v1013 = vpack.c.b16 %v895, %v893
      %v1014 = vpack.c.b16 %v898, %v896
      %v1015 = vpack.c.b16 %v899, %v897
      %v1016 = vpack.c.b16 %v902, %v900
      %v1017 = vpack.c.b16 %v903, %v901
      %v1018 = vpack.c.b16 %v906, %v904
      %v1019 = vpack.c.b16 %v907, %v905
      %v1020 = vpack.c.b16 %v910, %v908
      %v1021 = vpack.c.b16 %v911, %v909
      %v1022 = vpack.c.b16 %v914, %v912
      %v1023 = vpack.c.b16 %v915, %v913
      %v1024 = vpack.c.b16 %v918, %v916
      %v1025 = vpack.c.b16 %v919, %v917
      %v1026 = vpack.c.b16 %v922, %v920
      %v1027 = vpack.c.b16 %v923, %v921
      %v1028 = vpack.c.b16 %v926, %v924
      %v1029 = vpack.c.b16 %v927, %v925
      %v1030 = vpack.c.b16 %v930, %v928
      %v1031 = vpack.c.b16 %v931, %v929
      %v1032 = vpack.c.b16 %v934, %v932
      %v1033 = vpack.c.b16 %v935, %v933
      %v1034 = vpack.c.b16 %v938, %v936
      %v1035 = vpack.c.b16 %v939, %v937
      %v1036 = vpack.c.b16 %v942, %v940
      %v1037 = vpack.c.b16 %v943, %v941
      %v1038 = vpack.c.b16 %v946, %v944
      %v1039 = vpack.c.b16 %v947, %v945
      %v1040 = vpack.c.b16 %v950, %v948
      %v1041 = vpack.c.b16 %v951, %v949
      %v1042 = vpack.c.b16 %v954, %v952
      %v1043 = vpack.c.b16 %v955, %v953
      %v1044 = vpack.c.b16 %v958, %v956
      %v1045 = vpack.c.b16 %v959, %v957
      %v1046 = vpack.c.b16 %v962, %v960
      %v1047 = vpack.c.b16 %v963, %v961
      %v1048 = vpack.c.b16 %v966, %v964
      %v1049 = vpack.c.b16 %v967, %v965
      %v1050 = vpack.c.b16 %v970, %v968
      %v1051 = vpack.c.b16 %v971, %v969
      %1132 = vmatpush.bf16.msra.mxu0 %v986
      %1133 = vmatpush.bf16.msra.mxu0 %v984
      %1134 = vmatpush.bf16.msra.mxu0 %v982
      %1135 = vmatpush.bf16.msra.mxu0 %v980
      %1136 = vmatpush.bf16.msra.mxu0 %v978
      %1137 = vmatpush.bf16.msra.mxu0 %v976
      %1138 = vmatpush.bf16.msra.mxu0 %v974
      %1139 = vmatpush.bf16.msra.mxu0 %v972
      %1140 = vmatmul.bf16.gmra.mxu0 %v566
      %v1141 = vpop.f32.mrf.mxu0
      %v1142 = vadd.f32 %v728, %v1141
      %v1143 = vpop.f32.mrf.mxu0
      %v1144 = vadd.f32 %v728, %v1143
      %1145 = vmatmul.bf16.gmra.mxu0 %v567
      %v1146 = vpop.f32.mrf.mxu0
      %v1147 = vadd.f32 %v728, %v1146
      %v1148 = vpop.f32.mrf.mxu0
      %v1149 = vadd.f32 %v728, %v1148
      %1150 = vmatmul.bf16.gmra.mxu0 %v568
      %v1151 = vpop.f32.mrf.mxu0
      %v1152 = vadd.f32 %v728, %v1151
      %v1153 = vpop.f32.mrf.mxu0
      %v1154 = vadd.f32 %v728, %v1153
      %1155 = vmatmul.bf16.gmra.mxu0 %v569
      %v1156 = vpop.f32.mrf.mxu0
      %v1157 = vadd.f32 %v728, %v1156
      %v1158 = vpop.f32.mrf.mxu0
      %v1159 = vadd.f32 %v728, %v1158
      %1160 = vmatmul.bf16.gmra.mxu0 %v570
      %v1161 = vpop.f32.mrf.mxu0
      %v1162 = vadd.f32 %v728, %v1161
      %v1163 = vpop.f32.mrf.mxu0
      %v1164 = vadd.f32 %v728, %v1163
      %1165 = vmatmul.bf16.gmra.mxu0 %v571
      %v1166 = vpop.f32.mrf.mxu0
      %v1167 = vadd.f32 %v728, %v1166
      %v1168 = vpop.f32.mrf.mxu0
      %v1169 = vadd.f32 %v728, %v1168
      %1170 = vmatmul.bf16.gmra.mxu0 %v572
      %v1171 = vpop.f32.mrf.mxu0
      %v1172 = vadd.f32 %v728, %v1171
      %v1173 = vpop.f32.mrf.mxu0
      %v1174 = vadd.f32 %v728, %v1173
      %1175 = vmatmul.bf16.gmra.mxu0 %v573
      %v1176 = vpop.f32.mrf.mxu0
      %v1177 = vadd.f32 %v728, %v1176
      %v1178 = vpop.f32.mrf.mxu0
      %v1179 = vadd.f32 %v728, %v1178
      %1180 = vmatmul.bf16.gmra.mxu0 %v574
      %v1181 = vpop.f32.mrf.mxu0
      %v1182 = vadd.f32 %v728, %v1181
      %v1183 = vpop.f32.mrf.mxu0
      %v1184 = vadd.f32 %v728, %v1183
      %1185 = vmatmul.bf16.gmra.mxu0 %v575
      %v1186 = vpop.f32.mrf.mxu0
      %v1187 = vadd.f32 %v728, %v1186
      %v1188 = vpop.f32.mrf.mxu0
      %v1189 = vadd.f32 %v728, %v1188
      %1190 = vmatmul.bf16.gmra.mxu0 %v576
      %v1191 = vpop.f32.mrf.mxu0
      %v1192 = vadd.f32 %v728, %v1191
      %v1193 = vpop.f32.mrf.mxu0
      %v1194 = vadd.f32 %v728, %v1193
      %1195 = vmatmul.bf16.gmra.mxu0 %v577
      %v1196 = vpop.f32.mrf.mxu0
      %v1197 = vadd.f32 %v728, %v1196
      %v1198 = vpop.f32.mrf.mxu0
      %v1199 = vadd.f32 %v728, %v1198
      %1200 = vmatmul.bf16.gmra.mxu0 %v578
      %v1201 = vpop.f32.mrf.mxu0
      %v1202 = vadd.f32 %v728, %v1201
      %v1203 = vpop.f32.mrf.mxu0
      %v1204 = vadd.f32 %v728, %v1203
      %1205 = vmatmul.bf16.gmra.mxu0 %v579
      %v1206 = vpop.f32.mrf.mxu0
      %v1207 = vadd.f32 %v728, %v1206
      %v1208 = vpop.f32.mrf.mxu0
      %v1209 = vadd.f32 %v728, %v1208
      %1210 = vmatmul.bf16.gmra.mxu0 %v580
      %v1211 = vpop.f32.mrf.mxu0
      %v1212 = vadd.f32 %v728, %v1211
      %v1213 = vpop.f32.mrf.mxu0
      %v1214 = vadd.f32 %v728, %v1213
      %1215 = vmatmul.bf16.gmra.mxu0 %v581
      %v1216 = vpop.f32.mrf.mxu0
      %v1217 = vadd.f32 %v728, %v1216
      %v1218 = vpop.f32.mrf.mxu0
      %v1219 = vadd.f32 %v728, %v1218
      %1220 = vmatmul.bf16.gmra.mxu0 %v582
      %v1221 = vpop.f32.mrf.mxu0
      %v1222 = vadd.f32 %v728, %v1221
      %v1223 = vpop.f32.mrf.mxu0
      %v1224 = vadd.f32 %v728, %v1223
      %1225 = vmatmul.bf16.gmra.mxu0 %v583
      %v1226 = vpop.f32.mrf.mxu0
      %v1227 = vadd.f32 %v728, %v1226
      %v1228 = vpop.f32.mrf.mxu0
      %v1229 = vadd.f32 %v728, %v1228
      %1230 = vmatmul.bf16.gmra.mxu0 %v584
      %v1231 = vpop.f32.mrf.mxu0
      %v1232 = vadd.f32 %v728, %v1231
      %v1233 = vpop.f32.mrf.mxu0
      %v1234 = vadd.f32 %v728, %v1233
      %1235 = vmatmul.bf16.gmra.mxu0 %v585
      %v1236 = vpop.f32.mrf.mxu0
      %v1237 = vadd.f32 %v728, %v1236
      %v1238 = vpop.f32.mrf.mxu0
      %v1239 = vadd.f32 %v728, %v1238
      %1240 = vmatmul.bf16.gmra.mxu0 %v586
      %v1241 = vpop.f32.mrf.mxu0
      %v1242 = vadd.f32 %v728, %v1241
      %v1243 = vpop.f32.mrf.mxu0
      %v1244 = vadd.f32 %v728, %v1243
      %1245 = vmatmul.bf16.gmra.mxu0 %v587
      %v1246 = vpop.f32.mrf.mxu0
      %v1247 = vadd.f32 %v728, %v1246
      %v1248 = vpop.f32.mrf.mxu0
      %v1249 = vadd.f32 %v728, %v1248
      %1250 = vmatmul.bf16.gmra.mxu0 %v588
      %v1251 = vpop.f32.mrf.mxu0
      %v1252 = vadd.f32 %v728, %v1251
      %v1253 = vpop.f32.mrf.mxu0
      %v1254 = vadd.f32 %v728, %v1253
      %1255 = vmatmul.bf16.gmra.mxu0 %v589
      %v1256 = vpop.f32.mrf.mxu0
      %v1257 = vadd.f32 %v728, %v1256
      %v1258 = vpop.f32.mrf.mxu0
      %v1259 = vadd.f32 %v728, %v1258
      %1260 = vmatmul.bf16.gmra.mxu0 %v590
      %v1261 = vpop.f32.mrf.mxu0
      %v1262 = vadd.f32 %v728, %v1261
      %v1263 = vpop.f32.mrf.mxu0
      %v1264 = vadd.f32 %v728, %v1263
      %1265 = vmatmul.bf16.gmra.mxu0 %v591
      %v1266 = vpop.f32.mrf.mxu0
      %v1267 = vadd.f32 %v728, %v1266
      %v1268 = vpop.f32.mrf.mxu0
      %v1269 = vadd.f32 %v728, %v1268
      %1270 = vmatmul.bf16.gmra.mxu0 %v592
      %v1271 = vpop.f32.mrf.mxu0
      %v1272 = vadd.f32 %v728, %v1271
      %v1273 = vpop.f32.mrf.mxu0
      %v1274 = vadd.f32 %v728, %v1273
      %1275 = vmatmul.bf16.gmra.mxu0 %v593
      %v1276 = vpop.f32.mrf.mxu0
      %v1277 = vadd.f32 %v728, %v1276
      %v1278 = vpop.f32.mrf.mxu0
      %v1279 = vadd.f32 %v728, %v1278
      %1280 = vdwg.mxu0
      %1281 = vmatpush.bf16.msra.mxu0 %v1002
      %1282 = vmatpush.bf16.msra.mxu0 %v1000
      %1283 = vmatpush.bf16.msra.mxu0 %v998
      %1284 = vmatpush.bf16.msra.mxu0 %v996
      %1285 = vmatpush.bf16.msra.mxu0 %v994
      %1286 = vmatpush.bf16.msra.mxu0 %v992
      %1287 = vmatpush.bf16.msra.mxu0 %v990
      %1288 = vmatpush.bf16.msra.mxu0 %v988
      %1289 = vmatmul.bf16.gmra.mxu0 %v567
      %v1290 = vpop.f32.mrf.mxu0
      %v1291 = vadd.f32 %v1142, %v1290
      %v1292 = vpop.f32.mrf.mxu0
      %v1293 = vadd.f32 %v1144, %v1292
      %1294 = vmatmul.bf16.gmra.mxu0 %v568
      %v1295 = vpop.f32.mrf.mxu0
      %v1296 = vadd.f32 %v1147, %v1295
      %v1297 = vpop.f32.mrf.mxu0
      %v1298 = vadd.f32 %v1149, %v1297
      %1299 = vmatmul.bf16.gmra.mxu0 %v569
      %v1300 = vpop.f32.mrf.mxu0
      %v1301 = vadd.f32 %v1152, %v1300
      %v1302 = vpop.f32.mrf.mxu0
      %v1303 = vadd.f32 %v1154, %v1302
      %1304 = vmatmul.bf16.gmra.mxu0 %v570
      %v1305 = vpop.f32.mrf.mxu0
      %v1306 = vadd.f32 %v1157, %v1305
      %v1307 = vpop.f32.mrf.mxu0
      %v1308 = vadd.f32 %v1159, %v1307
      %1309 = vmatmul.bf16.gmra.mxu0 %v571
      %v1310 = vpop.f32.mrf.mxu0
      %v1311 = vadd.f32 %v1162, %v1310
      %v1312 = vpop.f32.mrf.mxu0
      %v1313 = vadd.f32 %v1164, %v1312
      %1314 = vmatmul.bf16.gmra.mxu0 %v572
      %v1315 = vpop.f32.mrf.mxu0
      %v1316 = vadd.f32 %v1167, %v1315
      %v1317 = vpop.f32.mrf.mxu0
      %v1318 = vadd.f32 %v1169, %v1317
      %1319 = vmatmul.bf16.gmra.mxu0 %v573
      %v1320 = vpop.f32.mrf.mxu0
      %v1321 = vadd.f32 %v1172, %v1320
      %v1322 = vpop.f32.mrf.mxu0
      %v1323 = vadd.f32 %v1174, %v1322
      %1324 = vmatmul.bf16.gmra.mxu0 %v574
      %v1325 = vpop.f32.mrf.mxu0
      %v1326 = vadd.f32 %v1177, %v1325
      %v1327 = vpop.f32.mrf.mxu0
      %v1328 = vadd.f32 %v1179, %v1327
      %1329 = vmatmul.bf16.gmra.mxu0 %v575
      %v1330 = vpop.f32.mrf.mxu0
      %v1331 = vadd.f32 %v1182, %v1330
      %v1332 = vpop.f32.mrf.mxu0
      %v1333 = vadd.f32 %v1184, %v1332
      %1334 = vmatmul.bf16.gmra.mxu0 %v576
      %v1335 = vpop.f32.mrf.mxu0
      %v1336 = vadd.f32 %v1187, %v1335
      %v1337 = vpop.f32.mrf.mxu0
      %v1338 = vadd.f32 %v1189, %v1337
      %1339 = vmatmul.bf16.gmra.mxu0 %v577
      %v1340 = vpop.f32.mrf.mxu0
      %v1341 = vadd.f32 %v1192, %v1340
      %v1342 = vpop.f32.mrf.mxu0
      %v1343 = vadd.f32 %v1194, %v1342
      %1344 = vmatmul.bf16.gmra.mxu0 %v578
      %v1345 = vpop.f32.mrf.mxu0
      %v1346 = vadd.f32 %v1197, %v1345
      %v1347 = vpop.f32.mrf.mxu0
      %v1348 = vadd.f32 %v1199, %v1347
      %1349 = vmatmul.bf16.gmra.mxu0 %v579
      %v1350 = vpop.f32.mrf.mxu0
      %v1351 = vadd.f32 %v1202, %v1350
      %v1352 = vpop.f32.mrf.mxu0
      %v1353 = vadd.f32 %v1204, %v1352
      %1354 = vmatmul.bf16.gmra.mxu0 %v580
      %v1355 = vpop.f32.mrf.mxu0
      %v1356 = vadd.f32 %v1207, %v1355
      %v1357 = vpop.f32.mrf.mxu0
      %v1358 = vadd.f32 %v1209, %v1357
      %1359 = vmatmul.bf16.gmra.mxu0 %v581
      %v1360 = vpop.f32.mrf.mxu0
      %v1361 = vadd.f32 %v1212, %v1360
      %v1362 = vpop.f32.mrf.mxu0
      %v1363 = vadd.f32 %v1214, %v1362
      %1364 = vmatmul.bf16.gmra.mxu0 %v582
      %v1365 = vpop.f32.mrf.mxu0
      %v1366 = vadd.f32 %v1217, %v1365
      %v1367 = vpop.f32.mrf.mxu0
      %v1368 = vadd.f32 %v1219, %v1367
      %1369 = vmatmul.bf16.gmra.mxu0 %v583
      %v1370 = vpop.f32.mrf.mxu0
      %v1371 = vadd.f32 %v1222, %v1370
      %v1372 = vpop.f32.mrf.mxu0
      %v1373 = vadd.f32 %v1224, %v1372
      %1374 = vmatmul.bf16.gmra.mxu0 %v584
      %v1375 = vpop.f32.mrf.mxu0
      %v1376 = vadd.f32 %v1227, %v1375
      %v1377 = vpop.f32.mrf.mxu0
      %v1378 = vadd.f32 %v1229, %v1377
      %1379 = vmatmul.bf16.gmra.mxu0 %v585
      %v1380 = vpop.f32.mrf.mxu0
      %v1381 = vadd.f32 %v1232, %v1380
      %v1382 = vpop.f32.mrf.mxu0
      %v1383 = vadd.f32 %v1234, %v1382
      %1384 = vmatmul.bf16.gmra.mxu0 %v586
      %v1385 = vpop.f32.mrf.mxu0
      %v1386 = vadd.f32 %v1237, %v1385
      %v1387 = vpop.f32.mrf.mxu0
      %v1388 = vadd.f32 %v1239, %v1387
      %1389 = vmatmul.bf16.gmra.mxu0 %v587
      %v1390 = vpop.f32.mrf.mxu0
      %v1391 = vadd.f32 %v1242, %v1390
      %v1392 = vpop.f32.mrf.mxu0
      %v1393 = vadd.f32 %v1244, %v1392
      %1394 = vmatmul.bf16.gmra.mxu0 %v588
      %v1395 = vpop.f32.mrf.mxu0
      %v1396 = vadd.f32 %v1247, %v1395
      %v1397 = vpop.f32.mrf.mxu0
      %v1398 = vadd.f32 %v1249, %v1397
      %1399 = vmatmul.bf16.gmra.mxu0 %v589
      %v1400 = vpop.f32.mrf.mxu0
      %v1401 = vadd.f32 %v1252, %v1400
      %v1402 = vpop.f32.mrf.mxu0
      %v1403 = vadd.f32 %v1254, %v1402
      %1404 = vmatmul.bf16.gmra.mxu0 %v590
      %v1405 = vpop.f32.mrf.mxu0
      %v1406 = vadd.f32 %v1257, %v1405
      %v1407 = vpop.f32.mrf.mxu0
      %v1408 = vadd.f32 %v1259, %v1407
      %1409 = vmatmul.bf16.gmra.mxu0 %v591
      %v1410 = vpop.f32.mrf.mxu0
      %v1411 = vadd.f32 %v1262, %v1410
      %v1412 = vpop.f32.mrf.mxu0
      %v1413 = vadd.f32 %v1264, %v1412
      %1414 = vmatmul.bf16.gmra.mxu0 %v592
      %v1415 = vpop.f32.mrf.mxu0
      %v1416 = vadd.f32 %v1267, %v1415
      %v1417 = vpop.f32.mrf.mxu0
      %v1418 = vadd.f32 %v1269, %v1417
      %1419 = vmatmul.bf16.gmra.mxu0 %v593
      %v1420 = vpop.f32.mrf.mxu0
      %v1421 = vadd.f32 %v1272, %v1420
      %v1422 = vpop.f32.mrf.mxu0
      %v1423 = vadd.f32 %v1274, %v1422
      %1424 = vmatmul.bf16.gmra.mxu0 %v626
      %v1425 = vpop.f32.mrf.mxu0
      %v1426 = vadd.f32 %v1277, %v1425
      %v1427 = vpop.f32.mrf.mxu0
      %v1428 = vadd.f32 %v1279, %v1427
      %1429 = vdwg.mxu0
      %1430 = vmatpush.bf16.msra.mxu0 %v1018
      %1431 = vmatpush.bf16.msra.mxu0 %v1016
      %1432 = vmatpush.bf16.msra.mxu0 %v1014
      %1433 = vmatpush.bf16.msra.mxu0 %v1012
      %1434 = vmatpush.bf16.msra.mxu0 %v1010
      %1435 = vmatpush.bf16.msra.mxu0 %v1008
      %1436 = vmatpush.bf16.msra.mxu0 %v1006
      %1437 = vmatpush.bf16.msra.mxu0 %v1004
      %1438 = vmatmul.bf16.gmra.mxu0 %v568
      %v1439 = vpop.f32.mrf.mxu0
      %v1440 = vadd.f32 %v1291, %v1439
      %v1441 = vpop.f32.mrf.mxu0
      %v1442 = vadd.f32 %v1293, %v1441
      %1443 = vmatmul.bf16.gmra.mxu0 %v569
      %v1444 = vpop.f32.mrf.mxu0
      %v1445 = vadd.f32 %v1296, %v1444
      %v1446 = vpop.f32.mrf.mxu0
      %v1447 = vadd.f32 %v1298, %v1446
      %1448 = vmatmul.bf16.gmra.mxu0 %v570
      %v1449 = vpop.f32.mrf.mxu0
      %v1450 = vadd.f32 %v1301, %v1449
      %v1451 = vpop.f32.mrf.mxu0
      %v1452 = vadd.f32 %v1303, %v1451
      %1453 = vmatmul.bf16.gmra.mxu0 %v571
      %v1454 = vpop.f32.mrf.mxu0
      %v1455 = vadd.f32 %v1306, %v1454
      %v1456 = vpop.f32.mrf.mxu0
      %v1457 = vadd.f32 %v1308, %v1456
      %1458 = vmatmul.bf16.gmra.mxu0 %v572
      %v1459 = vpop.f32.mrf.mxu0
      %v1460 = vadd.f32 %v1311, %v1459
      %v1461 = vpop.f32.mrf.mxu0
      %v1462 = vadd.f32 %v1313, %v1461
      %1463 = vmatmul.bf16.gmra.mxu0 %v573
      %v1464 = vpop.f32.mrf.mxu0
      %v1465 = vadd.f32 %v1316, %v1464
      %v1466 = vpop.f32.mrf.mxu0
      %v1467 = vadd.f32 %v1318, %v1466
      %1468 = vmatmul.bf16.gmra.mxu0 %v574
      %v1469 = vpop.f32.mrf.mxu0
      %v1470 = vadd.f32 %v1321, %v1469
      %v1471 = vpop.f32.mrf.mxu0
      %v1472 = vadd.f32 %v1323, %v1471
      %1473 = vmatmul.bf16.gmra.mxu0 %v575
      %v1474 = vpop.f32.mrf.mxu0
      %v1475 = vadd.f32 %v1326, %v1474
      %v1476 = vpop.f32.mrf.mxu0
      %v1477 = vadd.f32 %v1328, %v1476
      %1478 = vmatmul.bf16.gmra.mxu0 %v576
      %v1479 = vpop.f32.mrf.mxu0
      %v1480 = vadd.f32 %v1331, %v1479
      %v1481 = vpop.f32.mrf.mxu0
      %v1482 = vadd.f32 %v1333, %v1481
      %1483 = vmatmul.bf16.gmra.mxu0 %v577
      %v1484 = vpop.f32.mrf.mxu0
      %v1485 = vadd.f32 %v1336, %v1484
      %v1486 = vpop.f32.mrf.mxu0
      %v1487 = vadd.f32 %v1338, %v1486
      %1488 = vmatmul.bf16.gmra.mxu0 %v578
      %v1489 = vpop.f32.mrf.mxu0
      %v1490 = vadd.f32 %v1341, %v1489
      %v1491 = vpop.f32.mrf.mxu0
      %v1492 = vadd.f32 %v1343, %v1491
      %1493 = vmatmul.bf16.gmra.mxu0 %v579
      %v1494 = vpop.f32.mrf.mxu0
      %v1495 = vadd.f32 %v1346, %v1494
      %v1496 = vpop.f32.mrf.mxu0
      %v1497 = vadd.f32 %v1348, %v1496
      %1498 = vmatmul.bf16.gmra.mxu0 %v580
      %v1499 = vpop.f32.mrf.mxu0
      %v1500 = vadd.f32 %v1351, %v1499
      %v1501 = vpop.f32.mrf.mxu0
      %v1502 = vadd.f32 %v1353, %v1501
      %1503 = vmatmul.bf16.gmra.mxu0 %v581
      %v1504 = vpop.f32.mrf.mxu0
      %v1505 = vadd.f32 %v1356, %v1504
      %v1506 = vpop.f32.mrf.mxu0
      %v1507 = vadd.f32 %v1358, %v1506
      %1508 = vmatmul.bf16.gmra.mxu0 %v582
      %v1509 = vpop.f32.mrf.mxu0
      %v1510 = vadd.f32 %v1361, %v1509
      %v1511 = vpop.f32.mrf.mxu0
      %v1512 = vadd.f32 %v1363, %v1511
      %1513 = vmatmul.bf16.gmra.mxu0 %v583
      %v1514 = vpop.f32.mrf.mxu0
      %v1515 = vadd.f32 %v1366, %v1514
      %v1516 = vpop.f32.mrf.mxu0
      %v1517 = vadd.f32 %v1368, %v1516
      %1518 = vmatmul.bf16.gmra.mxu0 %v584
      %v1519 = vpop.f32.mrf.mxu0
      %v1520 = vadd.f32 %v1371, %v1519
      %v1521 = vpop.f32.mrf.mxu0
      %v1522 = vadd.f32 %v1373, %v1521
      %1523 = vmatmul.bf16.gmra.mxu0 %v585
      %v1524 = vpop.f32.mrf.mxu0
      %v1525 = vadd.f32 %v1376, %v1524
      %v1526 = vpop.f32.mrf.mxu0
      %v1527 = vadd.f32 %v1378, %v1526
      %1528 = vmatmul.bf16.gmra.mxu0 %v586
      %v1529 = vpop.f32.mrf.mxu0
      %v1530 = vadd.f32 %v1381, %v1529
      %v1531 = vpop.f32.mrf.mxu0
      %v1532 = vadd.f32 %v1383, %v1531
      %1533 = vmatmul.bf16.gmra.mxu0 %v587
      %v1534 = vpop.f32.mrf.mxu0
      %v1535 = vadd.f32 %v1386, %v1534
      %v1536 = vpop.f32.mrf.mxu0
      %v1537 = vadd.f32 %v1388, %v1536
      %1538 = vmatmul.bf16.gmra.mxu0 %v588
      %v1539 = vpop.f32.mrf.mxu0
      %v1540 = vadd.f32 %v1391, %v1539
      %v1541 = vpop.f32.mrf.mxu0
      %v1542 = vadd.f32 %v1393, %v1541
      %1543 = vmatmul.bf16.gmra.mxu0 %v589
      %v1544 = vpop.f32.mrf.mxu0
      %v1545 = vadd.f32 %v1396, %v1544
      %v1546 = vpop.f32.mrf.mxu0
      %v1547 = vadd.f32 %v1398, %v1546
      %1548 = vmatmul.bf16.gmra.mxu0 %v590
      %v1549 = vpop.f32.mrf.mxu0
      %v1550 = vadd.f32 %v1401, %v1549
      %v1551 = vpop.f32.mrf.mxu0
      %v1552 = vadd.f32 %v1403, %v1551
      %1553 = vmatmul.bf16.gmra.mxu0 %v591
      %v1554 = vpop.f32.mrf.mxu0
      %v1555 = vadd.f32 %v1406, %v1554
      %v1556 = vpop.f32.mrf.mxu0
      %v1557 = vadd.f32 %v1408, %v1556
      %1558 = vmatmul.bf16.gmra.mxu0 %v592
      %v1559 = vpop.f32.mrf.mxu0
      %v1560 = vadd.f32 %v1411, %v1559
      %v1561 = vpop.f32.mrf.mxu0
      %v1562 = vadd.f32 %v1413, %v1561
      %1563 = vmatmul.bf16.gmra.mxu0 %v593
      %v1564 = vpop.f32.mrf.mxu0
      %v1565 = vadd.f32 %v1416, %v1564
      %v1566 = vpop.f32.mrf.mxu0
      %v1567 = vadd.f32 %v1418, %v1566
      %1568 = vmatmul.bf16.gmra.mxu0 %v626
      %v1569 = vpop.f32.mrf.mxu0
      %v1570 = vadd.f32 %v1421, %v1569
      %v1571 = vpop.f32.mrf.mxu0
      %v1572 = vadd.f32 %v1423, %v1571
      %1573 = vmatmul.bf16.gmra.mxu0 %v632
      %v1574 = vpop.f32.mrf.mxu0
      %v1575 = vadd.f32 %v1426, %v1574
      %v1576 = vpop.f32.mrf.mxu0
      %v1577 = vadd.f32 %v1428, %v1576
      %1578 = vdwg.mxu0
      %1579 = vmatpush.bf16.msra.mxu0 %v1034
      %1580 = vmatpush.bf16.msra.mxu0 %v1032
      %1581 = vmatpush.bf16.msra.mxu0 %v1030
      %1582 = vmatpush.bf16.msra.mxu0 %v1028
      %1583 = vmatpush.bf16.msra.mxu0 %v1026
      %1584 = vmatpush.bf16.msra.mxu0 %v1024
      %1585 = vmatpush.bf16.msra.mxu0 %v1022
      %1586 = vmatpush.bf16.msra.mxu0 %v1020
      %1587 = vmatmul.bf16.gmra.mxu0 %v569
      %v1588 = vpop.f32.mrf.mxu0
      %v1589 = vadd.f32 %v1440, %v1588
      %v1590 = vpop.f32.mrf.mxu0
      %v1591 = vadd.f32 %v1442, %v1590
      %1592 = vmatmul.bf16.gmra.mxu0 %v570
      %v1593 = vpop.f32.mrf.mxu0
      %v1594 = vadd.f32 %v1445, %v1593
      %v1595 = vpop.f32.mrf.mxu0
      %v1596 = vadd.f32 %v1447, %v1595
      %1597 = vmatmul.bf16.gmra.mxu0 %v571
      %v1598 = vpop.f32.mrf.mxu0
      %v1599 = vadd.f32 %v1450, %v1598
      %v1600 = vpop.f32.mrf.mxu0
      %v1601 = vadd.f32 %v1452, %v1600
      %1602 = vmatmul.bf16.gmra.mxu0 %v572
      %v1603 = vpop.f32.mrf.mxu0
      %v1604 = vadd.f32 %v1455, %v1603
      %v1605 = vpop.f32.mrf.mxu0
      %v1606 = vadd.f32 %v1457, %v1605
      %1607 = vmatmul.bf16.gmra.mxu0 %v573
      %v1608 = vpop.f32.mrf.mxu0
      %v1609 = vadd.f32 %v1460, %v1608
      %v1610 = vpop.f32.mrf.mxu0
      %v1611 = vadd.f32 %v1462, %v1610
      %1612 = vmatmul.bf16.gmra.mxu0 %v574
      %v1613 = vpop.f32.mrf.mxu0
      %v1614 = vadd.f32 %v1465, %v1613
      %v1615 = vpop.f32.mrf.mxu0
      %v1616 = vadd.f32 %v1467, %v1615
      %1617 = vmatmul.bf16.gmra.mxu0 %v575
      %v1618 = vpop.f32.mrf.mxu0
      %v1619 = vadd.f32 %v1470, %v1618
      %v1620 = vpop.f32.mrf.mxu0
      %v1621 = vadd.f32 %v1472, %v1620
      %1622 = vmatmul.bf16.gmra.mxu0 %v576
      %v1623 = vpop.f32.mrf.mxu0
      %v1624 = vadd.f32 %v1475, %v1623
      %v1625 = vpop.f32.mrf.mxu0
      %v1626 = vadd.f32 %v1477, %v1625
      %1627 = vmatmul.bf16.gmra.mxu0 %v577
      %v1628 = vpop.f32.mrf.mxu0
      %v1629 = vadd.f32 %v1480, %v1628
      %v1630 = vpop.f32.mrf.mxu0
      %v1631 = vadd.f32 %v1482, %v1630
      %1632 = vmatmul.bf16.gmra.mxu0 %v578
      %v1633 = vpop.f32.mrf.mxu0
      %v1634 = vadd.f32 %v1485, %v1633
      %v1635 = vpop.f32.mrf.mxu0
      %v1636 = vadd.f32 %v1487, %v1635
      %1637 = vmatmul.bf16.gmra.mxu0 %v579
      %v1638 = vpop.f32.mrf.mxu0
      %v1639 = vadd.f32 %v1490, %v1638
      %v1640 = vpop.f32.mrf.mxu0
      %v1641 = vadd.f32 %v1492, %v1640
      %1642 = vmatmul.bf16.gmra.mxu0 %v580
      %v1643 = vpop.f32.mrf.mxu0
      %v1644 = vadd.f32 %v1495, %v1643
      %v1645 = vpop.f32.mrf.mxu0
      %v1646 = vadd.f32 %v1497, %v1645
      %1647 = vmatmul.bf16.gmra.mxu0 %v581
      %v1648 = vpop.f32.mrf.mxu0
      %v1649 = vadd.f32 %v1500, %v1648
      %v1650 = vpop.f32.mrf.mxu0
      %v1651 = vadd.f32 %v1502, %v1650
      %1652 = vmatmul.bf16.gmra.mxu0 %v582
      %v1653 = vpop.f32.mrf.mxu0
      %v1654 = vadd.f32 %v1505, %v1653
      %v1655 = vpop.f32.mrf.mxu0
      %v1656 = vadd.f32 %v1507, %v1655
      %1657 = vmatmul.bf16.gmra.mxu0 %v583
      %v1658 = vpop.f32.mrf.mxu0
      %v1659 = vadd.f32 %v1510, %v1658
      %v1660 = vpop.f32.mrf.mxu0
      %v1661 = vadd.f32 %v1512, %v1660
      %1662 = vmatmul.bf16.gmra.mxu0 %v584
      %v1663 = vpop.f32.mrf.mxu0
      %v1664 = vadd.f32 %v1515, %v1663
      %v1665 = vpop.f32.mrf.mxu0
      %v1666 = vadd.f32 %v1517, %v1665
      %1667 = vmatmul.bf16.gmra.mxu0 %v585
      %v1668 = vpop.f32.mrf.mxu0
      %v1669 = vadd.f32 %v1520, %v1668
      %v1670 = vpop.f32.mrf.mxu0
      %v1671 = vadd.f32 %v1522, %v1670
      %1672 = vmatmul.bf16.gmra.mxu0 %v586
      %v1673 = vpop.f32.mrf.mxu0
      %v1674 = vadd.f32 %v1525, %v1673
      %v1675 = vpop.f32.mrf.mxu0
      %v1676 = vadd.f32 %v1527, %v1675
      %1677 = vmatmul.bf16.gmra.mxu0 %v587
      %v1678 = vpop.f32.mrf.mxu0
      %v1679 = vadd.f32 %v1530, %v1678
      %v1680 = vpop.f32.mrf.mxu0
      %v1681 = vadd.f32 %v1532, %v1680
      %1682 = vmatmul.bf16.gmra.mxu0 %v588
      %v1683 = vpop.f32.mrf.mxu0
      %v1684 = vadd.f32 %v1535, %v1683
      %v1685 = vpop.f32.mrf.mxu0
      %v1686 = vadd.f32 %v1537, %v1685
      %1687 = vmatmul.bf16.gmra.mxu0 %v589
      %v1688 = vpop.f32.mrf.mxu0
      %v1689 = vadd.f32 %v1540, %v1688
      %v1690 = vpop.f32.mrf.mxu0
      %v1691 = vadd.f32 %v1542, %v1690
      %1692 = vmatmul.bf16.gmra.mxu0 %v590
      %v1693 = vpop.f32.mrf.mxu0
      %v1694 = vadd.f32 %v1545, %v1693
      %v1695 = vpop.f32.mrf.mxu0
      %v1696 = vadd.f32 %v1547, %v1695
      %1697 = vmatmul.bf16.gmra.mxu0 %v591
      %v1698 = vpop.f32.mrf.mxu0
      %v1699 = vadd.f32 %v1550, %v1698
      %v1700 = vpop.f32.mrf.mxu0
      %v1701 = vadd.f32 %v1552, %v1700
      %1702 = vmatmul.bf16.gmra.mxu0 %v592
      %v1703 = vpop.f32.mrf.mxu0
      %v1704 = vadd.f32 %v1555, %v1703
      %v1705 = vpop.f32.mrf.mxu0
      %v1706 = vadd.f32 %v1557, %v1705
      %1707 = vmatmul.bf16.gmra.mxu0 %v593
      %v1708 = vpop.f32.mrf.mxu0
      %v1709 = vadd.f32 %v1560, %v1708
      %v1710 = vpop.f32.mrf.mxu0
      %v1711 = vadd.f32 %v1562, %v1710
      %1712 = vmatmul.bf16.gmra.mxu0 %v626
      %v1713 = vpop.f32.mrf.mxu0
      %v1714 = vadd.f32 %v1565, %v1713
      %v1715 = vpop.f32.mrf.mxu0
      %v1716 = vadd.f32 %v1567, %v1715
      %1717 = vmatmul.bf16.gmra.mxu0 %v632
      %v1718 = vpop.f32.mrf.mxu0
      %v1719 = vadd.f32 %v1570, %v1718
      %v1720 = vpop.f32.mrf.mxu0
      %v1721 = vadd.f32 %v1572, %v1720
      %1722 = vmatmul.bf16.gmra.mxu0 %v638
      %v1723 = vpop.f32.mrf.mxu0
      %v1724 = vadd.f32 %v1575, %v1723
      %v1725 = vpop.f32.mrf.mxu0
      %v1726 = vadd.f32 %v1577, %v1725
      %1727 = vdwg.mxu0
      %1728 = vmatpush.bf16.msra.mxu0 %v1050
      %1729 = vmatpush.bf16.msra.mxu0 %v1048
      %1730 = vmatpush.bf16.msra.mxu0 %v1046
      %1731 = vmatpush.bf16.msra.mxu0 %v1044
      %1732 = vmatpush.bf16.msra.mxu0 %v1042
      %1733 = vmatpush.bf16.msra.mxu0 %v1040
      %1734 = vmatpush.bf16.msra.mxu0 %v1038
      %1735 = vmatpush.bf16.msra.mxu0 %v1036
      %1736 = vmatmul.bf16.gmra.mxu0 %v570
      %v1737 = vpop.f32.mrf.mxu0
      %v1738 = vadd.f32 %v1589, %v1737
      %v1739 = vpop.f32.mrf.mxu0
      %v1740 = vadd.f32 %v1591, %v1739
      %1741 = vmatmul.bf16.gmra.mxu0 %v571
      %v1742 = vpop.f32.mrf.mxu0
      %v1743 = vadd.f32 %v1594, %v1742
      %v1744 = vpop.f32.mrf.mxu0
      %v1745 = vadd.f32 %v1596, %v1744
      %1746 = vmatmul.bf16.gmra.mxu0 %v572
      %v1747 = vpop.f32.mrf.mxu0
      %v1748 = vadd.f32 %v1599, %v1747
      %v1749 = vpop.f32.mrf.mxu0
      %v1750 = vadd.f32 %v1601, %v1749
      %1751 = vmatmul.bf16.gmra.mxu0 %v573
      %v1752 = vpop.f32.mrf.mxu0
      %v1753 = vadd.f32 %v1604, %v1752
      %v1754 = vpop.f32.mrf.mxu0
      %v1755 = vadd.f32 %v1606, %v1754
      %1756 = vmatmul.bf16.gmra.mxu0 %v574
      %v1757 = vpop.f32.mrf.mxu0
      %v1758 = vadd.f32 %v1609, %v1757
      %v1759 = vpop.f32.mrf.mxu0
      %v1760 = vadd.f32 %v1611, %v1759
      %1761 = vmatmul.bf16.gmra.mxu0 %v575
      %v1762 = vpop.f32.mrf.mxu0
      %v1763 = vadd.f32 %v1614, %v1762
      %v1764 = vpop.f32.mrf.mxu0
      %v1765 = vadd.f32 %v1616, %v1764
      %1766 = vmatmul.bf16.gmra.mxu0 %v576
      %v1767 = vpop.f32.mrf.mxu0
      %v1768 = vadd.f32 %v1619, %v1767
      %v1769 = vpop.f32.mrf.mxu0
      %v1770 = vadd.f32 %v1621, %v1769
      %1771 = vmatmul.bf16.gmra.mxu0 %v577
      %v1772 = vpop.f32.mrf.mxu0
      %v1773 = vadd.f32 %v1624, %v1772
      %v1774 = vpop.f32.mrf.mxu0
      %v1775 = vadd.f32 %v1626, %v1774
      %1776 = vmatmul.bf16.gmra.mxu0 %v578
      %v1777 = vpop.f32.mrf.mxu0
      %v1778 = vadd.f32 %v1629, %v1777
      %v1779 = vpop.f32.mrf.mxu0
      %v1780 = vadd.f32 %v1631, %v1779
      %1781 = vmatmul.bf16.gmra.mxu0 %v579
      %v1782 = vpop.f32.mrf.mxu0
      %v1783 = vadd.f32 %v1634, %v1782
      %v1784 = vpop.f32.mrf.mxu0
      %v1785 = vadd.f32 %v1636, %v1784
      %1786 = vmatmul.bf16.gmra.mxu0 %v580
      %v1787 = vpop.f32.mrf.mxu0
      %v1788 = vadd.f32 %v1639, %v1787
      %v1789 = vpop.f32.mrf.mxu0
      %v1790 = vadd.f32 %v1641, %v1789
      %1791 = vmatmul.bf16.gmra.mxu0 %v581
      %v1792 = vpop.f32.mrf.mxu0
      %v1793 = vadd.f32 %v1644, %v1792
      %v1794 = vpop.f32.mrf.mxu0
      %v1795 = vadd.f32 %v1646, %v1794
      %1796 = vmatmul.bf16.gmra.mxu0 %v582
      %v1797 = vpop.f32.mrf.mxu0
      %v1798 = vadd.f32 %v1649, %v1797
      %v1799 = vpop.f32.mrf.mxu0
      %v1800 = vadd.f32 %v1651, %v1799
      %1801 = vmatmul.bf16.gmra.mxu0 %v583
      %v1802 = vpop.f32.mrf.mxu0
      %v1803 = vadd.f32 %v1654, %v1802
      %v1804 = vpop.f32.mrf.mxu0
      %v1805 = vadd.f32 %v1656, %v1804
      %1806 = vmatmul.bf16.gmra.mxu0 %v584
      %v1807 = vpop.f32.mrf.mxu0
      %v1808 = vadd.f32 %v1659, %v1807
      %v1809 = vpop.f32.mrf.mxu0
      %v1810 = vadd.f32 %v1661, %v1809
      %1811 = vmatmul.bf16.gmra.mxu0 %v585
      %v1812 = vpop.f32.mrf.mxu0
      %v1813 = vadd.f32 %v1664, %v1812
      %v1814 = vpop.f32.mrf.mxu0
      %v1815 = vadd.f32 %v1666, %v1814
      %1816 = vmatmul.bf16.gmra.mxu0 %v586
      %v1817 = vpop.f32.mrf.mxu0
      %v1818 = vadd.f32 %v1669, %v1817
      %v1819 = vpop.f32.mrf.mxu0
      %v1820 = vadd.f32 %v1671, %v1819
      %1821 = vmatmul.bf16.gmra.mxu0 %v587
      %v1822 = vpop.f32.mrf.mxu0
      %v1823 = vadd.f32 %v1674, %v1822
      %v1824 = vpop.f32.mrf.mxu0
      %v1825 = vadd.f32 %v1676, %v1824
      %1826 = vmatmul.bf16.gmra.mxu0 %v588
      %v1827 = vpop.f32.mrf.mxu0
      %v1828 = vadd.f32 %v1679, %v1827
      %v1829 = vpop.f32.mrf.mxu0
      %v1830 = vadd.f32 %v1681, %v1829
      %1831 = vmatmul.bf16.gmra.mxu0 %v589
      %v1832 = vpop.f32.mrf.mxu0
      %v1833 = vadd.f32 %v1684, %v1832
      %v1834 = vpop.f32.mrf.mxu0
      %v1835 = vadd.f32 %v1686, %v1834
      %1836 = vmatmul.bf16.gmra.mxu0 %v590
      %v1837 = vpop.f32.mrf.mxu0
      %v1838 = vadd.f32 %v1689, %v1837
      %v1839 = vpop.f32.mrf.mxu0
      %v1840 = vadd.f32 %v1691, %v1839
      %1841 = vmatmul.bf16.gmra.mxu0 %v591
      %v1842 = vpop.f32.mrf.mxu0
      %v1843 = vadd.f32 %v1694, %v1842
      %v1844 = vpop.f32.mrf.mxu0
      %v1845 = vadd.f32 %v1696, %v1844
      %1846 = vmatmul.bf16.gmra.mxu0 %v592
      %v1847 = vpop.f32.mrf.mxu0
      %v1848 = vadd.f32 %v1699, %v1847
      %v1849 = vpop.f32.mrf.mxu0
      %v1850 = vadd.f32 %v1701, %v1849
      %1851 = vmatmul.bf16.gmra.mxu0 %v593
      %v1852 = vpop.f32.mrf.mxu0
      %v1853 = vadd.f32 %v1704, %v1852
      %v1854 = vpop.f32.mrf.mxu0
      %v1855 = vadd.f32 %v1706, %v1854
      %1856 = vmatmul.bf16.gmra.mxu0 %v626
      %v1857 = vpop.f32.mrf.mxu0
      %v1858 = vadd.f32 %v1709, %v1857
      %v1859 = vpop.f32.mrf.mxu0
      %v1860 = vadd.f32 %v1711, %v1859
      %1861 = vmatmul.bf16.gmra.mxu0 %v632
      %v1862 = vpop.f32.mrf.mxu0
      %v1863 = vadd.f32 %v1714, %v1862
      %v1864 = vpop.f32.mrf.mxu0
      %v1865 = vadd.f32 %v1716, %v1864
      %1866 = vmatmul.bf16.gmra.mxu0 %v638
      %v1867 = vpop.f32.mrf.mxu0
      %v1868 = vadd.f32 %v1719, %v1867
      %v1869 = vpop.f32.mrf.mxu0
      %v1870 = vadd.f32 %v1721, %v1869
      %1871 = vmatmul.bf16.gmra.mxu0 %v644
      %v1872 = vpop.f32.mrf.mxu0
      %v1873 = vadd.f32 %v1724, %v1872
      %v1874 = vpop.f32.mrf.mxu0
      %v1875 = vadd.f32 %v1726, %v1874
      %1876 = vdwg.mxu0
      %1877 = vmatpush.bf16.msra.mxu0 %v987
      %1878 = vmatpush.bf16.msra.mxu0 %v985
      %1879 = vmatpush.bf16.msra.mxu0 %v983
      %1880 = vmatpush.bf16.msra.mxu0 %v981
      %1881 = vmatpush.bf16.msra.mxu0 %v979
      %1882 = vmatpush.bf16.msra.mxu0 %v977
      %1883 = vmatpush.bf16.msra.mxu0 %v975
      %1884 = vmatpush.bf16.msra.mxu0 %v973
      %1885 = vmatmul.bf16.gmra.mxu0 %v566
      %v1886 = vpop.f32.mrf.mxu0
      %v1887 = vadd.f32 %v729, %v1886
      %v1888 = vpop.f32.mrf.mxu0
      %v1889 = vadd.f32 %v729, %v1888
      %1890 = vmatmul.bf16.gmra.mxu0 %v567
      %v1891 = vpop.f32.mrf.mxu0
      %v1892 = vadd.f32 %v729, %v1891
      %v1893 = vpop.f32.mrf.mxu0
      %v1894 = vadd.f32 %v729, %v1893
      %1895 = vmatmul.bf16.gmra.mxu0 %v568
      %v1896 = vpop.f32.mrf.mxu0
      %v1897 = vadd.f32 %v729, %v1896
      %v1898 = vpop.f32.mrf.mxu0
      %v1899 = vadd.f32 %v729, %v1898
      %1900 = vmatmul.bf16.gmra.mxu0 %v569
      %v1901 = vpop.f32.mrf.mxu0
      %v1902 = vadd.f32 %v729, %v1901
      %v1903 = vpop.f32.mrf.mxu0
      %v1904 = vadd.f32 %v729, %v1903
      %1905 = vmatmul.bf16.gmra.mxu0 %v570
      %v1906 = vpop.f32.mrf.mxu0
      %v1907 = vadd.f32 %v729, %v1906
      %v1908 = vpop.f32.mrf.mxu0
      %v1909 = vadd.f32 %v729, %v1908
      %1910 = vmatmul.bf16.gmra.mxu0 %v571
      %v1911 = vpop.f32.mrf.mxu0
      %v1912 = vadd.f32 %v729, %v1911
      %v1913 = vpop.f32.mrf.mxu0
      %v1914 = vadd.f32 %v729, %v1913
      %1915 = vmatmul.bf16.gmra.mxu0 %v572
      %v1916 = vpop.f32.mrf.mxu0
      %v1917 = vadd.f32 %v729, %v1916
      %v1918 = vpop.f32.mrf.mxu0
      %v1919 = vadd.f32 %v729, %v1918
      %1920 = vmatmul.bf16.gmra.mxu0 %v573
      %v1921 = vpop.f32.mrf.mxu0
      %v1922 = vadd.f32 %v729, %v1921
      %v1923 = vpop.f32.mrf.mxu0
      %v1924 = vadd.f32 %v729, %v1923
      %1925 = vmatmul.bf16.gmra.mxu0 %v574
      %v1926 = vpop.f32.mrf.mxu0
      %v1927 = vadd.f32 %v729, %v1926
      %v1928 = vpop.f32.mrf.mxu0
      %v1929 = vadd.f32 %v729, %v1928
      %1930 = vmatmul.bf16.gmra.mxu0 %v575
      %v1931 = vpop.f32.mrf.mxu0
      %v1932 = vadd.f32 %v729, %v1931
      %v1933 = vpop.f32.mrf.mxu0
      %v1934 = vadd.f32 %v729, %v1933
      %1935 = vmatmul.bf16.gmra.mxu0 %v576
      %v1936 = vpop.f32.mrf.mxu0
      %v1937 = vadd.f32 %v729, %v1936
      %v1938 = vpop.f32.mrf.mxu0
      %v1939 = vadd.f32 %v729, %v1938
      %1940 = vmatmul.bf16.gmra.mxu0 %v577
      %v1941 = vpop.f32.mrf.mxu0
      %v1942 = vadd.f32 %v729, %v1941
      %v1943 = vpop.f32.mrf.mxu0
      %v1944 = vadd.f32 %v729, %v1943
      %1945 = vmatmul.bf16.gmra.mxu0 %v578
      %v1946 = vpop.f32.mrf.mxu0
      %v1947 = vadd.f32 %v729, %v1946
      %v1948 = vpop.f32.mrf.mxu0
      %v1949 = vadd.f32 %v729, %v1948
      %1950 = vmatmul.bf16.gmra.mxu0 %v579
      %v1951 = vpop.f32.mrf.mxu0
      %v1952 = vadd.f32 %v729, %v1951
      %v1953 = vpop.f32.mrf.mxu0
      %v1954 = vadd.f32 %v729, %v1953
      %1955 = vmatmul.bf16.gmra.mxu0 %v580
      %v1956 = vpop.f32.mrf.mxu0
      %v1957 = vadd.f32 %v729, %v1956
      %v1958 = vpop.f32.mrf.mxu0
      %v1959 = vadd.f32 %v729, %v1958
      %1960 = vmatmul.bf16.gmra.mxu0 %v581
      %v1961 = vpop.f32.mrf.mxu0
      %v1962 = vadd.f32 %v729, %v1961
      %v1963 = vpop.f32.mrf.mxu0
      %v1964 = vadd.f32 %v729, %v1963
      %1965 = vmatmul.bf16.gmra.mxu0 %v582
      %v1966 = vpop.f32.mrf.mxu0
      %v1967 = vadd.f32 %v729, %v1966
      %v1968 = vpop.f32.mrf.mxu0
      %v1969 = vadd.f32 %v729, %v1968
      %1970 = vmatmul.bf16.gmra.mxu0 %v583
      %v1971 = vpop.f32.mrf.mxu0
      %v1972 = vadd.f32 %v729, %v1971
      %v1973 = vpop.f32.mrf.mxu0
      %v1974 = vadd.f32 %v729, %v1973
      %1975 = vmatmul.bf16.gmra.mxu0 %v584
      %v1976 = vpop.f32.mrf.mxu0
      %v1977 = vadd.f32 %v729, %v1976
      %v1978 = vpop.f32.mrf.mxu0
      %v1979 = vadd.f32 %v729, %v1978
      %1980 = vmatmul.bf16.gmra.mxu0 %v585
      %v1981 = vpop.f32.mrf.mxu0
      %v1982 = vadd.f32 %v729, %v1981
      %v1983 = vpop.f32.mrf.mxu0
      %v1984 = vadd.f32 %v729, %v1983
      %1985 = vmatmul.bf16.gmra.mxu0 %v586
      %v1986 = vpop.f32.mrf.mxu0
      %v1987 = vadd.f32 %v729, %v1986
      %v1988 = vpop.f32.mrf.mxu0
      %v1989 = vadd.f32 %v729, %v1988
      %1990 = vmatmul.bf16.gmra.mxu0 %v587
      %v1991 = vpop.f32.mrf.mxu0
      %v1992 = vadd.f32 %v729, %v1991
      %v1993 = vpop.f32.mrf.mxu0
      %v1994 = vadd.f32 %v729, %v1993
      %1995 = vmatmul.bf16.gmra.mxu0 %v588
      %v1996 = vpop.f32.mrf.mxu0
      %v1997 = vadd.f32 %v729, %v1996
      %v1998 = vpop.f32.mrf.mxu0
      %v1999 = vadd.f32 %v729, %v1998
      %2000 = vmatmul.bf16.gmra.mxu0 %v589
      %v2001 = vpop.f32.mrf.mxu0
      %v2002 = vadd.f32 %v729, %v2001
      %v2003 = vpop.f32.mrf.mxu0
      %v2004 = vadd.f32 %v729, %v2003
      %2005 = vmatmul.bf16.gmra.mxu0 %v590
      %v2006 = vpop.f32.mrf.mxu0
      %v2007 = vadd.f32 %v729, %v2006
      %v2008 = vpop.f32.mrf.mxu0
      %v2009 = vadd.f32 %v729, %v2008
      %2010 = vmatmul.bf16.gmra.mxu0 %v591
      %v2011 = vpop.f32.mrf.mxu0
      %v2012 = vadd.f32 %v729, %v2011
      %v2013 = vpop.f32.mrf.mxu0
      %v2014 = vadd.f32 %v729, %v2013
      %2015 = vmatmul.bf16.gmra.mxu0 %v592
      %v2016 = vpop.f32.mrf.mxu0
      %v2017 = vadd.f32 %v729, %v2016
      %v2018 = vpop.f32.mrf.mxu0
      %v2019 = vadd.f32 %v729, %v2018
      %2020 = vmatmul.bf16.gmra.mxu0 %v593
      %v2021 = vpop.f32.mrf.mxu0
      %v2022 = vadd.f32 %v729, %v2021
      %v2023 = vpop.f32.mrf.mxu0
      %v2024 = vadd.f32 %v729, %v2023
      %2025 = vdwg.mxu0
      %2026 = vmatpush.bf16.msra.mxu0 %v1003
      %2027 = vmatpush.bf16.msra.mxu0 %v1001
      %2028 = vmatpush.bf16.msra.mxu0 %v999
      %2029 = vmatpush.bf16.msra.mxu0 %v997
      %2030 = vmatpush.bf16.msra.mxu0 %v995
      %2031 = vmatpush.bf16.msra.mxu0 %v993
      %2032 = vmatpush.bf16.msra.mxu0 %v991
      %2033 = vmatpush.bf16.msra.mxu0 %v989
      %2034 = vmatmul.bf16.gmra.mxu0 %v567
      %v2035 = vpop.f32.mrf.mxu0
      %v2036 = vadd.f32 %v1887, %v2035
      %v2037 = vpop.f32.mrf.mxu0
      %v2038 = vadd.f32 %v1889, %v2037
      %2039 = vmatmul.bf16.gmra.mxu0 %v568
      %v2040 = vpop.f32.mrf.mxu0
      %v2041 = vadd.f32 %v1892, %v2040
      %v2042 = vpop.f32.mrf.mxu0
      %v2043 = vadd.f32 %v1894, %v2042
      %2044 = vmatmul.bf16.gmra.mxu0 %v569
      %v2045 = vpop.f32.mrf.mxu0
      %v2046 = vadd.f32 %v1897, %v2045
      %v2047 = vpop.f32.mrf.mxu0
      %v2048 = vadd.f32 %v1899, %v2047
      %2049 = vmatmul.bf16.gmra.mxu0 %v570
      %v2050 = vpop.f32.mrf.mxu0
      %v2051 = vadd.f32 %v1902, %v2050
      %v2052 = vpop.f32.mrf.mxu0
      %v2053 = vadd.f32 %v1904, %v2052
      %2054 = vmatmul.bf16.gmra.mxu0 %v571
      %v2055 = vpop.f32.mrf.mxu0
      %v2056 = vadd.f32 %v1907, %v2055
      %v2057 = vpop.f32.mrf.mxu0
      %v2058 = vadd.f32 %v1909, %v2057
      %2059 = vmatmul.bf16.gmra.mxu0 %v572
      %v2060 = vpop.f32.mrf.mxu0
      %v2061 = vadd.f32 %v1912, %v2060
      %v2062 = vpop.f32.mrf.mxu0
      %v2063 = vadd.f32 %v1914, %v2062
      %2064 = vmatmul.bf16.gmra.mxu0 %v573
      %v2065 = vpop.f32.mrf.mxu0
      %v2066 = vadd.f32 %v1917, %v2065
      %v2067 = vpop.f32.mrf.mxu0
      %v2068 = vadd.f32 %v1919, %v2067
      %2069 = vmatmul.bf16.gmra.mxu0 %v574
      %v2070 = vpop.f32.mrf.mxu0
      %v2071 = vadd.f32 %v1922, %v2070
      %v2072 = vpop.f32.mrf.mxu0
      %v2073 = vadd.f32 %v1924, %v2072
      %2074 = vmatmul.bf16.gmra.mxu0 %v575
      %v2075 = vpop.f32.mrf.mxu0
      %v2076 = vadd.f32 %v1927, %v2075
      %v2077 = vpop.f32.mrf.mxu0
      %v2078 = vadd.f32 %v1929, %v2077
      %2079 = vmatmul.bf16.gmra.mxu0 %v576
      %v2080 = vpop.f32.mrf.mxu0
      %v2081 = vadd.f32 %v1932, %v2080
      %v2082 = vpop.f32.mrf.mxu0
      %v2083 = vadd.f32 %v1934, %v2082
      %2084 = vmatmul.bf16.gmra.mxu0 %v577
      %v2085 = vpop.f32.mrf.mxu0
      %v2086 = vadd.f32 %v1937, %v2085
      %v2087 = vpop.f32.mrf.mxu0
      %v2088 = vadd.f32 %v1939, %v2087
      %2089 = vmatmul.bf16.gmra.mxu0 %v578
      %v2090 = vpop.f32.mrf.mxu0
      %v2091 = vadd.f32 %v1942, %v2090
      %v2092 = vpop.f32.mrf.mxu0
      %v2093 = vadd.f32 %v1944, %v2092
      %2094 = vmatmul.bf16.gmra.mxu0 %v579
      %v2095 = vpop.f32.mrf.mxu0
      %v2096 = vadd.f32 %v1947, %v2095
      %v2097 = vpop.f32.mrf.mxu0
      %v2098 = vadd.f32 %v1949, %v2097
      %2099 = vmatmul.bf16.gmra.mxu0 %v580
      %v2100 = vpop.f32.mrf.mxu0
      %v2101 = vadd.f32 %v1952, %v2100
      %v2102 = vpop.f32.mrf.mxu0
      %v2103 = vadd.f32 %v1954, %v2102
      %2104 = vmatmul.bf16.gmra.mxu0 %v581
      %v2105 = vpop.f32.mrf.mxu0
      %v2106 = vadd.f32 %v1957, %v2105
      %v2107 = vpop.f32.mrf.mxu0
      %v2108 = vadd.f32 %v1959, %v2107
      %2109 = vmatmul.bf16.gmra.mxu0 %v582
      %v2110 = vpop.f32.mrf.mxu0
      %v2111 = vadd.f32 %v1962, %v2110
      %v2112 = vpop.f32.mrf.mxu0
      %v2113 = vadd.f32 %v1964, %v2112
      %2114 = vmatmul.bf16.gmra.mxu0 %v583
      %v2115 = vpop.f32.mrf.mxu0
      %v2116 = vadd.f32 %v1967, %v2115
      %v2117 = vpop.f32.mrf.mxu0
      %v2118 = vadd.f32 %v1969, %v2117
      %2119 = vmatmul.bf16.gmra.mxu0 %v584
      %v2120 = vpop.f32.mrf.mxu0
      %v2121 = vadd.f32 %v1972, %v2120
      %v2122 = vpop.f32.mrf.mxu0
      %v2123 = vadd.f32 %v1974, %v2122
      %2124 = vmatmul.bf16.gmra.mxu0 %v585
      %v2125 = vpop.f32.mrf.mxu0
      %v2126 = vadd.f32 %v1977, %v2125
      %v2127 = vpop.f32.mrf.mxu0
      %v2128 = vadd.f32 %v1979, %v2127
      %2129 = vmatmul.bf16.gmra.mxu0 %v586
      %v2130 = vpop.f32.mrf.mxu0
      %v2131 = vadd.f32 %v1982, %v2130
      %v2132 = vpop.f32.mrf.mxu0
      %v2133 = vadd.f32 %v1984, %v2132
      %2134 = vmatmul.bf16.gmra.mxu0 %v587
      %v2135 = vpop.f32.mrf.mxu0
      %v2136 = vadd.f32 %v1987, %v2135
      %v2137 = vpop.f32.mrf.mxu0
      %v2138 = vadd.f32 %v1989, %v2137
      %2139 = vmatmul.bf16.gmra.mxu0 %v588
      %v2140 = vpop.f32.mrf.mxu0
      %v2141 = vadd.f32 %v1992, %v2140
      %v2142 = vpop.f32.mrf.mxu0
      %v2143 = vadd.f32 %v1994, %v2142
      %2144 = vmatmul.bf16.gmra.mxu0 %v589
      %v2145 = vpop.f32.mrf.mxu0
      %v2146 = vadd.f32 %v1997, %v2145
      %v2147 = vpop.f32.mrf.mxu0
      %v2148 = vadd.f32 %v1999, %v2147
      %2149 = vmatmul.bf16.gmra.mxu0 %v590
      %v2150 = vpop.f32.mrf.mxu0
      %v2151 = vadd.f32 %v2002, %v2150
      %v2152 = vpop.f32.mrf.mxu0
      %v2153 = vadd.f32 %v2004, %v2152
      %2154 = vmatmul.bf16.gmra.mxu0 %v591
      %v2155 = vpop.f32.mrf.mxu0
      %v2156 = vadd.f32 %v2007, %v2155
      %v2157 = vpop.f32.mrf.mxu0
      %v2158 = vadd.f32 %v2009, %v2157
      %2159 = vmatmul.bf16.gmra.mxu0 %v592
      %v2160 = vpop.f32.mrf.mxu0
      %v2161 = vadd.f32 %v2012, %v2160
      %v2162 = vpop.f32.mrf.mxu0
      %v2163 = vadd.f32 %v2014, %v2162
      %2164 = vmatmul.bf16.gmra.mxu0 %v593
      %v2165 = vpop.f32.mrf.mxu0
      %v2166 = vadd.f32 %v2017, %v2165
      %v2167 = vpop.f32.mrf.mxu0
      %v2168 = vadd.f32 %v2019, %v2167
      %2169 = vmatmul.bf16.gmra.mxu0 %v626
      %v2170 = vpop.f32.mrf.mxu0
      %v2171 = vadd.f32 %v2022, %v2170
      %v2172 = vpop.f32.mrf.mxu0
      %v2173 = vadd.f32 %v2024, %v2172
      %2174 = vdwg.mxu0
      %2175 = vmatpush.bf16.msra.mxu0 %v1019
      %2176 = vmatpush.bf16.msra.mxu0 %v1017
      %2177 = vmatpush.bf16.msra.mxu0 %v1015
      %2178 = vmatpush.bf16.msra.mxu0 %v1013
      %2179 = vmatpush.bf16.msra.mxu0 %v1011
      %2180 = vmatpush.bf16.msra.mxu0 %v1009
      %2181 = vmatpush.bf16.msra.mxu0 %v1007
      %2182 = vmatpush.bf16.msra.mxu0 %v1005
      %2183 = vmatmul.bf16.gmra.mxu0 %v568
      %v2184 = vpop.f32.mrf.mxu0
      %v2185 = vadd.f32 %v2036, %v2184
      %v2186 = vpop.f32.mrf.mxu0
      %v2187 = vadd.f32 %v2038, %v2186
      %2188 = vmatmul.bf16.gmra.mxu0 %v569
      %v2189 = vpop.f32.mrf.mxu0
      %v2190 = vadd.f32 %v2041, %v2189
      %v2191 = vpop.f32.mrf.mxu0
      %v2192 = vadd.f32 %v2043, %v2191
      %2193 = vmatmul.bf16.gmra.mxu0 %v570
      %v2194 = vpop.f32.mrf.mxu0
      %v2195 = vadd.f32 %v2046, %v2194
      %v2196 = vpop.f32.mrf.mxu0
      %v2197 = vadd.f32 %v2048, %v2196
      %2198 = vmatmul.bf16.gmra.mxu0 %v571
      %v2199 = vpop.f32.mrf.mxu0
      %v2200 = vadd.f32 %v2051, %v2199
      %v2201 = vpop.f32.mrf.mxu0
      %v2202 = vadd.f32 %v2053, %v2201
      %2203 = vmatmul.bf16.gmra.mxu0 %v572
      %v2204 = vpop.f32.mrf.mxu0
      %v2205 = vadd.f32 %v2056, %v2204
      %v2206 = vpop.f32.mrf.mxu0
      %v2207 = vadd.f32 %v2058, %v2206
      %2208 = vmatmul.bf16.gmra.mxu0 %v573
      %v2209 = vpop.f32.mrf.mxu0
      %v2210 = vadd.f32 %v2061, %v2209
      %v2211 = vpop.f32.mrf.mxu0
      %v2212 = vadd.f32 %v2063, %v2211
      %2213 = vmatmul.bf16.gmra.mxu0 %v574
      %v2214 = vpop.f32.mrf.mxu0
      %v2215 = vadd.f32 %v2066, %v2214
      %v2216 = vpop.f32.mrf.mxu0
      %v2217 = vadd.f32 %v2068, %v2216
      %2218 = vmatmul.bf16.gmra.mxu0 %v575
      %v2219 = vpop.f32.mrf.mxu0
      %v2220 = vadd.f32 %v2071, %v2219
      %v2221 = vpop.f32.mrf.mxu0
      %v2222 = vadd.f32 %v2073, %v2221
      %2223 = vmatmul.bf16.gmra.mxu0 %v576
      %v2224 = vpop.f32.mrf.mxu0
      %v2225 = vadd.f32 %v2076, %v2224
      %v2226 = vpop.f32.mrf.mxu0
      %v2227 = vadd.f32 %v2078, %v2226
      %2228 = vmatmul.bf16.gmra.mxu0 %v577
      %v2229 = vpop.f32.mrf.mxu0
      %v2230 = vadd.f32 %v2081, %v2229
      %v2231 = vpop.f32.mrf.mxu0
      %v2232 = vadd.f32 %v2083, %v2231
      %2233 = vmatmul.bf16.gmra.mxu0 %v578
      %v2234 = vpop.f32.mrf.mxu0
      %v2235 = vadd.f32 %v2086, %v2234
      %v2236 = vpop.f32.mrf.mxu0
      %v2237 = vadd.f32 %v2088, %v2236
      %2238 = vmatmul.bf16.gmra.mxu0 %v579
      %v2239 = vpop.f32.mrf.mxu0
      %v2240 = vadd.f32 %v2091, %v2239
      %v2241 = vpop.f32.mrf.mxu0
      %v2242 = vadd.f32 %v2093, %v2241
      %2243 = vmatmul.bf16.gmra.mxu0 %v580
      %v2244 = vpop.f32.mrf.mxu0
      %v2245 = vadd.f32 %v2096, %v2244
      %v2246 = vpop.f32.mrf.mxu0
      %v2247 = vadd.f32 %v2098, %v2246
      %2248 = vmatmul.bf16.gmra.mxu0 %v581
      %v2249 = vpop.f32.mrf.mxu0
      %v2250 = vadd.f32 %v2101, %v2249
      %v2251 = vpop.f32.mrf.mxu0
      %v2252 = vadd.f32 %v2103, %v2251
      %2253 = vmatmul.bf16.gmra.mxu0 %v582
      %v2254 = vpop.f32.mrf.mxu0
      %v2255 = vadd.f32 %v2106, %v2254
      %v2256 = vpop.f32.mrf.mxu0
      %v2257 = vadd.f32 %v2108, %v2256
      %2258 = vmatmul.bf16.gmra.mxu0 %v583
      %v2259 = vpop.f32.mrf.mxu0
      %v2260 = vadd.f32 %v2111, %v2259
      %v2261 = vpop.f32.mrf.mxu0
      %v2262 = vadd.f32 %v2113, %v2261
      %2263 = vmatmul.bf16.gmra.mxu0 %v584
      %v2264 = vpop.f32.mrf.mxu0
      %v2265 = vadd.f32 %v2116, %v2264
      %v2266 = vpop.f32.mrf.mxu0
      %v2267 = vadd.f32 %v2118, %v2266
      %2268 = vmatmul.bf16.gmra.mxu0 %v585
      %v2269 = vpop.f32.mrf.mxu0
      %v2270 = vadd.f32 %v2121, %v2269
      %v2271 = vpop.f32.mrf.mxu0
      %v2272 = vadd.f32 %v2123, %v2271
      %2273 = vmatmul.bf16.gmra.mxu0 %v586
      %v2274 = vpop.f32.mrf.mxu0
      %v2275 = vadd.f32 %v2126, %v2274
      %v2276 = vpop.f32.mrf.mxu0
      %v2277 = vadd.f32 %v2128, %v2276
      %2278 = vmatmul.bf16.gmra.mxu0 %v587
      %v2279 = vpop.f32.mrf.mxu0
      %v2280 = vadd.f32 %v2131, %v2279
      %v2281 = vpop.f32.mrf.mxu0
      %v2282 = vadd.f32 %v2133, %v2281
      %2283 = vmatmul.bf16.gmra.mxu0 %v588
      %v2284 = vpop.f32.mrf.mxu0
      %v2285 = vadd.f32 %v2136, %v2284
      %v2286 = vpop.f32.mrf.mxu0
      %v2287 = vadd.f32 %v2138, %v2286
      %2288 = vmatmul.bf16.gmra.mxu0 %v589
      %v2289 = vpop.f32.mrf.mxu0
      %v2290 = vadd.f32 %v2141, %v2289
      %v2291 = vpop.f32.mrf.mxu0
      %v2292 = vadd.f32 %v2143, %v2291
      %2293 = vmatmul.bf16.gmra.mxu0 %v590
      %v2294 = vpop.f32.mrf.mxu0
      %v2295 = vadd.f32 %v2146, %v2294
      %v2296 = vpop.f32.mrf.mxu0
      %v2297 = vadd.f32 %v2148, %v2296
      %2298 = vmatmul.bf16.gmra.mxu0 %v591
      %v2299 = vpop.f32.mrf.mxu0
      %v2300 = vadd.f32 %v2151, %v2299
      %v2301 = vpop.f32.mrf.mxu0
      %v2302 = vadd.f32 %v2153, %v2301
      %2303 = vmatmul.bf16.gmra.mxu0 %v592
      %v2304 = vpop.f32.mrf.mxu0
      %v2305 = vadd.f32 %v2156, %v2304
      %v2306 = vpop.f32.mrf.mxu0
      %v2307 = vadd.f32 %v2158, %v2306
      %2308 = vmatmul.bf16.gmra.mxu0 %v593
      %v2309 = vpop.f32.mrf.mxu0
      %v2310 = vadd.f32 %v2161, %v2309
      %v2311 = vpop.f32.mrf.mxu0
      %v2312 = vadd.f32 %v2163, %v2311
      %2313 = vmatmul.bf16.gmra.mxu0 %v626
      %v2314 = vpop.f32.mrf.mxu0
      %v2315 = vadd.f32 %v2166, %v2314
      %v2316 = vpop.f32.mrf.mxu0
      %v2317 = vadd.f32 %v2168, %v2316
      %2318 = vmatmul.bf16.gmra.mxu0 %v632
      %v2319 = vpop.f32.mrf.mxu0
      %v2320 = vadd.f32 %v2171, %v2319
      %v2321 = vpop.f32.mrf.mxu0
      %v2322 = vadd.f32 %v2173, %v2321
      %2323 = vdwg.mxu0
      %2324 = vmatpush.bf16.msra.mxu0 %v1035
      %2325 = vmatpush.bf16.msra.mxu0 %v1033
      %2326 = vmatpush.bf16.msra.mxu0 %v1031
      %2327 = vmatpush.bf16.msra.mxu0 %v1029
      %2328 = vmatpush.bf16.msra.mxu0 %v1027
      %2329 = vmatpush.bf16.msra.mxu0 %v1025
      %2330 = vmatpush.bf16.msra.mxu0 %v1023
      %2331 = vmatpush.bf16.msra.mxu0 %v1021
      %2332 = vmatmul.bf16.gmra.mxu0 %v569
      %v2333 = vpop.f32.mrf.mxu0
      %v2334 = vadd.f32 %v2185, %v2333
      %v2335 = vpop.f32.mrf.mxu0
      %v2336 = vadd.f32 %v2187, %v2335
      %2337 = vmatmul.bf16.gmra.mxu0 %v570
      %v2338 = vpop.f32.mrf.mxu0
      %v2339 = vadd.f32 %v2190, %v2338
      %v2340 = vpop.f32.mrf.mxu0
      %v2341 = vadd.f32 %v2192, %v2340
      %2342 = vmatmul.bf16.gmra.mxu0 %v571
      %v2343 = vpop.f32.mrf.mxu0
      %v2344 = vadd.f32 %v2195, %v2343
      %v2345 = vpop.f32.mrf.mxu0
      %v2346 = vadd.f32 %v2197, %v2345
      %2347 = vmatmul.bf16.gmra.mxu0 %v572
      %v2348 = vpop.f32.mrf.mxu0
      %v2349 = vadd.f32 %v2200, %v2348
      %v2350 = vpop.f32.mrf.mxu0
      %v2351 = vadd.f32 %v2202, %v2350
      %2352 = vmatmul.bf16.gmra.mxu0 %v573
      %v2353 = vpop.f32.mrf.mxu0
      %v2354 = vadd.f32 %v2205, %v2353
      %v2355 = vpop.f32.mrf.mxu0
      %v2356 = vadd.f32 %v2207, %v2355
      %2357 = vmatmul.bf16.gmra.mxu0 %v574
      %v2358 = vpop.f32.mrf.mxu0
      %v2359 = vadd.f32 %v2210, %v2358
      %v2360 = vpop.f32.mrf.mxu0
      %v2361 = vadd.f32 %v2212, %v2360
      %2362 = vmatmul.bf16.gmra.mxu0 %v575
      %v2363 = vpop.f32.mrf.mxu0
      %v2364 = vadd.f32 %v2215, %v2363
      %v2365 = vpop.f32.mrf.mxu0
      %v2366 = vadd.f32 %v2217, %v2365
      %2367 = vmatmul.bf16.gmra.mxu0 %v576
      %v2368 = vpop.f32.mrf.mxu0
      %v2369 = vadd.f32 %v2220, %v2368
      %v2370 = vpop.f32.mrf.mxu0
      %v2371 = vadd.f32 %v2222, %v2370
      %2372 = vmatmul.bf16.gmra.mxu0 %v577
      %v2373 = vpop.f32.mrf.mxu0
      %v2374 = vadd.f32 %v2225, %v2373
      %v2375 = vpop.f32.mrf.mxu0
      %v2376 = vadd.f32 %v2227, %v2375
      %2377 = vmatmul.bf16.gmra.mxu0 %v578
      %v2378 = vpop.f32.mrf.mxu0
      %v2379 = vadd.f32 %v2230, %v2378
      %v2380 = vpop.f32.mrf.mxu0
      %v2381 = vadd.f32 %v2232, %v2380
      %2382 = vmatmul.bf16.gmra.mxu0 %v579
      %v2383 = vpop.f32.mrf.mxu0
      %v2384 = vadd.f32 %v2235, %v2383
      %v2385 = vpop.f32.mrf.mxu0
      %v2386 = vadd.f32 %v2237, %v2385
      %2387 = vmatmul.bf16.gmra.mxu0 %v580
      %v2388 = vpop.f32.mrf.mxu0
      %v2389 = vadd.f32 %v2240, %v2388
      %v2390 = vpop.f32.mrf.mxu0
      %v2391 = vadd.f32 %v2242, %v2390
      %2392 = vmatmul.bf16.gmra.mxu0 %v581
      %v2393 = vpop.f32.mrf.mxu0
      %v2394 = vadd.f32 %v2245, %v2393
      %v2395 = vpop.f32.mrf.mxu0
      %v2396 = vadd.f32 %v2247, %v2395
      %2397 = vmatmul.bf16.gmra.mxu0 %v582
      %v2398 = vpop.f32.mrf.mxu0
      %v2399 = vadd.f32 %v2250, %v2398
      %v2400 = vpop.f32.mrf.mxu0
      %v2401 = vadd.f32 %v2252, %v2400
      %2402 = vmatmul.bf16.gmra.mxu0 %v583
      %v2403 = vpop.f32.mrf.mxu0
      %v2404 = vadd.f32 %v2255, %v2403
      %v2405 = vpop.f32.mrf.mxu0
      %v2406 = vadd.f32 %v2257, %v2405
      %2407 = vmatmul.bf16.gmra.mxu0 %v584
      %v2408 = vpop.f32.mrf.mxu0
      %v2409 = vadd.f32 %v2260, %v2408
      %v2410 = vpop.f32.mrf.mxu0
      %v2411 = vadd.f32 %v2262, %v2410
      %2412 = vmatmul.bf16.gmra.mxu0 %v585
      %v2413 = vpop.f32.mrf.mxu0
      %v2414 = vadd.f32 %v2265, %v2413
      %v2415 = vpop.f32.mrf.mxu0
      %v2416 = vadd.f32 %v2267, %v2415
      %2417 = vmatmul.bf16.gmra.mxu0 %v586
      %v2418 = vpop.f32.mrf.mxu0
      %v2419 = vadd.f32 %v2270, %v2418
      %v2420 = vpop.f32.mrf.mxu0
      %v2421 = vadd.f32 %v2272, %v2420
      %2422 = vmatmul.bf16.gmra.mxu0 %v587
      %v2423 = vpop.f32.mrf.mxu0
      %v2424 = vadd.f32 %v2275, %v2423
      %v2425 = vpop.f32.mrf.mxu0
      %v2426 = vadd.f32 %v2277, %v2425
      %2427 = vmatmul.bf16.gmra.mxu0 %v588
      %v2428 = vpop.f32.mrf.mxu0
      %v2429 = vadd.f32 %v2280, %v2428
      %v2430 = vpop.f32.mrf.mxu0
      %v2431 = vadd.f32 %v2282, %v2430
      %2432 = vmatmul.bf16.gmra.mxu0 %v589
      %v2433 = vpop.f32.mrf.mxu0
      %v2434 = vadd.f32 %v2285, %v2433
      %v2435 = vpop.f32.mrf.mxu0
      %v2436 = vadd.f32 %v2287, %v2435
      %2437 = vmatmul.bf16.gmra.mxu0 %v590
      %v2438 = vpop.f32.mrf.mxu0
      %v2439 = vadd.f32 %v2290, %v2438
      %v2440 = vpop.f32.mrf.mxu0
      %v2441 = vadd.f32 %v2292, %v2440
      %2442 = vmatmul.bf16.gmra.mxu0 %v591
      %v2443 = vpop.f32.mrf.mxu0
      %v2444 = vadd.f32 %v2295, %v2443
      %v2445 = vpop.f32.mrf.mxu0
      %v2446 = vadd.f32 %v2297, %v2445
      %2447 = vmatmul.bf16.gmra.mxu0 %v592
      %v2448 = vpop.f32.mrf.mxu0
      %v2449 = vadd.f32 %v2300, %v2448
      %v2450 = vpop.f32.mrf.mxu0
      %v2451 = vadd.f32 %v2302, %v2450
      %2452 = vmatmul.bf16.gmra.mxu0 %v593
      %v2453 = vpop.f32.mrf.mxu0
      %v2454 = vadd.f32 %v2305, %v2453
      %v2455 = vpop.f32.mrf.mxu0
      %v2456 = vadd.f32 %v2307, %v2455
      %2457 = vmatmul.bf16.gmra.mxu0 %v626
      %v2458 = vpop.f32.mrf.mxu0
      %v2459 = vadd.f32 %v2310, %v2458
      %v2460 = vpop.f32.mrf.mxu0
      %v2461 = vadd.f32 %v2312, %v2460
      %2462 = vmatmul.bf16.gmra.mxu0 %v632
      %v2463 = vpop.f32.mrf.mxu0
      %v2464 = vadd.f32 %v2315, %v2463
      %v2465 = vpop.f32.mrf.mxu0
      %v2466 = vadd.f32 %v2317, %v2465
      %2467 = vmatmul.bf16.gmra.mxu0 %v638
      %v2468 = vpop.f32.mrf.mxu0
      %v2469 = vadd.f32 %v2320, %v2468
      %v2470 = vpop.f32.mrf.mxu0
      %v2471 = vadd.f32 %v2322, %v2470
      %2472 = vdwg.mxu0
      %2473 = vmatpush.bf16.msra.mxu0 %v1051
      %2474 = vmatpush.bf16.msra.mxu0 %v1049
      %2475 = vmatpush.bf16.msra.mxu0 %v1047
      %2476 = vmatpush.bf16.msra.mxu0 %v1045
      %2477 = vmatpush.bf16.msra.mxu0 %v1043
      %2478 = vmatpush.bf16.msra.mxu0 %v1041
      %2479 = vmatpush.bf16.msra.mxu0 %v1039
      %2480 = vmatpush.bf16.msra.mxu0 %v1037
      %2481 = vmatmul.bf16.gmra.mxu0 %v570
      %v2482 = vpop.f32.mrf.mxu0
      %v2483 = vadd.f32 %v2334, %v2482
      %v2484 = vpop.f32.mrf.mxu0
      %v2485 = vadd.f32 %v2336, %v2484
      %2486 = vmatmul.bf16.gmra.mxu0 %v571
      %v2487 = vpop.f32.mrf.mxu0
      %v2488 = vadd.f32 %v2339, %v2487
      %v2489 = vpop.f32.mrf.mxu0
      %v2490 = vadd.f32 %v2341, %v2489
      %2491 = vmatmul.bf16.gmra.mxu0 %v572
      %v2492 = vpop.f32.mrf.mxu0
      %v2493 = vadd.f32 %v2344, %v2492
      %v2494 = vpop.f32.mrf.mxu0
      %v2495 = vadd.f32 %v2346, %v2494
      %2496 = vmatmul.bf16.gmra.mxu0 %v573
      %v2497 = vpop.f32.mrf.mxu0
      %v2498 = vadd.f32 %v2349, %v2497
      %v2499 = vpop.f32.mrf.mxu0
      %v2500 = vadd.f32 %v2351, %v2499
      %2501 = vmatmul.bf16.gmra.mxu0 %v574
      %v2502 = vpop.f32.mrf.mxu0
      %v2503 = vadd.f32 %v2354, %v2502
      %v2504 = vpop.f32.mrf.mxu0
      %v2505 = vadd.f32 %v2356, %v2504
      %2506 = vmatmul.bf16.gmra.mxu0 %v575
      %v2507 = vpop.f32.mrf.mxu0
      %v2508 = vadd.f32 %v2359, %v2507
      %v2509 = vpop.f32.mrf.mxu0
      %v2510 = vadd.f32 %v2361, %v2509
      %2511 = vmatmul.bf16.gmra.mxu0 %v576
      %v2512 = vpop.f32.mrf.mxu0
      %v2513 = vadd.f32 %v2364, %v2512
      %v2514 = vpop.f32.mrf.mxu0
      %v2515 = vadd.f32 %v2366, %v2514
      %2516 = vmatmul.bf16.gmra.mxu0 %v577
      %v2517 = vpop.f32.mrf.mxu0
      %v2518 = vadd.f32 %v2369, %v2517
      %v2519 = vpop.f32.mrf.mxu0
      %v2520 = vadd.f32 %v2371, %v2519
      %2521 = vmatmul.bf16.gmra.mxu0 %v578
      %v2522 = vpop.f32.mrf.mxu0
      %v2523 = vadd.f32 %v2374, %v2522
      %v2524 = vpop.f32.mrf.mxu0
      %v2525 = vadd.f32 %v2376, %v2524
      %2526 = vmatmul.bf16.gmra.mxu0 %v579
      %v2527 = vpop.f32.mrf.mxu0
      %v2528 = vadd.f32 %v2379, %v2527
      %v2529 = vpop.f32.mrf.mxu0
      %v2530 = vadd.f32 %v2381, %v2529
      %2531 = vmatmul.bf16.gmra.mxu0 %v580
      %v2532 = vpop.f32.mrf.mxu0
      %v2533 = vadd.f32 %v2384, %v2532
      %v2534 = vpop.f32.mrf.mxu0
      %v2535 = vadd.f32 %v2386, %v2534
      %2536 = vmatmul.bf16.gmra.mxu0 %v581
      %v2537 = vpop.f32.mrf.mxu0
      %v2538 = vadd.f32 %v2389, %v2537
      %v2539 = vpop.f32.mrf.mxu0
      %v2540 = vadd.f32 %v2391, %v2539
      %2541 = vmatmul.bf16.gmra.mxu0 %v582
      %v2542 = vpop.f32.mrf.mxu0
      %v2543 = vadd.f32 %v2394, %v2542
      %v2544 = vpop.f32.mrf.mxu0
      %v2545 = vadd.f32 %v2396, %v2544
      %2546 = vmatmul.bf16.gmra.mxu0 %v583
      %v2547 = vpop.f32.mrf.mxu0
      %v2548 = vadd.f32 %v2399, %v2547
      %v2549 = vpop.f32.mrf.mxu0
      %v2550 = vadd.f32 %v2401, %v2549
      %2551 = vmatmul.bf16.gmra.mxu0 %v584
      %v2552 = vpop.f32.mrf.mxu0
      %v2553 = vadd.f32 %v2404, %v2552
      %v2554 = vpop.f32.mrf.mxu0
      %v2555 = vadd.f32 %v2406, %v2554
      %2556 = vmatmul.bf16.gmra.mxu0 %v585
      %v2557 = vpop.f32.mrf.mxu0
      %v2558 = vadd.f32 %v2409, %v2557
      %v2559 = vpop.f32.mrf.mxu0
      %v2560 = vadd.f32 %v2411, %v2559
      %2561 = vmatmul.bf16.gmra.mxu0 %v586
      %v2562 = vpop.f32.mrf.mxu0
      %v2563 = vadd.f32 %v2414, %v2562
      %v2564 = vpop.f32.mrf.mxu0
      %v2565 = vadd.f32 %v2416, %v2564
      %2566 = vmatmul.bf16.gmra.mxu0 %v587
      %v2567 = vpop.f32.mrf.mxu0
      %v2568 = vadd.f32 %v2419, %v2567
      %v2569 = vpop.f32.mrf.mxu0
      %v2570 = vadd.f32 %v2421, %v2569
      %2571 = vmatmul.bf16.gmra.mxu0 %v588
      %v2572 = vpop.f32.mrf.mxu0
      %v2573 = vadd.f32 %v2424, %v2572
      %v2574 = vpop.f32.mrf.mxu0
      %v2575 = vadd.f32 %v2426, %v2574
      %2576 = vmatmul.bf16.gmra.mxu0 %v589
      %v2577 = vpop.f32.mrf.mxu0
      %v2578 = vadd.f32 %v2429, %v2577
      %v2579 = vpop.f32.mrf.mxu0
      %v2580 = vadd.f32 %v2431, %v2579
      %2581 = vmatmul.bf16.gmra.mxu0 %v590
      %v2582 = vpop.f32.mrf.mxu0
      %v2583 = vadd.f32 %v2434, %v2582
      %v2584 = vpop.f32.mrf.mxu0
      %v2585 = vadd.f32 %v2436, %v2584
      %2586 = vmatmul.bf16.gmra.mxu0 %v591
      %v2587 = vpop.f32.mrf.mxu0
      %v2588 = vadd.f32 %v2439, %v2587
      %v2589 = vpop.f32.mrf.mxu0
      %v2590 = vadd.f32 %v2441, %v2589
      %2591 = vmatmul.bf16.gmra.mxu0 %v592
      %v2592 = vpop.f32.mrf.mxu0
      %v2593 = vadd.f32 %v2444, %v2592
      %v2594 = vpop.f32.mrf.mxu0
      %v2595 = vadd.f32 %v2446, %v2594
      %2596 = vmatmul.bf16.gmra.mxu0 %v593
      %v2597 = vpop.f32.mrf.mxu0
      %v2598 = vadd.f32 %v2449, %v2597
      %v2599 = vpop.f32.mrf.mxu0
      %v2600 = vadd.f32 %v2451, %v2599
      %2601 = vmatmul.bf16.gmra.mxu0 %v626
      %v2602 = vpop.f32.mrf.mxu0
      %v2603 = vadd.f32 %v2454, %v2602
      %v2604 = vpop.f32.mrf.mxu0
      %v2605 = vadd.f32 %v2456, %v2604
      %2606 = vmatmul.bf16.gmra.mxu0 %v632
      %v2607 = vpop.f32.mrf.mxu0
      %v2608 = vadd.f32 %v2459, %v2607
      %v2609 = vpop.f32.mrf.mxu0
      %v2610 = vadd.f32 %v2461, %v2609
      %2611 = vmatmul.bf16.gmra.mxu0 %v638
      %v2612 = vpop.f32.mrf.mxu0
      %v2613 = vadd.f32 %v2464, %v2612
      %v2614 = vpop.f32.mrf.mxu0
      %v2615 = vadd.f32 %v2466, %v2614
      %2616 = vmatmul.bf16.gmra.mxu0 %v644
      %v2617 = vpop.f32.mrf.mxu0
      %v2618 = vadd.f32 %v2469, %v2617
      %v2619 = vpop.f32.mrf.mxu0
      %v2620 = vadd.f32 %v2471, %v2619
      %2621 = vdwg.mxu0
      %v2622 = vmax.f32 %v1738, 0.0
      %v2623 = vmax.f32 %v2483, 0.0
      %v2624 = vmax.f32 %v1740, 0.0
      %v2625 = vmax.f32 %v2485, 0.0
      %v2626 = vmax.f32 %v1743, 0.0
      %v2627 = vmax.f32 %v2488, 0.0
      %v2628 = vmax.f32 %v1745, 0.0
      %v2629 = vmax.f32 %v2490, 0.0
      %v2630 = vmax.f32 %v1748, 0.0
      %v2631 = vmax.f32 %v2493, 0.0
      %v2632 = vmax.f32 %v1750, 0.0
      %v2633 = vmax.f32 %v2495, 0.0
      %v2634 = vmax.f32 %v1753, 0.0
      %v2635 = vmax.f32 %v2498, 0.0
      %v2636 = vmax.f32 %v1755, 0.0
      %v2637 = vmax.f32 %v2500, 0.0
      %v2638 = vmax.f32 %v1758, 0.0
      %v2639 = vmax.f32 %v2503, 0.0
      %v2640 = vmax.f32 %v1760, 0.0
      %v2641 = vmax.f32 %v2505, 0.0
      %v2642 = vmax.f32 %v1763, 0.0
      %v2643 = vmax.f32 %v2508, 0.0
      %v2644 = vmax.f32 %v1765, 0.0
      %v2645 = vmax.f32 %v2510, 0.0
      %v2646 = vmax.f32 %v1768, 0.0
      %v2647 = vmax.f32 %v2513, 0.0
      %v2648 = vmax.f32 %v1770, 0.0
      %v2649 = vmax.f32 %v2515, 0.0
      %v2650 = vmax.f32 %v1773, 0.0
      %v2651 = vmax.f32 %v2518, 0.0
      %v2652 = vmax.f32 %v1775, 0.0
      %v2653 = vmax.f32 %v2520, 0.0
      %v2654 = vmax.f32 %v1778, 0.0
      %v2655 = vmax.f32 %v2523, 0.0
      %v2656 = vmax.f32 %v1780, 0.0
      %v2657 = vmax.f32 %v2525, 0.0
      %v2658 = vmax.f32 %v1783, 0.0
      %v2659 = vmax.f32 %v2528, 0.0
      %v2660 = vmax.f32 %v1785, 0.0
      %v2661 = vmax.f32 %v2530, 0.0
      %v2662 = vmax.f32 %v1788, 0.0
      %v2663 = vmax.f32 %v2533, 0.0
      %v2664 = vmax.f32 %v1790, 0.0
      %v2665 = vmax.f32 %v2535, 0.0
      %v2666 = vmax.f32 %v1793, 0.0
      %v2667 = vmax.f32 %v2538, 0.0
      %v2668 = vmax.f32 %v1795, 0.0
      %v2669 = vmax.f32 %v2540, 0.0
      %v2670 = vmax.f32 %v1798, 0.0
      %v2671 = vmax.f32 %v2543, 0.0
      %v2672 = vmax.f32 %v1800, 0.0
      %v2673 = vmax.f32 %v2545, 0.0
      %v2674 = vmax.f32 %v1803, 0.0
      %v2675 = vmax.f32 %v2548, 0.0
      %v2676 = vmax.f32 %v1805, 0.0
      %v2677 = vmax.f32 %v2550, 0.0
      %v2678 = vmax.f32 %v1808, 0.0
      %v2679 = vmax.f32 %v2553, 0.0
      %v2680 = vmax.f32 %v1810, 0.0
      %v2681 = vmax.f32 %v2555, 0.0
      %v2682 = vmax.f32 %v1813, 0.0
      %v2683 = vmax.f32 %v2558, 0.0
      %v2684 = vmax.f32 %v1815, 0.0
      %v2685 = vmax.f32 %v2560, 0.0
      %v2686 = vmax.f32 %v1818, 0.0
      %v2687 = vmax.f32 %v2563, 0.0
      %v2688 = vmax.f32 %v1820, 0.0
      %v2689 = vmax.f32 %v2565, 0.0
      %v2690 = vmax.f32 %v1823, 0.0
      %v2691 = vmax.f32 %v2568, 0.0
      %v2692 = vmax.f32 %v1825, 0.0
      %v2693 = vmax.f32 %v2570, 0.0
      %v2694 = vmax.f32 %v1828, 0.0
      %v2695 = vmax.f32 %v2573, 0.0
      %v2696 = vmax.f32 %v1830, 0.0
      %v2697 = vmax.f32 %v2575, 0.0
      %v2698 = vmax.f32 %v1833, 0.0
      %v2699 = vmax.f32 %v2578, 0.0
      %v2700 = vmax.f32 %v1835, 0.0
      %v2701 = vmax.f32 %v2580, 0.0
      %v2702 = vmax.f32 %v1838, 0.0
      %v2703 = vmax.f32 %v2583, 0.0
      %v2704 = vmax.f32 %v1840, 0.0
      %v2705 = vmax.f32 %v2585, 0.0
      %v2706 = vmax.f32 %v1843, 0.0
      %v2707 = vmax.f32 %v2588, 0.0
      %v2708 = vmax.f32 %v1845, 0.0
      %v2709 = vmax.f32 %v2590, 0.0
      %v2710 = vmax.f32 %v1848, 0.0
      %v2711 = vmax.f32 %v2593, 0.0
      %v2712 = vmax.f32 %v1850, 0.0
      %v2713 = vmax.f32 %v2595, 0.0
      %v2714 = vmax.f32 %v1853, 0.0
      %v2715 = vmax.f32 %v2598, 0.0
      %v2716 = vmax.f32 %v1855, 0.0
      %v2717 = vmax.f32 %v2600, 0.0
      %v2718 = vmax.f32 %v1858, 0.0
      %v2719 = vmax.f32 %v2603, 0.0
      %v2720 = vmax.f32 %v1860, 0.0
      %v2721 = vmax.f32 %v2605, 0.0
      %v2722 = vmax.f32 %v1863, 0.0
      %v2723 = vmax.f32 %v2608, 0.0
      %v2724 = vmax.f32 %v1865, 0.0
      %v2725 = vmax.f32 %v2610, 0.0
      %v2726 = vmax.f32 %v1868, 0.0
      %v2727 = vmax.f32 %v2613, 0.0
      %v2728 = vmax.f32 %v1870, 0.0
      %v2729 = vmax.f32 %v2615, 0.0
      %v2730 = vmax.f32 %v1873, 0.0
      %v2731 = vmax.f32 %v2618, 0.0
      %v2732 = vmax.f32 %v1875, 0.0
      %v2733 = vmax.f32 %v2620, 0.0
      %v2734 = vmax.f32 %v2622, %v2626
      %v2735 = vmax.f32 %v2623, %v2627
      %v2736 = vmax.f32 %v2624, %v2628
      %v2737 = vmax.f32 %v2625, %v2629
      %v2738 = vmax.f32 %v2626, %v2630
      %v2739 = vmax.f32 %v2627, %v2631
      %v2740 = vmax.f32 %v2628, %v2632
      %v2741 = vmax.f32 %v2629, %v2633
      %v2742 = vmax.f32 %v2630, %v2634
      %v2743 = vmax.f32 %v2631, %v2635
      %v2744 = vmax.f32 %v2632, %v2636
      %v2745 = vmax.f32 %v2633, %v2637
      %v2746 = vmax.f32 %v2634, %v2638
      %v2747 = vmax.f32 %v2635, %v2639
      %v2748 = vmax.f32 %v2636, %v2640
      %v2749 = vmax.f32 %v2637, %v2641
      %v2750 = vmax.f32 %v2638, %v2642
      %v2751 = vmax.f32 %v2639, %v2643
      %v2752 = vmax.f32 %v2640, %v2644
      %v2753 = vmax.f32 %v2641, %v2645
      %v2754 = vmax.f32 %v2642, %v2646
      %v2755 = vmax.f32 %v2643, %v2647
      %v2756 = vmax.f32 %v2644, %v2648
      %v2757 = vmax.f32 %v2645, %v2649
      %v2758 = vmax.f32 %v2646, %v2650
      %v2759 = vmax.f32 %v2647, %v2651
      %v2760 = vmax.f32 %v2648, %v2652
      %v2761 = vmax.f32 %v2649, %v2653
      %v2762 = vmax.f32 %v2650, %v2654
      %v2763 = vmax.f32 %v2651, %v2655
      %v2764 = vmax.f32 %v2652, %v2656
      %v2765 = vmax.f32 %v2653, %v2657
      %v2766 = vmax.f32 %v2654, %v2658
      %v2767 = vmax.f32 %v2655, %v2659
      %v2768 = vmax.f32 %v2656, %v2660
      %v2769 = vmax.f32 %v2657, %v2661
      %v2770 = vmax.f32 %v2658, %v2662
      %v2771 = vmax.f32 %v2659, %v2663
      %v2772 = vmax.f32 %v2660, %v2664
      %v2773 = vmax.f32 %v2661, %v2665
      %v2774 = vmax.f32 %v2662, %v2666
      %v2775 = vmax.f32 %v2663, %v2667
      %v2776 = vmax.f32 %v2664, %v2668
      %v2777 = vmax.f32 %v2665, %v2669
      %v2778 = vmax.f32 %v2666, %v2670
      %v2779 = vmax.f32 %v2667, %v2671
      %v2780 = vmax.f32 %v2668, %v2672
      %v2781 = vmax.f32 %v2669, %v2673
      %v2782 = vmax.f32 %v2670, %v2674
      %v2783 = vmax.f32 %v2671, %v2675
      %v2784 = vmax.f32 %v2672, %v2676
      %v2785 = vmax.f32 %v2673, %v2677
      %v2786 = vmax.f32 %v2674, %v2678
      %v2787 = vmax.f32 %v2675, %v2679
      %v2788 = vmax.f32 %v2676, %v2680
      %v2789 = vmax.f32 %v2677, %v2681
      %v2790 = vmax.f32 %v2678, %v2682
      %v2791 = vmax.f32 %v2679, %v2683
      %v2792 = vmax.f32 %v2680, %v2684
      %v2793 = vmax.f32 %v2681, %v2685
      %v2794 = vmax.f32 %v2682, %v2686
      %v2795 = vmax.f32 %v2683, %v2687
      %v2796 = vmax.f32 %v2684, %v2688
      %v2797 = vmax.f32 %v2685, %v2689
      %v2798 = vmax.f32 %v2686, %v2690
      %v2799 = vmax.f32 %v2687, %v2691
      %v2800 = vmax.f32 %v2688, %v2692
      %v2801 = vmax.f32 %v2689, %v2693
      %v2802 = vmax.f32 %v2690, %v2694
      %v2803 = vmax.f32 %v2691, %v2695
      %v2804 = vmax.f32 %v2692, %v2696
      %v2805 = vmax.f32 %v2693, %v2697
      %v2806 = vmax.f32 %v2694, %v2698
      %v2807 = vmax.f32 %v2695, %v2699
      %v2808 = vmax.f32 %v2696, %v2700
      %v2809 = vmax.f32 %v2697, %v2701
      %v2810 = vmax.f32 %v2698, %v2702
      %v2811 = vmax.f32 %v2699, %v2703
      %v2812 = vmax.f32 %v2700, %v2704
      %v2813 = vmax.f32 %v2701, %v2705
      %v2814 = vmax.f32 %v2702, %v2706
      %v2815 = vmax.f32 %v2703, %v2707
      %v2816 = vmax.f32 %v2704, %v2708
      %v2817 = vmax.f32 %v2705, %v2709
      %v2818 = vmax.f32 %v2706, %v2710
      %v2819 = vmax.f32 %v2707, %v2711
      %v2820 = vmax.f32 %v2708, %v2712
      %v2821 = vmax.f32 %v2709, %v2713
      %v2822 = vmax.f32 %v2710, %v2714
      %v2823 = vmax.f32 %v2711, %v2715
      %v2824 = vmax.f32 %v2712, %v2716
      %v2825 = vmax.f32 %v2713, %v2717
      %v2826 = vmax.f32 %v2714, %v2718
      %v2827 = vmax.f32 %v2715, %v2719
      %v2828 = vmax.f32 %v2716, %v2720
      %v2829 = vmax.f32 %v2717, %v2721
      %v2830 = vmax.f32 %v2718, %v2722
      %v2831 = vmax.f32 %v2719, %v2723
      %v2832 = vmax.f32 %v2720, %v2724
      %v2833 = vmax.f32 %v2721, %v2725
      %v2834 = vmax.f32 %v2722, %v2726
      %v2835 = vmax.f32 %v2723, %v2727
      %v2836 = vmax.f32 %v2724, %v2728
      %v2837 = vmax.f32 %v2725, %v2729
      %v2838 = vmax.f32 %v2726, %v2730
      %v2839 = vmax.f32 %v2727, %v2731
      %v2840 = vmax.f32 %v2728, %v2732
      %v2841 = vmax.f32 %v2729, %v2733
      %2842 = vrot.lane.b32.xlu0 %v2734, 122
      %v2843 = vpop.permute.xlu0 %2842
      %2844 = vrot.lane.b32.xlu0 %v2736, 122
      %v2845 = vpop.permute.xlu0 %2844
      %2846 = vrot.lane.b32.xlu0 %v2738, 122
      %v2847 = vpop.permute.xlu0 %2846
      %2848 = vrot.lane.b32.xlu0 %v2740, 122
      %v2849 = vpop.permute.xlu0 %2848
      %2850 = vrot.lane.b32.xlu0 %v2742, 122
      %v2851 = vpop.permute.xlu0 %2850
      %2852 = vrot.lane.b32.xlu0 %v2744, 122
      %v2853 = vpop.permute.xlu0 %2852
      %2854 = vrot.lane.b32.xlu0 %v2746, 122
      %v2855 = vpop.permute.xlu0 %2854
      %2856 = vrot.lane.b32.xlu0 %v2748, 122
      %v2857 = vpop.permute.xlu0 %2856
      %2858 = vrot.lane.b32.xlu0 %v2750, 122
      %v2859 = vpop.permute.xlu0 %2858
      %2860 = vrot.lane.b32.xlu0 %v2752, 122
      %v2861 = vpop.permute.xlu0 %2860
      %2862 = vrot.lane.b32.xlu0 %v2754, 122
      %v2863 = vpop.permute.xlu0 %2862
      %2864 = vrot.lane.b32.xlu0 %v2756, 122
      %v2865 = vpop.permute.xlu0 %2864
      %2866 = vrot.lane.b32.xlu0 %v2758, 122
      %v2867 = vpop.permute.xlu0 %2866
      %2868 = vrot.lane.b32.xlu0 %v2760, 122
      %v2869 = vpop.permute.xlu0 %2868
      %2870 = vrot.lane.b32.xlu0 %v2762, 122
      %v2871 = vpop.permute.xlu0 %2870
      %2872 = vrot.lane.b32.xlu0 %v2764, 122
      %v2873 = vpop.permute.xlu0 %2872
      %2874 = vrot.lane.b32.xlu0 %v2766, 122
      %v2875 = vpop.permute.xlu0 %2874
      %2876 = vrot.lane.b32.xlu0 %v2768, 122
      %v2877 = vpop.permute.xlu0 %2876
      %2878 = vrot.lane.b32.xlu0 %v2770, 122
      %v2879 = vpop.permute.xlu0 %2878
      %2880 = vrot.lane.b32.xlu0 %v2772, 122
      %v2881 = vpop.permute.xlu0 %2880
      %2882 = vrot.lane.b32.xlu0 %v2774, 122
      %v2883 = vpop.permute.xlu0 %2882
      %2884 = vrot.lane.b32.xlu0 %v2776, 122
      %v2885 = vpop.permute.xlu0 %2884
      %2886 = vrot.lane.b32.xlu0 %v2778, 122
      %v2887 = vpop.permute.xlu0 %2886
      %2888 = vrot.lane.b32.xlu0 %v2780, 122
      %v2889 = vpop.permute.xlu0 %2888
      %2890 = vrot.lane.b32.xlu0 %v2782, 122
      %v2891 = vpop.permute.xlu0 %2890
      %2892 = vrot.lane.b32.xlu0 %v2784, 122
      %v2893 = vpop.permute.xlu0 %2892
      %2894 = vrot.lane.b32.xlu0 %v2786, 122
      %v2895 = vpop.permute.xlu0 %2894
      %2896 = vrot.lane.b32.xlu0 %v2788, 122
      %v2897 = vpop.permute.xlu0 %2896
      %2898 = vrot.lane.b32.xlu0 %v2790, 122
      %v2899 = vpop.permute.xlu0 %2898
      %2900 = vrot.lane.b32.xlu0 %v2792, 122
      %v2901 = vpop.permute.xlu0 %2900
      %2902 = vrot.lane.b32.xlu0 %v2794, 122
      %v2903 = vpop.permute.xlu0 %2902
      %2904 = vrot.lane.b32.xlu0 %v2796, 122
      %v2905 = vpop.permute.xlu0 %2904
      %2906 = vrot.lane.b32.xlu0 %v2798, 122
      %v2907 = vpop.permute.xlu0 %2906
      %2908 = vrot.lane.b32.xlu0 %v2800, 122
      %v2909 = vpop.permute.xlu0 %2908
      %2910 = vrot.lane.b32.xlu0 %v2802, 122
      %v2911 = vpop.permute.xlu0 %2910
      %2912 = vrot.lane.b32.xlu0 %v2804, 122
      %v2913 = vpop.permute.xlu0 %2912
      %2914 = vrot.lane.b32.xlu0 %v2806, 122
      %v2915 = vpop.permute.xlu0 %2914
      %2916 = vrot.lane.b32.xlu0 %v2808, 122
      %v2917 = vpop.permute.xlu0 %2916
      %2918 = vrot.lane.b32.xlu0 %v2810, 122
      %v2919 = vpop.permute.xlu0 %2918
      %2920 = vrot.lane.b32.xlu0 %v2812, 122
      %v2921 = vpop.permute.xlu0 %2920
      %2922 = vrot.lane.b32.xlu0 %v2814, 122
      %v2923 = vpop.permute.xlu0 %2922
      %2924 = vrot.lane.b32.xlu0 %v2816, 122
      %v2925 = vpop.permute.xlu0 %2924
      %2926 = vrot.lane.b32.xlu0 %v2818, 122
      %v2927 = vpop.permute.xlu0 %2926
      %2928 = vrot.lane.b32.xlu0 %v2820, 122
      %v2929 = vpop.permute.xlu0 %2928
      %2930 = vrot.lane.b32.xlu0 %v2822, 122
      %v2931 = vpop.permute.xlu0 %2930
      %2932 = vrot.lane.b32.xlu0 %v2824, 122
      %v2933 = vpop.permute.xlu0 %2932
      %2934 = vrot.lane.b32.xlu0 %v2826, 122
      %v2935 = vpop.permute.xlu0 %2934
      %2936 = vrot.lane.b32.xlu0 %v2828, 122
      %v2937 = vpop.permute.xlu0 %2936
      %2938 = vrot.lane.b32.xlu0 %v2830, 122
      %v2939 = vpop.permute.xlu0 %2938
      %2940 = vrot.lane.b32.xlu0 %v2832, 122
      %v2941 = vpop.permute.xlu0 %2940
      %2942 = vrot.lane.b32.xlu0 %v2834, 122
      %v2943 = vpop.permute.xlu0 %2942
      %2944 = vrot.lane.b32.xlu0 %v2836, 122
      %v2945 = vpop.permute.xlu0 %2944
      %2946 = vrot.lane.b32.xlu0 %v2838, 122
      %v2947 = vpop.permute.xlu0 %2946
      %2948 = vrot.lane.b32.xlu0 %v2840, 122
      %v2949 = vpop.permute.xlu0 %2948
      %2950 = vrot.lane.b32.xlu0 %v2735, 122
      %v2951 = vpop.permute.xlu0 %2950
      %2952 = vrot.lane.b32.xlu0 %v2737, 122
      %v2953 = vpop.permute.xlu0 %2952
      %2954 = vrot.lane.b32.xlu0 %v2739, 122
      %v2955 = vpop.permute.xlu0 %2954
      %2956 = vrot.lane.b32.xlu0 %v2741, 122
      %v2957 = vpop.permute.xlu0 %2956
      %2958 = vrot.lane.b32.xlu0 %v2743, 122
      %v2959 = vpop.permute.xlu0 %2958
      %2960 = vrot.lane.b32.xlu0 %v2745, 122
      %v2961 = vpop.permute.xlu0 %2960
      %2962 = vrot.lane.b32.xlu0 %v2747, 122
      %v2963 = vpop.permute.xlu0 %2962
      %2964 = vrot.lane.b32.xlu0 %v2749, 122
      %v2965 = vpop.permute.xlu0 %2964
      %2966 = vrot.lane.b32.xlu0 %v2751, 122
      %v2967 = vpop.permute.xlu0 %2966
      %2968 = vrot.lane.b32.xlu0 %v2753, 122
      %v2969 = vpop.permute.xlu0 %2968
      %2970 = vrot.lane.b32.xlu0 %v2755, 122
      %v2971 = vpop.permute.xlu0 %2970
      %2972 = vrot.lane.b32.xlu0 %v2757, 122
      %v2973 = vpop.permute.xlu0 %2972
      %2974 = vrot.lane.b32.xlu0 %v2759, 122
      %v2975 = vpop.permute.xlu0 %2974
      %2976 = vrot.lane.b32.xlu0 %v2761, 122
      %v2977 = vpop.permute.xlu0 %2976
      %2978 = vrot.lane.b32.xlu0 %v2763, 122
      %v2979 = vpop.permute.xlu0 %2978
      %2980 = vrot.lane.b32.xlu0 %v2765, 122
      %v2981 = vpop.permute.xlu0 %2980
      %2982 = vrot.lane.b32.xlu0 %v2767, 122
      %v2983 = vpop.permute.xlu0 %2982
      %2984 = vrot.lane.b32.xlu0 %v2769, 122
      %v2985 = vpop.permute.xlu0 %2984
      %2986 = vrot.lane.b32.xlu0 %v2771, 122
      %v2987 = vpop.permute.xlu0 %2986
      %2988 = vrot.lane.b32.xlu0 %v2773, 122
      %v2989 = vpop.permute.xlu0 %2988
      %2990 = vrot.lane.b32.xlu0 %v2775, 122
      %v2991 = vpop.permute.xlu0 %2990
      %2992 = vrot.lane.b32.xlu0 %v2777, 122
      %v2993 = vpop.permute.xlu0 %2992
      %2994 = vrot.lane.b32.xlu0 %v2779, 122
      %v2995 = vpop.permute.xlu0 %2994
      %2996 = vrot.lane.b32.xlu0 %v2781, 122
      %v2997 = vpop.permute.xlu0 %2996
      %2998 = vrot.lane.b32.xlu0 %v2783, 122
      %v2999 = vpop.permute.xlu0 %2998
      %3000 = vrot.lane.b32.xlu0 %v2785, 122
      %v3001 = vpop.permute.xlu0 %3000
      %3002 = vrot.lane.b32.xlu0 %v2787, 122
      %v3003 = vpop.permute.xlu0 %3002
      %3004 = vrot.lane.b32.xlu0 %v2789, 122
      %v3005 = vpop.permute.xlu0 %3004
      %3006 = vrot.lane.b32.xlu0 %v2791, 122
      %v3007 = vpop.permute.xlu0 %3006
      %3008 = vrot.lane.b32.xlu0 %v2793, 122
      %v3009 = vpop.permute.xlu0 %3008
      %3010 = vrot.lane.b32.xlu0 %v2795, 122
      %v3011 = vpop.permute.xlu0 %3010
      %3012 = vrot.lane.b32.xlu0 %v2797, 122
      %v3013 = vpop.permute.xlu0 %3012
      %3014 = vrot.lane.b32.xlu0 %v2799, 122
      %v3015 = vpop.permute.xlu0 %3014
      %3016 = vrot.lane.b32.xlu0 %v2801, 122
      %v3017 = vpop.permute.xlu0 %3016
      %3018 = vrot.lane.b32.xlu0 %v2803, 122
      %v3019 = vpop.permute.xlu0 %3018
      %3020 = vrot.lane.b32.xlu0 %v2805, 122
      %v3021 = vpop.permute.xlu0 %3020
      %3022 = vrot.lane.b32.xlu0 %v2807, 122
      %v3023 = vpop.permute.xlu0 %3022
      %3024 = vrot.lane.b32.xlu0 %v2809, 122
      %v3025 = vpop.permute.xlu0 %3024
      %3026 = vrot.lane.b32.xlu0 %v2811, 122
      %v3027 = vpop.permute.xlu0 %3026
      %3028 = vrot.lane.b32.xlu0 %v2813, 122
      %v3029 = vpop.permute.xlu0 %3028
      %3030 = vrot.lane.b32.xlu0 %v2815, 122
      %v3031 = vpop.permute.xlu0 %3030
      %3032 = vrot.lane.b32.xlu0 %v2817, 122
      %v3033 = vpop.permute.xlu0 %3032
      %3034 = vrot.lane.b32.xlu0 %v2819, 122
      %v3035 = vpop.permute.xlu0 %3034
      %3036 = vrot.lane.b32.xlu0 %v2821, 122
      %v3037 = vpop.permute.xlu0 %3036
      %3038 = vrot.lane.b32.xlu0 %v2823, 122
      %v3039 = vpop.permute.xlu0 %3038
      %3040 = vrot.lane.b32.xlu0 %v2825, 122
      %v3041 = vpop.permute.xlu0 %3040
      %3042 = vrot.lane.b32.xlu0 %v2827, 122
      %v3043 = vpop.permute.xlu0 %3042
      %3044 = vrot.lane.b32.xlu0 %v2829, 122
      %v3045 = vpop.permute.xlu0 %3044
      %3046 = vrot.lane.b32.xlu0 %v2831, 122
      %v3047 = vpop.permute.xlu0 %3046
      %3048 = vrot.lane.b32.xlu0 %v2833, 122
      %v3049 = vpop.permute.xlu0 %3048
      %3050 = vrot.lane.b32.xlu0 %v2835, 122
      %v3051 = vpop.permute.xlu0 %3050
      %3052 = vrot.lane.b32.xlu0 %v2837, 122
      %v3053 = vpop.permute.xlu0 %3052
      %3054 = vrot.lane.b32.xlu0 %v2839, 122
      %v3055 = vpop.permute.xlu0 %3054
      %3056 = vrot.lane.b32.xlu0 %v2841, 122
      %v3057 = vpop.permute.xlu0 %3056
      %v3058 = vlaneseq
      %v3059 = vand.u32 %v3058, 127
      %vm3060 = vcmp.lt.s32.totalorder %v3059, 122
      %v3061 = vsel %vm3060, %v2843, %v2951
      %v3062 = vsel %vm3060, %v2845, %v2953
      %v3063 = vsel %vm3060, %v2847, %v2955
      %v3064 = vsel %vm3060, %v2849, %v2957
      %v3065 = vsel %vm3060, %v2851, %v2959
      %v3066 = vsel %vm3060, %v2853, %v2961
      %v3067 = vsel %vm3060, %v2855, %v2963
      %v3068 = vsel %vm3060, %v2857, %v2965
      %v3069 = vsel %vm3060, %v2859, %v2967
      %v3070 = vsel %vm3060, %v2861, %v2969
      %v3071 = vsel %vm3060, %v2863, %v2971
      %v3072 = vsel %vm3060, %v2865, %v2973
      %v3073 = vsel %vm3060, %v2867, %v2975
      %v3074 = vsel %vm3060, %v2869, %v2977
      %v3075 = vsel %vm3060, %v2871, %v2979
      %v3076 = vsel %vm3060, %v2873, %v2981
      %v3077 = vsel %vm3060, %v2875, %v2983
      %v3078 = vsel %vm3060, %v2877, %v2985
      %v3079 = vsel %vm3060, %v2879, %v2987
      %v3080 = vsel %vm3060, %v2881, %v2989
      %v3081 = vsel %vm3060, %v2883, %v2991
      %v3082 = vsel %vm3060, %v2885, %v2993
      %v3083 = vsel %vm3060, %v2887, %v2995
      %v3084 = vsel %vm3060, %v2889, %v2997
      %v3085 = vsel %vm3060, %v2891, %v2999
      %v3086 = vsel %vm3060, %v2893, %v3001
      %v3087 = vsel %vm3060, %v2895, %v3003
      %v3088 = vsel %vm3060, %v2897, %v3005
      %v3089 = vsel %vm3060, %v2899, %v3007
      %v3090 = vsel %vm3060, %v2901, %v3009
      %v3091 = vsel %vm3060, %v2903, %v3011
      %v3092 = vsel %vm3060, %v2905, %v3013
      %v3093 = vsel %vm3060, %v2907, %v3015
      %v3094 = vsel %vm3060, %v2909, %v3017
      %v3095 = vsel %vm3060, %v2911, %v3019
      %v3096 = vsel %vm3060, %v2913, %v3021
      %v3097 = vsel %vm3060, %v2915, %v3023
      %v3098 = vsel %vm3060, %v2917, %v3025
      %v3099 = vsel %vm3060, %v2919, %v3027
      %v3100 = vsel %vm3060, %v2921, %v3029
      %v3101 = vsel %vm3060, %v2923, %v3031
      %v3102 = vsel %vm3060, %v2925, %v3033
      %v3103 = vsel %vm3060, %v2927, %v3035
      %v3104 = vsel %vm3060, %v2929, %v3037
      %v3105 = vsel %vm3060, %v2931, %v3039
      %v3106 = vsel %vm3060, %v2933, %v3041
      %v3107 = vsel %vm3060, %v2935, %v3043
      %v3108 = vsel %vm3060, %v2937, %v3045
      %v3109 = vsel %vm3060, %v2939, %v3047
      %v3110 = vsel %vm3060, %v2941, %v3049
      %v3111 = vsel %vm3060, %v2943, %v3051
      %v3112 = vsel %vm3060, %v2945, %v3053
      %v3113 = vsel %vm3060, %v2947, %v3055
      %v3114 = vsel %vm3060, %v2949, %v3057
      %v3115 = vsel %vm3060, %v2951, %v2843
      %v3116 = vsel %vm3060, %v2953, %v2845
      %v3117 = vsel %vm3060, %v2955, %v2847
      %v3118 = vsel %vm3060, %v2957, %v2849
      %v3119 = vsel %vm3060, %v2959, %v2851
      %v3120 = vsel %vm3060, %v2961, %v2853
      %v3121 = vsel %vm3060, %v2963, %v2855
      %v3122 = vsel %vm3060, %v2965, %v2857
      %v3123 = vsel %vm3060, %v2967, %v2859
      %v3124 = vsel %vm3060, %v2969, %v2861
      %v3125 = vsel %vm3060, %v2971, %v2863
      %v3126 = vsel %vm3060, %v2973, %v2865
      %v3127 = vsel %vm3060, %v2975, %v2867
      %v3128 = vsel %vm3060, %v2977, %v2869
      %v3129 = vsel %vm3060, %v2979, %v2871
      %v3130 = vsel %vm3060, %v2981, %v2873
      %v3131 = vsel %vm3060, %v2983, %v2875
      %v3132 = vsel %vm3060, %v2985, %v2877
      %v3133 = vsel %vm3060, %v2987, %v2879
      %v3134 = vsel %vm3060, %v2989, %v2881
      %v3135 = vsel %vm3060, %v2991, %v2883
      %v3136 = vsel %vm3060, %v2993, %v2885
      %v3137 = vsel %vm3060, %v2995, %v2887
      %v3138 = vsel %vm3060, %v2997, %v2889
      %v3139 = vsel %vm3060, %v2999, %v2891
      %v3140 = vsel %vm3060, %v3001, %v2893
      %v3141 = vsel %vm3060, %v3003, %v2895
      %v3142 = vsel %vm3060, %v3005, %v2897
      %v3143 = vsel %vm3060, %v3007, %v2899
      %v3144 = vsel %vm3060, %v3009, %v2901
      %v3145 = vsel %vm3060, %v3011, %v2903
      %v3146 = vsel %vm3060, %v3013, %v2905
      %v3147 = vsel %vm3060, %v3015, %v2907
      %v3148 = vsel %vm3060, %v3017, %v2909
      %v3149 = vsel %vm3060, %v3019, %v2911
      %v3150 = vsel %vm3060, %v3021, %v2913
      %v3151 = vsel %vm3060, %v3023, %v2915
      %v3152 = vsel %vm3060, %v3025, %v2917
      %v3153 = vsel %vm3060, %v3027, %v2919
      %v3154 = vsel %vm3060, %v3029, %v2921
      %v3155 = vsel %vm3060, %v3031, %v2923
      %v3156 = vsel %vm3060, %v3033, %v2925
      %v3157 = vsel %vm3060, %v3035, %v2927
      %v3158 = vsel %vm3060, %v3037, %v2929
      %v3159 = vsel %vm3060, %v3039, %v2931
      %v3160 = vsel %vm3060, %v3041, %v2933
      %v3161 = vsel %vm3060, %v3043, %v2935
      %v3162 = vsel %vm3060, %v3045, %v2937
      %v3163 = vsel %vm3060, %v3047, %v2939
      %v3164 = vsel %vm3060, %v3049, %v2941
      %v3165 = vsel %vm3060, %v3051, %v2943
      %v3166 = vsel %vm3060, %v3053, %v2945
      %v3167 = vsel %vm3060, %v3055, %v2947
      %v3168 = vsel %vm3060, %v3057, %v2949
      %v3169 = vmax.f32 %v2734, %v3061
      %v3170 = vmax.f32 %v2735, %v3115
      %v3171 = vmax.f32 %v2736, %v3062
      %v3172 = vmax.f32 %v2737, %v3116
      %v3173 = vmax.f32 %v2738, %v3063
      %v3174 = vmax.f32 %v2739, %v3117
      %v3175 = vmax.f32 %v2740, %v3064
      %v3176 = vmax.f32 %v2741, %v3118
      %v3177 = vmax.f32 %v2742, %v3065
      %v3178 = vmax.f32 %v2743, %v3119
      %v3179 = vmax.f32 %v2744, %v3066
      %v3180 = vmax.f32 %v2745, %v3120
      %v3181 = vmax.f32 %v2746, %v3067
      %v3182 = vmax.f32 %v2747, %v3121
      %v3183 = vmax.f32 %v2748, %v3068
      %v3184 = vmax.f32 %v2749, %v3122
      %v3185 = vmax.f32 %v2750, %v3069
      %v3186 = vmax.f32 %v2751, %v3123
      %v3187 = vmax.f32 %v2752, %v3070
      %v3188 = vmax.f32 %v2753, %v3124
      %v3189 = vmax.f32 %v2754, %v3071
      %v3190 = vmax.f32 %v2755, %v3125
      %v3191 = vmax.f32 %v2756, %v3072
      %v3192 = vmax.f32 %v2757, %v3126
      %v3193 = vmax.f32 %v2758, %v3073
      %v3194 = vmax.f32 %v2759, %v3127
      %v3195 = vmax.f32 %v2760, %v3074
      %v3196 = vmax.f32 %v2761, %v3128
      %v3197 = vmax.f32 %v2762, %v3075
      %v3198 = vmax.f32 %v2763, %v3129
      %v3199 = vmax.f32 %v2764, %v3076
      %v3200 = vmax.f32 %v2765, %v3130
      %v3201 = vmax.f32 %v2766, %v3077
      %v3202 = vmax.f32 %v2767, %v3131
      %v3203 = vmax.f32 %v2768, %v3078
      %v3204 = vmax.f32 %v2769, %v3132
      %v3205 = vmax.f32 %v2770, %v3079
      %v3206 = vmax.f32 %v2771, %v3133
      %v3207 = vmax.f32 %v2772, %v3080
      %v3208 = vmax.f32 %v2773, %v3134
      %v3209 = vmax.f32 %v2774, %v3081
      %v3210 = vmax.f32 %v2775, %v3135
      %v3211 = vmax.f32 %v2776, %v3082
      %v3212 = vmax.f32 %v2777, %v3136
      %v3213 = vmax.f32 %v2778, %v3083
      %v3214 = vmax.f32 %v2779, %v3137
      %v3215 = vmax.f32 %v2780, %v3084
      %v3216 = vmax.f32 %v2781, %v3138
      %v3217 = vmax.f32 %v2782, %v3085
      %v3218 = vmax.f32 %v2783, %v3139
      %v3219 = vmax.f32 %v2784, %v3086
      %v3220 = vmax.f32 %v2785, %v3140
      %v3221 = vmax.f32 %v2786, %v3087
      %v3222 = vmax.f32 %v2787, %v3141
      %v3223 = vmax.f32 %v2788, %v3088
      %v3224 = vmax.f32 %v2789, %v3142
      %v3225 = vmax.f32 %v2790, %v3089
      %v3226 = vmax.f32 %v2791, %v3143
      %v3227 = vmax.f32 %v2792, %v3090
      %v3228 = vmax.f32 %v2793, %v3144
      %v3229 = vmax.f32 %v2794, %v3091
      %v3230 = vmax.f32 %v2795, %v3145
      %v3231 = vmax.f32 %v2796, %v3092
      %v3232 = vmax.f32 %v2797, %v3146
      %v3233 = vmax.f32 %v2798, %v3093
      %v3234 = vmax.f32 %v2799, %v3147
      %v3235 = vmax.f32 %v2800, %v3094
      %v3236 = vmax.f32 %v2801, %v3148
      %v3237 = vmax.f32 %v2802, %v3095
      %v3238 = vmax.f32 %v2803, %v3149
      %v3239 = vmax.f32 %v2804, %v3096
      %v3240 = vmax.f32 %v2805, %v3150
      %v3241 = vmax.f32 %v2806, %v3097
      %v3242 = vmax.f32 %v2807, %v3151
      %v3243 = vmax.f32 %v2808, %v3098
      %v3244 = vmax.f32 %v2809, %v3152
      %v3245 = vmax.f32 %v2810, %v3099
      %v3246 = vmax.f32 %v2811, %v3153
      %v3247 = vmax.f32 %v2812, %v3100
      %v3248 = vmax.f32 %v2813, %v3154
      %v3249 = vmax.f32 %v2814, %v3101
      %v3250 = vmax.f32 %v2815, %v3155
      %v3251 = vmax.f32 %v2816, %v3102
      %v3252 = vmax.f32 %v2817, %v3156
      %v3253 = vmax.f32 %v2818, %v3103
      %v3254 = vmax.f32 %v2819, %v3157
      %v3255 = vmax.f32 %v2820, %v3104
      %v3256 = vmax.f32 %v2821, %v3158
      %v3257 = vmax.f32 %v2822, %v3105
      %v3258 = vmax.f32 %v2823, %v3159
      %v3259 = vmax.f32 %v2824, %v3106
      %v3260 = vmax.f32 %v2825, %v3160
      %v3261 = vmax.f32 %v2826, %v3107
      %v3262 = vmax.f32 %v2827, %v3161
      %v3263 = vmax.f32 %v2828, %v3108
      %v3264 = vmax.f32 %v2829, %v3162
      %v3265 = vmax.f32 %v2830, %v3109
      %v3266 = vmax.f32 %v2831, %v3163
      %v3267 = vmax.f32 %v2832, %v3110
      %v3268 = vmax.f32 %v2833, %v3164
      %v3269 = vmax.f32 %v2834, %v3111
      %v3270 = vmax.f32 %v2835, %v3165
      %v3271 = vmax.f32 %v2836, %v3112
      %v3272 = vmax.f32 %v2837, %v3166
      %v3273 = vmax.f32 %v2838, %v3113
      %v3274 = vmax.f32 %v2839, %v3167
      %v3275 = vmax.f32 %v2840, %v3114
      %v3276 = vmax.f32 %v2841, %v3168
      %v3277 = vpack.c.bf16 %v3170, %v3169
      %v3278 = vpack.c.bf16 %v3172, %v3171
      %v3279 = vpack.c.bf16 %v3174, %v3173
      %v3280 = vpack.c.bf16 %v3176, %v3175
      %v3281 = vpack.c.bf16 %v3178, %v3177
      %v3282 = vpack.c.bf16 %v3180, %v3179
      %v3283 = vpack.c.bf16 %v3182, %v3181
      %v3284 = vpack.c.bf16 %v3184, %v3183
      %v3285 = vpack.c.bf16 %v3186, %v3185
      %v3286 = vpack.c.bf16 %v3188, %v3187
      %v3287 = vpack.c.bf16 %v3190, %v3189
      %v3288 = vpack.c.bf16 %v3192, %v3191
      %v3289 = vpack.c.bf16 %v3194, %v3193
      %v3290 = vpack.c.bf16 %v3196, %v3195
      %v3291 = vpack.c.bf16 %v3198, %v3197
      %v3292 = vpack.c.bf16 %v3200, %v3199
      %v3293 = vpack.c.bf16 %v3202, %v3201
      %v3294 = vpack.c.bf16 %v3204, %v3203
      %v3295 = vpack.c.bf16 %v3206, %v3205
      %v3296 = vpack.c.bf16 %v3208, %v3207
      %v3297 = vpack.c.bf16 %v3210, %v3209
      %v3298 = vpack.c.bf16 %v3212, %v3211
      %v3299 = vpack.c.bf16 %v3214, %v3213
      %v3300 = vpack.c.bf16 %v3216, %v3215
      %v3301 = vpack.c.bf16 %v3218, %v3217
      %v3302 = vpack.c.bf16 %v3220, %v3219
      %v3303 = vpack.c.bf16 %v3222, %v3221
      %v3304 = vpack.c.bf16 %v3224, %v3223
      %v3305 = vpack.c.bf16 %v3226, %v3225
      %v3306 = vpack.c.bf16 %v3228, %v3227
      %v3307 = vpack.c.bf16 %v3230, %v3229
      %v3308 = vpack.c.bf16 %v3232, %v3231
      %v3309 = vpack.c.bf16 %v3234, %v3233
      %v3310 = vpack.c.bf16 %v3236, %v3235
      %v3311 = vpack.c.bf16 %v3238, %v3237
      %v3312 = vpack.c.bf16 %v3240, %v3239
      %v3313 = vpack.c.bf16 %v3242, %v3241
      %v3314 = vpack.c.bf16 %v3244, %v3243
      %v3315 = vpack.c.bf16 %v3246, %v3245
      %v3316 = vpack.c.bf16 %v3248, %v3247
      %v3317 = vpack.c.bf16 %v3250, %v3249
      %v3318 = vpack.c.bf16 %v3252, %v3251
      %v3319 = vpack.c.bf16 %v3254, %v3253
      %v3320 = vpack.c.bf16 %v3256, %v3255
      %v3321 = vpack.c.bf16 %v3258, %v3257
      %v3322 = vpack.c.bf16 %v3260, %v3259
      %v3323 = vpack.c.bf16 %v3262, %v3261
      %v3324 = vpack.c.bf16 %v3264, %v3263
      %v3325 = vpack.c.bf16 %v3266, %v3265
      %v3326 = vpack.c.bf16 %v3268, %v3267
      %v3327 = vpack.c.bf16 %v3270, %v3269
      %v3328 = vpack.c.bf16 %v3272, %v3271
      %v3329 = vpack.c.bf16 %v3274, %v3273
      %v3330 = vpack.c.bf16 %v3276, %v3275
      %v3369 = vunpack.c.l.b16 %v3277
      %v3370 = vunpack.c.h.b16 %v3277
      %v3371 = vunpack.c.l.b16 %v3278
      %v3372 = vunpack.c.h.b16 %v3278
      %v3373 = vunpack.c.l.b16 %v3279
      %v3374 = vunpack.c.h.b16 %v3279
      %v3375 = vunpack.c.l.b16 %v3280
      %v3376 = vunpack.c.h.b16 %v3280
      %v3377 = vunpack.c.l.b16 %v3281
      %v3378 = vunpack.c.h.b16 %v3281
      %v3379 = vunpack.c.l.b16 %v3282
      %v3380 = vunpack.c.h.b16 %v3282
      %v3381 = vunpack.c.l.b16 %v3283
      %v3382 = vunpack.c.h.b16 %v3283
      %v3383 = vunpack.c.l.b16 %v3284
      %v3384 = vunpack.c.h.b16 %v3284
      %v3385 = vunpack.c.l.b16 %v3285
      %v3386 = vunpack.c.h.b16 %v3285
      %v3387 = vunpack.c.l.b16 %v3286
      %v3388 = vunpack.c.h.b16 %v3286
      %v3389 = vunpack.c.l.b16 %v3287
      %v3390 = vunpack.c.h.b16 %v3287
      %v3391 = vunpack.c.l.b16 %v3288
      %v3392 = vunpack.c.h.b16 %v3288
      %v3393 = vunpack.c.l.b16 %v3289
      %v3394 = vunpack.c.h.b16 %v3289
      %v3395 = vunpack.c.l.b16 %v3290
      %v3396 = vunpack.c.h.b16 %v3290
      %v3397 = vunpack.c.l.b16 %v3291
      %v3398 = vunpack.c.h.b16 %v3291
      %v3399 = vunpack.c.l.b16 %v3292
      %v3400 = vunpack.c.h.b16 %v3292
      %v3401 = vunpack.c.l.b16 %v3293
      %v3402 = vunpack.c.h.b16 %v3293
      %v3403 = vunpack.c.l.b16 %v3294
      %v3404 = vunpack.c.h.b16 %v3294
      %v3405 = vunpack.c.l.b16 %v3295
      %v3406 = vunpack.c.h.b16 %v3295
      %v3407 = vunpack.c.l.b16 %v3296
      %v3408 = vunpack.c.h.b16 %v3296
      %v3409 = vunpack.c.l.b16 %v3297
      %v3410 = vunpack.c.h.b16 %v3297
      %v3411 = vunpack.c.l.b16 %v3298
      %v3412 = vunpack.c.h.b16 %v3298
      %v3413 = vunpack.c.l.b16 %v3299
      %v3414 = vunpack.c.h.b16 %v3299
      %v3415 = vunpack.c.l.b16 %v3300
      %v3416 = vunpack.c.h.b16 %v3300
      %v3417 = vunpack.c.l.b16 %v3301
      %v3418 = vunpack.c.h.b16 %v3301
      %v3419 = vunpack.c.l.b16 %v3302
      %v3420 = vunpack.c.h.b16 %v3302
      %v3421 = vunpack.c.l.b16 %v3303
      %v3422 = vunpack.c.h.b16 %v3303
      %v3423 = vunpack.c.l.b16 %v3304
      %v3424 = vunpack.c.h.b16 %v3304
      %v3425 = vunpack.c.l.b16 %v3305
      %v3426 = vunpack.c.h.b16 %v3305
      %v3427 = vunpack.c.l.b16 %v3306
      %v3428 = vunpack.c.h.b16 %v3306
      %v3429 = vunpack.c.l.b16 %v3307
      %v3430 = vunpack.c.h.b16 %v3307
      %v3431 = vunpack.c.l.b16 %v3308
      %v3432 = vunpack.c.h.b16 %v3308
      %v3433 = vunpack.c.l.b16 %v3309
      %v3434 = vunpack.c.h.b16 %v3309
      %v3435 = vunpack.c.l.b16 %v3310
      %v3436 = vunpack.c.h.b16 %v3310
      %v3437 = vunpack.c.l.b16 %v3311
      %v3438 = vunpack.c.h.b16 %v3311
      %v3439 = vunpack.c.l.b16 %v3312
      %v3440 = vunpack.c.h.b16 %v3312
      %v3441 = vunpack.c.l.b16 %v3313
      %v3442 = vunpack.c.h.b16 %v3313
      %v3443 = vunpack.c.l.b16 %v3314
      %v3444 = vunpack.c.h.b16 %v3314
      %v3445 = vpack.c.b16 %v3371, %v3369
      %v3446 = vpack.c.b16 %v3372, %v3370
      %v3447 = vpack.c.b16 %v3375, %v3373
      %v3448 = vpack.c.b16 %v3376, %v3374
      %v3449 = vpack.c.b16 %v3379, %v3377
      %v3450 = vpack.c.b16 %v3380, %v3378
      %v3451 = vpack.c.b16 %v3383, %v3381
      %v3452 = vpack.c.b16 %v3384, %v3382
      %v3453 = vpack.c.b16 %v3387, %v3385
      %v3454 = vpack.c.b16 %v3388, %v3386
      %v3455 = vpack.c.b16 %v3391, %v3389
      %v3456 = vpack.c.b16 %v3392, %v3390
      %v3457 = vpack.c.b16 %v3395, %v3393
      %v3458 = vpack.c.b16 %v3396, %v3394
      %v3459 = vpack.c.b16 %v3399, %v3397
      %v3460 = vpack.c.b16 %v3400, %v3398
      %v3461 = vpack.c.b16 %v3403, %v3401
      %v3462 = vpack.c.b16 %v3404, %v3402
      %v3463 = vpack.c.b16 %v3407, %v3405
      %v3464 = vpack.c.b16 %v3408, %v3406
      %v3465 = vpack.c.b16 %v3411, %v3409
      %v3466 = vpack.c.b16 %v3412, %v3410
      %v3467 = vpack.c.b16 %v3415, %v3413
      %v3468 = vpack.c.b16 %v3416, %v3414
      %v3469 = vpack.c.b16 %v3419, %v3417
      %v3470 = vpack.c.b16 %v3420, %v3418
      %v3471 = vpack.c.b16 %v3423, %v3421
      %v3472 = vpack.c.b16 %v3424, %v3422
      %v3473 = vpack.c.b16 %v3427, %v3425
      %v3474 = vpack.c.b16 %v3428, %v3426
      %v3475 = vpack.c.b16 %v3431, %v3429
      %v3476 = vpack.c.b16 %v3432, %v3430
      %v3477 = vpack.c.b16 %v3435, %v3433
      %v3478 = vpack.c.b16 %v3436, %v3434
      %v3479 = vpack.c.b16 %v3439, %v3437
      %v3480 = vpack.c.b16 %v3440, %v3438
      %v3481 = vpack.c.b16 %v3443, %v3441
      %v3482 = vpack.c.b16 %v3444, %v3442
      %v3525 = vunpack.c.l.b16 %v3315
      %v3526 = vunpack.c.h.b16 %v3315
      %v3527 = vunpack.c.l.b16 %v3316
      %v3528 = vunpack.c.h.b16 %v3316
      %v3529 = vunpack.c.l.b16 %v3317
      %v3530 = vunpack.c.h.b16 %v3317
      %v3531 = vunpack.c.l.b16 %v3318
      %v3532 = vunpack.c.h.b16 %v3318
      %v3533 = vpack.c.b16 %v3527, %v3525
      %v3534 = vpack.c.b16 %v3528, %v3526
      %v3535 = vpack.c.b16 %v3531, %v3529
      %v3536 = vpack.c.b16 %v3532, %v3530
      %v3545 = vunpack.c.l.b16 %v3319
      %v3546 = vunpack.c.h.b16 %v3319
      %v3547 = vunpack.c.l.b16 %v3320
      %v3548 = vunpack.c.h.b16 %v3320
      %v3549 = vunpack.c.l.b16 %v3321
      %v3550 = vunpack.c.h.b16 %v3321
      %v3551 = vunpack.c.l.b16 %v3322
      %v3552 = vunpack.c.h.b16 %v3322
      %v3553 = vpack.c.b16 %v3547, %v3545
      %v3554 = vpack.c.b16 %v3548, %v3546
      %v3555 = vpack.c.b16 %v3551, %v3549
      %v3556 = vpack.c.b16 %v3552, %v3550
      %v3565 = vunpack.c.l.b16 %v3323
      %v3566 = vunpack.c.h.b16 %v3323
      %v3567 = vunpack.c.l.b16 %v3324
      %v3568 = vunpack.c.h.b16 %v3324
      %v3569 = vunpack.c.l.b16 %v3325
      %v3570 = vunpack.c.h.b16 %v3325
      %v3571 = vunpack.c.l.b16 %v3326
      %v3572 = vunpack.c.h.b16 %v3326
      %v3573 = vpack.c.b16 %v3567, %v3565
      %v3574 = vpack.c.b16 %v3568, %v3566
      %v3575 = vpack.c.b16 %v3571, %v3569
      %v3576 = vpack.c.b16 %v3572, %v3570
      %v3585 = vunpack.c.l.b16 %v3327
      %v3586 = vunpack.c.h.b16 %v3327
      %v3587 = vunpack.c.l.b16 %v3328
      %v3588 = vunpack.c.h.b16 %v3328
      %v3589 = vunpack.c.l.b16 %v3329
      %v3590 = vunpack.c.h.b16 %v3329
      %v3591 = vunpack.c.l.b16 %v3330
      %v3592 = vunpack.c.h.b16 %v3330
      %v3593 = vpack.c.b16 %v3587, %v3585
      %v3594 = vpack.c.b16 %v3588, %v3586
      %v3595 = vpack.c.b16 %v3591, %v3589
      %v3596 = vpack.c.b16 %v3592, %v3590
      %v3601 = vld [vmem:[%s3] sm:$0xff]
      %v3602 = vld [vmem:[%s3 + $0x8] sm:$0xff]
      %v3603 = vld [vmem:[%s3 + $0x10] sm:$0xff]
      %v3604 = vld [vmem:[%s3 + $0x18] sm:$0xff]
      %v3605 = vld [vmem:[%s3 + $0x20] sm:$0xff]
      %v3606 = vld [vmem:[%s3 + $0x28] sm:$0xff]
      %v3607 = vld [vmem:[%s3 + $0x30] sm:$0xff]
      %v3608 = vld [vmem:[%s3 + $0x38] sm:$0xff]
      %v3609 = vld [vmem:[%s3 + $0x40] sm:$0xff]
      %v3610 = vld [vmem:[%s3 + $0x48] sm:$0xff]
      %v3611 = vld [vmem:[%s3 + $0x50] sm:$0xff]
      %v3612 = vld [vmem:[%s3 + $0x58] sm:$0xff]
      %v3613 = vld [vmem:[%s3 + $0x60] sm:$0xff]
      %v3614 = vld [vmem:[%s3 + $0x68] sm:$0xff]
      %v3615 = vld [vmem:[%s3 + $0x70] sm:$0xff]
      %v3616 = vld [vmem:[%s3 + $0x78] sm:$0xff]
      %v3617 = vld [vmem:[%s3 + $0x80] sm:$0xff]
      %v3618 = vld [vmem:[%s3 + $0x88] sm:$0xff]
      %v3619 = vld [vmem:[%s3 + $0x90] sm:$0xff]
      %v3620 = vld [vmem:[%s3 + $0x98] sm:$0xff]
      %v3621 = vld [vmem:[%s3 + $0xa0] sm:$0xff]
      %v3622 = vld [vmem:[%s3 + $0xa8] sm:$0xff]
      %v3623 = vld [vmem:[%s3 + $0xb0] sm:$0xff]
      %v3624 = vld [vmem:[%s3 + $0xb8] sm:$0xff]
      %v3625 = vld [vmem:[%s3 + $0xc0] sm:$0xff]
      %v3626 = vld [vmem:[%s3 + $0xc8] sm:$0xff]
      %v3627 = vld [vmem:[%s3 + $0xd0] sm:$0xff]
      %v3628 = vld [vmem:[%s3 + $0xd8] sm:$0xff]
      %v3629 = vld [vmem:[%s3 + $0xe0] sm:$0xff]
      %v3630 = vld [vmem:[%s3 + $0xe8] sm:$0xff]
      %v3631 = vld [vmem:[%s3 + $0xf0] sm:$0xff]
      %v3632 = vld [vmem:[%s3 + $0xf8] sm:$0xff]
      %v3633 = vld [vmem:[%s3 + $0x100] sm:$0xff]
      %v3634 = vld [vmem:[%s3 + $0x108] sm:$0xff]
      %v3635 = vld [vmem:[%s3 + $0x110] sm:$0xff]
      %v3636 = vld [vmem:[%s3 + $0x118] sm:$0xff]
      %v3637 = vld [vmem:[%s3 + $0x120] sm:$0xff]
      %v3638 = vld [vmem:[%s3 + $0x128] sm:$0xff]
      %v3639 = vld [vmem:[%s3 + $0x130] sm:$0xff]
      %v3640 = vld [vmem:[%s3 + $0x138] sm:$0xff]
      %v3641 = vld [vmem:[%s3 + $0x140] sm:$0xff]
      %v3642 = vld [vmem:[%s3 + $0x148] sm:$0xff]
      %v3643 = vld [vmem:[%s3 + $0x150] sm:$0xff]
      %v3644 = vld [vmem:[%s3 + $0x158] sm:$0xff]
      %v3645 = vld [vmem:[%s3 + $0x160] sm:$0xff]
      %v3646 = vld [vmem:[%s3 + $0x168] sm:$0xff]
      %v3647 = vld [vmem:[%s3 + $0x170] sm:$0xff]
      %v3648 = vld [vmem:[%s3 + $0x178] sm:$0xff]
      %v3649 = vld [vmem:[%s3 + $0x180] sm:$0xff]
      %v3650 = vld [vmem:[%s3 + $0x188] sm:$0xff]
      %v3651 = vld [vmem:[%s3 + $0x190] sm:$0xff]
      %v3652 = vld [vmem:[%s3 + $0x198] sm:$0xff]
      %v3653 = vld [vmem:[%s3 + $0x1a0] sm:$0xff]
      %v3654 = vld [vmem:[%s3 + $0x1a8] sm:$0xff]
      %v3655 = vld [vmem:[%s3 + $0x1b0] sm:$0xff]
      %v3656 = vld [vmem:[%s3 + $0x1b8] sm:$0xff]
      %v3657 = vld [vmem:[%s3 + $0x1c0] sm:$0xff]
      %v3658 = vld [vmem:[%s3 + $0x1c8] sm:$0xff]
      %v3659 = vld [vmem:[%s3 + $0x1d0] sm:$0xff]
      %v3660 = vld [vmem:[%s3 + $0x1d8] sm:$0xff]
      %v3661 = vld [vmem:[%s3 + $0x1e0] sm:$0xff]
      %v3662 = vld [vmem:[%s3 + $0x1e8] sm:$0xff]
      %v3663 = vld [vmem:[%s3 + $0x1f0] sm:$0xff]
      %v3664 = vld [vmem:[%s3 + $0x1f8] sm:$0xff]
      %v3665 = vld [vmem:[%s3 + $0x200] sm:$0xff]
      %v3666 = vld [vmem:[%s3 + $0x208] sm:$0xff]
      %v3667 = vld [vmem:[%s3 + $0x210] sm:$0xff]
      %v3668 = vld [vmem:[%s3 + $0x218] sm:$0xff]
      %v3669 = vld [vmem:[%s3 + $0x220] sm:$0xff]
      %v3670 = vld [vmem:[%s3 + $0x228] sm:$0xff]
      %v3671 = vld [vmem:[%s3 + $0x230] sm:$0xff]
      %v3672 = vld [vmem:[%s3 + $0x238] sm:$0xff]
      %v3673 = vld [vmem:[%s3 + $0x240] sm:$0xff]
      %v3674 = vld [vmem:[%s3 + $0x248] sm:$0xff]
      %v3675 = vld [vmem:[%s3 + $0x250] sm:$0xff]
      %v3676 = vld [vmem:[%s3 + $0x258] sm:$0xff]
      %v3677 = vld [vmem:[%s3 + $0x260] sm:$0xff]
      %v3678 = vld [vmem:[%s3 + $0x268] sm:$0xff]
      %v3679 = vld [vmem:[%s3 + $0x270] sm:$0xff]
      %v3680 = vld [vmem:[%s3 + $0x278] sm:$0xff]
      %v3681 = vld [vmem:[%s3 + $0x280] sm:$0xff]
      %v3682 = vld [vmem:[%s3 + $0x288] sm:$0xff]
      %v3683 = vld [vmem:[%s3 + $0x290] sm:$0xff]
      %v3684 = vld [vmem:[%s3 + $0x298] sm:$0xff]
      %v3685 = vld [vmem:[%s3 + $0x2a0] sm:$0xff]
      %v3686 = vld [vmem:[%s3 + $0x2a8] sm:$0xff]
      %v3687 = vld [vmem:[%s3 + $0x2b0] sm:$0xff]
      %v3688 = vld [vmem:[%s3 + $0x2b8] sm:$0xff]
      %v3689 = vld [vmem:[%s3 + $0x2c0] sm:$0xff]
      %v3690 = vld [vmem:[%s3 + $0x2c8] sm:$0xff]
      %v3691 = vld [vmem:[%s3 + $0x2d0] sm:$0xff]
      %v3692 = vld [vmem:[%s3 + $0x2d8] sm:$0xff]
      %v3693 = vld [vmem:[%s3 + $0x2e0] sm:$0xff]
      %v3694 = vld [vmem:[%s3 + $0x2e8] sm:$0xff]
      %v3695 = vld [vmem:[%s3 + $0x2f0] sm:$0xff]
      %v3696 = vld [vmem:[%s3 + $0x2f8] sm:$0xff]
      %v3697 = vld [vmem:[%s3 + $0x300] sm:$0xff]
      %v3698 = vld [vmem:[%s3 + $0x308] sm:$0xff]
      %v3699 = vld [vmem:[%s3 + $0x310] sm:$0xff]
      %v3700 = vld [vmem:[%s3 + $0x318] sm:$0xff]
      %v3701 = vld [vmem:[%s3 + $0x320] sm:$0xff]
      %v3702 = vld [vmem:[%s3 + $0x328] sm:$0xff]
      %v3703 = vld [vmem:[%s3 + $0x330] sm:$0xff]
      %v3704 = vld [vmem:[%s3 + $0x338] sm:$0xff]
      %v3705 = vld [vmem:[%s3 + $0x340] sm:$0xff]
      %v3706 = vld [vmem:[%s3 + $0x348] sm:$0xff]
      %v3707 = vld [vmem:[%s3 + $0x350] sm:$0xff]
      %v3708 = vld [vmem:[%s3 + $0x358] sm:$0xff]
      %v3709 = vld [vmem:[%s3 + $0x360] sm:$0xff]
      %v3710 = vld [vmem:[%s3 + $0x368] sm:$0xff]
      %v3711 = vld [vmem:[%s3 + $0x370] sm:$0xff]
      %v3712 = vld [vmem:[%s3 + $0x378] sm:$0xff]
      %v3713 = vld [vmem:[%s3 + $0x380] sm:$0xff]
      %v3714 = vld [vmem:[%s3 + $0x388] sm:$0xff]
      %v3715 = vld [vmem:[%s3 + $0x390] sm:$0xff]
      %v3716 = vld [vmem:[%s3 + $0x398] sm:$0xff]
      %v3717 = vld [vmem:[%s3 + $0x3a0] sm:$0xff]
      %v3718 = vld [vmem:[%s3 + $0x3a8] sm:$0xff]
      %v3719 = vld [vmem:[%s3 + $0x3b0] sm:$0xff]
      %v3720 = vld [vmem:[%s3 + $0x3b8] sm:$0xff]
      %v3721 = vld [vmem:[%s3 + $0x3c0] sm:$0xff]
      %v3722 = vld [vmem:[%s3 + $0x3c8] sm:$0xff]
      %v3723 = vld [vmem:[%s3 + $0x3d0] sm:$0xff]
      %v3724 = vld [vmem:[%s3 + $0x3d8] sm:$0xff]
      %v3725 = vld [vmem:[%s3 + $0x3e0] sm:$0xff]
      %v3726 = vld [vmem:[%s3 + $0x3e8] sm:$0xff]
      %v3727 = vld [vmem:[%s3 + $0x3f0] sm:$0xff]
      %v3728 = vld [vmem:[%s3 + $0x3f8] sm:$0xff]
      %v3729 = vld [vmem:[%s3 + $0x400] sm:$0xff]
      %v3730 = vld [vmem:[%s3 + $0x408] sm:$0xff]
      %v3731 = vld [vmem:[%s3 + $0x410] sm:$0xff]
      %v3732 = vld [vmem:[%s3 + $0x418] sm:$0xff]
      %v3733 = vld [vmem:[%s3 + $0x420] sm:$0xff]
      %v3734 = vld [vmem:[%s3 + $0x428] sm:$0xff]
      %v3735 = vld [vmem:[%s3 + $0x430] sm:$0xff]
      %v3736 = vld [vmem:[%s3 + $0x438] sm:$0xff]
      %v3737 = vld [vmem:[%s3 + $0x440] sm:$0xff]
      %v3738 = vld [vmem:[%s3 + $0x448] sm:$0xff]
      %v3739 = vld [vmem:[%s3 + $0x450] sm:$0xff]
      %v3740 = vld [vmem:[%s3 + $0x458] sm:$0xff]
      %v3741 = vld [vmem:[%s3 + $0x460] sm:$0xff]
      %v3742 = vld [vmem:[%s3 + $0x468] sm:$0xff]
      %v3743 = vld [vmem:[%s3 + $0x470] sm:$0xff]
      %v3744 = vld [vmem:[%s3 + $0x478] sm:$0xff]
      %v3745 = vld [vmem:[%s3 + $0x480] sm:$0xff]
      %v3746 = vld [vmem:[%s3 + $0x488] sm:$0xff]
      %v3747 = vld [vmem:[%s3 + $0x490] sm:$0xff]
      %v3748 = vld [vmem:[%s3 + $0x498] sm:$0xff]
      %v3749 = vld [vmem:[%s3 + $0x4a0] sm:$0xff]
      %v3750 = vld [vmem:[%s3 + $0x4a8] sm:$0xff]
      %v3751 = vld [vmem:[%s3 + $0x4b0] sm:$0xff]
      %v3752 = vld [vmem:[%s3 + $0x4b8] sm:$0xff]
      %v3753 = vld [vmem:[%s3 + $0x4c0] sm:$0xff]
      %v3754 = vld [vmem:[%s3 + $0x4c8] sm:$0xff]
      %v3755 = vld [vmem:[%s3 + $0x4d0] sm:$0xff]
      %v3756 = vld [vmem:[%s3 + $0x4d8] sm:$0xff]
      %v3757 = vld [vmem:[%s3 + $0x4e0] sm:$0xff]
      %v3758 = vld [vmem:[%s3 + $0x4e8] sm:$0xff]
      %v3759 = vld [vmem:[%s3 + $0x4f0] sm:$0xff]
      %v3760 = vld [vmem:[%s3 + $0x4f8] sm:$0xff]
      %v3761 = vld [vmem:[%s4] sm:$0x3]
      %v3763 = vperm.slane %v3761, 0
      %v3764 = vperm.slane %v3761, 1
      %v3927 = vunpack.c.l.b16 %v3601
      %v3928 = vunpack.c.h.b16 %v3601
      %v3929 = vunpack.c.l.b16 %v3602
      %v3930 = vunpack.c.h.b16 %v3602
      %v3931 = vunpack.c.l.b16 %v3603
      %v3932 = vunpack.c.h.b16 %v3603
      %v3933 = vunpack.c.l.b16 %v3604
      %v3934 = vunpack.c.h.b16 %v3604
      %v3935 = vunpack.c.l.b16 %v3605
      %v3936 = vunpack.c.h.b16 %v3605
      %v3937 = vunpack.c.l.b16 %v3606
      %v3938 = vunpack.c.h.b16 %v3606
      %v3939 = vunpack.c.l.b16 %v3607
      %v3940 = vunpack.c.h.b16 %v3607
      %v3941 = vunpack.c.l.b16 %v3608
      %v3942 = vunpack.c.h.b16 %v3608
      %v3943 = vunpack.c.l.b16 %v3609
      %v3944 = vunpack.c.h.b16 %v3609
      %v3945 = vunpack.c.l.b16 %v3610
      %v3946 = vunpack.c.h.b16 %v3610
      %v3947 = vunpack.c.l.b16 %v3611
      %v3948 = vunpack.c.h.b16 %v3611
      %v3949 = vunpack.c.l.b16 %v3612
      %v3950 = vunpack.c.h.b16 %v3612
      %v3951 = vunpack.c.l.b16 %v3613
      %v3952 = vunpack.c.h.b16 %v3613
      %v3953 = vunpack.c.l.b16 %v3614
      %v3954 = vunpack.c.h.b16 %v3614
      %v3955 = vunpack.c.l.b16 %v3615
      %v3956 = vunpack.c.h.b16 %v3615
      %v3957 = vunpack.c.l.b16 %v3616
      %v3958 = vunpack.c.h.b16 %v3616
      %v3959 = vunpack.c.l.b16 %v3617
      %v3960 = vunpack.c.h.b16 %v3617
      %v3961 = vunpack.c.l.b16 %v3618
      %v3962 = vunpack.c.h.b16 %v3618
      %v3963 = vunpack.c.l.b16 %v3619
      %v3964 = vunpack.c.h.b16 %v3619
      %v3965 = vunpack.c.l.b16 %v3620
      %v3966 = vunpack.c.h.b16 %v3620
      %v3967 = vunpack.c.l.b16 %v3621
      %v3968 = vunpack.c.h.b16 %v3621
      %v3969 = vunpack.c.l.b16 %v3622
      %v3970 = vunpack.c.h.b16 %v3622
      %v3971 = vunpack.c.l.b16 %v3623
      %v3972 = vunpack.c.h.b16 %v3623
      %v3973 = vunpack.c.l.b16 %v3624
      %v3974 = vunpack.c.h.b16 %v3624
      %v3975 = vunpack.c.l.b16 %v3625
      %v3976 = vunpack.c.h.b16 %v3625
      %v3977 = vunpack.c.l.b16 %v3626
      %v3978 = vunpack.c.h.b16 %v3626
      %v3979 = vunpack.c.l.b16 %v3627
      %v3980 = vunpack.c.h.b16 %v3627
      %v3981 = vunpack.c.l.b16 %v3628
      %v3982 = vunpack.c.h.b16 %v3628
      %v3983 = vunpack.c.l.b16 %v3629
      %v3984 = vunpack.c.h.b16 %v3629
      %v3985 = vunpack.c.l.b16 %v3630
      %v3986 = vunpack.c.h.b16 %v3630
      %v3987 = vunpack.c.l.b16 %v3631
      %v3988 = vunpack.c.h.b16 %v3631
      %v3989 = vunpack.c.l.b16 %v3632
      %v3990 = vunpack.c.h.b16 %v3632
      %v3991 = vunpack.c.l.b16 %v3633
      %v3992 = vunpack.c.h.b16 %v3633
      %v3993 = vunpack.c.l.b16 %v3634
      %v3994 = vunpack.c.h.b16 %v3634
      %v3995 = vunpack.c.l.b16 %v3635
      %v3996 = vunpack.c.h.b16 %v3635
      %v3997 = vunpack.c.l.b16 %v3636
      %v3998 = vunpack.c.h.b16 %v3636
      %v3999 = vunpack.c.l.b16 %v3637
      %v4000 = vunpack.c.h.b16 %v3637
      %v4001 = vunpack.c.l.b16 %v3638
      %v4002 = vunpack.c.h.b16 %v3638
      %v4003 = vunpack.c.l.b16 %v3639
      %v4004 = vunpack.c.h.b16 %v3639
      %v4005 = vunpack.c.l.b16 %v3640
      %v4006 = vunpack.c.h.b16 %v3640
      %v4007 = vunpack.c.l.b16 %v3641
      %v4008 = vunpack.c.h.b16 %v3641
      %v4009 = vunpack.c.l.b16 %v3642
      %v4010 = vunpack.c.h.b16 %v3642
      %v4011 = vunpack.c.l.b16 %v3643
      %v4012 = vunpack.c.h.b16 %v3643
      %v4013 = vunpack.c.l.b16 %v3644
      %v4014 = vunpack.c.h.b16 %v3644
      %v4015 = vunpack.c.l.b16 %v3645
      %v4016 = vunpack.c.h.b16 %v3645
      %v4017 = vunpack.c.l.b16 %v3646
      %v4018 = vunpack.c.h.b16 %v3646
      %v4019 = vunpack.c.l.b16 %v3647
      %v4020 = vunpack.c.h.b16 %v3647
      %v4021 = vunpack.c.l.b16 %v3648
      %v4022 = vunpack.c.h.b16 %v3648
      %v4023 = vunpack.c.l.b16 %v3649
      %v4024 = vunpack.c.h.b16 %v3649
      %v4025 = vunpack.c.l.b16 %v3650
      %v4026 = vunpack.c.h.b16 %v3650
      %v4027 = vunpack.c.l.b16 %v3651
      %v4028 = vunpack.c.h.b16 %v3651
      %v4029 = vunpack.c.l.b16 %v3652
      %v4030 = vunpack.c.h.b16 %v3652
      %v4031 = vunpack.c.l.b16 %v3653
      %v4032 = vunpack.c.h.b16 %v3653
      %v4033 = vunpack.c.l.b16 %v3654
      %v4034 = vunpack.c.h.b16 %v3654
      %v4035 = vunpack.c.l.b16 %v3655
      %v4036 = vunpack.c.h.b16 %v3655
      %v4037 = vunpack.c.l.b16 %v3656
      %v4038 = vunpack.c.h.b16 %v3656
      %v4039 = vunpack.c.l.b16 %v3657
      %v4040 = vunpack.c.h.b16 %v3657
      %v4041 = vunpack.c.l.b16 %v3658
      %v4042 = vunpack.c.h.b16 %v3658
      %v4043 = vunpack.c.l.b16 %v3659
      %v4044 = vunpack.c.h.b16 %v3659
      %v4045 = vunpack.c.l.b16 %v3660
      %v4046 = vunpack.c.h.b16 %v3660
      %v4047 = vunpack.c.l.b16 %v3661
      %v4048 = vunpack.c.h.b16 %v3661
      %v4049 = vunpack.c.l.b16 %v3662
      %v4050 = vunpack.c.h.b16 %v3662
      %v4051 = vunpack.c.l.b16 %v3663
      %v4052 = vunpack.c.h.b16 %v3663
      %v4053 = vunpack.c.l.b16 %v3664
      %v4054 = vunpack.c.h.b16 %v3664
      %v4055 = vunpack.c.l.b16 %v3665
      %v4056 = vunpack.c.h.b16 %v3665
      %v4057 = vunpack.c.l.b16 %v3666
      %v4058 = vunpack.c.h.b16 %v3666
      %v4059 = vunpack.c.l.b16 %v3667
      %v4060 = vunpack.c.h.b16 %v3667
      %v4061 = vunpack.c.l.b16 %v3668
      %v4062 = vunpack.c.h.b16 %v3668
      %v4063 = vunpack.c.l.b16 %v3669
      %v4064 = vunpack.c.h.b16 %v3669
      %v4065 = vunpack.c.l.b16 %v3670
      %v4066 = vunpack.c.h.b16 %v3670
      %v4067 = vunpack.c.l.b16 %v3671
      %v4068 = vunpack.c.h.b16 %v3671
      %v4069 = vunpack.c.l.b16 %v3672
      %v4070 = vunpack.c.h.b16 %v3672
      %v4071 = vunpack.c.l.b16 %v3673
      %v4072 = vunpack.c.h.b16 %v3673
      %v4073 = vunpack.c.l.b16 %v3674
      %v4074 = vunpack.c.h.b16 %v3674
      %v4075 = vunpack.c.l.b16 %v3675
      %v4076 = vunpack.c.h.b16 %v3675
      %v4077 = vunpack.c.l.b16 %v3676
      %v4078 = vunpack.c.h.b16 %v3676
      %v4079 = vunpack.c.l.b16 %v3677
      %v4080 = vunpack.c.h.b16 %v3677
      %v4081 = vunpack.c.l.b16 %v3678
      %v4082 = vunpack.c.h.b16 %v3678
      %v4083 = vunpack.c.l.b16 %v3679
      %v4084 = vunpack.c.h.b16 %v3679
      %v4085 = vunpack.c.l.b16 %v3680
      %v4086 = vunpack.c.h.b16 %v3680
      %v4087 = vunpack.c.l.b16 %v3681
      %v4088 = vunpack.c.h.b16 %v3681
      %v4089 = vunpack.c.l.b16 %v3682
      %v4090 = vunpack.c.h.b16 %v3682
      %v4091 = vunpack.c.l.b16 %v3683
      %v4092 = vunpack.c.h.b16 %v3683
      %v4093 = vunpack.c.l.b16 %v3684
      %v4094 = vunpack.c.h.b16 %v3684
      %v4095 = vunpack.c.l.b16 %v3685
      %v4096 = vunpack.c.h.b16 %v3685
      %v4097 = vunpack.c.l.b16 %v3686
      %v4098 = vunpack.c.h.b16 %v3686
      %v4099 = vunpack.c.l.b16 %v3687
      %v4100 = vunpack.c.h.b16 %v3687
      %v4101 = vunpack.c.l.b16 %v3688
      %v4102 = vunpack.c.h.b16 %v3688
      %v4103 = vunpack.c.l.b16 %v3689
      %v4104 = vunpack.c.h.b16 %v3689
      %v4105 = vunpack.c.l.b16 %v3690
      %v4106 = vunpack.c.h.b16 %v3690
      %v4107 = vunpack.c.l.b16 %v3691
      %v4108 = vunpack.c.h.b16 %v3691
      %v4109 = vunpack.c.l.b16 %v3692
      %v4110 = vunpack.c.h.b16 %v3692
      %v4111 = vunpack.c.l.b16 %v3693
      %v4112 = vunpack.c.h.b16 %v3693
      %v4113 = vunpack.c.l.b16 %v3694
      %v4114 = vunpack.c.h.b16 %v3694
      %v4115 = vunpack.c.l.b16 %v3695
      %v4116 = vunpack.c.h.b16 %v3695
      %v4117 = vunpack.c.l.b16 %v3696
      %v4118 = vunpack.c.h.b16 %v3696
      %v4119 = vunpack.c.l.b16 %v3697
      %v4120 = vunpack.c.h.b16 %v3697
      %v4121 = vunpack.c.l.b16 %v3698
      %v4122 = vunpack.c.h.b16 %v3698
      %v4123 = vunpack.c.l.b16 %v3699
      %v4124 = vunpack.c.h.b16 %v3699
      %v4125 = vunpack.c.l.b16 %v3700
      %v4126 = vunpack.c.h.b16 %v3700
      %v4127 = vunpack.c.l.b16 %v3701
      %v4128 = vunpack.c.h.b16 %v3701
      %v4129 = vunpack.c.l.b16 %v3702
      %v4130 = vunpack.c.h.b16 %v3702
      %v4131 = vunpack.c.l.b16 %v3703
      %v4132 = vunpack.c.h.b16 %v3703
      %v4133 = vunpack.c.l.b16 %v3704
      %v4134 = vunpack.c.h.b16 %v3704
      %v4135 = vunpack.c.l.b16 %v3705
      %v4136 = vunpack.c.h.b16 %v3705
      %v4137 = vunpack.c.l.b16 %v3706
      %v4138 = vunpack.c.h.b16 %v3706
      %v4139 = vunpack.c.l.b16 %v3707
      %v4140 = vunpack.c.h.b16 %v3707
      %v4141 = vunpack.c.l.b16 %v3708
      %v4142 = vunpack.c.h.b16 %v3708
      %v4143 = vunpack.c.l.b16 %v3709
      %v4144 = vunpack.c.h.b16 %v3709
      %v4145 = vunpack.c.l.b16 %v3710
      %v4146 = vunpack.c.h.b16 %v3710
      %v4147 = vunpack.c.l.b16 %v3711
      %v4148 = vunpack.c.h.b16 %v3711
      %v4149 = vunpack.c.l.b16 %v3712
      %v4150 = vunpack.c.h.b16 %v3712
      %v4151 = vunpack.c.l.b16 %v3713
      %v4152 = vunpack.c.h.b16 %v3713
      %v4153 = vunpack.c.l.b16 %v3714
      %v4154 = vunpack.c.h.b16 %v3714
      %v4155 = vunpack.c.l.b16 %v3715
      %v4156 = vunpack.c.h.b16 %v3715
      %v4157 = vunpack.c.l.b16 %v3716
      %v4158 = vunpack.c.h.b16 %v3716
      %v4159 = vunpack.c.l.b16 %v3717
      %v4160 = vunpack.c.h.b16 %v3717
      %v4161 = vunpack.c.l.b16 %v3718
      %v4162 = vunpack.c.h.b16 %v3718
      %v4163 = vunpack.c.l.b16 %v3719
      %v4164 = vunpack.c.h.b16 %v3719
      %v4165 = vunpack.c.l.b16 %v3720
      %v4166 = vunpack.c.h.b16 %v3720
      %v4167 = vunpack.c.l.b16 %v3721
      %v4168 = vunpack.c.h.b16 %v3721
      %v4169 = vunpack.c.l.b16 %v3722
      %v4170 = vunpack.c.h.b16 %v3722
      %v4171 = vunpack.c.l.b16 %v3723
      %v4172 = vunpack.c.h.b16 %v3723
      %v4173 = vunpack.c.l.b16 %v3724
      %v4174 = vunpack.c.h.b16 %v3724
      %v4175 = vunpack.c.l.b16 %v3725
      %v4176 = vunpack.c.h.b16 %v3725
      %v4177 = vunpack.c.l.b16 %v3726
      %v4178 = vunpack.c.h.b16 %v3726
      %v4179 = vunpack.c.l.b16 %v3727
      %v4180 = vunpack.c.h.b16 %v3727
      %v4181 = vunpack.c.l.b16 %v3728
      %v4182 = vunpack.c.h.b16 %v3728
      %v4183 = vunpack.c.l.b16 %v3729
      %v4184 = vunpack.c.h.b16 %v3729
      %v4185 = vunpack.c.l.b16 %v3730
      %v4186 = vunpack.c.h.b16 %v3730
      %v4187 = vunpack.c.l.b16 %v3731
      %v4188 = vunpack.c.h.b16 %v3731
      %v4189 = vunpack.c.l.b16 %v3732
      %v4190 = vunpack.c.h.b16 %v3732
      %v4191 = vunpack.c.l.b16 %v3733
      %v4192 = vunpack.c.h.b16 %v3733
      %v4193 = vunpack.c.l.b16 %v3734
      %v4194 = vunpack.c.h.b16 %v3734
      %v4195 = vunpack.c.l.b16 %v3735
      %v4196 = vunpack.c.h.b16 %v3735
      %v4197 = vunpack.c.l.b16 %v3736
      %v4198 = vunpack.c.h.b16 %v3736
      %v4199 = vunpack.c.l.b16 %v3737
      %v4200 = vunpack.c.h.b16 %v3737
      %v4201 = vunpack.c.l.b16 %v3738
      %v4202 = vunpack.c.h.b16 %v3738
      %v4203 = vunpack.c.l.b16 %v3739
      %v4204 = vunpack.c.h.b16 %v3739
      %v4205 = vunpack.c.l.b16 %v3740
      %v4206 = vunpack.c.h.b16 %v3740
      %v4207 = vunpack.c.l.b16 %v3741
      %v4208 = vunpack.c.h.b16 %v3741
      %v4209 = vunpack.c.l.b16 %v3742
      %v4210 = vunpack.c.h.b16 %v3742
      %v4211 = vunpack.c.l.b16 %v3743
      %v4212 = vunpack.c.h.b16 %v3743
      %v4213 = vunpack.c.l.b16 %v3744
      %v4214 = vunpack.c.h.b16 %v3744
      %v4215 = vunpack.c.l.b16 %v3745
      %v4216 = vunpack.c.h.b16 %v3745
      %v4217 = vunpack.c.l.b16 %v3746
      %v4218 = vunpack.c.h.b16 %v3746
      %v4219 = vunpack.c.l.b16 %v3747
      %v4220 = vunpack.c.h.b16 %v3747
      %v4221 = vunpack.c.l.b16 %v3748
      %v4222 = vunpack.c.h.b16 %v3748
      %v4223 = vunpack.c.l.b16 %v3749
      %v4224 = vunpack.c.h.b16 %v3749
      %v4225 = vunpack.c.l.b16 %v3750
      %v4226 = vunpack.c.h.b16 %v3750
      %v4227 = vunpack.c.l.b16 %v3751
      %v4228 = vunpack.c.h.b16 %v3751
      %v4229 = vunpack.c.l.b16 %v3752
      %v4230 = vunpack.c.h.b16 %v3752
      %v4231 = vunpack.c.l.b16 %v3753
      %v4232 = vunpack.c.h.b16 %v3753
      %v4233 = vunpack.c.l.b16 %v3754
      %v4234 = vunpack.c.h.b16 %v3754
      %v4235 = vunpack.c.l.b16 %v3755
      %v4236 = vunpack.c.h.b16 %v3755
      %v4237 = vunpack.c.l.b16 %v3756
      %v4238 = vunpack.c.h.b16 %v3756
      %v4239 = vunpack.c.l.b16 %v3757
      %v4240 = vunpack.c.h.b16 %v3757
      %v4241 = vunpack.c.l.b16 %v3758
      %v4242 = vunpack.c.h.b16 %v3758
      %v4243 = vunpack.c.l.b16 %v3759
      %v4244 = vunpack.c.h.b16 %v3759
      %v4245 = vunpack.c.l.b16 %v3760
      %v4246 = vunpack.c.h.b16 %v3760
      %v4247 = vpack.c.b16 %v3929, %v3927
      %v4248 = vpack.c.b16 %v3930, %v3928
      %v4249 = vpack.c.b16 %v3933, %v3931
      %v4250 = vpack.c.b16 %v3934, %v3932
      %v4251 = vpack.c.b16 %v3937, %v3935
      %v4252 = vpack.c.b16 %v3938, %v3936
      %v4253 = vpack.c.b16 %v3941, %v3939
      %v4254 = vpack.c.b16 %v3942, %v3940
      %v4255 = vpack.c.b16 %v3945, %v3943
      %v4256 = vpack.c.b16 %v3946, %v3944
      %v4257 = vpack.c.b16 %v3949, %v3947
      %v4258 = vpack.c.b16 %v3950, %v3948
      %v4259 = vpack.c.b16 %v3953, %v3951
      %v4260 = vpack.c.b16 %v3954, %v3952
      %v4261 = vpack.c.b16 %v3957, %v3955
      %v4262 = vpack.c.b16 %v3958, %v3956
      %v4263 = vpack.c.b16 %v3961, %v3959
      %v4264 = vpack.c.b16 %v3962, %v3960
      %v4265 = vpack.c.b16 %v3965, %v3963
      %v4266 = vpack.c.b16 %v3966, %v3964
      %v4267 = vpack.c.b16 %v3969, %v3967
      %v4268 = vpack.c.b16 %v3970, %v3968
      %v4269 = vpack.c.b16 %v3973, %v3971
      %v4270 = vpack.c.b16 %v3974, %v3972
      %v4271 = vpack.c.b16 %v3977, %v3975
      %v4272 = vpack.c.b16 %v3978, %v3976
      %v4273 = vpack.c.b16 %v3981, %v3979
      %v4274 = vpack.c.b16 %v3982, %v3980
      %v4275 = vpack.c.b16 %v3985, %v3983
      %v4276 = vpack.c.b16 %v3986, %v3984
      %v4277 = vpack.c.b16 %v3989, %v3987
      %v4278 = vpack.c.b16 %v3990, %v3988
      %v4279 = vpack.c.b16 %v3993, %v3991
      %v4280 = vpack.c.b16 %v3994, %v3992
      %v4281 = vpack.c.b16 %v3997, %v3995
      %v4282 = vpack.c.b16 %v3998, %v3996
      %v4283 = vpack.c.b16 %v4001, %v3999
      %v4284 = vpack.c.b16 %v4002, %v4000
      %v4285 = vpack.c.b16 %v4005, %v4003
      %v4286 = vpack.c.b16 %v4006, %v4004
      %v4287 = vpack.c.b16 %v4009, %v4007
      %v4288 = vpack.c.b16 %v4010, %v4008
      %v4289 = vpack.c.b16 %v4013, %v4011
      %v4290 = vpack.c.b16 %v4014, %v4012
      %v4291 = vpack.c.b16 %v4017, %v4015
      %v4292 = vpack.c.b16 %v4018, %v4016
      %v4293 = vpack.c.b16 %v4021, %v4019
      %v4294 = vpack.c.b16 %v4022, %v4020
      %v4295 = vpack.c.b16 %v4025, %v4023
      %v4296 = vpack.c.b16 %v4026, %v4024
      %v4297 = vpack.c.b16 %v4029, %v4027
      %v4298 = vpack.c.b16 %v4030, %v4028
      %v4299 = vpack.c.b16 %v4033, %v4031
      %v4300 = vpack.c.b16 %v4034, %v4032
      %v4301 = vpack.c.b16 %v4037, %v4035
      %v4302 = vpack.c.b16 %v4038, %v4036
      %v4303 = vpack.c.b16 %v4041, %v4039
      %v4304 = vpack.c.b16 %v4042, %v4040
      %v4305 = vpack.c.b16 %v4045, %v4043
      %v4306 = vpack.c.b16 %v4046, %v4044
      %v4307 = vpack.c.b16 %v4049, %v4047
      %v4308 = vpack.c.b16 %v4050, %v4048
      %v4309 = vpack.c.b16 %v4053, %v4051
      %v4310 = vpack.c.b16 %v4054, %v4052
      %v4311 = vpack.c.b16 %v4057, %v4055
      %v4312 = vpack.c.b16 %v4058, %v4056
      %v4313 = vpack.c.b16 %v4061, %v4059
      %v4314 = vpack.c.b16 %v4062, %v4060
      %v4315 = vpack.c.b16 %v4065, %v4063
      %v4316 = vpack.c.b16 %v4066, %v4064
      %v4317 = vpack.c.b16 %v4069, %v4067
      %v4318 = vpack.c.b16 %v4070, %v4068
      %v4319 = vpack.c.b16 %v4073, %v4071
      %v4320 = vpack.c.b16 %v4074, %v4072
      %v4321 = vpack.c.b16 %v4077, %v4075
      %v4322 = vpack.c.b16 %v4078, %v4076
      %v4323 = vpack.c.b16 %v4081, %v4079
      %v4324 = vpack.c.b16 %v4082, %v4080
      %v4325 = vpack.c.b16 %v4085, %v4083
      %v4326 = vpack.c.b16 %v4086, %v4084
      %v4327 = vpack.c.b16 %v4089, %v4087
      %v4328 = vpack.c.b16 %v4090, %v4088
      %v4329 = vpack.c.b16 %v4093, %v4091
      %v4330 = vpack.c.b16 %v4094, %v4092
      %v4331 = vpack.c.b16 %v4097, %v4095
      %v4332 = vpack.c.b16 %v4098, %v4096
      %v4333 = vpack.c.b16 %v4101, %v4099
      %v4334 = vpack.c.b16 %v4102, %v4100
      %v4335 = vpack.c.b16 %v4105, %v4103
      %v4336 = vpack.c.b16 %v4106, %v4104
      %v4337 = vpack.c.b16 %v4109, %v4107
      %v4338 = vpack.c.b16 %v4110, %v4108
      %v4339 = vpack.c.b16 %v4113, %v4111
      %v4340 = vpack.c.b16 %v4114, %v4112
      %v4341 = vpack.c.b16 %v4117, %v4115
      %v4342 = vpack.c.b16 %v4118, %v4116
      %v4343 = vpack.c.b16 %v4121, %v4119
      %v4344 = vpack.c.b16 %v4122, %v4120
      %v4345 = vpack.c.b16 %v4125, %v4123
      %v4346 = vpack.c.b16 %v4126, %v4124
      %v4347 = vpack.c.b16 %v4129, %v4127
      %v4348 = vpack.c.b16 %v4130, %v4128
      %v4349 = vpack.c.b16 %v4133, %v4131
      %v4350 = vpack.c.b16 %v4134, %v4132
      %v4351 = vpack.c.b16 %v4137, %v4135
      %v4352 = vpack.c.b16 %v4138, %v4136
      %v4353 = vpack.c.b16 %v4141, %v4139
      %v4354 = vpack.c.b16 %v4142, %v4140
      %v4355 = vpack.c.b16 %v4145, %v4143
      %v4356 = vpack.c.b16 %v4146, %v4144
      %v4357 = vpack.c.b16 %v4149, %v4147
      %v4358 = vpack.c.b16 %v4150, %v4148
      %v4359 = vpack.c.b16 %v4153, %v4151
      %v4360 = vpack.c.b16 %v4154, %v4152
      %v4361 = vpack.c.b16 %v4157, %v4155
      %v4362 = vpack.c.b16 %v4158, %v4156
      %v4363 = vpack.c.b16 %v4161, %v4159
      %v4364 = vpack.c.b16 %v4162, %v4160
      %v4365 = vpack.c.b16 %v4165, %v4163
      %v4366 = vpack.c.b16 %v4166, %v4164
      %v4367 = vpack.c.b16 %v4169, %v4167
      %v4368 = vpack.c.b16 %v4170, %v4168
      %v4369 = vpack.c.b16 %v4173, %v4171
      %v4370 = vpack.c.b16 %v4174, %v4172
      %v4371 = vpack.c.b16 %v4177, %v4175
      %v4372 = vpack.c.b16 %v4178, %v4176
      %v4373 = vpack.c.b16 %v4181, %v4179
      %v4374 = vpack.c.b16 %v4182, %v4180
      %v4375 = vpack.c.b16 %v4185, %v4183
      %v4376 = vpack.c.b16 %v4186, %v4184
      %v4377 = vpack.c.b16 %v4189, %v4187
      %v4378 = vpack.c.b16 %v4190, %v4188
      %v4379 = vpack.c.b16 %v4193, %v4191
      %v4380 = vpack.c.b16 %v4194, %v4192
      %v4381 = vpack.c.b16 %v4197, %v4195
      %v4382 = vpack.c.b16 %v4198, %v4196
      %v4383 = vpack.c.b16 %v4201, %v4199
      %v4384 = vpack.c.b16 %v4202, %v4200
      %v4385 = vpack.c.b16 %v4205, %v4203
      %v4386 = vpack.c.b16 %v4206, %v4204
      %v4387 = vpack.c.b16 %v4209, %v4207
      %v4388 = vpack.c.b16 %v4210, %v4208
      %v4389 = vpack.c.b16 %v4213, %v4211
      %v4390 = vpack.c.b16 %v4214, %v4212
      %v4391 = vpack.c.b16 %v4217, %v4215
      %v4392 = vpack.c.b16 %v4218, %v4216
      %v4393 = vpack.c.b16 %v4221, %v4219
      %v4394 = vpack.c.b16 %v4222, %v4220
      %v4395 = vpack.c.b16 %v4225, %v4223
      %v4396 = vpack.c.b16 %v4226, %v4224
      %v4397 = vpack.c.b16 %v4229, %v4227
      %v4398 = vpack.c.b16 %v4230, %v4228
      %v4399 = vpack.c.b16 %v4233, %v4231
      %v4400 = vpack.c.b16 %v4234, %v4232
      %v4401 = vpack.c.b16 %v4237, %v4235
      %v4402 = vpack.c.b16 %v4238, %v4236
      %v4403 = vpack.c.b16 %v4241, %v4239
      %v4404 = vpack.c.b16 %v4242, %v4240
      %v4405 = vpack.c.b16 %v4245, %v4243
      %v4406 = vpack.c.b16 %v4246, %v4244
      %4567 = vmatpush.bf16.msra.mxu0 %v4261
      %4568 = vmatpush.bf16.msra.mxu0 %v4259
      %4569 = vmatpush.bf16.msra.mxu0 %v4257
      %4570 = vmatpush.bf16.msra.mxu0 %v4255
      %4571 = vmatpush.bf16.msra.mxu0 %v4253
      %4572 = vmatpush.bf16.msra.mxu0 %v4251
      %4573 = vmatpush.bf16.msra.mxu0 %v4249
      %4574 = vmatpush.bf16.msra.mxu0 %v4247
      %4575 = vmatmul.bf16.gmra.mxu0 %v3445
      %v4576 = vpop.f32.mrf.mxu0
      %v4577 = vadd.f32 %v3763, %v4576
      %v4578 = vpop.f32.mrf.mxu0
      %v4579 = vadd.f32 %v3763, %v4578
      %4580 = vmatmul.bf16.gmra.mxu0 %v3447
      %v4581 = vpop.f32.mrf.mxu0
      %v4582 = vpop.f32.mrf.mxu0
      %4583 = vmatmul.bf16.gmra.mxu0 %v3449
      %v4584 = vpop.f32.mrf.mxu0
      %v4585 = vadd.f32 %v3763, %v4584
      %v4586 = vpop.f32.mrf.mxu0
      %v4587 = vadd.f32 %v3763, %v4586
      %4588 = vmatmul.bf16.gmra.mxu0 %v3451
      %v4589 = vpop.f32.mrf.mxu0
      %v4590 = vpop.f32.mrf.mxu0
      %4591 = vmatmul.bf16.gmra.mxu0 %v3453
      %v4592 = vpop.f32.mrf.mxu0
      %v4593 = vadd.f32 %v3763, %v4592
      %v4594 = vpop.f32.mrf.mxu0
      %v4595 = vadd.f32 %v3763, %v4594
      %4596 = vmatmul.bf16.gmra.mxu0 %v3455
      %v4597 = vpop.f32.mrf.mxu0
      %v4598 = vpop.f32.mrf.mxu0
      %4599 = vmatmul.bf16.gmra.mxu0 %v3457
      %v4600 = vpop.f32.mrf.mxu0
      %v4601 = vadd.f32 %v3763, %v4600
      %v4602 = vpop.f32.mrf.mxu0
      %v4603 = vadd.f32 %v3763, %v4602
      %4604 = vmatmul.bf16.gmra.mxu0 %v3459
      %v4605 = vpop.f32.mrf.mxu0
      %v4606 = vpop.f32.mrf.mxu0
      %4607 = vmatmul.bf16.gmra.mxu0 %v3461
      %v4608 = vpop.f32.mrf.mxu0
      %v4609 = vadd.f32 %v3763, %v4608
      %v4610 = vpop.f32.mrf.mxu0
      %v4611 = vadd.f32 %v3763, %v4610
      %4612 = vmatmul.bf16.gmra.mxu0 %v3463
      %v4613 = vpop.f32.mrf.mxu0
      %v4614 = vpop.f32.mrf.mxu0
      %4615 = vmatmul.bf16.gmra.mxu0 %v3465
      %v4616 = vpop.f32.mrf.mxu0
      %v4617 = vadd.f32 %v3763, %v4616
      %v4618 = vpop.f32.mrf.mxu0
      %v4619 = vadd.f32 %v3763, %v4618
      %4620 = vmatmul.bf16.gmra.mxu0 %v3467
      %v4621 = vpop.f32.mrf.mxu0
      %v4622 = vpop.f32.mrf.mxu0
      %4623 = vmatmul.bf16.gmra.mxu0 %v3469
      %v4624 = vpop.f32.mrf.mxu0
      %v4625 = vadd.f32 %v3763, %v4624
      %v4626 = vpop.f32.mrf.mxu0
      %v4627 = vadd.f32 %v3763, %v4626
      %4628 = vmatmul.bf16.gmra.mxu0 %v3471
      %v4629 = vpop.f32.mrf.mxu0
      %v4630 = vpop.f32.mrf.mxu0
      %4631 = vmatmul.bf16.gmra.mxu0 %v3473
      %v4632 = vpop.f32.mrf.mxu0
      %v4633 = vadd.f32 %v3763, %v4632
      %v4634 = vpop.f32.mrf.mxu0
      %v4635 = vadd.f32 %v3763, %v4634
      %4636 = vmatmul.bf16.gmra.mxu0 %v3475
      %v4637 = vpop.f32.mrf.mxu0
      %v4638 = vpop.f32.mrf.mxu0
      %4639 = vmatmul.bf16.gmra.mxu0 %v3477
      %v4640 = vpop.f32.mrf.mxu0
      %v4641 = vadd.f32 %v3763, %v4640
      %v4642 = vpop.f32.mrf.mxu0
      %v4643 = vadd.f32 %v3763, %v4642
      %4644 = vmatmul.bf16.gmra.mxu0 %v3479
      %v4645 = vpop.f32.mrf.mxu0
      %v4646 = vpop.f32.mrf.mxu0
      %4647 = vmatmul.bf16.gmra.mxu0 %v3481
      %v4648 = vpop.f32.mrf.mxu0
      %v4649 = vadd.f32 %v3763, %v4648
      %v4650 = vpop.f32.mrf.mxu0
      %v4651 = vadd.f32 %v3763, %v4650
      %4652 = vdwg.mxu0
      %4653 = vmatpush.bf16.msra.mxu0 %v4277
      %4654 = vmatpush.bf16.msra.mxu0 %v4275
      %4655 = vmatpush.bf16.msra.mxu0 %v4273
      %4656 = vmatpush.bf16.msra.mxu0 %v4271
      %4657 = vmatpush.bf16.msra.mxu0 %v4269
      %4658 = vmatpush.bf16.msra.mxu0 %v4267
      %4659 = vmatpush.bf16.msra.mxu0 %v4265
      %4660 = vmatpush.bf16.msra.mxu0 %v4263
      %4661 = vmatmul.bf16.gmra.mxu0 %v3446
      %v4662 = vpop.f32.mrf.mxu0
      %v4663 = vadd.f32 %v4577, %v4662
      %v4664 = vpop.f32.mrf.mxu0
      %v4665 = vadd.f32 %v4579, %v4664
      %4666 = vmatmul.bf16.gmra.mxu0 %v3448
      %v4667 = vpop.f32.mrf.mxu0
      %v4668 = vpop.f32.mrf.mxu0
      %4669 = vmatmul.bf16.gmra.mxu0 %v3450
      %v4670 = vpop.f32.mrf.mxu0
      %v4671 = vadd.f32 %v4585, %v4670
      %v4672 = vpop.f32.mrf.mxu0
      %v4673 = vadd.f32 %v4587, %v4672
      %4674 = vmatmul.bf16.gmra.mxu0 %v3452
      %v4675 = vpop.f32.mrf.mxu0
      %v4676 = vpop.f32.mrf.mxu0
      %4677 = vmatmul.bf16.gmra.mxu0 %v3454
      %v4678 = vpop.f32.mrf.mxu0
      %v4679 = vadd.f32 %v4593, %v4678
      %v4680 = vpop.f32.mrf.mxu0
      %v4681 = vadd.f32 %v4595, %v4680
      %4682 = vmatmul.bf16.gmra.mxu0 %v3456
      %v4683 = vpop.f32.mrf.mxu0
      %v4684 = vpop.f32.mrf.mxu0
      %4685 = vmatmul.bf16.gmra.mxu0 %v3458
      %v4686 = vpop.f32.mrf.mxu0
      %v4687 = vadd.f32 %v4601, %v4686
      %v4688 = vpop.f32.mrf.mxu0
      %v4689 = vadd.f32 %v4603, %v4688
      %4690 = vmatmul.bf16.gmra.mxu0 %v3460
      %v4691 = vpop.f32.mrf.mxu0
      %v4692 = vpop.f32.mrf.mxu0
      %4693 = vmatmul.bf16.gmra.mxu0 %v3462
      %v4694 = vpop.f32.mrf.mxu0
      %v4695 = vadd.f32 %v4609, %v4694
      %v4696 = vpop.f32.mrf.mxu0
      %v4697 = vadd.f32 %v4611, %v4696
      %4698 = vmatmul.bf16.gmra.mxu0 %v3464
      %v4699 = vpop.f32.mrf.mxu0
      %v4700 = vpop.f32.mrf.mxu0
      %4701 = vmatmul.bf16.gmra.mxu0 %v3466
      %v4702 = vpop.f32.mrf.mxu0
      %v4703 = vadd.f32 %v4617, %v4702
      %v4704 = vpop.f32.mrf.mxu0
      %v4705 = vadd.f32 %v4619, %v4704
      %4706 = vmatmul.bf16.gmra.mxu0 %v3468
      %v4707 = vpop.f32.mrf.mxu0
      %v4708 = vpop.f32.mrf.mxu0
      %4709 = vmatmul.bf16.gmra.mxu0 %v3470
      %v4710 = vpop.f32.mrf.mxu0
      %v4711 = vadd.f32 %v4625, %v4710
      %v4712 = vpop.f32.mrf.mxu0
      %v4713 = vadd.f32 %v4627, %v4712
      %4714 = vmatmul.bf16.gmra.mxu0 %v3472
      %v4715 = vpop.f32.mrf.mxu0
      %v4716 = vpop.f32.mrf.mxu0
      %4717 = vmatmul.bf16.gmra.mxu0 %v3474
      %v4718 = vpop.f32.mrf.mxu0
      %v4719 = vadd.f32 %v4633, %v4718
      %v4720 = vpop.f32.mrf.mxu0
      %v4721 = vadd.f32 %v4635, %v4720
      %4722 = vmatmul.bf16.gmra.mxu0 %v3476
      %v4723 = vpop.f32.mrf.mxu0
      %v4724 = vpop.f32.mrf.mxu0
      %4725 = vmatmul.bf16.gmra.mxu0 %v3478
      %v4726 = vpop.f32.mrf.mxu0
      %v4727 = vadd.f32 %v4641, %v4726
      %v4728 = vpop.f32.mrf.mxu0
      %v4729 = vadd.f32 %v4643, %v4728
      %4730 = vmatmul.bf16.gmra.mxu0 %v3480
      %v4731 = vpop.f32.mrf.mxu0
      %v4732 = vpop.f32.mrf.mxu0
      %4733 = vmatmul.bf16.gmra.mxu0 %v3482
      %v4734 = vpop.f32.mrf.mxu0
      %v4735 = vadd.f32 %v4649, %v4734
      %v4736 = vpop.f32.mrf.mxu0
      %v4737 = vadd.f32 %v4651, %v4736
      %4738 = vdwg.mxu0
      %4739 = vmatpush.bf16.msra.mxu0 %v4293
      %4740 = vmatpush.bf16.msra.mxu0 %v4291
      %4741 = vmatpush.bf16.msra.mxu0 %v4289
      %4742 = vmatpush.bf16.msra.mxu0 %v4287
      %4743 = vmatpush.bf16.msra.mxu0 %v4285
      %4744 = vmatpush.bf16.msra.mxu0 %v4283
      %4745 = vmatpush.bf16.msra.mxu0 %v4281
      %4746 = vmatpush.bf16.msra.mxu0 %v4279
      %4747 = vmatmul.bf16.gmra.mxu0 %v3449
      %v4748 = vpop.f32.mrf.mxu0
      %v4749 = vadd.f32 %v4663, %v4748
      %v4750 = vpop.f32.mrf.mxu0
      %v4751 = vadd.f32 %v4665, %v4750
      %4752 = vmatmul.bf16.gmra.mxu0 %v3451
      %v4753 = vpop.f32.mrf.mxu0
      %v4754 = vpop.f32.mrf.mxu0
      %4755 = vmatmul.bf16.gmra.mxu0 %v3453
      %v4756 = vpop.f32.mrf.mxu0
      %v4757 = vadd.f32 %v4671, %v4756
      %v4758 = vpop.f32.mrf.mxu0
      %v4759 = vadd.f32 %v4673, %v4758
      %4760 = vmatmul.bf16.gmra.mxu0 %v3455
      %v4761 = vpop.f32.mrf.mxu0
      %v4762 = vpop.f32.mrf.mxu0
      %4763 = vmatmul.bf16.gmra.mxu0 %v3457
      %v4764 = vpop.f32.mrf.mxu0
      %v4765 = vadd.f32 %v4679, %v4764
      %v4766 = vpop.f32.mrf.mxu0
      %v4767 = vadd.f32 %v4681, %v4766
      %4768 = vmatmul.bf16.gmra.mxu0 %v3459
      %v4769 = vpop.f32.mrf.mxu0
      %v4770 = vpop.f32.mrf.mxu0
      %4771 = vmatmul.bf16.gmra.mxu0 %v3461
      %v4772 = vpop.f32.mrf.mxu0
      %v4773 = vadd.f32 %v4687, %v4772
      %v4774 = vpop.f32.mrf.mxu0
      %v4775 = vadd.f32 %v4689, %v4774
      %4776 = vmatmul.bf16.gmra.mxu0 %v3463
      %v4777 = vpop.f32.mrf.mxu0
      %v4778 = vpop.f32.mrf.mxu0
      %4779 = vmatmul.bf16.gmra.mxu0 %v3465
      %v4780 = vpop.f32.mrf.mxu0
      %v4781 = vadd.f32 %v4695, %v4780
      %v4782 = vpop.f32.mrf.mxu0
      %v4783 = vadd.f32 %v4697, %v4782
      %4784 = vmatmul.bf16.gmra.mxu0 %v3467
      %v4785 = vpop.f32.mrf.mxu0
      %v4786 = vpop.f32.mrf.mxu0
      %4787 = vmatmul.bf16.gmra.mxu0 %v3469
      %v4788 = vpop.f32.mrf.mxu0
      %v4789 = vadd.f32 %v4703, %v4788
      %v4790 = vpop.f32.mrf.mxu0
      %v4791 = vadd.f32 %v4705, %v4790
      %4792 = vmatmul.bf16.gmra.mxu0 %v3471
      %v4793 = vpop.f32.mrf.mxu0
      %v4794 = vpop.f32.mrf.mxu0
      %4795 = vmatmul.bf16.gmra.mxu0 %v3473
      %v4796 = vpop.f32.mrf.mxu0
      %v4797 = vadd.f32 %v4711, %v4796
      %v4798 = vpop.f32.mrf.mxu0
      %v4799 = vadd.f32 %v4713, %v4798
      %4800 = vmatmul.bf16.gmra.mxu0 %v3475
      %v4801 = vpop.f32.mrf.mxu0
      %v4802 = vpop.f32.mrf.mxu0
      %4803 = vmatmul.bf16.gmra.mxu0 %v3477
      %v4804 = vpop.f32.mrf.mxu0
      %v4805 = vadd.f32 %v4719, %v4804
      %v4806 = vpop.f32.mrf.mxu0
      %v4807 = vadd.f32 %v4721, %v4806
      %4808 = vmatmul.bf16.gmra.mxu0 %v3479
      %v4809 = vpop.f32.mrf.mxu0
      %v4810 = vpop.f32.mrf.mxu0
      %4811 = vmatmul.bf16.gmra.mxu0 %v3481
      %v4812 = vpop.f32.mrf.mxu0
      %v4813 = vadd.f32 %v4727, %v4812
      %v4814 = vpop.f32.mrf.mxu0
      %v4815 = vadd.f32 %v4729, %v4814
      %4816 = vmatmul.bf16.gmra.mxu0 %v3533
      %v4817 = vpop.f32.mrf.mxu0
      %v4818 = vpop.f32.mrf.mxu0
      %4819 = vmatmul.bf16.gmra.mxu0 %v3535
      %v4820 = vpop.f32.mrf.mxu0
      %v4821 = vadd.f32 %v4735, %v4820
      %v4822 = vpop.f32.mrf.mxu0
      %v4823 = vadd.f32 %v4737, %v4822
      %4824 = vdwg.mxu0
      %4825 = vmatpush.bf16.msra.mxu0 %v4309
      %4826 = vmatpush.bf16.msra.mxu0 %v4307
      %4827 = vmatpush.bf16.msra.mxu0 %v4305
      %4828 = vmatpush.bf16.msra.mxu0 %v4303
      %4829 = vmatpush.bf16.msra.mxu0 %v4301
      %4830 = vmatpush.bf16.msra.mxu0 %v4299
      %4831 = vmatpush.bf16.msra.mxu0 %v4297
      %4832 = vmatpush.bf16.msra.mxu0 %v4295
      %4833 = vmatmul.bf16.gmra.mxu0 %v3450
      %v4834 = vpop.f32.mrf.mxu0
      %v4835 = vadd.f32 %v4749, %v4834
      %v4836 = vpop.f32.mrf.mxu0
      %v4837 = vadd.f32 %v4751, %v4836
      %4838 = vmatmul.bf16.gmra.mxu0 %v3452
      %v4839 = vpop.f32.mrf.mxu0
      %v4840 = vpop.f32.mrf.mxu0
      %4841 = vmatmul.bf16.gmra.mxu0 %v3454
      %v4842 = vpop.f32.mrf.mxu0
      %v4843 = vadd.f32 %v4757, %v4842
      %v4844 = vpop.f32.mrf.mxu0
      %v4845 = vadd.f32 %v4759, %v4844
      %4846 = vmatmul.bf16.gmra.mxu0 %v3456
      %v4847 = vpop.f32.mrf.mxu0
      %v4848 = vpop.f32.mrf.mxu0
      %4849 = vmatmul.bf16.gmra.mxu0 %v3458
      %v4850 = vpop.f32.mrf.mxu0
      %v4851 = vadd.f32 %v4765, %v4850
      %v4852 = vpop.f32.mrf.mxu0
      %v4853 = vadd.f32 %v4767, %v4852
      %4854 = vmatmul.bf16.gmra.mxu0 %v3460
      %v4855 = vpop.f32.mrf.mxu0
      %v4856 = vpop.f32.mrf.mxu0
      %4857 = vmatmul.bf16.gmra.mxu0 %v3462
      %v4858 = vpop.f32.mrf.mxu0
      %v4859 = vadd.f32 %v4773, %v4858
      %v4860 = vpop.f32.mrf.mxu0
      %v4861 = vadd.f32 %v4775, %v4860
      %4862 = vmatmul.bf16.gmra.mxu0 %v3464
      %v4863 = vpop.f32.mrf.mxu0
      %v4864 = vpop.f32.mrf.mxu0
      %4865 = vmatmul.bf16.gmra.mxu0 %v3466
      %v4866 = vpop.f32.mrf.mxu0
      %v4867 = vadd.f32 %v4781, %v4866
      %v4868 = vpop.f32.mrf.mxu0
      %v4869 = vadd.f32 %v4783, %v4868
      %4870 = vmatmul.bf16.gmra.mxu0 %v3468
      %v4871 = vpop.f32.mrf.mxu0
      %v4872 = vpop.f32.mrf.mxu0
      %4873 = vmatmul.bf16.gmra.mxu0 %v3470
      %v4874 = vpop.f32.mrf.mxu0
      %v4875 = vadd.f32 %v4789, %v4874
      %v4876 = vpop.f32.mrf.mxu0
      %v4877 = vadd.f32 %v4791, %v4876
      %4878 = vmatmul.bf16.gmra.mxu0 %v3472
      %v4879 = vpop.f32.mrf.mxu0
      %v4880 = vpop.f32.mrf.mxu0
      %4881 = vmatmul.bf16.gmra.mxu0 %v3474
      %v4882 = vpop.f32.mrf.mxu0
      %v4883 = vadd.f32 %v4797, %v4882
      %v4884 = vpop.f32.mrf.mxu0
      %v4885 = vadd.f32 %v4799, %v4884
      %4886 = vmatmul.bf16.gmra.mxu0 %v3476
      %v4887 = vpop.f32.mrf.mxu0
      %v4888 = vpop.f32.mrf.mxu0
      %4889 = vmatmul.bf16.gmra.mxu0 %v3478
      %v4890 = vpop.f32.mrf.mxu0
      %v4891 = vadd.f32 %v4805, %v4890
      %v4892 = vpop.f32.mrf.mxu0
      %v4893 = vadd.f32 %v4807, %v4892
      %4894 = vmatmul.bf16.gmra.mxu0 %v3480
      %v4895 = vpop.f32.mrf.mxu0
      %v4896 = vpop.f32.mrf.mxu0
      %4897 = vmatmul.bf16.gmra.mxu0 %v3482
      %v4898 = vpop.f32.mrf.mxu0
      %v4899 = vadd.f32 %v4813, %v4898
      %v4900 = vpop.f32.mrf.mxu0
      %v4901 = vadd.f32 %v4815, %v4900
      %4902 = vmatmul.bf16.gmra.mxu0 %v3534
      %v4903 = vpop.f32.mrf.mxu0
      %v4904 = vpop.f32.mrf.mxu0
      %4905 = vmatmul.bf16.gmra.mxu0 %v3536
      %v4906 = vpop.f32.mrf.mxu0
      %v4907 = vadd.f32 %v4821, %v4906
      %v4908 = vpop.f32.mrf.mxu0
      %v4909 = vadd.f32 %v4823, %v4908
      %4910 = vdwg.mxu0
      %4911 = vmatpush.bf16.msra.mxu0 %v4325
      %4912 = vmatpush.bf16.msra.mxu0 %v4323
      %4913 = vmatpush.bf16.msra.mxu0 %v4321
      %4914 = vmatpush.bf16.msra.mxu0 %v4319
      %4915 = vmatpush.bf16.msra.mxu0 %v4317
      %4916 = vmatpush.bf16.msra.mxu0 %v4315
      %4917 = vmatpush.bf16.msra.mxu0 %v4313
      %4918 = vmatpush.bf16.msra.mxu0 %v4311
      %4919 = vmatmul.bf16.gmra.mxu0 %v3453
      %v4920 = vpop.f32.mrf.mxu0
      %v4921 = vadd.f32 %v4835, %v4920
      %v4922 = vpop.f32.mrf.mxu0
      %v4923 = vadd.f32 %v4837, %v4922
      %4924 = vmatmul.bf16.gmra.mxu0 %v3455
      %v4925 = vpop.f32.mrf.mxu0
      %v4926 = vpop.f32.mrf.mxu0
      %4927 = vmatmul.bf16.gmra.mxu0 %v3457
      %v4928 = vpop.f32.mrf.mxu0
      %v4929 = vadd.f32 %v4843, %v4928
      %v4930 = vpop.f32.mrf.mxu0
      %v4931 = vadd.f32 %v4845, %v4930
      %4932 = vmatmul.bf16.gmra.mxu0 %v3459
      %v4933 = vpop.f32.mrf.mxu0
      %v4934 = vpop.f32.mrf.mxu0
      %4935 = vmatmul.bf16.gmra.mxu0 %v3461
      %v4936 = vpop.f32.mrf.mxu0
      %v4937 = vadd.f32 %v4851, %v4936
      %v4938 = vpop.f32.mrf.mxu0
      %v4939 = vadd.f32 %v4853, %v4938
      %4940 = vmatmul.bf16.gmra.mxu0 %v3463
      %v4941 = vpop.f32.mrf.mxu0
      %v4942 = vpop.f32.mrf.mxu0
      %4943 = vmatmul.bf16.gmra.mxu0 %v3465
      %v4944 = vpop.f32.mrf.mxu0
      %v4945 = vadd.f32 %v4859, %v4944
      %v4946 = vpop.f32.mrf.mxu0
      %v4947 = vadd.f32 %v4861, %v4946
      %4948 = vmatmul.bf16.gmra.mxu0 %v3467
      %v4949 = vpop.f32.mrf.mxu0
      %v4950 = vpop.f32.mrf.mxu0
      %4951 = vmatmul.bf16.gmra.mxu0 %v3469
      %v4952 = vpop.f32.mrf.mxu0
      %v4953 = vadd.f32 %v4867, %v4952
      %v4954 = vpop.f32.mrf.mxu0
      %v4955 = vadd.f32 %v4869, %v4954
      %4956 = vmatmul.bf16.gmra.mxu0 %v3471
      %v4957 = vpop.f32.mrf.mxu0
      %v4958 = vpop.f32.mrf.mxu0
      %4959 = vmatmul.bf16.gmra.mxu0 %v3473
      %v4960 = vpop.f32.mrf.mxu0
      %v4961 = vadd.f32 %v4875, %v4960
      %v4962 = vpop.f32.mrf.mxu0
      %v4963 = vadd.f32 %v4877, %v4962
      %4964 = vmatmul.bf16.gmra.mxu0 %v3475
      %v4965 = vpop.f32.mrf.mxu0
      %v4966 = vpop.f32.mrf.mxu0
      %4967 = vmatmul.bf16.gmra.mxu0 %v3477
      %v4968 = vpop.f32.mrf.mxu0
      %v4969 = vadd.f32 %v4883, %v4968
      %v4970 = vpop.f32.mrf.mxu0
      %v4971 = vadd.f32 %v4885, %v4970
      %4972 = vmatmul.bf16.gmra.mxu0 %v3479
      %v4973 = vpop.f32.mrf.mxu0
      %v4974 = vpop.f32.mrf.mxu0
      %4975 = vmatmul.bf16.gmra.mxu0 %v3481
      %v4976 = vpop.f32.mrf.mxu0
      %v4977 = vadd.f32 %v4891, %v4976
      %v4978 = vpop.f32.mrf.mxu0
      %v4979 = vadd.f32 %v4893, %v4978
      %4980 = vmatmul.bf16.gmra.mxu0 %v3533
      %v4981 = vpop.f32.mrf.mxu0
      %v4982 = vpop.f32.mrf.mxu0
      %4983 = vmatmul.bf16.gmra.mxu0 %v3535
      %v4984 = vpop.f32.mrf.mxu0
      %v4985 = vadd.f32 %v4899, %v4984
      %v4986 = vpop.f32.mrf.mxu0
      %v4987 = vadd.f32 %v4901, %v4986
      %4988 = vmatmul.bf16.gmra.mxu0 %v3553
      %v4989 = vpop.f32.mrf.mxu0
      %v4990 = vpop.f32.mrf.mxu0
      %4991 = vmatmul.bf16.gmra.mxu0 %v3555
      %v4992 = vpop.f32.mrf.mxu0
      %v4993 = vadd.f32 %v4907, %v4992
      %v4994 = vpop.f32.mrf.mxu0
      %v4995 = vadd.f32 %v4909, %v4994
      %4996 = vdwg.mxu0
      %4997 = vmatpush.bf16.msra.mxu0 %v4341
      %4998 = vmatpush.bf16.msra.mxu0 %v4339
      %4999 = vmatpush.bf16.msra.mxu0 %v4337
      %5000 = vmatpush.bf16.msra.mxu0 %v4335
      %5001 = vmatpush.bf16.msra.mxu0 %v4333
      %5002 = vmatpush.bf16.msra.mxu0 %v4331
      %5003 = vmatpush.bf16.msra.mxu0 %v4329
      %5004 = vmatpush.bf16.msra.mxu0 %v4327
      %5005 = vmatmul.bf16.gmra.mxu0 %v3454
      %v5006 = vpop.f32.mrf.mxu0
      %v5007 = vadd.f32 %v4921, %v5006
      %v5008 = vpop.f32.mrf.mxu0
      %v5009 = vadd.f32 %v4923, %v5008
      %5010 = vmatmul.bf16.gmra.mxu0 %v3456
      %v5011 = vpop.f32.mrf.mxu0
      %v5012 = vpop.f32.mrf.mxu0
      %5013 = vmatmul.bf16.gmra.mxu0 %v3458
      %v5014 = vpop.f32.mrf.mxu0
      %v5015 = vadd.f32 %v4929, %v5014
      %v5016 = vpop.f32.mrf.mxu0
      %v5017 = vadd.f32 %v4931, %v5016
      %5018 = vmatmul.bf16.gmra.mxu0 %v3460
      %v5019 = vpop.f32.mrf.mxu0
      %v5020 = vpop.f32.mrf.mxu0
      %5021 = vmatmul.bf16.gmra.mxu0 %v3462
      %v5022 = vpop.f32.mrf.mxu0
      %v5023 = vadd.f32 %v4937, %v5022
      %v5024 = vpop.f32.mrf.mxu0
      %v5025 = vadd.f32 %v4939, %v5024
      %5026 = vmatmul.bf16.gmra.mxu0 %v3464
      %v5027 = vpop.f32.mrf.mxu0
      %v5028 = vpop.f32.mrf.mxu0
      %5029 = vmatmul.bf16.gmra.mxu0 %v3466
      %v5030 = vpop.f32.mrf.mxu0
      %v5031 = vadd.f32 %v4945, %v5030
      %v5032 = vpop.f32.mrf.mxu0
      %v5033 = vadd.f32 %v4947, %v5032
      %5034 = vmatmul.bf16.gmra.mxu0 %v3468
      %v5035 = vpop.f32.mrf.mxu0
      %v5036 = vpop.f32.mrf.mxu0
      %5037 = vmatmul.bf16.gmra.mxu0 %v3470
      %v5038 = vpop.f32.mrf.mxu0
      %v5039 = vadd.f32 %v4953, %v5038
      %v5040 = vpop.f32.mrf.mxu0
      %v5041 = vadd.f32 %v4955, %v5040
      %5042 = vmatmul.bf16.gmra.mxu0 %v3472
      %v5043 = vpop.f32.mrf.mxu0
      %v5044 = vpop.f32.mrf.mxu0
      %5045 = vmatmul.bf16.gmra.mxu0 %v3474
      %v5046 = vpop.f32.mrf.mxu0
      %v5047 = vadd.f32 %v4961, %v5046
      %v5048 = vpop.f32.mrf.mxu0
      %v5049 = vadd.f32 %v4963, %v5048
      %5050 = vmatmul.bf16.gmra.mxu0 %v3476
      %v5051 = vpop.f32.mrf.mxu0
      %v5052 = vpop.f32.mrf.mxu0
      %5053 = vmatmul.bf16.gmra.mxu0 %v3478
      %v5054 = vpop.f32.mrf.mxu0
      %v5055 = vadd.f32 %v4969, %v5054
      %v5056 = vpop.f32.mrf.mxu0
      %v5057 = vadd.f32 %v4971, %v5056
      %5058 = vmatmul.bf16.gmra.mxu0 %v3480
      %v5059 = vpop.f32.mrf.mxu0
      %v5060 = vpop.f32.mrf.mxu0
      %5061 = vmatmul.bf16.gmra.mxu0 %v3482
      %v5062 = vpop.f32.mrf.mxu0
      %v5063 = vadd.f32 %v4977, %v5062
      %v5064 = vpop.f32.mrf.mxu0
      %v5065 = vadd.f32 %v4979, %v5064
      %5066 = vmatmul.bf16.gmra.mxu0 %v3534
      %v5067 = vpop.f32.mrf.mxu0
      %v5068 = vpop.f32.mrf.mxu0
      %5069 = vmatmul.bf16.gmra.mxu0 %v3536
      %v5070 = vpop.f32.mrf.mxu0
      %v5071 = vadd.f32 %v4985, %v5070
      %v5072 = vpop.f32.mrf.mxu0
      %v5073 = vadd.f32 %v4987, %v5072
      %5074 = vmatmul.bf16.gmra.mxu0 %v3554
      %v5075 = vpop.f32.mrf.mxu0
      %v5076 = vpop.f32.mrf.mxu0
      %5077 = vmatmul.bf16.gmra.mxu0 %v3556
      %v5078 = vpop.f32.mrf.mxu0
      %v5079 = vadd.f32 %v4993, %v5078
      %v5080 = vpop.f32.mrf.mxu0
      %v5081 = vadd.f32 %v4995, %v5080
      %5082 = vdwg.mxu0
      %5083 = vmatpush.bf16.msra.mxu0 %v4357
      %5084 = vmatpush.bf16.msra.mxu0 %v4355
      %5085 = vmatpush.bf16.msra.mxu0 %v4353
      %5086 = vmatpush.bf16.msra.mxu0 %v4351
      %5087 = vmatpush.bf16.msra.mxu0 %v4349
      %5088 = vmatpush.bf16.msra.mxu0 %v4347
      %5089 = vmatpush.bf16.msra.mxu0 %v4345
      %5090 = vmatpush.bf16.msra.mxu0 %v4343
      %5091 = vmatmul.bf16.gmra.mxu0 %v3457
      %v5092 = vpop.f32.mrf.mxu0
      %v5093 = vadd.f32 %v5007, %v5092
      %v5094 = vpop.f32.mrf.mxu0
      %v5095 = vadd.f32 %v5009, %v5094
      %5096 = vmatmul.bf16.gmra.mxu0 %v3459
      %v5097 = vpop.f32.mrf.mxu0
      %v5098 = vpop.f32.mrf.mxu0
      %5099 = vmatmul.bf16.gmra.mxu0 %v3461
      %v5100 = vpop.f32.mrf.mxu0
      %v5101 = vadd.f32 %v5015, %v5100
      %v5102 = vpop.f32.mrf.mxu0
      %v5103 = vadd.f32 %v5017, %v5102
      %5104 = vmatmul.bf16.gmra.mxu0 %v3463
      %v5105 = vpop.f32.mrf.mxu0
      %v5106 = vpop.f32.mrf.mxu0
      %5107 = vmatmul.bf16.gmra.mxu0 %v3465
      %v5108 = vpop.f32.mrf.mxu0
      %v5109 = vadd.f32 %v5023, %v5108
      %v5110 = vpop.f32.mrf.mxu0
      %v5111 = vadd.f32 %v5025, %v5110
      %5112 = vmatmul.bf16.gmra.mxu0 %v3467
      %v5113 = vpop.f32.mrf.mxu0
      %v5114 = vpop.f32.mrf.mxu0
      %5115 = vmatmul.bf16.gmra.mxu0 %v3469
      %v5116 = vpop.f32.mrf.mxu0
      %v5117 = vadd.f32 %v5031, %v5116
      %v5118 = vpop.f32.mrf.mxu0
      %v5119 = vadd.f32 %v5033, %v5118
      %5120 = vmatmul.bf16.gmra.mxu0 %v3471
      %v5121 = vpop.f32.mrf.mxu0
      %v5122 = vpop.f32.mrf.mxu0
      %5123 = vmatmul.bf16.gmra.mxu0 %v3473
      %v5124 = vpop.f32.mrf.mxu0
      %v5125 = vadd.f32 %v5039, %v5124
      %v5126 = vpop.f32.mrf.mxu0
      %v5127 = vadd.f32 %v5041, %v5126
      %5128 = vmatmul.bf16.gmra.mxu0 %v3475
      %v5129 = vpop.f32.mrf.mxu0
      %v5130 = vpop.f32.mrf.mxu0
      %5131 = vmatmul.bf16.gmra.mxu0 %v3477
      %v5132 = vpop.f32.mrf.mxu0
      %v5133 = vadd.f32 %v5047, %v5132
      %v5134 = vpop.f32.mrf.mxu0
      %v5135 = vadd.f32 %v5049, %v5134
      %5136 = vmatmul.bf16.gmra.mxu0 %v3479
      %v5137 = vpop.f32.mrf.mxu0
      %v5138 = vpop.f32.mrf.mxu0
      %5139 = vmatmul.bf16.gmra.mxu0 %v3481
      %v5140 = vpop.f32.mrf.mxu0
      %v5141 = vadd.f32 %v5055, %v5140
      %v5142 = vpop.f32.mrf.mxu0
      %v5143 = vadd.f32 %v5057, %v5142
      %5144 = vmatmul.bf16.gmra.mxu0 %v3533
      %v5145 = vpop.f32.mrf.mxu0
      %v5146 = vpop.f32.mrf.mxu0
      %5147 = vmatmul.bf16.gmra.mxu0 %v3535
      %v5148 = vpop.f32.mrf.mxu0
      %v5149 = vadd.f32 %v5063, %v5148
      %v5150 = vpop.f32.mrf.mxu0
      %v5151 = vadd.f32 %v5065, %v5150
      %5152 = vmatmul.bf16.gmra.mxu0 %v3553
      %v5153 = vpop.f32.mrf.mxu0
      %v5154 = vpop.f32.mrf.mxu0
      %5155 = vmatmul.bf16.gmra.mxu0 %v3555
      %v5156 = vpop.f32.mrf.mxu0
      %v5157 = vadd.f32 %v5071, %v5156
      %v5158 = vpop.f32.mrf.mxu0
      %v5159 = vadd.f32 %v5073, %v5158
      %5160 = vmatmul.bf16.gmra.mxu0 %v3573
      %v5161 = vpop.f32.mrf.mxu0
      %v5162 = vpop.f32.mrf.mxu0
      %5163 = vmatmul.bf16.gmra.mxu0 %v3575
      %v5164 = vpop.f32.mrf.mxu0
      %v5165 = vadd.f32 %v5079, %v5164
      %v5166 = vpop.f32.mrf.mxu0
      %v5167 = vadd.f32 %v5081, %v5166
      %5168 = vdwg.mxu0
      %5169 = vmatpush.bf16.msra.mxu0 %v4373
      %5170 = vmatpush.bf16.msra.mxu0 %v4371
      %5171 = vmatpush.bf16.msra.mxu0 %v4369
      %5172 = vmatpush.bf16.msra.mxu0 %v4367
      %5173 = vmatpush.bf16.msra.mxu0 %v4365
      %5174 = vmatpush.bf16.msra.mxu0 %v4363
      %5175 = vmatpush.bf16.msra.mxu0 %v4361
      %5176 = vmatpush.bf16.msra.mxu0 %v4359
      %5177 = vmatmul.bf16.gmra.mxu0 %v3458
      %v5178 = vpop.f32.mrf.mxu0
      %v5179 = vadd.f32 %v5093, %v5178
      %v5180 = vpop.f32.mrf.mxu0
      %v5181 = vadd.f32 %v5095, %v5180
      %5182 = vmatmul.bf16.gmra.mxu0 %v3460
      %v5183 = vpop.f32.mrf.mxu0
      %v5184 = vpop.f32.mrf.mxu0
      %5185 = vmatmul.bf16.gmra.mxu0 %v3462
      %v5186 = vpop.f32.mrf.mxu0
      %v5187 = vadd.f32 %v5101, %v5186
      %v5188 = vpop.f32.mrf.mxu0
      %v5189 = vadd.f32 %v5103, %v5188
      %5190 = vmatmul.bf16.gmra.mxu0 %v3464
      %v5191 = vpop.f32.mrf.mxu0
      %v5192 = vpop.f32.mrf.mxu0
      %5193 = vmatmul.bf16.gmra.mxu0 %v3466
      %v5194 = vpop.f32.mrf.mxu0
      %v5195 = vadd.f32 %v5109, %v5194
      %v5196 = vpop.f32.mrf.mxu0
      %v5197 = vadd.f32 %v5111, %v5196
      %5198 = vmatmul.bf16.gmra.mxu0 %v3468
      %v5199 = vpop.f32.mrf.mxu0
      %v5200 = vpop.f32.mrf.mxu0
      %5201 = vmatmul.bf16.gmra.mxu0 %v3470
      %v5202 = vpop.f32.mrf.mxu0
      %v5203 = vadd.f32 %v5117, %v5202
      %v5204 = vpop.f32.mrf.mxu0
      %v5205 = vadd.f32 %v5119, %v5204
      %5206 = vmatmul.bf16.gmra.mxu0 %v3472
      %v5207 = vpop.f32.mrf.mxu0
      %v5208 = vpop.f32.mrf.mxu0
      %5209 = vmatmul.bf16.gmra.mxu0 %v3474
      %v5210 = vpop.f32.mrf.mxu0
      %v5211 = vadd.f32 %v5125, %v5210
      %v5212 = vpop.f32.mrf.mxu0
      %v5213 = vadd.f32 %v5127, %v5212
      %5214 = vmatmul.bf16.gmra.mxu0 %v3476
      %v5215 = vpop.f32.mrf.mxu0
      %v5216 = vpop.f32.mrf.mxu0
      %5217 = vmatmul.bf16.gmra.mxu0 %v3478
      %v5218 = vpop.f32.mrf.mxu0
      %v5219 = vadd.f32 %v5133, %v5218
      %v5220 = vpop.f32.mrf.mxu0
      %v5221 = vadd.f32 %v5135, %v5220
      %5222 = vmatmul.bf16.gmra.mxu0 %v3480
      %v5223 = vpop.f32.mrf.mxu0
      %v5224 = vpop.f32.mrf.mxu0
      %5225 = vmatmul.bf16.gmra.mxu0 %v3482
      %v5226 = vpop.f32.mrf.mxu0
      %v5227 = vadd.f32 %v5141, %v5226
      %v5228 = vpop.f32.mrf.mxu0
      %v5229 = vadd.f32 %v5143, %v5228
      %5230 = vmatmul.bf16.gmra.mxu0 %v3534
      %v5231 = vpop.f32.mrf.mxu0
      %v5232 = vpop.f32.mrf.mxu0
      %5233 = vmatmul.bf16.gmra.mxu0 %v3536
      %v5234 = vpop.f32.mrf.mxu0
      %v5235 = vadd.f32 %v5149, %v5234
      %v5236 = vpop.f32.mrf.mxu0
      %v5237 = vadd.f32 %v5151, %v5236
      %5238 = vmatmul.bf16.gmra.mxu0 %v3554
      %v5239 = vpop.f32.mrf.mxu0
      %v5240 = vpop.f32.mrf.mxu0
      %5241 = vmatmul.bf16.gmra.mxu0 %v3556
      %v5242 = vpop.f32.mrf.mxu0
      %v5243 = vadd.f32 %v5157, %v5242
      %v5244 = vpop.f32.mrf.mxu0
      %v5245 = vadd.f32 %v5159, %v5244
      %5246 = vmatmul.bf16.gmra.mxu0 %v3574
      %v5247 = vpop.f32.mrf.mxu0
      %v5248 = vpop.f32.mrf.mxu0
      %5249 = vmatmul.bf16.gmra.mxu0 %v3576
      %v5250 = vpop.f32.mrf.mxu0
      %v5251 = vadd.f32 %v5165, %v5250
      %v5252 = vpop.f32.mrf.mxu0
      %v5253 = vadd.f32 %v5167, %v5252
      %5254 = vdwg.mxu0
      %5255 = vmatpush.bf16.msra.mxu0 %v4389
      %5256 = vmatpush.bf16.msra.mxu0 %v4387
      %5257 = vmatpush.bf16.msra.mxu0 %v4385
      %5258 = vmatpush.bf16.msra.mxu0 %v4383
      %5259 = vmatpush.bf16.msra.mxu0 %v4381
      %5260 = vmatpush.bf16.msra.mxu0 %v4379
      %5261 = vmatpush.bf16.msra.mxu0 %v4377
      %5262 = vmatpush.bf16.msra.mxu0 %v4375
      %5263 = vmatmul.bf16.gmra.mxu0 %v3461
      %v5264 = vpop.f32.mrf.mxu0
      %v5265 = vadd.f32 %v5179, %v5264
      %v5266 = vpop.f32.mrf.mxu0
      %v5267 = vadd.f32 %v5181, %v5266
      %5268 = vmatmul.bf16.gmra.mxu0 %v3463
      %v5269 = vpop.f32.mrf.mxu0
      %v5270 = vpop.f32.mrf.mxu0
      %5271 = vmatmul.bf16.gmra.mxu0 %v3465
      %v5272 = vpop.f32.mrf.mxu0
      %v5273 = vadd.f32 %v5187, %v5272
      %v5274 = vpop.f32.mrf.mxu0
      %v5275 = vadd.f32 %v5189, %v5274
      %5276 = vmatmul.bf16.gmra.mxu0 %v3467
      %v5277 = vpop.f32.mrf.mxu0
      %v5278 = vpop.f32.mrf.mxu0
      %5279 = vmatmul.bf16.gmra.mxu0 %v3469
      %v5280 = vpop.f32.mrf.mxu0
      %v5281 = vadd.f32 %v5195, %v5280
      %v5282 = vpop.f32.mrf.mxu0
      %v5283 = vadd.f32 %v5197, %v5282
      %5284 = vmatmul.bf16.gmra.mxu0 %v3471
      %v5285 = vpop.f32.mrf.mxu0
      %v5286 = vpop.f32.mrf.mxu0
      %5287 = vmatmul.bf16.gmra.mxu0 %v3473
      %v5288 = vpop.f32.mrf.mxu0
      %v5289 = vadd.f32 %v5203, %v5288
      %v5290 = vpop.f32.mrf.mxu0
      %v5291 = vadd.f32 %v5205, %v5290
      %5292 = vmatmul.bf16.gmra.mxu0 %v3475
      %v5293 = vpop.f32.mrf.mxu0
      %v5294 = vpop.f32.mrf.mxu0
      %5295 = vmatmul.bf16.gmra.mxu0 %v3477
      %v5296 = vpop.f32.mrf.mxu0
      %v5297 = vadd.f32 %v5211, %v5296
      %v5298 = vpop.f32.mrf.mxu0
      %v5299 = vadd.f32 %v5213, %v5298
      %5300 = vmatmul.bf16.gmra.mxu0 %v3479
      %v5301 = vpop.f32.mrf.mxu0
      %v5302 = vpop.f32.mrf.mxu0
      %5303 = vmatmul.bf16.gmra.mxu0 %v3481
      %v5304 = vpop.f32.mrf.mxu0
      %v5305 = vadd.f32 %v5219, %v5304
      %v5306 = vpop.f32.mrf.mxu0
      %v5307 = vadd.f32 %v5221, %v5306
      %5308 = vmatmul.bf16.gmra.mxu0 %v3533
      %v5309 = vpop.f32.mrf.mxu0
      %v5310 = vpop.f32.mrf.mxu0
      %5311 = vmatmul.bf16.gmra.mxu0 %v3535
      %v5312 = vpop.f32.mrf.mxu0
      %v5313 = vadd.f32 %v5227, %v5312
      %v5314 = vpop.f32.mrf.mxu0
      %v5315 = vadd.f32 %v5229, %v5314
      %5316 = vmatmul.bf16.gmra.mxu0 %v3553
      %v5317 = vpop.f32.mrf.mxu0
      %v5318 = vpop.f32.mrf.mxu0
      %5319 = vmatmul.bf16.gmra.mxu0 %v3555
      %v5320 = vpop.f32.mrf.mxu0
      %v5321 = vadd.f32 %v5235, %v5320
      %v5322 = vpop.f32.mrf.mxu0
      %v5323 = vadd.f32 %v5237, %v5322
      %5324 = vmatmul.bf16.gmra.mxu0 %v3573
      %v5325 = vpop.f32.mrf.mxu0
      %v5326 = vpop.f32.mrf.mxu0
      %5327 = vmatmul.bf16.gmra.mxu0 %v3575
      %v5328 = vpop.f32.mrf.mxu0
      %v5329 = vadd.f32 %v5243, %v5328
      %v5330 = vpop.f32.mrf.mxu0
      %v5331 = vadd.f32 %v5245, %v5330
      %5332 = vmatmul.bf16.gmra.mxu0 %v3593
      %v5333 = vpop.f32.mrf.mxu0
      %v5334 = vpop.f32.mrf.mxu0
      %5335 = vmatmul.bf16.gmra.mxu0 %v3595
      %v5336 = vpop.f32.mrf.mxu0
      %v5337 = vadd.f32 %v5251, %v5336
      %v5338 = vpop.f32.mrf.mxu0
      %v5339 = vadd.f32 %v5253, %v5338
      %5340 = vdwg.mxu0
      %5341 = vmatpush.bf16.msra.mxu0 %v4405
      %5342 = vmatpush.bf16.msra.mxu0 %v4403
      %5343 = vmatpush.bf16.msra.mxu0 %v4401
      %5344 = vmatpush.bf16.msra.mxu0 %v4399
      %5345 = vmatpush.bf16.msra.mxu0 %v4397
      %5346 = vmatpush.bf16.msra.mxu0 %v4395
      %5347 = vmatpush.bf16.msra.mxu0 %v4393
      %5348 = vmatpush.bf16.msra.mxu0 %v4391
      %5349 = vmatmul.bf16.gmra.mxu0 %v3462
      %v5350 = vpop.f32.mrf.mxu0
      %v5351 = vadd.f32 %v5265, %v5350
      %v5352 = vpop.f32.mrf.mxu0
      %v5353 = vadd.f32 %v5267, %v5352
      %5354 = vmatmul.bf16.gmra.mxu0 %v3464
      %v5355 = vpop.f32.mrf.mxu0
      %v5356 = vpop.f32.mrf.mxu0
      %5357 = vmatmul.bf16.gmra.mxu0 %v3466
      %v5358 = vpop.f32.mrf.mxu0
      %v5359 = vadd.f32 %v5273, %v5358
      %v5360 = vpop.f32.mrf.mxu0
      %v5361 = vadd.f32 %v5275, %v5360
      %5362 = vmatmul.bf16.gmra.mxu0 %v3468
      %v5363 = vpop.f32.mrf.mxu0
      %v5364 = vpop.f32.mrf.mxu0
      %5365 = vmatmul.bf16.gmra.mxu0 %v3470
      %v5366 = vpop.f32.mrf.mxu0
      %v5367 = vadd.f32 %v5281, %v5366
      %v5368 = vpop.f32.mrf.mxu0
      %v5369 = vadd.f32 %v5283, %v5368
      %5370 = vmatmul.bf16.gmra.mxu0 %v3472
      %v5371 = vpop.f32.mrf.mxu0
      %v5372 = vpop.f32.mrf.mxu0
      %5373 = vmatmul.bf16.gmra.mxu0 %v3474
      %v5374 = vpop.f32.mrf.mxu0
      %v5375 = vadd.f32 %v5289, %v5374
      %v5376 = vpop.f32.mrf.mxu0
      %v5377 = vadd.f32 %v5291, %v5376
      %5378 = vmatmul.bf16.gmra.mxu0 %v3476
      %v5379 = vpop.f32.mrf.mxu0
      %v5380 = vpop.f32.mrf.mxu0
      %5381 = vmatmul.bf16.gmra.mxu0 %v3478
      %v5382 = vpop.f32.mrf.mxu0
      %v5383 = vadd.f32 %v5297, %v5382
      %v5384 = vpop.f32.mrf.mxu0
      %v5385 = vadd.f32 %v5299, %v5384
      %5386 = vmatmul.bf16.gmra.mxu0 %v3480
      %v5387 = vpop.f32.mrf.mxu0
      %v5388 = vpop.f32.mrf.mxu0
      %5389 = vmatmul.bf16.gmra.mxu0 %v3482
      %v5390 = vpop.f32.mrf.mxu0
      %v5391 = vadd.f32 %v5305, %v5390
      %v5392 = vpop.f32.mrf.mxu0
      %v5393 = vadd.f32 %v5307, %v5392
      %5394 = vmatmul.bf16.gmra.mxu0 %v3534
      %v5395 = vpop.f32.mrf.mxu0
      %v5396 = vpop.f32.mrf.mxu0
      %5397 = vmatmul.bf16.gmra.mxu0 %v3536
      %v5398 = vpop.f32.mrf.mxu0
      %v5399 = vadd.f32 %v5313, %v5398
      %v5400 = vpop.f32.mrf.mxu0
      %v5401 = vadd.f32 %v5315, %v5400
      %5402 = vmatmul.bf16.gmra.mxu0 %v3554
      %v5403 = vpop.f32.mrf.mxu0
      %v5404 = vpop.f32.mrf.mxu0
      %5405 = vmatmul.bf16.gmra.mxu0 %v3556
      %v5406 = vpop.f32.mrf.mxu0
      %v5407 = vadd.f32 %v5321, %v5406
      %v5408 = vpop.f32.mrf.mxu0
      %v5409 = vadd.f32 %v5323, %v5408
      %5410 = vmatmul.bf16.gmra.mxu0 %v3574
      %v5411 = vpop.f32.mrf.mxu0
      %v5412 = vpop.f32.mrf.mxu0
      %5413 = vmatmul.bf16.gmra.mxu0 %v3576
      %v5414 = vpop.f32.mrf.mxu0
      %v5415 = vadd.f32 %v5329, %v5414
      %v5416 = vpop.f32.mrf.mxu0
      %v5417 = vadd.f32 %v5331, %v5416
      %5418 = vmatmul.bf16.gmra.mxu0 %v3594
      %v5419 = vpop.f32.mrf.mxu0
      %v5420 = vpop.f32.mrf.mxu0
      %5421 = vmatmul.bf16.gmra.mxu0 %v3596
      %v5422 = vpop.f32.mrf.mxu0
      %v5423 = vadd.f32 %v5337, %v5422
      %v5424 = vpop.f32.mrf.mxu0
      %v5425 = vadd.f32 %v5339, %v5424
      %5426 = vdwg.mxu0
      %5427 = vmatpush.bf16.msra.mxu0 %v4262
      %5428 = vmatpush.bf16.msra.mxu0 %v4260
      %5429 = vmatpush.bf16.msra.mxu0 %v4258
      %5430 = vmatpush.bf16.msra.mxu0 %v4256
      %5431 = vmatpush.bf16.msra.mxu0 %v4254
      %5432 = vmatpush.bf16.msra.mxu0 %v4252
      %5433 = vmatpush.bf16.msra.mxu0 %v4250
      %5434 = vmatpush.bf16.msra.mxu0 %v4248
      %5435 = vmatmul.bf16.gmra.mxu0 %v3445
      %v5436 = vpop.f32.mrf.mxu0
      %v5437 = vadd.f32 %v3764, %v5436
      %v5438 = vpop.f32.mrf.mxu0
      %v5439 = vadd.f32 %v3764, %v5438
      %5440 = vmatmul.bf16.gmra.mxu0 %v3447
      %v5441 = vpop.f32.mrf.mxu0
      %v5442 = vpop.f32.mrf.mxu0
      %5443 = vmatmul.bf16.gmra.mxu0 %v3449
      %v5444 = vpop.f32.mrf.mxu0
      %v5445 = vadd.f32 %v3764, %v5444
      %v5446 = vpop.f32.mrf.mxu0
      %v5447 = vadd.f32 %v3764, %v5446
      %5448 = vmatmul.bf16.gmra.mxu0 %v3451
      %v5449 = vpop.f32.mrf.mxu0
      %v5450 = vpop.f32.mrf.mxu0
      %5451 = vmatmul.bf16.gmra.mxu0 %v3453
      %v5452 = vpop.f32.mrf.mxu0
      %v5453 = vadd.f32 %v3764, %v5452
      %v5454 = vpop.f32.mrf.mxu0
      %v5455 = vadd.f32 %v3764, %v5454
      %5456 = vmatmul.bf16.gmra.mxu0 %v3455
      %v5457 = vpop.f32.mrf.mxu0
      %v5458 = vpop.f32.mrf.mxu0
      %5459 = vmatmul.bf16.gmra.mxu0 %v3457
      %v5460 = vpop.f32.mrf.mxu0
      %v5461 = vadd.f32 %v3764, %v5460
      %v5462 = vpop.f32.mrf.mxu0
      %v5463 = vadd.f32 %v3764, %v5462
      %5464 = vmatmul.bf16.gmra.mxu0 %v3459
      %v5465 = vpop.f32.mrf.mxu0
      %v5466 = vpop.f32.mrf.mxu0
      %5467 = vmatmul.bf16.gmra.mxu0 %v3461
      %v5468 = vpop.f32.mrf.mxu0
      %v5469 = vadd.f32 %v3764, %v5468
      %v5470 = vpop.f32.mrf.mxu0
      %v5471 = vadd.f32 %v3764, %v5470
      %5472 = vmatmul.bf16.gmra.mxu0 %v3463
      %v5473 = vpop.f32.mrf.mxu0
      %v5474 = vpop.f32.mrf.mxu0
      %5475 = vmatmul.bf16.gmra.mxu0 %v3465
      %v5476 = vpop.f32.mrf.mxu0
      %v5477 = vadd.f32 %v3764, %v5476
      %v5478 = vpop.f32.mrf.mxu0
      %v5479 = vadd.f32 %v3764, %v5478
      %5480 = vmatmul.bf16.gmra.mxu0 %v3467
      %v5481 = vpop.f32.mrf.mxu0
      %v5482 = vpop.f32.mrf.mxu0
      %5483 = vmatmul.bf16.gmra.mxu0 %v3469
      %v5484 = vpop.f32.mrf.mxu0
      %v5485 = vadd.f32 %v3764, %v5484
      %v5486 = vpop.f32.mrf.mxu0
      %v5487 = vadd.f32 %v3764, %v5486
      %5488 = vmatmul.bf16.gmra.mxu0 %v3471
      %v5489 = vpop.f32.mrf.mxu0
      %v5490 = vpop.f32.mrf.mxu0
      %5491 = vmatmul.bf16.gmra.mxu0 %v3473
      %v5492 = vpop.f32.mrf.mxu0
      %v5493 = vadd.f32 %v3764, %v5492
      %v5494 = vpop.f32.mrf.mxu0
      %v5495 = vadd.f32 %v3764, %v5494
      %5496 = vmatmul.bf16.gmra.mxu0 %v3475
      %v5497 = vpop.f32.mrf.mxu0
      %v5498 = vpop.f32.mrf.mxu0
      %5499 = vmatmul.bf16.gmra.mxu0 %v3477
      %v5500 = vpop.f32.mrf.mxu0
      %v5501 = vadd.f32 %v3764, %v5500
      %v5502 = vpop.f32.mrf.mxu0
      %v5503 = vadd.f32 %v3764, %v5502
      %5504 = vmatmul.bf16.gmra.mxu0 %v3479
      %v5505 = vpop.f32.mrf.mxu0
      %v5506 = vpop.f32.mrf.mxu0
      %5507 = vmatmul.bf16.gmra.mxu0 %v3481
      %v5508 = vpop.f32.mrf.mxu0
      %v5509 = vadd.f32 %v3764, %v5508
      %v5510 = vpop.f32.mrf.mxu0
      %v5511 = vadd.f32 %v3764, %v5510
      %5512 = vdwg.mxu0
      %5513 = vmatpush.bf16.msra.mxu0 %v4278
      %5514 = vmatpush.bf16.msra.mxu0 %v4276
      %5515 = vmatpush.bf16.msra.mxu0 %v4274
      %5516 = vmatpush.bf16.msra.mxu0 %v4272
      %5517 = vmatpush.bf16.msra.mxu0 %v4270
      %5518 = vmatpush.bf16.msra.mxu0 %v4268
      %5519 = vmatpush.bf16.msra.mxu0 %v4266
      %5520 = vmatpush.bf16.msra.mxu0 %v4264
      %5521 = vmatmul.bf16.gmra.mxu0 %v3446
      %v5522 = vpop.f32.mrf.mxu0
      %v5523 = vadd.f32 %v5437, %v5522
      %v5524 = vpop.f32.mrf.mxu0
      %v5525 = vadd.f32 %v5439, %v5524
      %5526 = vmatmul.bf16.gmra.mxu0 %v3448
      %v5527 = vpop.f32.mrf.mxu0
      %v5528 = vpop.f32.mrf.mxu0
      %5529 = vmatmul.bf16.gmra.mxu0 %v3450
      %v5530 = vpop.f32.mrf.mxu0
      %v5531 = vadd.f32 %v5445, %v5530
      %v5532 = vpop.f32.mrf.mxu0
      %v5533 = vadd.f32 %v5447, %v5532
      %5534 = vmatmul.bf16.gmra.mxu0 %v3452
      %v5535 = vpop.f32.mrf.mxu0
      %v5536 = vpop.f32.mrf.mxu0
      %5537 = vmatmul.bf16.gmra.mxu0 %v3454
      %v5538 = vpop.f32.mrf.mxu0
      %v5539 = vadd.f32 %v5453, %v5538
      %v5540 = vpop.f32.mrf.mxu0
      %v5541 = vadd.f32 %v5455, %v5540
      %5542 = vmatmul.bf16.gmra.mxu0 %v3456
      %v5543 = vpop.f32.mrf.mxu0
      %v5544 = vpop.f32.mrf.mxu0
      %5545 = vmatmul.bf16.gmra.mxu0 %v3458
      %v5546 = vpop.f32.mrf.mxu0
      %v5547 = vadd.f32 %v5461, %v5546
      %v5548 = vpop.f32.mrf.mxu0
      %v5549 = vadd.f32 %v5463, %v5548
      %5550 = vmatmul.bf16.gmra.mxu0 %v3460
      %v5551 = vpop.f32.mrf.mxu0
      %v5552 = vpop.f32.mrf.mxu0
      %5553 = vmatmul.bf16.gmra.mxu0 %v3462
      %v5554 = vpop.f32.mrf.mxu0
      %v5555 = vadd.f32 %v5469, %v5554
      %v5556 = vpop.f32.mrf.mxu0
      %v5557 = vadd.f32 %v5471, %v5556
      %5558 = vmatmul.bf16.gmra.mxu0 %v3464
      %v5559 = vpop.f32.mrf.mxu0
      %v5560 = vpop.f32.mrf.mxu0
      %5561 = vmatmul.bf16.gmra.mxu0 %v3466
      %v5562 = vpop.f32.mrf.mxu0
      %v5563 = vadd.f32 %v5477, %v5562
      %v5564 = vpop.f32.mrf.mxu0
      %v5565 = vadd.f32 %v5479, %v5564
      %5566 = vmatmul.bf16.gmra.mxu0 %v3468
      %v5567 = vpop.f32.mrf.mxu0
      %v5568 = vpop.f32.mrf.mxu0
      %5569 = vmatmul.bf16.gmra.mxu0 %v3470
      %v5570 = vpop.f32.mrf.mxu0
      %v5571 = vadd.f32 %v5485, %v5570
      %v5572 = vpop.f32.mrf.mxu0
      %v5573 = vadd.f32 %v5487, %v5572
      %5574 = vmatmul.bf16.gmra.mxu0 %v3472
      %v5575 = vpop.f32.mrf.mxu0
      %v5576 = vpop.f32.mrf.mxu0
      %5577 = vmatmul.bf16.gmra.mxu0 %v3474
      %v5578 = vpop.f32.mrf.mxu0
      %v5579 = vadd.f32 %v5493, %v5578
      %v5580 = vpop.f32.mrf.mxu0
      %v5581 = vadd.f32 %v5495, %v5580
      %5582 = vmatmul.bf16.gmra.mxu0 %v3476
      %v5583 = vpop.f32.mrf.mxu0
      %v5584 = vpop.f32.mrf.mxu0
      %5585 = vmatmul.bf16.gmra.mxu0 %v3478
      %v5586 = vpop.f32.mrf.mxu0
      %v5587 = vadd.f32 %v5501, %v5586
      %v5588 = vpop.f32.mrf.mxu0
      %v5589 = vadd.f32 %v5503, %v5588
      %5590 = vmatmul.bf16.gmra.mxu0 %v3480
      %v5591 = vpop.f32.mrf.mxu0
      %v5592 = vpop.f32.mrf.mxu0
      %5593 = vmatmul.bf16.gmra.mxu0 %v3482
      %v5594 = vpop.f32.mrf.mxu0
      %v5595 = vadd.f32 %v5509, %v5594
      %v5596 = vpop.f32.mrf.mxu0
      %v5597 = vadd.f32 %v5511, %v5596
      %5598 = vdwg.mxu0
      %5599 = vmatpush.bf16.msra.mxu0 %v4294
      %5600 = vmatpush.bf16.msra.mxu0 %v4292
      %5601 = vmatpush.bf16.msra.mxu0 %v4290
      %5602 = vmatpush.bf16.msra.mxu0 %v4288
      %5603 = vmatpush.bf16.msra.mxu0 %v4286
      %5604 = vmatpush.bf16.msra.mxu0 %v4284
      %5605 = vmatpush.bf16.msra.mxu0 %v4282
      %5606 = vmatpush.bf16.msra.mxu0 %v4280
      %5607 = vmatmul.bf16.gmra.mxu0 %v3449
      %v5608 = vpop.f32.mrf.mxu0
      %v5609 = vadd.f32 %v5523, %v5608
      %v5610 = vpop.f32.mrf.mxu0
      %v5611 = vadd.f32 %v5525, %v5610
      %5612 = vmatmul.bf16.gmra.mxu0 %v3451
      %v5613 = vpop.f32.mrf.mxu0
      %v5614 = vpop.f32.mrf.mxu0
      %5615 = vmatmul.bf16.gmra.mxu0 %v3453
      %v5616 = vpop.f32.mrf.mxu0
      %v5617 = vadd.f32 %v5531, %v5616
      %v5618 = vpop.f32.mrf.mxu0
      %v5619 = vadd.f32 %v5533, %v5618
      %5620 = vmatmul.bf16.gmra.mxu0 %v3455
      %v5621 = vpop.f32.mrf.mxu0
      %v5622 = vpop.f32.mrf.mxu0
      %5623 = vmatmul.bf16.gmra.mxu0 %v3457
      %v5624 = vpop.f32.mrf.mxu0
      %v5625 = vadd.f32 %v5539, %v5624
      %v5626 = vpop.f32.mrf.mxu0
      %v5627 = vadd.f32 %v5541, %v5626
      %5628 = vmatmul.bf16.gmra.mxu0 %v3459
      %v5629 = vpop.f32.mrf.mxu0
      %v5630 = vpop.f32.mrf.mxu0
      %5631 = vmatmul.bf16.gmra.mxu0 %v3461
      %v5632 = vpop.f32.mrf.mxu0
      %v5633 = vadd.f32 %v5547, %v5632
      %v5634 = vpop.f32.mrf.mxu0
      %v5635 = vadd.f32 %v5549, %v5634
      %5636 = vmatmul.bf16.gmra.mxu0 %v3463
      %v5637 = vpop.f32.mrf.mxu0
      %v5638 = vpop.f32.mrf.mxu0
      %5639 = vmatmul.bf16.gmra.mxu0 %v3465
      %v5640 = vpop.f32.mrf.mxu0
      %v5641 = vadd.f32 %v5555, %v5640
      %v5642 = vpop.f32.mrf.mxu0
      %v5643 = vadd.f32 %v5557, %v5642
      %5644 = vmatmul.bf16.gmra.mxu0 %v3467
      %v5645 = vpop.f32.mrf.mxu0
      %v5646 = vpop.f32.mrf.mxu0
      %5647 = vmatmul.bf16.gmra.mxu0 %v3469
      %v5648 = vpop.f32.mrf.mxu0
      %v5649 = vadd.f32 %v5563, %v5648
      %v5650 = vpop.f32.mrf.mxu0
      %v5651 = vadd.f32 %v5565, %v5650
      %5652 = vmatmul.bf16.gmra.mxu0 %v3471
      %v5653 = vpop.f32.mrf.mxu0
      %v5654 = vpop.f32.mrf.mxu0
      %5655 = vmatmul.bf16.gmra.mxu0 %v3473
      %v5656 = vpop.f32.mrf.mxu0
      %v5657 = vadd.f32 %v5571, %v5656
      %v5658 = vpop.f32.mrf.mxu0
      %v5659 = vadd.f32 %v5573, %v5658
      %5660 = vmatmul.bf16.gmra.mxu0 %v3475
      %v5661 = vpop.f32.mrf.mxu0
      %v5662 = vpop.f32.mrf.mxu0
      %5663 = vmatmul.bf16.gmra.mxu0 %v3477
      %v5664 = vpop.f32.mrf.mxu0
      %v5665 = vadd.f32 %v5579, %v5664
      %v5666 = vpop.f32.mrf.mxu0
      %v5667 = vadd.f32 %v5581, %v5666
      %5668 = vmatmul.bf16.gmra.mxu0 %v3479
      %v5669 = vpop.f32.mrf.mxu0
      %v5670 = vpop.f32.mrf.mxu0
      %5671 = vmatmul.bf16.gmra.mxu0 %v3481
      %v5672 = vpop.f32.mrf.mxu0
      %v5673 = vadd.f32 %v5587, %v5672
      %v5674 = vpop.f32.mrf.mxu0
      %v5675 = vadd.f32 %v5589, %v5674
      %5676 = vmatmul.bf16.gmra.mxu0 %v3533
      %v5677 = vpop.f32.mrf.mxu0
      %v5678 = vpop.f32.mrf.mxu0
      %5679 = vmatmul.bf16.gmra.mxu0 %v3535
      %v5680 = vpop.f32.mrf.mxu0
      %v5681 = vadd.f32 %v5595, %v5680
      %v5682 = vpop.f32.mrf.mxu0
      %v5683 = vadd.f32 %v5597, %v5682
      %5684 = vdwg.mxu0
      %5685 = vmatpush.bf16.msra.mxu0 %v4310
      %5686 = vmatpush.bf16.msra.mxu0 %v4308
      %5687 = vmatpush.bf16.msra.mxu0 %v4306
      %5688 = vmatpush.bf16.msra.mxu0 %v4304
      %5689 = vmatpush.bf16.msra.mxu0 %v4302
      %5690 = vmatpush.bf16.msra.mxu0 %v4300
      %5691 = vmatpush.bf16.msra.mxu0 %v4298
      %5692 = vmatpush.bf16.msra.mxu0 %v4296
      %5693 = vmatmul.bf16.gmra.mxu0 %v3450
      %v5694 = vpop.f32.mrf.mxu0
      %v5695 = vadd.f32 %v5609, %v5694
      %v5696 = vpop.f32.mrf.mxu0
      %v5697 = vadd.f32 %v5611, %v5696
      %5698 = vmatmul.bf16.gmra.mxu0 %v3452
      %v5699 = vpop.f32.mrf.mxu0
      %v5700 = vpop.f32.mrf.mxu0
      %5701 = vmatmul.bf16.gmra.mxu0 %v3454
      %v5702 = vpop.f32.mrf.mxu0
      %v5703 = vadd.f32 %v5617, %v5702
      %v5704 = vpop.f32.mrf.mxu0
      %v5705 = vadd.f32 %v5619, %v5704
      %5706 = vmatmul.bf16.gmra.mxu0 %v3456
      %v5707 = vpop.f32.mrf.mxu0
      %v5708 = vpop.f32.mrf.mxu0
      %5709 = vmatmul.bf16.gmra.mxu0 %v3458
      %v5710 = vpop.f32.mrf.mxu0
      %v5711 = vadd.f32 %v5625, %v5710
      %v5712 = vpop.f32.mrf.mxu0
      %v5713 = vadd.f32 %v5627, %v5712
      %5714 = vmatmul.bf16.gmra.mxu0 %v3460
      %v5715 = vpop.f32.mrf.mxu0
      %v5716 = vpop.f32.mrf.mxu0
      %5717 = vmatmul.bf16.gmra.mxu0 %v3462
      %v5718 = vpop.f32.mrf.mxu0
      %v5719 = vadd.f32 %v5633, %v5718
      %v5720 = vpop.f32.mrf.mxu0
      %v5721 = vadd.f32 %v5635, %v5720
      %5722 = vmatmul.bf16.gmra.mxu0 %v3464
      %v5723 = vpop.f32.mrf.mxu0
      %v5724 = vpop.f32.mrf.mxu0
      %5725 = vmatmul.bf16.gmra.mxu0 %v3466
      %v5726 = vpop.f32.mrf.mxu0
      %v5727 = vadd.f32 %v5641, %v5726
      %v5728 = vpop.f32.mrf.mxu0
      %v5729 = vadd.f32 %v5643, %v5728
      %5730 = vmatmul.bf16.gmra.mxu0 %v3468
      %v5731 = vpop.f32.mrf.mxu0
      %v5732 = vpop.f32.mrf.mxu0
      %5733 = vmatmul.bf16.gmra.mxu0 %v3470
      %v5734 = vpop.f32.mrf.mxu0
      %v5735 = vadd.f32 %v5649, %v5734
      %v5736 = vpop.f32.mrf.mxu0
      %v5737 = vadd.f32 %v5651, %v5736
      %5738 = vmatmul.bf16.gmra.mxu0 %v3472
      %v5739 = vpop.f32.mrf.mxu0
      %v5740 = vpop.f32.mrf.mxu0
      %5741 = vmatmul.bf16.gmra.mxu0 %v3474
      %v5742 = vpop.f32.mrf.mxu0
      %v5743 = vadd.f32 %v5657, %v5742
      %v5744 = vpop.f32.mrf.mxu0
      %v5745 = vadd.f32 %v5659, %v5744
      %5746 = vmatmul.bf16.gmra.mxu0 %v3476
      %v5747 = vpop.f32.mrf.mxu0
      %v5748 = vpop.f32.mrf.mxu0
      %5749 = vmatmul.bf16.gmra.mxu0 %v3478
      %v5750 = vpop.f32.mrf.mxu0
      %v5751 = vadd.f32 %v5665, %v5750
      %v5752 = vpop.f32.mrf.mxu0
      %v5753 = vadd.f32 %v5667, %v5752
      %5754 = vmatmul.bf16.gmra.mxu0 %v3480
      %v5755 = vpop.f32.mrf.mxu0
      %v5756 = vpop.f32.mrf.mxu0
      %5757 = vmatmul.bf16.gmra.mxu0 %v3482
      %v5758 = vpop.f32.mrf.mxu0
      %v5759 = vadd.f32 %v5673, %v5758
      %v5760 = vpop.f32.mrf.mxu0
      %v5761 = vadd.f32 %v5675, %v5760
      %5762 = vmatmul.bf16.gmra.mxu0 %v3534
      %v5763 = vpop.f32.mrf.mxu0
      %v5764 = vpop.f32.mrf.mxu0
      %5765 = vmatmul.bf16.gmra.mxu0 %v3536
      %v5766 = vpop.f32.mrf.mxu0
      %v5767 = vadd.f32 %v5681, %v5766
      %v5768 = vpop.f32.mrf.mxu0
      %v5769 = vadd.f32 %v5683, %v5768
      %5770 = vdwg.mxu0
      %5771 = vmatpush.bf16.msra.mxu0 %v4326
      %5772 = vmatpush.bf16.msra.mxu0 %v4324
      %5773 = vmatpush.bf16.msra.mxu0 %v4322
      %5774 = vmatpush.bf16.msra.mxu0 %v4320
      %5775 = vmatpush.bf16.msra.mxu0 %v4318
      %5776 = vmatpush.bf16.msra.mxu0 %v4316
      %5777 = vmatpush.bf16.msra.mxu0 %v4314
      %5778 = vmatpush.bf16.msra.mxu0 %v4312
      %5779 = vmatmul.bf16.gmra.mxu0 %v3453
      %v5780 = vpop.f32.mrf.mxu0
      %v5781 = vadd.f32 %v5695, %v5780
      %v5782 = vpop.f32.mrf.mxu0
      %v5783 = vadd.f32 %v5697, %v5782
      %5784 = vmatmul.bf16.gmra.mxu0 %v3455
      %v5785 = vpop.f32.mrf.mxu0
      %v5786 = vpop.f32.mrf.mxu0
      %5787 = vmatmul.bf16.gmra.mxu0 %v3457
      %v5788 = vpop.f32.mrf.mxu0
      %v5789 = vadd.f32 %v5703, %v5788
      %v5790 = vpop.f32.mrf.mxu0
      %v5791 = vadd.f32 %v5705, %v5790
      %5792 = vmatmul.bf16.gmra.mxu0 %v3459
      %v5793 = vpop.f32.mrf.mxu0
      %v5794 = vpop.f32.mrf.mxu0
      %5795 = vmatmul.bf16.gmra.mxu0 %v3461
      %v5796 = vpop.f32.mrf.mxu0
      %v5797 = vadd.f32 %v5711, %v5796
      %v5798 = vpop.f32.mrf.mxu0
      %v5799 = vadd.f32 %v5713, %v5798
      %5800 = vmatmul.bf16.gmra.mxu0 %v3463
      %v5801 = vpop.f32.mrf.mxu0
      %v5802 = vpop.f32.mrf.mxu0
      %5803 = vmatmul.bf16.gmra.mxu0 %v3465
      %v5804 = vpop.f32.mrf.mxu0
      %v5805 = vadd.f32 %v5719, %v5804
      %v5806 = vpop.f32.mrf.mxu0
      %v5807 = vadd.f32 %v5721, %v5806
      %5808 = vmatmul.bf16.gmra.mxu0 %v3467
      %v5809 = vpop.f32.mrf.mxu0
      %v5810 = vpop.f32.mrf.mxu0
      %5811 = vmatmul.bf16.gmra.mxu0 %v3469
      %v5812 = vpop.f32.mrf.mxu0
      %v5813 = vadd.f32 %v5727, %v5812
      %v5814 = vpop.f32.mrf.mxu0
      %v5815 = vadd.f32 %v5729, %v5814
      %5816 = vmatmul.bf16.gmra.mxu0 %v3471
      %v5817 = vpop.f32.mrf.mxu0
      %v5818 = vpop.f32.mrf.mxu0
      %5819 = vmatmul.bf16.gmra.mxu0 %v3473
      %v5820 = vpop.f32.mrf.mxu0
      %v5821 = vadd.f32 %v5735, %v5820
      %v5822 = vpop.f32.mrf.mxu0
      %v5823 = vadd.f32 %v5737, %v5822
      %5824 = vmatmul.bf16.gmra.mxu0 %v3475
      %v5825 = vpop.f32.mrf.mxu0
      %v5826 = vpop.f32.mrf.mxu0
      %5827 = vmatmul.bf16.gmra.mxu0 %v3477
      %v5828 = vpop.f32.mrf.mxu0
      %v5829 = vadd.f32 %v5743, %v5828
      %v5830 = vpop.f32.mrf.mxu0
      %v5831 = vadd.f32 %v5745, %v5830
      %5832 = vmatmul.bf16.gmra.mxu0 %v3479
      %v5833 = vpop.f32.mrf.mxu0
      %v5834 = vpop.f32.mrf.mxu0
      %5835 = vmatmul.bf16.gmra.mxu0 %v3481
      %v5836 = vpop.f32.mrf.mxu0
      %v5837 = vadd.f32 %v5751, %v5836
      %v5838 = vpop.f32.mrf.mxu0
      %v5839 = vadd.f32 %v5753, %v5838
      %5840 = vmatmul.bf16.gmra.mxu0 %v3533
      %v5841 = vpop.f32.mrf.mxu0
      %v5842 = vpop.f32.mrf.mxu0
      %5843 = vmatmul.bf16.gmra.mxu0 %v3535
      %v5844 = vpop.f32.mrf.mxu0
      %v5845 = vadd.f32 %v5759, %v5844
      %v5846 = vpop.f32.mrf.mxu0
      %v5847 = vadd.f32 %v5761, %v5846
      %5848 = vmatmul.bf16.gmra.mxu0 %v3553
      %v5849 = vpop.f32.mrf.mxu0
      %v5850 = vpop.f32.mrf.mxu0
      %5851 = vmatmul.bf16.gmra.mxu0 %v3555
      %v5852 = vpop.f32.mrf.mxu0
      %v5853 = vadd.f32 %v5767, %v5852
      %v5854 = vpop.f32.mrf.mxu0
      %v5855 = vadd.f32 %v5769, %v5854
      %5856 = vdwg.mxu0
      %5857 = vmatpush.bf16.msra.mxu0 %v4342
      %5858 = vmatpush.bf16.msra.mxu0 %v4340
      %5859 = vmatpush.bf16.msra.mxu0 %v4338
      %5860 = vmatpush.bf16.msra.mxu0 %v4336
      %5861 = vmatpush.bf16.msra.mxu0 %v4334
      %5862 = vmatpush.bf16.msra.mxu0 %v4332
      %5863 = vmatpush.bf16.msra.mxu0 %v4330
      %5864 = vmatpush.bf16.msra.mxu0 %v4328
      %5865 = vmatmul.bf16.gmra.mxu0 %v3454
      %v5866 = vpop.f32.mrf.mxu0
      %v5867 = vadd.f32 %v5781, %v5866
      %v5868 = vpop.f32.mrf.mxu0
      %v5869 = vadd.f32 %v5783, %v5868
      %5870 = vmatmul.bf16.gmra.mxu0 %v3456
      %v5871 = vpop.f32.mrf.mxu0
      %v5872 = vpop.f32.mrf.mxu0
      %5873 = vmatmul.bf16.gmra.mxu0 %v3458
      %v5874 = vpop.f32.mrf.mxu0
      %v5875 = vadd.f32 %v5789, %v5874
      %v5876 = vpop.f32.mrf.mxu0
      %v5877 = vadd.f32 %v5791, %v5876
      %5878 = vmatmul.bf16.gmra.mxu0 %v3460
      %v5879 = vpop.f32.mrf.mxu0
      %v5880 = vpop.f32.mrf.mxu0
      %5881 = vmatmul.bf16.gmra.mxu0 %v3462
      %v5882 = vpop.f32.mrf.mxu0
      %v5883 = vadd.f32 %v5797, %v5882
      %v5884 = vpop.f32.mrf.mxu0
      %v5885 = vadd.f32 %v5799, %v5884
      %5886 = vmatmul.bf16.gmra.mxu0 %v3464
      %v5887 = vpop.f32.mrf.mxu0
      %v5888 = vpop.f32.mrf.mxu0
      %5889 = vmatmul.bf16.gmra.mxu0 %v3466
      %v5890 = vpop.f32.mrf.mxu0
      %v5891 = vadd.f32 %v5805, %v5890
      %v5892 = vpop.f32.mrf.mxu0
      %v5893 = vadd.f32 %v5807, %v5892
      %5894 = vmatmul.bf16.gmra.mxu0 %v3468
      %v5895 = vpop.f32.mrf.mxu0
      %v5896 = vpop.f32.mrf.mxu0
      %5897 = vmatmul.bf16.gmra.mxu0 %v3470
      %v5898 = vpop.f32.mrf.mxu0
      %v5899 = vadd.f32 %v5813, %v5898
      %v5900 = vpop.f32.mrf.mxu0
      %v5901 = vadd.f32 %v5815, %v5900
      %5902 = vmatmul.bf16.gmra.mxu0 %v3472
      %v5903 = vpop.f32.mrf.mxu0
      %v5904 = vpop.f32.mrf.mxu0
      %5905 = vmatmul.bf16.gmra.mxu0 %v3474
      %v5906 = vpop.f32.mrf.mxu0
      %v5907 = vadd.f32 %v5821, %v5906
      %v5908 = vpop.f32.mrf.mxu0
      %v5909 = vadd.f32 %v5823, %v5908
      %5910 = vmatmul.bf16.gmra.mxu0 %v3476
      %v5911 = vpop.f32.mrf.mxu0
      %v5912 = vpop.f32.mrf.mxu0
      %5913 = vmatmul.bf16.gmra.mxu0 %v3478
      %v5914 = vpop.f32.mrf.mxu0
      %v5915 = vadd.f32 %v5829, %v5914
      %v5916 = vpop.f32.mrf.mxu0
      %v5917 = vadd.f32 %v5831, %v5916
      %5918 = vmatmul.bf16.gmra.mxu0 %v3480
      %v5919 = vpop.f32.mrf.mxu0
      %v5920 = vpop.f32.mrf.mxu0
      %5921 = vmatmul.bf16.gmra.mxu0 %v3482
      %v5922 = vpop.f32.mrf.mxu0
      %v5923 = vadd.f32 %v5837, %v5922
      %v5924 = vpop.f32.mrf.mxu0
      %v5925 = vadd.f32 %v5839, %v5924
      %5926 = vmatmul.bf16.gmra.mxu0 %v3534
      %v5927 = vpop.f32.mrf.mxu0
      %v5928 = vpop.f32.mrf.mxu0
      %5929 = vmatmul.bf16.gmra.mxu0 %v3536
      %v5930 = vpop.f32.mrf.mxu0
      %v5931 = vadd.f32 %v5845, %v5930
      %v5932 = vpop.f32.mrf.mxu0
      %v5933 = vadd.f32 %v5847, %v5932
      %5934 = vmatmul.bf16.gmra.mxu0 %v3554
      %v5935 = vpop.f32.mrf.mxu0
      %v5936 = vpop.f32.mrf.mxu0
      %5937 = vmatmul.bf16.gmra.mxu0 %v3556
      %v5938 = vpop.f32.mrf.mxu0
      %v5939 = vadd.f32 %v5853, %v5938
      %v5940 = vpop.f32.mrf.mxu0
      %v5941 = vadd.f32 %v5855, %v5940
      %5942 = vdwg.mxu0
      %5943 = vmatpush.bf16.msra.mxu0 %v4358
      %5944 = vmatpush.bf16.msra.mxu0 %v4356
      %5945 = vmatpush.bf16.msra.mxu0 %v4354
      %5946 = vmatpush.bf16.msra.mxu0 %v4352
      %5947 = vmatpush.bf16.msra.mxu0 %v4350
      %5948 = vmatpush.bf16.msra.mxu0 %v4348
      %5949 = vmatpush.bf16.msra.mxu0 %v4346
      %5950 = vmatpush.bf16.msra.mxu0 %v4344
      %5951 = vmatmul.bf16.gmra.mxu0 %v3457
      %v5952 = vpop.f32.mrf.mxu0
      %v5953 = vadd.f32 %v5867, %v5952
      %v5954 = vpop.f32.mrf.mxu0
      %v5955 = vadd.f32 %v5869, %v5954
      %5956 = vmatmul.bf16.gmra.mxu0 %v3459
      %v5957 = vpop.f32.mrf.mxu0
      %v5958 = vpop.f32.mrf.mxu0
      %5959 = vmatmul.bf16.gmra.mxu0 %v3461
      %v5960 = vpop.f32.mrf.mxu0
      %v5961 = vadd.f32 %v5875, %v5960
      %v5962 = vpop.f32.mrf.mxu0
      %v5963 = vadd.f32 %v5877, %v5962
      %5964 = vmatmul.bf16.gmra.mxu0 %v3463
      %v5965 = vpop.f32.mrf.mxu0
      %v5966 = vpop.f32.mrf.mxu0
      %5967 = vmatmul.bf16.gmra.mxu0 %v3465
      %v5968 = vpop.f32.mrf.mxu0
      %v5969 = vadd.f32 %v5883, %v5968
      %v5970 = vpop.f32.mrf.mxu0
      %v5971 = vadd.f32 %v5885, %v5970
      %5972 = vmatmul.bf16.gmra.mxu0 %v3467
      %v5973 = vpop.f32.mrf.mxu0
      %v5974 = vpop.f32.mrf.mxu0
      %5975 = vmatmul.bf16.gmra.mxu0 %v3469
      %v5976 = vpop.f32.mrf.mxu0
      %v5977 = vadd.f32 %v5891, %v5976
      %v5978 = vpop.f32.mrf.mxu0
      %v5979 = vadd.f32 %v5893, %v5978
      %5980 = vmatmul.bf16.gmra.mxu0 %v3471
      %v5981 = vpop.f32.mrf.mxu0
      %v5982 = vpop.f32.mrf.mxu0
      %5983 = vmatmul.bf16.gmra.mxu0 %v3473
      %v5984 = vpop.f32.mrf.mxu0
      %v5985 = vadd.f32 %v5899, %v5984
      %v5986 = vpop.f32.mrf.mxu0
      %v5987 = vadd.f32 %v5901, %v5986
      %5988 = vmatmul.bf16.gmra.mxu0 %v3475
      %v5989 = vpop.f32.mrf.mxu0
      %v5990 = vpop.f32.mrf.mxu0
      %5991 = vmatmul.bf16.gmra.mxu0 %v3477
      %v5992 = vpop.f32.mrf.mxu0
      %v5993 = vadd.f32 %v5907, %v5992
      %v5994 = vpop.f32.mrf.mxu0
      %v5995 = vadd.f32 %v5909, %v5994
      %5996 = vmatmul.bf16.gmra.mxu0 %v3479
      %v5997 = vpop.f32.mrf.mxu0
      %v5998 = vpop.f32.mrf.mxu0
      %5999 = vmatmul.bf16.gmra.mxu0 %v3481
      %v6000 = vpop.f32.mrf.mxu0
      %v6001 = vadd.f32 %v5915, %v6000
      %v6002 = vpop.f32.mrf.mxu0
      %v6003 = vadd.f32 %v5917, %v6002
      %6004 = vmatmul.bf16.gmra.mxu0 %v3533
      %v6005 = vpop.f32.mrf.mxu0
      %v6006 = vpop.f32.mrf.mxu0
      %6007 = vmatmul.bf16.gmra.mxu0 %v3535
      %v6008 = vpop.f32.mrf.mxu0
      %v6009 = vadd.f32 %v5923, %v6008
      %v6010 = vpop.f32.mrf.mxu0
      %v6011 = vadd.f32 %v5925, %v6010
      %6012 = vmatmul.bf16.gmra.mxu0 %v3553
      %v6013 = vpop.f32.mrf.mxu0
      %v6014 = vpop.f32.mrf.mxu0
      %6015 = vmatmul.bf16.gmra.mxu0 %v3555
      %v6016 = vpop.f32.mrf.mxu0
      %v6017 = vadd.f32 %v5931, %v6016
      %v6018 = vpop.f32.mrf.mxu0
      %v6019 = vadd.f32 %v5933, %v6018
      %6020 = vmatmul.bf16.gmra.mxu0 %v3573
      %v6021 = vpop.f32.mrf.mxu0
      %v6022 = vpop.f32.mrf.mxu0
      %6023 = vmatmul.bf16.gmra.mxu0 %v3575
      %v6024 = vpop.f32.mrf.mxu0
      %v6025 = vadd.f32 %v5939, %v6024
      %v6026 = vpop.f32.mrf.mxu0
      %v6027 = vadd.f32 %v5941, %v6026
      %6028 = vdwg.mxu0
      %6029 = vmatpush.bf16.msra.mxu0 %v4374
      %6030 = vmatpush.bf16.msra.mxu0 %v4372
      %6031 = vmatpush.bf16.msra.mxu0 %v4370
      %6032 = vmatpush.bf16.msra.mxu0 %v4368
      %6033 = vmatpush.bf16.msra.mxu0 %v4366
      %6034 = vmatpush.bf16.msra.mxu0 %v4364
      %6035 = vmatpush.bf16.msra.mxu0 %v4362
      %6036 = vmatpush.bf16.msra.mxu0 %v4360
      %6037 = vmatmul.bf16.gmra.mxu0 %v3458
      %v6038 = vpop.f32.mrf.mxu0
      %v6039 = vadd.f32 %v5953, %v6038
      %v6040 = vpop.f32.mrf.mxu0
      %v6041 = vadd.f32 %v5955, %v6040
      %6042 = vmatmul.bf16.gmra.mxu0 %v3460
      %v6043 = vpop.f32.mrf.mxu0
      %v6044 = vpop.f32.mrf.mxu0
      %6045 = vmatmul.bf16.gmra.mxu0 %v3462
      %v6046 = vpop.f32.mrf.mxu0
      %v6047 = vadd.f32 %v5961, %v6046
      %v6048 = vpop.f32.mrf.mxu0
      %v6049 = vadd.f32 %v5963, %v6048
      %6050 = vmatmul.bf16.gmra.mxu0 %v3464
      %v6051 = vpop.f32.mrf.mxu0
      %v6052 = vpop.f32.mrf.mxu0
      %6053 = vmatmul.bf16.gmra.mxu0 %v3466
      %v6054 = vpop.f32.mrf.mxu0
      %v6055 = vadd.f32 %v5969, %v6054
      %v6056 = vpop.f32.mrf.mxu0
      %v6057 = vadd.f32 %v5971, %v6056
      %6058 = vmatmul.bf16.gmra.mxu0 %v3468
      %v6059 = vpop.f32.mrf.mxu0
      %v6060 = vpop.f32.mrf.mxu0
      %6061 = vmatmul.bf16.gmra.mxu0 %v3470
      %v6062 = vpop.f32.mrf.mxu0
      %v6063 = vadd.f32 %v5977, %v6062
      %v6064 = vpop.f32.mrf.mxu0
      %v6065 = vadd.f32 %v5979, %v6064
      %6066 = vmatmul.bf16.gmra.mxu0 %v3472
      %v6067 = vpop.f32.mrf.mxu0
      %v6068 = vpop.f32.mrf.mxu0
      %6069 = vmatmul.bf16.gmra.mxu0 %v3474
      %v6070 = vpop.f32.mrf.mxu0
      %v6071 = vadd.f32 %v5985, %v6070
      %v6072 = vpop.f32.mrf.mxu0
      %v6073 = vadd.f32 %v5987, %v6072
      %6074 = vmatmul.bf16.gmra.mxu0 %v3476
      %v6075 = vpop.f32.mrf.mxu0
      %v6076 = vpop.f32.mrf.mxu0
      %6077 = vmatmul.bf16.gmra.mxu0 %v3478
      %v6078 = vpop.f32.mrf.mxu0
      %v6079 = vadd.f32 %v5993, %v6078
      %v6080 = vpop.f32.mrf.mxu0
      %v6081 = vadd.f32 %v5995, %v6080
      %6082 = vmatmul.bf16.gmra.mxu0 %v3480
      %v6083 = vpop.f32.mrf.mxu0
      %v6084 = vpop.f32.mrf.mxu0
      %6085 = vmatmul.bf16.gmra.mxu0 %v3482
      %v6086 = vpop.f32.mrf.mxu0
      %v6087 = vadd.f32 %v6001, %v6086
      %v6088 = vpop.f32.mrf.mxu0
      %v6089 = vadd.f32 %v6003, %v6088
      %6090 = vmatmul.bf16.gmra.mxu0 %v3534
      %v6091 = vpop.f32.mrf.mxu0
      %v6092 = vpop.f32.mrf.mxu0
      %6093 = vmatmul.bf16.gmra.mxu0 %v3536
      %v6094 = vpop.f32.mrf.mxu0
      %v6095 = vadd.f32 %v6009, %v6094
      %v6096 = vpop.f32.mrf.mxu0
      %v6097 = vadd.f32 %v6011, %v6096
      %6098 = vmatmul.bf16.gmra.mxu0 %v3554
      %v6099 = vpop.f32.mrf.mxu0
      %v6100 = vpop.f32.mrf.mxu0
      %6101 = vmatmul.bf16.gmra.mxu0 %v3556
      %v6102 = vpop.f32.mrf.mxu0
      %v6103 = vadd.f32 %v6017, %v6102
      %v6104 = vpop.f32.mrf.mxu0
      %v6105 = vadd.f32 %v6019, %v6104
      %6106 = vmatmul.bf16.gmra.mxu0 %v3574
      %v6107 = vpop.f32.mrf.mxu0
      %v6108 = vpop.f32.mrf.mxu0
      %6109 = vmatmul.bf16.gmra.mxu0 %v3576
      %v6110 = vpop.f32.mrf.mxu0
      %v6111 = vadd.f32 %v6025, %v6110
      %v6112 = vpop.f32.mrf.mxu0
      %v6113 = vadd.f32 %v6027, %v6112
      %6114 = vdwg.mxu0
      %6115 = vmatpush.bf16.msra.mxu0 %v4390
      %6116 = vmatpush.bf16.msra.mxu0 %v4388
      %6117 = vmatpush.bf16.msra.mxu0 %v4386
      %6118 = vmatpush.bf16.msra.mxu0 %v4384
      %6119 = vmatpush.bf16.msra.mxu0 %v4382
      %6120 = vmatpush.bf16.msra.mxu0 %v4380
      %6121 = vmatpush.bf16.msra.mxu0 %v4378
      %6122 = vmatpush.bf16.msra.mxu0 %v4376
      %6123 = vmatmul.bf16.gmra.mxu0 %v3461
      %v6124 = vpop.f32.mrf.mxu0
      %v6125 = vadd.f32 %v6039, %v6124
      %v6126 = vpop.f32.mrf.mxu0
      %v6127 = vadd.f32 %v6041, %v6126
      %6128 = vmatmul.bf16.gmra.mxu0 %v3463
      %v6129 = vpop.f32.mrf.mxu0
      %v6130 = vpop.f32.mrf.mxu0
      %6131 = vmatmul.bf16.gmra.mxu0 %v3465
      %v6132 = vpop.f32.mrf.mxu0
      %v6133 = vadd.f32 %v6047, %v6132
      %v6134 = vpop.f32.mrf.mxu0
      %v6135 = vadd.f32 %v6049, %v6134
      %6136 = vmatmul.bf16.gmra.mxu0 %v3467
      %v6137 = vpop.f32.mrf.mxu0
      %v6138 = vpop.f32.mrf.mxu0
      %6139 = vmatmul.bf16.gmra.mxu0 %v3469
      %v6140 = vpop.f32.mrf.mxu0
      %v6141 = vadd.f32 %v6055, %v6140
      %v6142 = vpop.f32.mrf.mxu0
      %v6143 = vadd.f32 %v6057, %v6142
      %6144 = vmatmul.bf16.gmra.mxu0 %v3471
      %v6145 = vpop.f32.mrf.mxu0
      %v6146 = vpop.f32.mrf.mxu0
      %6147 = vmatmul.bf16.gmra.mxu0 %v3473
      %v6148 = vpop.f32.mrf.mxu0
      %v6149 = vadd.f32 %v6063, %v6148
      %v6150 = vpop.f32.mrf.mxu0
      %v6151 = vadd.f32 %v6065, %v6150
      %6152 = vmatmul.bf16.gmra.mxu0 %v3475
      %v6153 = vpop.f32.mrf.mxu0
      %v6154 = vpop.f32.mrf.mxu0
      %6155 = vmatmul.bf16.gmra.mxu0 %v3477
      %v6156 = vpop.f32.mrf.mxu0
      %v6157 = vadd.f32 %v6071, %v6156
      %v6158 = vpop.f32.mrf.mxu0
      %v6159 = vadd.f32 %v6073, %v6158
      %6160 = vmatmul.bf16.gmra.mxu0 %v3479
      %v6161 = vpop.f32.mrf.mxu0
      %v6162 = vpop.f32.mrf.mxu0
      %6163 = vmatmul.bf16.gmra.mxu0 %v3481
      %v6164 = vpop.f32.mrf.mxu0
      %v6165 = vadd.f32 %v6079, %v6164
      %v6166 = vpop.f32.mrf.mxu0
      %v6167 = vadd.f32 %v6081, %v6166
      %6168 = vmatmul.bf16.gmra.mxu0 %v3533
      %v6169 = vpop.f32.mrf.mxu0
      %v6170 = vpop.f32.mrf.mxu0
      %6171 = vmatmul.bf16.gmra.mxu0 %v3535
      %v6172 = vpop.f32.mrf.mxu0
      %v6173 = vadd.f32 %v6087, %v6172
      %v6174 = vpop.f32.mrf.mxu0
      %v6175 = vadd.f32 %v6089, %v6174
      %6176 = vmatmul.bf16.gmra.mxu0 %v3553
      %v6177 = vpop.f32.mrf.mxu0
      %v6178 = vpop.f32.mrf.mxu0
      %6179 = vmatmul.bf16.gmra.mxu0 %v3555
      %v6180 = vpop.f32.mrf.mxu0
      %v6181 = vadd.f32 %v6095, %v6180
      %v6182 = vpop.f32.mrf.mxu0
      %v6183 = vadd.f32 %v6097, %v6182
      %6184 = vmatmul.bf16.gmra.mxu0 %v3573
      %v6185 = vpop.f32.mrf.mxu0
      %v6186 = vpop.f32.mrf.mxu0
      %6187 = vmatmul.bf16.gmra.mxu0 %v3575
      %v6188 = vpop.f32.mrf.mxu0
      %v6189 = vadd.f32 %v6103, %v6188
      %v6190 = vpop.f32.mrf.mxu0
      %v6191 = vadd.f32 %v6105, %v6190
      %6192 = vmatmul.bf16.gmra.mxu0 %v3593
      %v6193 = vpop.f32.mrf.mxu0
      %v6194 = vpop.f32.mrf.mxu0
      %6195 = vmatmul.bf16.gmra.mxu0 %v3595
      %v6196 = vpop.f32.mrf.mxu0
      %v6197 = vadd.f32 %v6111, %v6196
      %v6198 = vpop.f32.mrf.mxu0
      %v6199 = vadd.f32 %v6113, %v6198
      %6200 = vdwg.mxu0
      %6201 = vmatpush.bf16.msra.mxu0 %v4406
      %6202 = vmatpush.bf16.msra.mxu0 %v4404
      %6203 = vmatpush.bf16.msra.mxu0 %v4402
      %6204 = vmatpush.bf16.msra.mxu0 %v4400
      %6205 = vmatpush.bf16.msra.mxu0 %v4398
      %6206 = vmatpush.bf16.msra.mxu0 %v4396
      %6207 = vmatpush.bf16.msra.mxu0 %v4394
      %6208 = vmatpush.bf16.msra.mxu0 %v4392
      %6209 = vmatmul.bf16.gmra.mxu0 %v3462
      %v6210 = vpop.f32.mrf.mxu0
      %v6211 = vadd.f32 %v6125, %v6210
      %v6212 = vpop.f32.mrf.mxu0
      %v6213 = vadd.f32 %v6127, %v6212
      %6214 = vmatmul.bf16.gmra.mxu0 %v3464
      %v6215 = vpop.f32.mrf.mxu0
      %v6216 = vpop.f32.mrf.mxu0
      %6217 = vmatmul.bf16.gmra.mxu0 %v3466
      %v6218 = vpop.f32.mrf.mxu0
      %v6219 = vadd.f32 %v6133, %v6218
      %v6220 = vpop.f32.mrf.mxu0
      %v6221 = vadd.f32 %v6135, %v6220
      %6222 = vmatmul.bf16.gmra.mxu0 %v3468
      %v6223 = vpop.f32.mrf.mxu0
      %v6224 = vpop.f32.mrf.mxu0
      %6225 = vmatmul.bf16.gmra.mxu0 %v3470
      %v6226 = vpop.f32.mrf.mxu0
      %v6227 = vadd.f32 %v6141, %v6226
      %v6228 = vpop.f32.mrf.mxu0
      %v6229 = vadd.f32 %v6143, %v6228
      %6230 = vmatmul.bf16.gmra.mxu0 %v3472
      %v6231 = vpop.f32.mrf.mxu0
      %v6232 = vpop.f32.mrf.mxu0
      %6233 = vmatmul.bf16.gmra.mxu0 %v3474
      %v6234 = vpop.f32.mrf.mxu0
      %v6235 = vadd.f32 %v6149, %v6234
      %v6236 = vpop.f32.mrf.mxu0
      %v6237 = vadd.f32 %v6151, %v6236
      %6238 = vmatmul.bf16.gmra.mxu0 %v3476
      %v6239 = vpop.f32.mrf.mxu0
      %v6240 = vpop.f32.mrf.mxu0
      %6241 = vmatmul.bf16.gmra.mxu0 %v3478
      %v6242 = vpop.f32.mrf.mxu0
      %v6243 = vadd.f32 %v6157, %v6242
      %v6244 = vpop.f32.mrf.mxu0
      %v6245 = vadd.f32 %v6159, %v6244
      %6246 = vmatmul.bf16.gmra.mxu0 %v3480
      %v6247 = vpop.f32.mrf.mxu0
      %v6248 = vpop.f32.mrf.mxu0
      %6249 = vmatmul.bf16.gmra.mxu0 %v3482
      %v6250 = vpop.f32.mrf.mxu0
      %v6251 = vadd.f32 %v6165, %v6250
      %v6252 = vpop.f32.mrf.mxu0
      %v6253 = vadd.f32 %v6167, %v6252
      %6254 = vmatmul.bf16.gmra.mxu0 %v3534
      %v6255 = vpop.f32.mrf.mxu0
      %v6256 = vpop.f32.mrf.mxu0
      %6257 = vmatmul.bf16.gmra.mxu0 %v3536
      %v6258 = vpop.f32.mrf.mxu0
      %v6259 = vadd.f32 %v6173, %v6258
      %v6260 = vpop.f32.mrf.mxu0
      %v6261 = vadd.f32 %v6175, %v6260
      %6262 = vmatmul.bf16.gmra.mxu0 %v3554
      %v6263 = vpop.f32.mrf.mxu0
      %v6264 = vpop.f32.mrf.mxu0
      %6265 = vmatmul.bf16.gmra.mxu0 %v3556
      %v6266 = vpop.f32.mrf.mxu0
      %v6267 = vadd.f32 %v6181, %v6266
      %v6268 = vpop.f32.mrf.mxu0
      %v6269 = vadd.f32 %v6183, %v6268
      %6270 = vmatmul.bf16.gmra.mxu0 %v3574
      %v6271 = vpop.f32.mrf.mxu0
      %v6272 = vpop.f32.mrf.mxu0
      %6273 = vmatmul.bf16.gmra.mxu0 %v3576
      %v6274 = vpop.f32.mrf.mxu0
      %v6275 = vadd.f32 %v6189, %v6274
      %v6276 = vpop.f32.mrf.mxu0
      %v6277 = vadd.f32 %v6191, %v6276
      %6278 = vmatmul.bf16.gmra.mxu0 %v3594
      %v6279 = vpop.f32.mrf.mxu0
      %v6280 = vpop.f32.mrf.mxu0
      %6281 = vmatmul.bf16.gmra.mxu0 %v3596
      %v6282 = vpop.f32.mrf.mxu0
      %v6283 = vadd.f32 %v6197, %v6282
      %v6284 = vpop.f32.mrf.mxu0
      %v6285 = vadd.f32 %v6199, %v6284
      %6286 = vdwg.mxu0
      %v6287 = vmax.f32 %v5351, 0.0
      %v6288 = vmax.f32 %v6211, 0.0
      %v6289 = vmax.f32 %v5353, 0.0
      %v6290 = vmax.f32 %v6213, 0.0
      %v6291 = vmax.f32 %v5359, 0.0
      %v6292 = vmax.f32 %v6219, 0.0
      %v6293 = vmax.f32 %v5361, 0.0
      %v6294 = vmax.f32 %v6221, 0.0
      %v6295 = vmax.f32 %v5367, 0.0
      %v6296 = vmax.f32 %v6227, 0.0
      %v6297 = vmax.f32 %v5369, 0.0
      %v6298 = vmax.f32 %v6229, 0.0
      %v6299 = vmax.f32 %v5375, 0.0
      %v6300 = vmax.f32 %v6235, 0.0
      %v6301 = vmax.f32 %v5377, 0.0
      %v6302 = vmax.f32 %v6237, 0.0
      %v6303 = vmax.f32 %v5383, 0.0
      %v6304 = vmax.f32 %v6243, 0.0
      %v6305 = vmax.f32 %v5385, 0.0
      %v6306 = vmax.f32 %v6245, 0.0
      %v6307 = vmax.f32 %v5391, 0.0
      %v6308 = vmax.f32 %v6251, 0.0
      %v6309 = vmax.f32 %v5393, 0.0
      %v6310 = vmax.f32 %v6253, 0.0
      %v6311 = vmax.f32 %v5399, 0.0
      %v6312 = vmax.f32 %v6259, 0.0
      %v6313 = vmax.f32 %v5401, 0.0
      %v6314 = vmax.f32 %v6261, 0.0
      %v6315 = vmax.f32 %v5407, 0.0
      %v6316 = vmax.f32 %v6267, 0.0
      %v6317 = vmax.f32 %v5409, 0.0
      %v6318 = vmax.f32 %v6269, 0.0
      %v6319 = vmax.f32 %v5415, 0.0
      %v6320 = vmax.f32 %v6275, 0.0
      %v6321 = vmax.f32 %v5417, 0.0
      %v6322 = vmax.f32 %v6277, 0.0
      %v6323 = vmax.f32 %v5423, 0.0
      %v6324 = vmax.f32 %v6283, 0.0
      %v6325 = vmax.f32 %v5425, 0.0
      %v6326 = vmax.f32 %v6285, 0.0
      %v6327 = vmax.f32 %v6287, %v6291
      %v6328 = vmax.f32 %v6288, %v6292
      %v6329 = vmax.f32 %v6289, %v6293
      %v6330 = vmax.f32 %v6290, %v6294
      %6331 = vrot.lane.b32.xlu0 %v6327, 112
      %v6332 = vpop.permute.xlu0 %6331
      %6333 = vrot.lane.b32.xlu0 %v6329, 112
      %v6334 = vpop.permute.xlu0 %6333
      %6335 = vrot.lane.b32.xlu0 %v6328, 112
      %v6336 = vpop.permute.xlu0 %6335
      %6337 = vrot.lane.b32.xlu0 %v6330, 112
      %v6338 = vpop.permute.xlu0 %6337
      %vm6339 = vcmp.lt.s32.totalorder %v3059, 112
      %v6340 = vsel %vm6339, %v6332, %v6336
      %v6341 = vsel %vm6339, %v6334, %v6338
      %v6342 = vsel %vm6339, %v6336, %v6332
      %v6343 = vsel %vm6339, %v6338, %v6334
      %v6344 = vmax.f32 %v6327, %v6340
      %v6345 = vmax.f32 %v6328, %v6342
      %v6346 = vmax.f32 %v6329, %v6341
      %v6347 = vmax.f32 %v6330, %v6343
      %v6348 = vmax.f32 %v6295, %v6299
      %v6349 = vmax.f32 %v6296, %v6300
      %v6350 = vmax.f32 %v6297, %v6301
      %v6351 = vmax.f32 %v6298, %v6302
      %6352 = vrot.lane.b32.xlu0 %v6348, 112
      %v6353 = vpop.permute.xlu0 %6352
      %6354 = vrot.lane.b32.xlu0 %v6350, 112
      %v6355 = vpop.permute.xlu0 %6354
      %6356 = vrot.lane.b32.xlu0 %v6349, 112
      %v6357 = vpop.permute.xlu0 %6356
      %6358 = vrot.lane.b32.xlu0 %v6351, 112
      %v6359 = vpop.permute.xlu0 %6358
      %v6360 = vsel %vm6339, %v6353, %v6357
      %v6361 = vsel %vm6339, %v6355, %v6359
      %v6362 = vsel %vm6339, %v6357, %v6353
      %v6363 = vsel %vm6339, %v6359, %v6355
      %v6364 = vmax.f32 %v6348, %v6360
      %v6365 = vmax.f32 %v6349, %v6362
      %v6366 = vmax.f32 %v6350, %v6361
      %v6367 = vmax.f32 %v6351, %v6363
      %v6368 = vmax.f32 %v6303, %v6307
      %v6369 = vmax.f32 %v6304, %v6308
      %v6370 = vmax.f32 %v6305, %v6309
      %v6371 = vmax.f32 %v6306, %v6310
      %6372 = vrot.lane.b32.xlu0 %v6368, 112
      %v6373 = vpop.permute.xlu0 %6372
      %6374 = vrot.lane.b32.xlu0 %v6370, 112
      %v6375 = vpop.permute.xlu0 %6374
      %6376 = vrot.lane.b32.xlu0 %v6369, 112
      %v6377 = vpop.permute.xlu0 %6376
      %6378 = vrot.lane.b32.xlu0 %v6371, 112
      %v6379 = vpop.permute.xlu0 %6378
      %v6380 = vsel %vm6339, %v6373, %v6377
      %v6381 = vsel %vm6339, %v6375, %v6379
      %v6382 = vsel %vm6339, %v6377, %v6373
      %v6383 = vsel %vm6339, %v6379, %v6375
      %v6384 = vmax.f32 %v6368, %v6380
      %v6385 = vmax.f32 %v6369, %v6382
      %v6386 = vmax.f32 %v6370, %v6381
      %v6387 = vmax.f32 %v6371, %v6383
      %v6388 = vmax.f32 %v6311, %v6315
      %v6389 = vmax.f32 %v6312, %v6316
      %v6390 = vmax.f32 %v6313, %v6317
      %v6391 = vmax.f32 %v6314, %v6318
      %6392 = vrot.lane.b32.xlu0 %v6388, 112
      %v6393 = vpop.permute.xlu0 %6392
      %6394 = vrot.lane.b32.xlu0 %v6390, 112
      %v6395 = vpop.permute.xlu0 %6394
      %6396 = vrot.lane.b32.xlu0 %v6389, 112
      %v6397 = vpop.permute.xlu0 %6396
      %6398 = vrot.lane.b32.xlu0 %v6391, 112
      %v6399 = vpop.permute.xlu0 %6398
      %v6400 = vsel %vm6339, %v6393, %v6397
      %v6401 = vsel %vm6339, %v6395, %v6399
      %v6402 = vsel %vm6339, %v6397, %v6393
      %v6403 = vsel %vm6339, %v6399, %v6395
      %v6404 = vmax.f32 %v6388, %v6400
      %v6405 = vmax.f32 %v6389, %v6402
      %v6406 = vmax.f32 %v6390, %v6401
      %v6407 = vmax.f32 %v6391, %v6403
      %v6408 = vmax.f32 %v6319, %v6323
      %v6409 = vmax.f32 %v6320, %v6324
      %v6410 = vmax.f32 %v6321, %v6325
      %v6411 = vmax.f32 %v6322, %v6326
      %6412 = vrot.lane.b32.xlu0 %v6408, 112
      %v6413 = vpop.permute.xlu0 %6412
      %6414 = vrot.lane.b32.xlu0 %v6410, 112
      %v6415 = vpop.permute.xlu0 %6414
      %6416 = vrot.lane.b32.xlu0 %v6409, 112
      %v6417 = vpop.permute.xlu0 %6416
      %6418 = vrot.lane.b32.xlu0 %v6411, 112
      %v6419 = vpop.permute.xlu0 %6418
      %v6420 = vsel %vm6339, %v6413, %v6417
      %v6421 = vsel %vm6339, %v6415, %v6419
      %v6422 = vsel %vm6339, %v6417, %v6413
      %v6423 = vsel %vm6339, %v6419, %v6415
      %v6424 = vmax.f32 %v6408, %v6420
      %v6425 = vmax.f32 %v6409, %v6422
      %v6426 = vmax.f32 %v6410, %v6421
      %v6427 = vmax.f32 %v6411, %v6423
      %v6428 = vpack.c.bf16 %v6346, %v6344
      %v6429 = vpack.c.bf16 %v6347, %v6345
      %v6430 = vpack.c.bf16 %v6366, %v6364
      %v6431 = vpack.c.bf16 %v6367, %v6365
      %v6432 = vpack.c.bf16 %v6386, %v6384
      %v6433 = vpack.c.bf16 %v6387, %v6385
      %v6434 = vpack.c.bf16 %v6406, %v6404
      %v6435 = vpack.c.bf16 %v6407, %v6405
      %v6436 = vpack.c.bf16 %v6426, %v6424
      %v6437 = vpack.c.bf16 %v6427, %v6425
      %v6438 = vld [vmem:[%s5] sm:$0xf]
      %v6439 = vld [vmem:[%s5 + $0x4] sm:$0xf]
      %v6440 = vld [vmem:[%s5 + $0x8] sm:$0xf]
      %v6441 = vld [vmem:[%s5 + $0xc] sm:$0xf]
      %v6442 = vld [vmem:[%s5 + $0x10] sm:$0xf]
      %v6443 = vld [vmem:[%s5 + $0x14] sm:$0xf]
      %v6444 = vld [vmem:[%s5 + $0x18] sm:$0xf]
      %v6445 = vld [vmem:[%s5 + $0x1c] sm:$0xf]
      %v6446 = vld [vmem:[%s5 + $0x20] sm:$0xf]
      %v6447 = vld [vmem:[%s5 + $0x24] sm:$0xf]
      %v6448 = vld [vmem:[%s5 + $0x28] sm:$0xf]
      %v6449 = vld [vmem:[%s5 + $0x2c] sm:$0xf]
      %v6450 = vld [vmem:[%s5 + $0x30] sm:$0xf]
      %v6451 = vld [vmem:[%s5 + $0x34] sm:$0xf]
      %v6452 = vld [vmem:[%s5 + $0x38] sm:$0xf]
      %v6453 = vld [vmem:[%s5 + $0x3c] sm:$0xf]
      %v6454 = vld [vmem:[%s5 + $0x40] sm:$0xf]
      %v6455 = vld [vmem:[%s5 + $0x44] sm:$0xf]
      %v6456 = vld [vmem:[%s5 + $0x48] sm:$0xf]
      %v6457 = vld [vmem:[%s5 + $0x4c] sm:$0xf]
      %v6458 = vld [vmem:[%s5 + $0x50] sm:$0xf]
      %v6459 = vld [vmem:[%s5 + $0x54] sm:$0xf]
      %v6460 = vld [vmem:[%s5 + $0x58] sm:$0xf]
      %v6461 = vld [vmem:[%s5 + $0x5c] sm:$0xf]
      %v6462 = vld [vmem:[%s5 + $0x60] sm:$0xf]
      %v6463 = vld [vmem:[%s5 + $0x64] sm:$0xf]
      %v6464 = vld [vmem:[%s5 + $0x68] sm:$0xf]
      %v6465 = vld [vmem:[%s5 + $0x6c] sm:$0xf]
      %v6466 = vld [vmem:[%s5 + $0x70] sm:$0xf]
      %v6467 = vld [vmem:[%s5 + $0x74] sm:$0xf]
      %v6468 = vld [vmem:[%s5 + $0x78] sm:$0xf]
      %v6469 = vld [vmem:[%s5 + $0x7c] sm:$0xf]
      %v6470 = vld [vmem:[%s5 + $0x80] sm:$0xf]
      %v6471 = vld [vmem:[%s5 + $0x84] sm:$0xf]
      %v6472 = vld [vmem:[%s5 + $0x88] sm:$0xf]
      %v6473 = vld [vmem:[%s5 + $0x8c] sm:$0xf]
      %v6474 = vld [vmem:[%s5 + $0x90] sm:$0xf]
      %v6475 = vld [vmem:[%s5 + $0x94] sm:$0xf]
      %v6476 = vld [vmem:[%s5 + $0x98] sm:$0xf]
      %v6477 = vld [vmem:[%s5 + $0x9c] sm:$0xf]
      %v6478 = vld [vmem:[%s5 + $0xa0] sm:$0xf]
      %v6479 = vld [vmem:[%s5 + $0xa4] sm:$0xf]
      %v6480 = vld [vmem:[%s5 + $0xa8] sm:$0xf]
      %v6481 = vld [vmem:[%s5 + $0xac] sm:$0xf]
      %v6482 = vld [vmem:[%s5 + $0xb0] sm:$0xf]
      %v6483 = vld [vmem:[%s5 + $0xb4] sm:$0xf]
      %v6484 = vld [vmem:[%s5 + $0xb8] sm:$0xf]
      %v6485 = vld [vmem:[%s5 + $0xbc] sm:$0xf]
      %v6486 = vld [vmem:[%s5 + $0xc0] sm:$0xf]
      %v6487 = vld [vmem:[%s5 + $0xc4] sm:$0xf]
      %v6488 = vld [vmem:[%s5 + $0xc8] sm:$0xf]
      %v6489 = vld [vmem:[%s5 + $0xcc] sm:$0xf]
      %v6490 = vld [vmem:[%s5 + $0xd0] sm:$0xf]
      %v6491 = vld [vmem:[%s5 + $0xd4] sm:$0xf]
      %v6492 = vld [vmem:[%s5 + $0xd8] sm:$0xf]
      %v6493 = vld [vmem:[%s5 + $0xdc] sm:$0xf]
      %v6494 = vld [vmem:[%s5 + $0xe0] sm:$0xf]
      %v6495 = vld [vmem:[%s5 + $0xe4] sm:$0xf]
      %v6496 = vld [vmem:[%s5 + $0xe8] sm:$0xf]
      %v6497 = vld [vmem:[%s5 + $0xec] sm:$0xf]
      %v6498 = vld [vmem:[%s5 + $0xf0] sm:$0xf]
      %v6499 = vld [vmem:[%s5 + $0xf4] sm:$0xf]
      %v6500 = vld [vmem:[%s5 + $0xf8] sm:$0xf]
      %v6501 = vld [vmem:[%s5 + $0xfc] sm:$0xf]
      %v6502 = vld [vmem:[%s5 + $0x100] sm:$0xf]
      %v6503 = vld [vmem:[%s5 + $0x104] sm:$0xf]
      %v6504 = vld [vmem:[%s5 + $0x108] sm:$0xf]
      %v6505 = vld [vmem:[%s5 + $0x10c] sm:$0xf]
      %v6506 = vld [vmem:[%s5 + $0x110] sm:$0xf]
      %v6507 = vld [vmem:[%s5 + $0x114] sm:$0xf]
      %v6508 = vld [vmem:[%s5 + $0x118] sm:$0xf]
      %v6509 = vld [vmem:[%s5 + $0x11c] sm:$0xf]
      %v6510 = vld [vmem:[%s5 + $0x120] sm:$0xf]
      %v6511 = vld [vmem:[%s5 + $0x124] sm:$0xf]
      %v6512 = vld [vmem:[%s5 + $0x128] sm:$0xf]
      %v6513 = vld [vmem:[%s5 + $0x12c] sm:$0xf]
      %v6514 = vld [vmem:[%s5 + $0x130] sm:$0xf]
      %v6515 = vld [vmem:[%s5 + $0x134] sm:$0xf]
      %v6516 = vld [vmem:[%s5 + $0x138] sm:$0xf]
      %v6517 = vld [vmem:[%s5 + $0x13c] sm:$0xf]
      %v6518 = vld [vmem:[%s5 + $0x140] sm:$0xf]
      %v6519 = vld [vmem:[%s5 + $0x144] sm:$0xf]
      %v6520 = vld [vmem:[%s5 + $0x148] sm:$0xf]
      %v6521 = vld [vmem:[%s5 + $0x14c] sm:$0xf]
      %v6522 = vld [vmem:[%s5 + $0x150] sm:$0xf]
      %v6523 = vld [vmem:[%s5 + $0x154] sm:$0xf]
      %v6524 = vld [vmem:[%s5 + $0x158] sm:$0xf]
      %v6525 = vld [vmem:[%s5 + $0x15c] sm:$0xf]
      %v6526 = vld [vmem:[%s5 + $0x160] sm:$0xf]
      %v6527 = vld [vmem:[%s5 + $0x164] sm:$0xf]
      %v6528 = vld [vmem:[%s5 + $0x168] sm:$0xf]
      %v6529 = vld [vmem:[%s5 + $0x16c] sm:$0xf]
      %v6530 = vld [vmem:[%s5 + $0x170] sm:$0xf]
      %v6531 = vld [vmem:[%s5 + $0x174] sm:$0xf]
      %v6532 = vld [vmem:[%s5 + $0x178] sm:$0xf]
      %v6533 = vld [vmem:[%s5 + $0x17c] sm:$0xf]
      %v6534 = vld [vmem:[%s5 + $0x180] sm:$0xf]
      %v6535 = vld [vmem:[%s5 + $0x184] sm:$0xf]
      %v6536 = vld [vmem:[%s5 + $0x188] sm:$0xf]
      %v6537 = vld [vmem:[%s5 + $0x18c] sm:$0xf]
      %v6538 = vld [vmem:[%s5 + $0x190] sm:$0xf]
      %v6539 = vld [vmem:[%s5 + $0x194] sm:$0xf]
      %v6540 = vld [vmem:[%s5 + $0x198] sm:$0xf]
      %v6541 = vld [vmem:[%s5 + $0x19c] sm:$0xf]
      %v6542 = vld [vmem:[%s5 + $0x1a0] sm:$0xf]
      %v6543 = vld [vmem:[%s5 + $0x1a4] sm:$0xf]
      %v6544 = vld [vmem:[%s5 + $0x1a8] sm:$0xf]
      %v6545 = vld [vmem:[%s5 + $0x1ac] sm:$0xf]
      %v6546 = vld [vmem:[%s5 + $0x1b0] sm:$0xf]
      %v6547 = vld [vmem:[%s5 + $0x1b4] sm:$0xf]
      %v6548 = vld [vmem:[%s5 + $0x1b8] sm:$0xf]
      %v6549 = vld [vmem:[%s5 + $0x1bc] sm:$0xf]
      %v6550 = vld [vmem:[%s5 + $0x1c0] sm:$0xf]
      %v6551 = vld [vmem:[%s5 + $0x1c4] sm:$0xf]
      %v6552 = vld [vmem:[%s5 + $0x1c8] sm:$0xf]
      %v6553 = vld [vmem:[%s5 + $0x1cc] sm:$0xf]
      %v6554 = vld [vmem:[%s5 + $0x1d0] sm:$0xf]
      %v6555 = vld [vmem:[%s5 + $0x1d4] sm:$0xf]
      %v6556 = vld [vmem:[%s5 + $0x1d8] sm:$0xf]
      %v6557 = vld [vmem:[%s5 + $0x1dc] sm:$0xf]
      %v6558 = vld [vmem:[%s5 + $0x1e0] sm:$0xf]
      %v6559 = vld [vmem:[%s5 + $0x1e4] sm:$0xf]
      %v6560 = vld [vmem:[%s5 + $0x1e8] sm:$0xf]
      %v6561 = vld [vmem:[%s5 + $0x1ec] sm:$0xf]
      %v6562 = vld [vmem:[%s5 + $0x1f0] sm:$0xf]
      %v6563 = vld [vmem:[%s5 + $0x1f4] sm:$0xf]
      %v6564 = vld [vmem:[%s5 + $0x1f8] sm:$0xf]
      %v6565 = vld [vmem:[%s5 + $0x1fc] sm:$0xf]
      %v6566 = vld [vmem:[%s5 + $0x200] sm:$0xf]
      %v6567 = vld [vmem:[%s5 + $0x204] sm:$0xf]
      %v6568 = vld [vmem:[%s5 + $0x208] sm:$0xf]
      %v6569 = vld [vmem:[%s5 + $0x20c] sm:$0xf]
      %v6570 = vld [vmem:[%s5 + $0x210] sm:$0xf]
      %v6571 = vld [vmem:[%s5 + $0x214] sm:$0xf]
      %v6572 = vld [vmem:[%s5 + $0x218] sm:$0xf]
      %v6573 = vld [vmem:[%s5 + $0x21c] sm:$0xf]
      %v6574 = vld [vmem:[%s5 + $0x220] sm:$0xf]
      %v6575 = vld [vmem:[%s5 + $0x224] sm:$0xf]
      %v6576 = vld [vmem:[%s5 + $0x228] sm:$0xf]
      %v6577 = vld [vmem:[%s5 + $0x22c] sm:$0xf]
      %v6578 = vld [vmem:[%s5 + $0x230] sm:$0xf]
      %v6579 = vld [vmem:[%s5 + $0x234] sm:$0xf]
      %v6580 = vld [vmem:[%s5 + $0x238] sm:$0xf]
      %v6581 = vld [vmem:[%s5 + $0x23c] sm:$0xf]
      %v6582 = vld [vmem:[%s5 + $0x240] sm:$0xf]
      %v6583 = vld [vmem:[%s5 + $0x244] sm:$0xf]
      %v6584 = vld [vmem:[%s5 + $0x248] sm:$0xf]
      %v6585 = vld [vmem:[%s5 + $0x24c] sm:$0xf]
      %v6586 = vld [vmem:[%s5 + $0x250] sm:$0xf]
      %v6587 = vld [vmem:[%s5 + $0x254] sm:$0xf]
      %v6588 = vld [vmem:[%s5 + $0x258] sm:$0xf]
      %v6589 = vld [vmem:[%s5 + $0x25c] sm:$0xf]
      %v6590 = vld [vmem:[%s5 + $0x260] sm:$0xf]
      %v6591 = vld [vmem:[%s5 + $0x264] sm:$0xf]
      %v6592 = vld [vmem:[%s5 + $0x268] sm:$0xf]
      %v6593 = vld [vmem:[%s5 + $0x26c] sm:$0xf]
      %v6594 = vld [vmem:[%s5 + $0x270] sm:$0xf]
      %v6595 = vld [vmem:[%s5 + $0x274] sm:$0xf]
      %v6596 = vld [vmem:[%s5 + $0x278] sm:$0xf]
      %v6597 = vld [vmem:[%s5 + $0x27c] sm:$0xf]
      %v6598 = vld [vmem:[%s6] sm:$0x1]
      %v6600 = vperm.slane %v6598, 0
      %v6762 = vunpack.c.l.b16 %v6438
      %v6763 = vunpack.c.l.b16 %v6439
      %v6764 = vunpack.c.l.b16 %v6440
      %v6765 = vunpack.c.l.b16 %v6441
      %v6766 = vunpack.c.l.b16 %v6442
      %v6767 = vunpack.c.l.b16 %v6443
      %v6768 = vunpack.c.l.b16 %v6444
      %v6769 = vunpack.c.l.b16 %v6445
      %v6770 = vunpack.c.l.b16 %v6446
      %v6771 = vunpack.c.l.b16 %v6447
      %v6772 = vunpack.c.l.b16 %v6448
      %v6773 = vunpack.c.l.b16 %v6449
      %v6774 = vunpack.c.l.b16 %v6450
      %v6775 = vunpack.c.l.b16 %v6451
      %v6776 = vunpack.c.l.b16 %v6452
      %v6777 = vunpack.c.l.b16 %v6453
      %v6778 = vunpack.c.l.b16 %v6454
      %v6779 = vunpack.c.l.b16 %v6455
      %v6780 = vunpack.c.l.b16 %v6456
      %v6781 = vunpack.c.l.b16 %v6457
      %v6782 = vunpack.c.l.b16 %v6458
      %v6783 = vunpack.c.l.b16 %v6459
      %v6784 = vunpack.c.l.b16 %v6460
      %v6785 = vunpack.c.l.b16 %v6461
      %v6786 = vunpack.c.l.b16 %v6462
      %v6787 = vunpack.c.l.b16 %v6463
      %v6788 = vunpack.c.l.b16 %v6464
      %v6789 = vunpack.c.l.b16 %v6465
      %v6790 = vunpack.c.l.b16 %v6466
      %v6791 = vunpack.c.l.b16 %v6467
      %v6792 = vunpack.c.l.b16 %v6468
      %v6793 = vunpack.c.l.b16 %v6469
      %v6794 = vunpack.c.l.b16 %v6470
      %v6795 = vunpack.c.l.b16 %v6471
      %v6796 = vunpack.c.l.b16 %v6472
      %v6797 = vunpack.c.l.b16 %v6473
      %v6798 = vunpack.c.l.b16 %v6474
      %v6799 = vunpack.c.l.b16 %v6475
      %v6800 = vunpack.c.l.b16 %v6476
      %v6801 = vunpack.c.l.b16 %v6477
      %v6802 = vunpack.c.l.b16 %v6478
      %v6803 = vunpack.c.l.b16 %v6479
      %v6804 = vunpack.c.l.b16 %v6480
      %v6805 = vunpack.c.l.b16 %v6481
      %v6806 = vunpack.c.l.b16 %v6482
      %v6807 = vunpack.c.l.b16 %v6483
      %v6808 = vunpack.c.l.b16 %v6484
      %v6809 = vunpack.c.l.b16 %v6485
      %v6810 = vunpack.c.l.b16 %v6486
      %v6811 = vunpack.c.l.b16 %v6487
      %v6812 = vunpack.c.l.b16 %v6488
      %v6813 = vunpack.c.l.b16 %v6489
      %v6814 = vunpack.c.l.b16 %v6490
      %v6815 = vunpack.c.l.b16 %v6491
      %v6816 = vunpack.c.l.b16 %v6492
      %v6817 = vunpack.c.l.b16 %v6493
      %v6818 = vunpack.c.l.b16 %v6494
      %v6819 = vunpack.c.l.b16 %v6495
      %v6820 = vunpack.c.l.b16 %v6496
      %v6821 = vunpack.c.l.b16 %v6497
      %v6822 = vunpack.c.l.b16 %v6498
      %v6823 = vunpack.c.l.b16 %v6499
      %v6824 = vunpack.c.l.b16 %v6500
      %v6825 = vunpack.c.l.b16 %v6501
      %v6826 = vunpack.c.l.b16 %v6502
      %v6827 = vunpack.c.l.b16 %v6503
      %v6828 = vunpack.c.l.b16 %v6504
      %v6829 = vunpack.c.l.b16 %v6505
      %v6830 = vunpack.c.l.b16 %v6506
      %v6831 = vunpack.c.l.b16 %v6507
      %v6832 = vunpack.c.l.b16 %v6508
      %v6833 = vunpack.c.l.b16 %v6509
      %v6834 = vunpack.c.l.b16 %v6510
      %v6835 = vunpack.c.l.b16 %v6511
      %v6836 = vunpack.c.l.b16 %v6512
      %v6837 = vunpack.c.l.b16 %v6513
      %v6838 = vunpack.c.l.b16 %v6514
      %v6839 = vunpack.c.l.b16 %v6515
      %v6840 = vunpack.c.l.b16 %v6516
      %v6841 = vunpack.c.l.b16 %v6517
      %v6842 = vunpack.c.l.b16 %v6518
      %v6843 = vunpack.c.l.b16 %v6519
      %v6844 = vunpack.c.l.b16 %v6520
      %v6845 = vunpack.c.l.b16 %v6521
      %v6846 = vunpack.c.l.b16 %v6522
      %v6847 = vunpack.c.l.b16 %v6523
      %v6848 = vunpack.c.l.b16 %v6524
      %v6849 = vunpack.c.l.b16 %v6525
      %v6850 = vunpack.c.l.b16 %v6526
      %v6851 = vunpack.c.l.b16 %v6527
      %v6852 = vunpack.c.l.b16 %v6528
      %v6853 = vunpack.c.l.b16 %v6529
      %v6854 = vunpack.c.l.b16 %v6530
      %v6855 = vunpack.c.l.b16 %v6531
      %v6856 = vunpack.c.l.b16 %v6532
      %v6857 = vunpack.c.l.b16 %v6533
      %v6858 = vunpack.c.l.b16 %v6534
      %v6859 = vunpack.c.l.b16 %v6535
      %v6860 = vunpack.c.l.b16 %v6536
      %v6861 = vunpack.c.l.b16 %v6537
      %v6862 = vunpack.c.l.b16 %v6538
      %v6863 = vunpack.c.l.b16 %v6539
      %v6864 = vunpack.c.l.b16 %v6540
      %v6865 = vunpack.c.l.b16 %v6541
      %v6866 = vunpack.c.l.b16 %v6542
      %v6867 = vunpack.c.l.b16 %v6543
      %v6868 = vunpack.c.l.b16 %v6544
      %v6869 = vunpack.c.l.b16 %v6545
      %v6870 = vunpack.c.l.b16 %v6546
      %v6871 = vunpack.c.l.b16 %v6547
      %v6872 = vunpack.c.l.b16 %v6548
      %v6873 = vunpack.c.l.b16 %v6549
      %v6874 = vunpack.c.l.b16 %v6550
      %v6875 = vunpack.c.l.b16 %v6551
      %v6876 = vunpack.c.l.b16 %v6552
      %v6877 = vunpack.c.l.b16 %v6553
      %v6878 = vunpack.c.l.b16 %v6554
      %v6879 = vunpack.c.l.b16 %v6555
      %v6880 = vunpack.c.l.b16 %v6556
      %v6881 = vunpack.c.l.b16 %v6557
      %v6882 = vunpack.c.l.b16 %v6558
      %v6883 = vunpack.c.l.b16 %v6559
      %v6884 = vunpack.c.l.b16 %v6560
      %v6885 = vunpack.c.l.b16 %v6561
      %v6886 = vunpack.c.l.b16 %v6562
      %v6887 = vunpack.c.l.b16 %v6563
      %v6888 = vunpack.c.l.b16 %v6564
      %v6889 = vunpack.c.l.b16 %v6565
      %v6890 = vunpack.c.l.b16 %v6566
      %v6891 = vunpack.c.l.b16 %v6567
      %v6892 = vunpack.c.l.b16 %v6568
      %v6893 = vunpack.c.l.b16 %v6569
      %v6894 = vunpack.c.l.b16 %v6570
      %v6895 = vunpack.c.l.b16 %v6571
      %v6896 = vunpack.c.l.b16 %v6572
      %v6897 = vunpack.c.l.b16 %v6573
      %v6898 = vunpack.c.l.b16 %v6574
      %v6899 = vunpack.c.l.b16 %v6575
      %v6900 = vunpack.c.l.b16 %v6576
      %v6901 = vunpack.c.l.b16 %v6577
      %v6902 = vunpack.c.l.b16 %v6578
      %v6903 = vunpack.c.l.b16 %v6579
      %v6904 = vunpack.c.l.b16 %v6580
      %v6905 = vunpack.c.l.b16 %v6581
      %v6906 = vunpack.c.l.b16 %v6582
      %v6907 = vunpack.c.l.b16 %v6583
      %v6908 = vunpack.c.l.b16 %v6584
      %v6909 = vunpack.c.l.b16 %v6585
      %v6910 = vunpack.c.l.b16 %v6586
      %v6911 = vunpack.c.l.b16 %v6587
      %v6912 = vunpack.c.l.b16 %v6588
      %v6913 = vunpack.c.l.b16 %v6589
      %v6914 = vunpack.c.l.b16 %v6590
      %v6915 = vunpack.c.l.b16 %v6591
      %v6916 = vunpack.c.l.b16 %v6592
      %v6917 = vunpack.c.l.b16 %v6593
      %v6918 = vunpack.c.l.b16 %v6594
      %v6919 = vunpack.c.l.b16 %v6595
      %v6920 = vunpack.c.l.b16 %v6596
      %v6921 = vunpack.c.l.b16 %v6597
      %v6922 = vpack.c.b16 %v6763, %v6762
      %v6923 = vpack.c.b16 %v6765, %v6764
      %v6924 = vpack.c.b16 %v6767, %v6766
      %v6925 = vpack.c.b16 %v6769, %v6768
      %v6926 = vpack.c.b16 %v6771, %v6770
      %v6927 = vpack.c.b16 %v6773, %v6772
      %v6928 = vpack.c.b16 %v6775, %v6774
      %v6929 = vpack.c.b16 %v6777, %v6776
      %v6930 = vpack.c.b16 %v6779, %v6778
      %v6931 = vpack.c.b16 %v6781, %v6780
      %v6932 = vpack.c.b16 %v6783, %v6782
      %v6933 = vpack.c.b16 %v6785, %v6784
      %v6934 = vpack.c.b16 %v6787, %v6786
      %v6935 = vpack.c.b16 %v6789, %v6788
      %v6936 = vpack.c.b16 %v6791, %v6790
      %v6937 = vpack.c.b16 %v6793, %v6792
      %v6938 = vpack.c.b16 %v6795, %v6794
      %v6939 = vpack.c.b16 %v6797, %v6796
      %v6940 = vpack.c.b16 %v6799, %v6798
      %v6941 = vpack.c.b16 %v6801, %v6800
      %v6942 = vpack.c.b16 %v6803, %v6802
      %v6943 = vpack.c.b16 %v6805, %v6804
      %v6944 = vpack.c.b16 %v6807, %v6806
      %v6945 = vpack.c.b16 %v6809, %v6808
      %v6946 = vpack.c.b16 %v6811, %v6810
      %v6947 = vpack.c.b16 %v6813, %v6812
      %v6948 = vpack.c.b16 %v6815, %v6814
      %v6949 = vpack.c.b16 %v6817, %v6816
      %v6950 = vpack.c.b16 %v6819, %v6818
      %v6951 = vpack.c.b16 %v6821, %v6820
      %v6952 = vpack.c.b16 %v6823, %v6822
      %v6953 = vpack.c.b16 %v6825, %v6824
      %v6954 = vpack.c.b16 %v6827, %v6826
      %v6955 = vpack.c.b16 %v6829, %v6828
      %v6956 = vpack.c.b16 %v6831, %v6830
      %v6957 = vpack.c.b16 %v6833, %v6832
      %v6958 = vpack.c.b16 %v6835, %v6834
      %v6959 = vpack.c.b16 %v6837, %v6836
      %v6960 = vpack.c.b16 %v6839, %v6838
      %v6961 = vpack.c.b16 %v6841, %v6840
      %v6962 = vpack.c.b16 %v6843, %v6842
      %v6963 = vpack.c.b16 %v6845, %v6844
      %v6964 = vpack.c.b16 %v6847, %v6846
      %v6965 = vpack.c.b16 %v6849, %v6848
      %v6966 = vpack.c.b16 %v6851, %v6850
      %v6967 = vpack.c.b16 %v6853, %v6852
      %v6968 = vpack.c.b16 %v6855, %v6854
      %v6969 = vpack.c.b16 %v6857, %v6856
      %v6970 = vpack.c.b16 %v6859, %v6858
      %v6971 = vpack.c.b16 %v6861, %v6860
      %v6972 = vpack.c.b16 %v6863, %v6862
      %v6973 = vpack.c.b16 %v6865, %v6864
      %v6974 = vpack.c.b16 %v6867, %v6866
      %v6975 = vpack.c.b16 %v6869, %v6868
      %v6976 = vpack.c.b16 %v6871, %v6870
      %v6977 = vpack.c.b16 %v6873, %v6872
      %v6978 = vpack.c.b16 %v6875, %v6874
      %v6979 = vpack.c.b16 %v6877, %v6876
      %v6980 = vpack.c.b16 %v6879, %v6878
      %v6981 = vpack.c.b16 %v6881, %v6880
      %v6982 = vpack.c.b16 %v6883, %v6882
      %v6983 = vpack.c.b16 %v6885, %v6884
      %v6984 = vpack.c.b16 %v6887, %v6886
      %v6985 = vpack.c.b16 %v6889, %v6888
      %v6986 = vpack.c.b16 %v6891, %v6890
      %v6987 = vpack.c.b16 %v6893, %v6892
      %v6988 = vpack.c.b16 %v6895, %v6894
      %v6989 = vpack.c.b16 %v6897, %v6896
      %v6990 = vpack.c.b16 %v6899, %v6898
      %v6991 = vpack.c.b16 %v6901, %v6900
      %v6992 = vpack.c.b16 %v6903, %v6902
      %v6993 = vpack.c.b16 %v6905, %v6904
      %v6994 = vpack.c.b16 %v6907, %v6906
      %v6995 = vpack.c.b16 %v6909, %v6908
      %v6996 = vpack.c.b16 %v6911, %v6910
      %v6997 = vpack.c.b16 %v6913, %v6912
      %v6998 = vpack.c.b16 %v6915, %v6914
      %v6999 = vpack.c.b16 %v6917, %v6916
      %v7000 = vpack.c.b16 %v6919, %v6918
      %v7001 = vpack.c.b16 %v6921, %v6920
      %7082 = vmatpush.bf16.msra.mxu0 %v6929
      %7083 = vmatpush.bf16.msra.mxu0 %v6928
      %7084 = vmatpush.bf16.msra.mxu0 %v6927
      %7085 = vmatpush.bf16.msra.mxu0 %v6926
      %7086 = vmatpush.bf16.msra.mxu0 %v6925
      %7087 = vmatpush.bf16.msra.mxu0 %v6924
      %7088 = vmatpush.bf16.msra.mxu0 %v6923
      %7089 = vmatpush.bf16.msra.mxu0 %v6922
      %7090 = vmatmul.bf16.gmra.mxu0 %v6428
      %v7091 = vpop.f32.mrf.mxu0
      %v7092 = vadd.f32 %v6600, %v7091
      %v7093 = vpop.f32.mrf.mxu0
      %v7094 = vadd.f32 %v6600, %v7093
      %7095 = vdwg.mxu0
      %7096 = vmatpush.bf16.msra.mxu0 %v6937
      %7097 = vmatpush.bf16.msra.mxu0 %v6936
      %7098 = vmatpush.bf16.msra.mxu0 %v6935
      %7099 = vmatpush.bf16.msra.mxu0 %v6934
      %7100 = vmatpush.bf16.msra.mxu0 %v6933
      %7101 = vmatpush.bf16.msra.mxu0 %v6932
      %7102 = vmatpush.bf16.msra.mxu0 %v6931
      %7103 = vmatpush.bf16.msra.mxu0 %v6930
      %7104 = vmatmul.bf16.gmra.mxu0 %v6429
      %v7105 = vpop.f32.mrf.mxu0
      %v7106 = vadd.f32 %v7092, %v7105
      %v7107 = vpop.f32.mrf.mxu0
      %v7108 = vadd.f32 %v7094, %v7107
      %7109 = vdwg.mxu0
      %7110 = vmatpush.bf16.msra.mxu0 %v6945
      %7111 = vmatpush.bf16.msra.mxu0 %v6944
      %7112 = vmatpush.bf16.msra.mxu0 %v6943
      %7113 = vmatpush.bf16.msra.mxu0 %v6942
      %7114 = vmatpush.bf16.msra.mxu0 %v6941
      %7115 = vmatpush.bf16.msra.mxu0 %v6940
      %7116 = vmatpush.bf16.msra.mxu0 %v6939
      %7117 = vmatpush.bf16.msra.mxu0 %v6938
      %7118 = vmatmul.bf16.gmra.mxu0 %v6430
      %v7119 = vpop.f32.mrf.mxu0
      %v7120 = vadd.f32 %v7106, %v7119
      %v7121 = vpop.f32.mrf.mxu0
      %v7122 = vadd.f32 %v7108, %v7121
      %7123 = vdwg.mxu0
      %7124 = vmatpush.bf16.msra.mxu0 %v6953
      %7125 = vmatpush.bf16.msra.mxu0 %v6952
      %7126 = vmatpush.bf16.msra.mxu0 %v6951
      %7127 = vmatpush.bf16.msra.mxu0 %v6950
      %7128 = vmatpush.bf16.msra.mxu0 %v6949
      %7129 = vmatpush.bf16.msra.mxu0 %v6948
      %7130 = vmatpush.bf16.msra.mxu0 %v6947
      %7131 = vmatpush.bf16.msra.mxu0 %v6946
      %7132 = vmatmul.bf16.gmra.mxu0 %v6431
      %v7133 = vpop.f32.mrf.mxu0
      %v7134 = vadd.f32 %v7120, %v7133
      %v7135 = vpop.f32.mrf.mxu0
      %v7136 = vadd.f32 %v7122, %v7135
      %7137 = vdwg.mxu0
      %7138 = vmatpush.bf16.msra.mxu0 %v6961
      %7139 = vmatpush.bf16.msra.mxu0 %v6960
      %7140 = vmatpush.bf16.msra.mxu0 %v6959
      %7141 = vmatpush.bf16.msra.mxu0 %v6958
      %7142 = vmatpush.bf16.msra.mxu0 %v6957
      %7143 = vmatpush.bf16.msra.mxu0 %v6956
      %7144 = vmatpush.bf16.msra.mxu0 %v6955
      %7145 = vmatpush.bf16.msra.mxu0 %v6954
      %7146 = vmatmul.bf16.gmra.mxu0 %v6432
      %v7147 = vpop.f32.mrf.mxu0
      %v7148 = vadd.f32 %v7134, %v7147
      %v7149 = vpop.f32.mrf.mxu0
      %v7150 = vadd.f32 %v7136, %v7149
      %7151 = vdwg.mxu0
      %7152 = vmatpush.bf16.msra.mxu0 %v6969
      %7153 = vmatpush.bf16.msra.mxu0 %v6968
      %7154 = vmatpush.bf16.msra.mxu0 %v6967
      %7155 = vmatpush.bf16.msra.mxu0 %v6966
      %7156 = vmatpush.bf16.msra.mxu0 %v6965
      %7157 = vmatpush.bf16.msra.mxu0 %v6964
      %7158 = vmatpush.bf16.msra.mxu0 %v6963
      %7159 = vmatpush.bf16.msra.mxu0 %v6962
      %7160 = vmatmul.bf16.gmra.mxu0 %v6433
      %v7161 = vpop.f32.mrf.mxu0
      %v7162 = vadd.f32 %v7148, %v7161
      %v7163 = vpop.f32.mrf.mxu0
      %v7164 = vadd.f32 %v7150, %v7163
      %7165 = vdwg.mxu0
      %7166 = vmatpush.bf16.msra.mxu0 %v6977
      %7167 = vmatpush.bf16.msra.mxu0 %v6976
      %7168 = vmatpush.bf16.msra.mxu0 %v6975
      %7169 = vmatpush.bf16.msra.mxu0 %v6974
      %7170 = vmatpush.bf16.msra.mxu0 %v6973
      %7171 = vmatpush.bf16.msra.mxu0 %v6972
      %7172 = vmatpush.bf16.msra.mxu0 %v6971
      %7173 = vmatpush.bf16.msra.mxu0 %v6970
      %7174 = vmatmul.bf16.gmra.mxu0 %v6434
      %v7175 = vpop.f32.mrf.mxu0
      %v7176 = vadd.f32 %v7162, %v7175
      %v7177 = vpop.f32.mrf.mxu0
      %v7178 = vadd.f32 %v7164, %v7177
      %7179 = vdwg.mxu0
      %7180 = vmatpush.bf16.msra.mxu0 %v6985
      %7181 = vmatpush.bf16.msra.mxu0 %v6984
      %7182 = vmatpush.bf16.msra.mxu0 %v6983
      %7183 = vmatpush.bf16.msra.mxu0 %v6982
      %7184 = vmatpush.bf16.msra.mxu0 %v6981
      %7185 = vmatpush.bf16.msra.mxu0 %v6980
      %7186 = vmatpush.bf16.msra.mxu0 %v6979
      %7187 = vmatpush.bf16.msra.mxu0 %v6978
      %7188 = vmatmul.bf16.gmra.mxu0 %v6435
      %v7189 = vpop.f32.mrf.mxu0
      %v7190 = vadd.f32 %v7176, %v7189
      %v7191 = vpop.f32.mrf.mxu0
      %v7192 = vadd.f32 %v7178, %v7191
      %7193 = vdwg.mxu0
      %7194 = vmatpush.bf16.msra.mxu0 %v6993
      %7195 = vmatpush.bf16.msra.mxu0 %v6992
      %7196 = vmatpush.bf16.msra.mxu0 %v6991
      %7197 = vmatpush.bf16.msra.mxu0 %v6990
      %7198 = vmatpush.bf16.msra.mxu0 %v6989
      %7199 = vmatpush.bf16.msra.mxu0 %v6988
      %7200 = vmatpush.bf16.msra.mxu0 %v6987
      %7201 = vmatpush.bf16.msra.mxu0 %v6986
      %7202 = vmatmul.bf16.gmra.mxu0 %v6436
      %v7203 = vpop.f32.mrf.mxu0
      %v7204 = vadd.f32 %v7190, %v7203
      %v7205 = vpop.f32.mrf.mxu0
      %v7206 = vadd.f32 %v7192, %v7205
      %7207 = vdwg.mxu0
      %7208 = vmatpush.bf16.msra.mxu0 %v7001
      %7209 = vmatpush.bf16.msra.mxu0 %v7000
      %7210 = vmatpush.bf16.msra.mxu0 %v6999
      %7211 = vmatpush.bf16.msra.mxu0 %v6998
      %7212 = vmatpush.bf16.msra.mxu0 %v6997
      %7213 = vmatpush.bf16.msra.mxu0 %v6996
      %7214 = vmatpush.bf16.msra.mxu0 %v6995
      %7215 = vmatpush.bf16.msra.mxu0 %v6994
      %7216 = vmatmul.bf16.gmra.mxu0 %v6437
      %v7217 = vpop.f32.mrf.mxu0
      %v7218 = vadd.f32 %v7204, %v7217
      %v7219 = vpop.f32.mrf.mxu0
      %v7220 = vadd.f32 %v7206, %v7219
      %7221 = vdwg.mxu0
      %v7222 = vmax.f32 %v7218, 0.0
      %v7223 = vmax.f32 %v7220, 0.0
      %v7224 = vpack.c.bf16 %v7223, %v7222
      %v7225 = vld [vmem:[%s7] sm:$0xf]
      %v7226 = vld [vmem:[%s7 + $0x4] sm:$0xf]
      %v7227 = vld [vmem:[%s7 + $0x8] sm:$0xf]
      %v7228 = vld [vmem:[%s7 + $0xc] sm:$0xf]
      %v7229 = vld [vmem:[%s7 + $0x10] sm:$0xf]
      %v7230 = vld [vmem:[%s7 + $0x14] sm:$0xf]
      %v7231 = vld [vmem:[%s7 + $0x18] sm:$0xf]
      %v7232 = vld [vmem:[%s7 + $0x1c] sm:$0xf]
      %v7233 = vld [vmem:[%s7 + $0x20] sm:$0xf]
      %v7234 = vld [vmem:[%s7 + $0x24] sm:$0xf]
      %v7235 = vld [vmem:[%s7 + $0x28] sm:$0xf]
      %v7236 = vld [vmem:[%s7 + $0x2c] sm:$0xf]
      %v7237 = vld [vmem:[%s7 + $0x30] sm:$0xf]
      %v7238 = vld [vmem:[%s7 + $0x34] sm:$0xf]
      %v7239 = vld [vmem:[%s7 + $0x38] sm:$0xf]
      %v7240 = vld [vmem:[%s7 + $0x3c] sm:$0xf]
      %v7241 = vld [vmem:[%s8] sm:$0x1]
      %v7243 = vperm.slane %v7241, 0
      %v7261 = vunpack.c.l.b16 %v7225
      %v7262 = vunpack.c.l.b16 %v7226
      %v7263 = vunpack.c.l.b16 %v7227
      %v7264 = vunpack.c.l.b16 %v7228
      %v7265 = vunpack.c.l.b16 %v7229
      %v7266 = vunpack.c.l.b16 %v7230
      %v7267 = vunpack.c.l.b16 %v7231
      %v7268 = vunpack.c.l.b16 %v7232
      %v7269 = vunpack.c.l.b16 %v7233
      %v7270 = vunpack.c.l.b16 %v7234
      %v7271 = vunpack.c.l.b16 %v7235
      %v7272 = vunpack.c.l.b16 %v7236
      %v7273 = vunpack.c.l.b16 %v7237
      %v7274 = vunpack.c.l.b16 %v7238
      %v7275 = vunpack.c.l.b16 %v7239
      %v7276 = vunpack.c.l.b16 %v7240
      %v7277 = vpack.c.b16 %v7262, %v7261
      %v7278 = vpack.c.b16 %v7264, %v7263
      %v7279 = vpack.c.b16 %v7266, %v7265
      %v7280 = vpack.c.b16 %v7268, %v7267
      %v7281 = vpack.c.b16 %v7270, %v7269
      %v7282 = vpack.c.b16 %v7272, %v7271
      %v7283 = vpack.c.b16 %v7274, %v7273
      %v7284 = vpack.c.b16 %v7276, %v7275
      %7293 = vmatpush.bf16.msra.mxu0 %v7284
      %7294 = vmatpush.bf16.msra.mxu0 %v7283
      %7295 = vmatpush.bf16.msra.mxu0 %v7282
      %7296 = vmatpush.bf16.msra.mxu0 %v7281
      %7297 = vmatpush.bf16.msra.mxu0 %v7280
      %7298 = vmatpush.bf16.msra.mxu0 %v7279
      %7299 = vmatpush.bf16.msra.mxu0 %v7278
      %7300 = vmatpush.bf16.msra.mxu0 %v7277
      %7301 = vmatmul.bf16.gmra.mxu0 %v7224
      %v7302 = vpop.f32.mrf.mxu0
      %v7303 = vadd.f32 %v7243, %v7302
      %v7304 = vpop.f32.mrf.mxu0
      %v7305 = vadd.f32 %v7243, %v7304
      %7306 = vdwg.mxu0
      %v7307 = vmax.f32 %v7303, 0.0
      %v7308 = vmax.f32 %v7305, 0.0
      %v7309 = vpack.c.bf16 %v7308, %v7307
      %v7310 = vld [vmem:[%s9] sm:$0xf]
      %v7311 = vld [vmem:[%s9 + $0x4] sm:$0xf]
      %v7312 = vld [vmem:[%s9 + $0x8] sm:$0xf]
      %v7313 = vld [vmem:[%s9 + $0xc] sm:$0xf]
      %v7314 = vld [vmem:[%s9 + $0x10] sm:$0xf]
      %v7315 = vld [vmem:[%s9 + $0x14] sm:$0xf]
      %v7316 = vld [vmem:[%s9 + $0x18] sm:$0xf]
      %v7317 = vld [vmem:[%s9 + $0x1c] sm:$0xf]
      %v7318 = vld [vmem:[%s9 + $0x20] sm:$0xf]
      %v7319 = vld [vmem:[%s9 + $0x24] sm:$0xf]
      %v7320 = vld [vmem:[%s9 + $0x28] sm:$0xf]
      %v7321 = vld [vmem:[%s9 + $0x2c] sm:$0xf]
      %v7322 = vld [vmem:[%s9 + $0x30] sm:$0xf]
      %v7323 = vld [vmem:[%s9 + $0x34] sm:$0xf]
      %v7324 = vld [vmem:[%s9 + $0x38] sm:$0xf]
      %v7325 = vld [vmem:[%s9 + $0x3c] sm:$0xf]
      %v7326 = vld [vmem:[%s10] sm:$0x1]
      %v7328 = vperm.slane %v7326, 0
      %v7346 = vunpack.c.l.b16 %v7310
      %v7347 = vunpack.c.l.b16 %v7311
      %v7348 = vunpack.c.l.b16 %v7312
      %v7349 = vunpack.c.l.b16 %v7313
      %v7350 = vunpack.c.l.b16 %v7314
      %v7351 = vunpack.c.l.b16 %v7315
      %v7352 = vunpack.c.l.b16 %v7316
      %v7353 = vunpack.c.l.b16 %v7317
      %v7354 = vunpack.c.l.b16 %v7318
      %v7355 = vunpack.c.l.b16 %v7319
      %v7356 = vunpack.c.l.b16 %v7320
      %v7357 = vunpack.c.l.b16 %v7321
      %v7358 = vunpack.c.l.b16 %v7322
      %v7359 = vunpack.c.l.b16 %v7323
      %v7360 = vunpack.c.l.b16 %v7324
      %v7361 = vunpack.c.l.b16 %v7325
      %v7362 = vpack.c.b16 %v7347, %v7346
      %v7363 = vpack.c.b16 %v7349, %v7348
      %v7364 = vpack.c.b16 %v7351, %v7350
      %v7365 = vpack.c.b16 %v7353, %v7352
      %v7366 = vpack.c.b16 %v7355, %v7354
      %v7367 = vpack.c.b16 %v7357, %v7356
      %v7368 = vpack.c.b16 %v7359, %v7358
      %v7369 = vpack.c.b16 %v7361, %v7360
      %7378 = vmatpush.bf16.msra.mxu0 %v7369
      %7379 = vmatpush.bf16.msra.mxu0 %v7368
      %7380 = vmatpush.bf16.msra.mxu0 %v7367
      %7381 = vmatpush.bf16.msra.mxu0 %v7366
      %7382 = vmatpush.bf16.msra.mxu0 %v7365
      %7383 = vmatpush.bf16.msra.mxu0 %v7364
      %7384 = vmatpush.bf16.msra.mxu0 %v7363
      %7385 = vmatpush.bf16.msra.mxu0 %v7362
      %7386 = vmatmul.bf16.gmra.mxu0 %v7309
      %v7387 = vpop.f32.mrf.mxu0
      %v7388 = vadd.f32 %v7328, %v7387
      %v7389 = vpop.f32.mrf.mxu0
      %v7390 = vadd.f32 %v7328, %v7389
      %7391 = vdwg.mxu0
      %7392 = vst [vmem:[%s388] sm:$0xff] %v7388
      %7393 = vst [vmem:[%s388 + $0x8] sm:$0xff] %v7390
      %s7394 = smul.u32 2, %s22
      %p7395 = scmp.lt.s32.totalorder %s7394, 3
      %s7396 = scalar_select %p7395, %s7394, 3
      %s7397 = smul.addr %s7396, 8
      %s7398 = scalar_lea.vmem %s11, %s7397
      // Predicated region
      $region65: #{example_cnn_forward.1} parent=63 // pred_check
        %p7399 = pneg %p276
      $region66: #{example_cnn_forward.1} parent=63 // pred_check_branch
        %7401 = sbr.rel (%p7399) target = $region68
      $region67: #{example_cnn_forward.1} parent=63 // pred_region
        %s7402 = smul.u32 2, %s22
      $region68: #{example_cnn_forward.1} parent=63 // pred_fallthru
        _
    $region64: #{example_cnn_forward.1} parent=5 // pred_fallthru
      _
    %p7403 = scmp.le.s32.totalorder 2, %s17
    // Predicated region
    $region69: #{example_cnn_forward.1} parent=5 // pred_check
      %p7404 = pneg %p7403
    $region70: #{example_cnn_forward.1} parent=5 // pred_check_branch
      %7406 = sbr.rel (%p7404) target = $region72
    $region71: #{example_cnn_forward.1} parent=5 // pred_region
      %s7407 = ssub.s32 %s17, 2
      // Predicated region
      $region73: #{example_cnn_forward.1} parent=71 // pred_check
        %p7408 = pneg %p282
      $region74: #{example_cnn_forward.1} parent=71 // pred_check_branch
        %7410 = sbr.rel (%p7408) target = $region76
      $region75: #{example_cnn_forward.1} parent=71 // pred_region
        %s7411 = smul.u32 2, %s23
        %p7412 = scmp.lt.s32.totalorder %s7411, 3
        %s7413 = scalar_select %p7412, %s7411, 3
        %s7414 = smul.addr %s7413, 8
        %s7415 = scalar_lea.vmem %s11, %s7414
      $region76: #{example_cnn_forward.1} parent=71 // pred_fallthru
        _
    $region72: #{example_cnn_forward.1} parent=5 // pred_fallthru
      _
  $region6: #{example_cnn_forward.1} parent=0 // loop_footer
    %s21 = sadd.s32 1, %s17
  $region7: #{example_cnn_forward.1} parent=0 // loop_footer_branch
    %16 = sbr.rel target = $region3
  $region8: #{example_cnn_forward.1} parent=0 // loop_exit
    _

</llo_original>
